<compile_context>
chip_gen: v7x
topology: tpu7x:2x2x1
jax: 0.10.0
libtpu: 0.0.40
codegen_flags: <defaults>
</compile_context>

<pallas_src>
import functools
import math

import jax
import jax.numpy as jnp
from jax.experimental import pallas as pl
from jax.experimental.pallas import tpu as pltpu


# ----------------------------------------------------------------------------
# shared math helpers
# ----------------------------------------------------------------------------
def _mxu(a, b):
    """MXU matmul: bf16 operands, f32 accumulation (perf-review recommendation)."""
    return jnp.dot(a.astype(jnp.bfloat16), b.astype(jnp.bfloat16),
                   preferred_element_type=jnp.float32)


def _softmax(x, axis=-1):
    m = jnp.max(x, axis=axis, keepdims=True)
    e = jnp.exp(x - m)
    return e / jnp.sum(e, axis=axis, keepdims=True)


def _layernorm(x, gamma, beta, eps=1e-5):
    mu = jnp.mean(x, axis=-1, keepdims=True)
    var = jnp.mean(jnp.square(x - mu), axis=-1, keepdims=True)
    return (x - mu) * jax.lax.rsqrt(var + eps) * gamma + beta


def _gelu_tanh(x):
    c = math.sqrt(2.0 / math.pi)
    return 0.5 * x * (1.0 + jnp.tanh(c * (x + 0.044715 * x * x * x)))


def _encoder_math(x, nheads, wqkv, bqkv, wo, bo, g1, be1, w1, b1, w2, b2, g2, be2):
    """One post-LN nn.TransformerEncoderLayer on x: [N, L, C] (N sequences)."""
    n, seq_l, d = x.shape
    dh = d // nheads
    x2 = x.reshape(n * seq_l, d)
    qkv = _mxu(x2, wqkv) + bqkv                       # fused QKV: one [C,3C] matmul
    qkv3 = qkv.reshape(n, seq_l, 3 * d)
    scale = 1.0 / math.sqrt(dh)
    # sum-over-heads formulation == concat(heads) @ wo (avoids a lane concat).
    attn2 = jnp.zeros((n * seq_l, d), jnp.float32)
    for h in range(nheads):                           # nheads is tiny & static
        q_h = qkv3[:, :, h * dh:(h + 1) * dh]
        k_h = qkv3[:, :, d + h * dh:d + (h + 1) * dh]
        v_h = qkv3[:, :, 2 * d + h * dh:2 * d + (h + 1) * dh]
        s = jnp.einsum("nqd,nkd->nqk", q_h.astype(jnp.bfloat16),
                       k_h.astype(jnp.bfloat16),
                       preferred_element_type=jnp.float32) * scale
        p = _softmax(s, axis=-1)
        o_h = jnp.einsum("nqk,nkd->nqd", p.astype(jnp.bfloat16),
                         v_h.astype(jnp.bfloat16),
                         preferred_element_type=jnp.float32)
        attn2 = attn2 + _mxu(o_h.reshape(n * seq_l, dh), wo[h * dh:(h + 1) * dh, :])
    attn2 = attn2 + bo
    h1 = _layernorm(x2 + attn2, g1, be1)
    ff = _gelu_tanh(_mxu(h1, w1) + b1)
    ff = _mxu(ff, w2) + b2
    return _layernorm(h1 + ff, g2, be2).reshape(n, seq_l, d)


# ----------------------------------------------------------------------------
# Kernel A : diffusion-emb inject + time-transformer, gridded over batch
# ----------------------------------------------------------------------------
def _inject_encoder_kernel(x_ref, demb_ref, wdp_ref, bdp_ref,
                           wqkv_ref, bqkv_ref, wo_ref, bo_ref,
                           g1_ref, be1_ref, w1_ref, b1_ref, w2_ref, b2_ref,
                           g2_ref, be2_ref, o_ref, *, nheads):
    _, kdim, ldim, cdim = x_ref.shape
    x = x_ref[...].reshape(kdim, ldim, cdim)                       # squeeze leading 1
    proj = _mxu(demb_ref[...].reshape(1, -1), wdp_ref[...]) + bdp_ref[...]   # [1, C]
    y = x + proj.reshape(1, 1, cdim)                               # broadcast inject
    enc = _encoder_math(y, nheads,
                        wqkv_ref[...], bqkv_ref[...], wo_ref[...], bo_ref[...],
                        g1_ref[...], be1_ref[...], w1_ref[...], b1_ref[...],
                        w2_ref[...], b2_ref[...], g2_ref[...], be2_ref[...])
    o_ref[...] = enc.reshape(1, kdim, ldim, cdim)


def _replicated_spec(a):
    nd = a.ndim
    return pl.BlockSpec(a.shape, lambda b: (0,) * nd)


# ----------------------------------------------------------------------------
# Kernel B : feature attention + GCN + gated output block (channel-first)
# ----------------------------------------------------------------------------
def _feature_gated_kernel(xf_ref, x_ref, cond_ref, wtile_ref, bpool_ref,
                          gsum_ref, fold_ref, spread_ref, mgp_ref, bgp_ref,
                          wm_ref, wc_ref, bmc_ref, wor_ref, bor_ref, wos_ref, bos_ref,
                          res_out_ref, skip_out_ref, *, nbatch, nchan, nfeat):
    xf = xf_ref[...]                                               # [B*C, T] rows=(b,c)
    # --- att_dot_var: pool (VPU mul + 0/1-matrix group sum) -> global softmax -> relu
    zt = _mxu(xf * wtile_ref[...], gsum_ref[...]) + bpool_ref[...]          # [B*C, T]
    e = _mxu(jnp.sum(zt * xf, axis=0, keepdims=True), fold_ref[...])        # [1, K]
    att = _softmax(e * (1.0 / math.sqrt(nfeat)), axis=-1)                   # [1, K]
    att_t = _mxu(att, spread_ref[...])                                      # [1, T]
    relu_out = jnp.maximum(xf * att_t, 0.0)                                 # [B*C, T]
    # --- GCN propagate+linear fused with torch's K<->L reshuffle (constant matrix)
    res = _mxu(relu_out, mgp_ref[...]) + bgp_ref[...]                       # [B*C, T]
    # --- gated 1x1-conv output block, channel-first (lane dim = T)
    inv_sqrt2 = 1.0 / math.sqrt(2.0)
    for b in range(nbatch):                                        # nbatch static, tiny
        res_b = res[b * nchan:(b + 1) * nchan, :]                  # [C, T]
        pre = (_mxu(wm_ref[...], res_b) + _mxu(wc_ref[...], cond_ref[b])
               + bmc_ref[...])                                     # [2C, T]
        gated = jax.nn.sigmoid(pre[:nchan, :]) * jnp.tanh(pre[nchan:, :])   # [C, T]
        res_out_ref[b] = (x_ref[b] + _mxu(wor_ref[...], gated)
                          + bor_ref[...]) * inv_sqrt2
        skip_out_ref[b] = _mxu(wos_ref[...], gated) + bos_ref[...]


# ----------------------------------------------------------------------------
# module
# ----------------------------------------------------------------------------
class ResidualBlockPallas:
    def __init__(self, side_dim, channels, diffusion_embedding_dim, nheads, target_dim,
                 gcn_hidden=64, ff_dim=64, *, key):
        C, E, K, S = channels, diffusion_embedding_dim, target_dim, side_dim
        self.C, self.E, self.K, self.S, self.H = C, E, K, S, nheads
        keys = iter(jax.random.split(key, 32))

        def uni(shape, fan_in):
            s = 1.0 / math.sqrt(fan_in)
            return jax.random.uniform(next(keys), shape, jnp.float32, -s, s)

        def kaiming(shape, fan_in):
            return jax.random.normal(next(keys), shape, jnp.float32) * math.sqrt(2.0 / fan_in)

        # diffusion_projection = nn.Linear(E, C), stored [in, out]
        self.w_dp, self.b_dp = uni((E, C), E), uni((1, C), E)
        # time_layer: one TransformerEncoderLayer(d_model=C, nhead, ff=ff_dim, gelu)
        self.wqkv, self.bqkv = uni((C, 3 * C), C), uni((1, 3 * C), C)      # fused QKV
        self.wo, self.bo = uni((C, C), C), uni((1, C), C)
        self.g1, self.be1 = jnp.ones((1, C), jnp.float32), jnp.zeros((1, C), jnp.float32)
        self.w1, self.b1 = uni((C, ff_dim), C), uni((1, ff_dim), C)
        self.w2, self.b2 = uni((ff_dim, C), ff_dim), uni((1, C), ff_dim)
        self.g2, self.be2 = jnp.ones((1, C), jnp.float32), jnp.zeros((1, C), jnp.float32)
        # pool = nn.Linear(target_dim, 1)
        self.w_pool, self.b_pool = uni((K,), K), uni((), K)
        # GraphConvolutionalNetwork(gcn_hidden, K): parameter-only adjacency -> precompute.
        emb = jax.random.normal(next(keys), (K, gcn_hidden), jnp.float32)
        self.adj = jax.nn.softmax(emb @ emb.T, axis=-1)
        self.w_gcn, self.b_gcn = uni((K, K), K), uni((K,), K)
        # 1x1 Conv1d layers stored channel-first [out, in]
        self.w_cond, self.b_cond = kaiming((2 * C, S), S), uni((2 * C,), S)
        self.w_mid, self.b_mid = kaiming((2 * C, C), C), uni((2 * C,), C)
        self.w_out, self.b_out = kaiming((2 * C, C), C), uni((2 * C,), C)
        # self.feature_layer is never used by forward -> omitted.

    # -------------------- Pallas forward --------------------
    def _inject_encoder_call(self, x_seq, demb):
        B, K, L, C = x_seq.shape
        weights = (self.w_dp, self.b_dp, self.wqkv, self.bqkv, self.wo, self.bo,
                   self.g1, self.be1, self.w1, self.b1, self.w2, self.b2,
                   self.g2, self.be2)
        in_specs = ([pl.BlockSpec((1, K, L, C), lambda b: (b, 0, 0, 0)),
                     pl.BlockSpec((1, 1, demb.shape[-1]), lambda b: (b, 0, 0))]
                    + [_replicated_spec(w) for w in weights])
        return pl.pallas_call(
            functools.partial(_inject_encoder_kernel, nheads=self.H),
            out_shape=jax.ShapeDtypeStruct((B, K, L, C), jnp.float32),
            grid=(B,),
            in_specs=in_specs,
            out_specs=pl.BlockSpec((1, K, L, C), lambda b: (b, 0, 0, 0)),
            compiler_params=pltpu.CompilerParams(dimension_semantics=("parallel",)),
        )(x_seq, demb, *weights)

    def forward(self, x, cond_info, diffusion_emb):
        B, C, K, L = x.shape
        T = K * L
        S = cond_info.shape[1]

        # ---- Kernel A: inject + time transformer (grid over batch, parallel) ----
        x_seq = jnp.transpose(x, (0, 2, 3, 1))                     # [B, K, L, C]
        if L == 1:
            # torch forward_time early-returns when L == 1 (time layer is identity);
            # the tiny inject stays in XLA on this path.
            proj = jnp.dot(diffusion_emb, self.w_dp) + self.b_dp
            enc = x_seq + proj[:, None, None, :]
        else:
            enc = self._inject_encoder_call(x_seq, diffusion_emb.reshape(B, 1, -1))

        # ---- constants that fold pool-group-sums, GCN and the torch K<->L reshuffle
        #      into plain matmuls (computed from parameters, constant-folded under jit)
        idx = jnp.arange(T)
        kidx = jnp.arange(K)
        gsum = (idx[:, None] // K == idx[None, :] // K).astype(jnp.float32)   # [T, T]
        fold = (idx[:, None] % K == kidx[None, :]).astype(jnp.float32)        # [T, K]
        spread = fold.T                                                        # [K, T]
        perm = (idx % K) * L + (idx // K)           # res[.., t] = y_feat[.., perm[t]]
        g_mat = jnp.dot(self.adj, self.w_gcn.T)                                # [K, K]
        bdg = jnp.kron(jnp.eye(L, dtype=jnp.float32), g_mat)                   # [T, T]
        m_gp = bdg[:, perm]                          # GCN + reshuffle, one matrix
        b_gp = jnp.tile(self.b_gcn, L)[perm][None, :]                          # [1, T]
        w_tile = jnp.tile(self.w_pool, L)[None, :]                             # [1, T]
        b_pool = self.b_pool.reshape(1, 1)

        wm, wc = self.w_mid, self.w_cond
        bmc = (self.b_mid + self.b_cond).reshape(2 * C, 1)         # pre-added biases
        wor, wos = self.w_out[:C], self.w_out[C:]                  # split res/skip
        bor = self.b_out[:C].reshape(C, 1)
        bos = self.b_out[C:].reshape(C, 1)

        # ---- Kernel B: feature attention + GCN + gated output block ----
        # x_feat rows = (b, c), lanes t' = l*K + k  (== torch's y.transpose(1,2) rows)
        x_feat = jnp.transpose(enc, (0, 3, 2, 1)).reshape(B * C, T)
        x_cf = x.reshape(B, C, T)                                  # channel-first, free
        cond_cf = cond_info.reshape(B, S, T)
        args = (x_feat, x_cf, cond_cf, w_tile, b_pool, gsum, fold, spread, m_gp, b_gp,
                wm, wc, bmc, wor, bor, wos, bos)
        out_sd = jax.ShapeDtypeStruct((B, C, T), jnp.float32)
        res_cf, skip_cf = pl.pallas_call(
            functools.partial(_feature_gated_kernel, nbatch=B, nchan=C, nfeat=K),
            out_shape=(out_sd, out_sd),
            in_specs=[pl.BlockSpec(memory_space=pltpu.MemorySpace.VMEM) for _ in args],
            out_specs=(pl.BlockSpec(memory_space=pltpu.MemorySpace.VMEM),
                       pl.BlockSpec(memory_space=pltpu.MemorySpace.VMEM)),
        )(*args)

        loss_d = jnp.zeros((), jnp.float32)  # TODO(synk): dispatcher undefined -> 0
        return (res_cf.reshape(B, C, K, L), skip_cf.reshape(B, C, K, L), loss_d)

    # -------------------- pure-JAX (f32, torch-literal) reference --------------------
    def forward_reference(self, x, cond_info, diffusion_emb):
        hp = jax.lax.Precision.HIGHEST
        B, C, K, L = x.shape
        T = K * L
        x_cf = x.reshape(B, C, T)
        proj = jnp.dot(diffusion_emb, self.w_dp, precision=hp) + self.b_dp
        y = x_cf + proj[:, :, None]
        if L == 1:
            y_time = y
        else:
            H, dh = self.H, C // self.H
            seq = y.reshape(B, C, K, L).transpose(0, 2, 3, 1).reshape(B * K, L, C)
            s2 = seq.reshape(-1, C)
            qkv = (jnp.dot(s2, self.wqkv, precision=hp)
                   + self.bqkv).reshape(B * K, L, 3, H, dh)
            q = qkv[:, :, 0].transpose(0, 2, 1, 3)
            k = qkv[:, :, 1].transpose(0, 2, 1, 3)
            v = qkv[:, :, 2].transpose(0, 2, 1, 3)
            sc = jnp.einsum("nhqd,nhkd->nhqk", q, k, precision=hp) / math.sqrt(dh)
            p = _softmax(sc, axis=-1)
            o = jnp.einsum("nhqk,nhkd->nhqd", p, v, precision=hp)
            o = o.transpose(0, 2, 1, 3).reshape(-1, C)
            attn = jnp.dot(o, self.wo, precision=hp) + self.bo
            h1 = _layernorm(s2 + attn, self.g1, self.be1)
            ff = _gelu_tanh(jnp.dot(h1, self.w1, precision=hp) + self.b1)
            ff = jnp.dot(ff, self.w2, precision=hp) + self.b2
            enc = _layernorm(h1 + ff, self.g2, self.be2).reshape(B, K, L, C)
            y_time = enc.transpose(0, 3, 1, 2).reshape(B, C, T)
        # forward_feature (torch-literal)
        y3 = jnp.swapaxes(y_time.reshape(B * C, K, L), 1, 2)       # [B*C, L, K]
        temp = y3.reshape(-1, K)
        zt = jnp.dot(temp, self.w_pool[:, None], precision=hp) + self.b_pool
        e = jnp.dot(zt.T, temp, precision=hp) / math.sqrt(K)
        att = _softmax(e, axis=-1)
        relu_out = jnp.maximum(temp * att, 0.0)
        z = jnp.dot(jnp.dot(relu_out, self.adj, precision=hp), self.w_gcn.T,
                    precision=hp) + self.b_gcn
        y_feat = z.reshape(B, C, T)
        res = jnp.swapaxes(y_feat.reshape(B * C, K, L), 1, 2).reshape(B, C, T)
        # gated output block
        cond = cond_info.reshape(B, cond_info.shape[1], T)
        pre = (jnp.einsum("oc,bct->bot", self.w_mid, res, precision=hp)
               + jnp.einsum("os,bst->bot", self.w_cond, cond, precision=hp)
               + (self.b_mid + self.b_cond)[None, :, None])
        gated = jax.nn.sigmoid(pre[:, :C]) * jnp.tanh(pre[:, C:])
        yo = (jnp.einsum("oc,bct->bot", self.w_out, gated, precision=hp)
              + self.b_out[None, :, None])
        residual = (x_cf + yo[:, :C]) / math.sqrt(2.0)
        skip = yo[:, C:]
        return (residual.reshape(B, C, K, L), skip.reshape(B, C, K, L),
                jnp.zeros((), jnp.float32))


if __name__ == "__main__":
    B, C, K, L = 2, 16, 8, 8      # batch, channels, target_dim (features), time
    S = 6                         # side_dim
    E = 32                        # diffusion_embedding_dim
    H = 4                         # nheads

    root = jax.random.PRNGKey(0)
    kx, kc, kd, kp = jax.random.split(root, 4)
    x = jax.random.normal(kx, (B, C, K, L), jnp.float32)
    cond_info = jax.random.normal(kc, (B, S, K, L), jnp.float32)
    diffusion_emb = jax.random.normal(kd, (B, E), jnp.float32)

    block = ResidualBlockPallas(side_dim=S, channels=C, diffusion_embedding_dim=E,
                                nheads=H, target_dim=K, key=kp)

    fwd = jax.jit(block.forward)
    out_res, out_skip, loss_d = fwd(x, cond_info, diffusion_emb)
    out_res = jax.block_until_ready(out_res)
    out_skip = jax.block_until_ready(out_skip)

    ref_res, ref_skip, _ = jax.jit(block.forward_reference)(x, cond_info, diffusion_emb)
    ref_res = jax.block_until_ready(ref_res)

    assert out_res.shape == (B, C, K, L) and out_skip.shape == (B, C, K, L)
    assert bool(jnp.all(jnp.isfinite(out_res))) and bool(jnp.all(jnp.isfinite(out_skip)))
    # Tolerance covers bf16-MXU (kernel) vs f32-HIGHEST (reference) matmul drift;
    # structural errors would show up as O(1) mismatches.
    assert jnp.allclose(out_res, ref_res, atol=5e-2, rtol=5e-2)
    assert jnp.allclose(out_skip, ref_skip, atol=5e-2, rtol=5e-2)

    print("KERNEL_OK")
</pallas_src>

<mosaic_0001>
module attributes {stable_mosaic.version = 11 : i64} {
  func.func @_feature_gated_kernel(%arg0: memref<32x64xf32, #tpu.memory_space<vmem>>, %arg1: memref<2x16x64xf32, #tpu.memory_space<vmem>>, %arg2: memref<2x6x64xf32, #tpu.memory_space<vmem>>, %arg3: memref<1x64xf32, #tpu.memory_space<vmem>>, %arg4: memref<1x1xf32, #tpu.memory_space<vmem>>, %arg5: memref<64x64xf32, #tpu.memory_space<vmem>>, %arg6: memref<64x8xf32, #tpu.memory_space<vmem>>, %arg7: memref<8x64xf32, #tpu.memory_space<vmem>>, %arg8: memref<64x64xf32, #tpu.memory_space<vmem>>, %arg9: memref<1x64xf32, #tpu.memory_space<vmem>>, %arg10: memref<32x16xf32, #tpu.memory_space<vmem>>, %arg11: memref<32x6xf32, #tpu.memory_space<vmem>>, %arg12: memref<32x1xf32, #tpu.memory_space<vmem>>, %arg13: memref<16x16xf32, #tpu.memory_space<vmem>>, %arg14: memref<16x1xf32, #tpu.memory_space<vmem>>, %arg15: memref<16x16xf32, #tpu.memory_space<vmem>>, %arg16: memref<16x1xf32, #tpu.memory_space<vmem>>, %arg17: memref<2x16x64xf32, #tpu.memory_space<vmem>>, %arg18: memref<2x16x64xf32, #tpu.memory_space<vmem>>) attributes {dimension_semantics = [], scalar_prefetch = 0 : i64, scratch_operands = 0 : i64, tpu.core_type = #tpu.core_type<tc>} {
    %c0 = arith.constant 0 : index
    %c0_0 = arith.constant 0 : index
    %0 = vector.load %arg0[%c0, %c0_0] : memref<32x64xf32, #tpu.memory_space<vmem>>, vector<32x64xf32>
    %c0_1 = arith.constant 0 : index
    %c0_2 = arith.constant 0 : index
    %1 = vector.load %arg3[%c0_1, %c0_2] : memref<1x64xf32, #tpu.memory_space<vmem>>, vector<1x64xf32>
    %2 = vector.broadcast %1 : vector<1x64xf32> to vector<32x64xf32>
    %3 = arith.mulf %0, %2 : vector<32x64xf32>
    %c0_3 = arith.constant 0 : index
    %c0_4 = arith.constant 0 : index
    %4 = vector.load %arg5[%c0_3, %c0_4] : memref<64x64xf32, #tpu.memory_space<vmem>>, vector<64x64xf32>
    %5 = arith.truncf %3 : vector<32x64xf32> to vector<32x64xbf16>
    %6 = arith.truncf %4 : vector<64x64xf32> to vector<64x64xbf16>
    %cst = arith.constant dense<0.000000e+00> : vector<32x64xf32>
    %7 = tpu.matmul %5, %6, %cst {dimension_numbers = #tpu.dot_dimension_numbers<[1], [0], [0], [1], [0, 0, 1, 1], [], []>} : vector<32x64xbf16>, vector<64x64xbf16>, vector<32x64xf32> -> vector<32x64xf32>
    %c0_5 = arith.constant 0 : index
    %c0_6 = arith.constant 0 : index
    %8 = vector.load %arg4[%c0_5, %c0_6] : memref<1x1xf32, #tpu.memory_space<vmem>>, vector<1x1xf32>
    %9 = vector.broadcast %8 : vector<1x1xf32> to vector<32x64xf32>
    %10 = arith.addf %7, %9 : vector<32x64xf32>
    %11 = arith.mulf %10, %0 : vector<32x64xf32>
    %cst_7 = arith.constant dense<0.000000e+00> : vector<64xf32>
    %12 = vector.multi_reduction <add>, %11, %cst_7 [0] : vector<32x64xf32> to vector<64xf32>
    %13 = vector.shape_cast %12 : vector<64xf32> to vector<1x64xf32>
    %c0_8 = arith.constant 0 : index
    %c0_9 = arith.constant 0 : index
    %14 = vector.load %arg6[%c0_8, %c0_9] : memref<64x8xf32, #tpu.memory_space<vmem>>, vector<64x8xf32>
    %15 = arith.truncf %13 : vector<1x64xf32> to vector<1x64xbf16>
    %16 = arith.truncf %14 : vector<64x8xf32> to vector<64x8xbf16>
    %cst_10 = arith.constant dense<0.000000e+00> : vector<1x8xf32>
    %17 = tpu.matmul %15, %16, %cst_10 {dimension_numbers = #tpu.dot_dimension_numbers<[1], [0], [0], [1], [0, 0, 1, 1], [], []>} : vector<1x64xbf16>, vector<64x8xbf16>, vector<1x8xf32> -> vector<1x8xf32>
    %cst_11 = arith.constant 0.353553385 : f32
    %18 = vector.broadcast %cst_11 : f32 to vector<1x8xf32>
    %19 = arith.mulf %17, %18 : vector<1x8xf32>
    %cst_12 = arith.constant dense<0xFF800000> : vector<1xf32>
    %20 = vector.multi_reduction <maximumf>, %19, %cst_12 [1] : vector<1x8xf32> to vector<1xf32>
    %21 = vector.shape_cast %20 : vector<1xf32> to vector<1x1xf32>
    %22 = vector.broadcast %21 : vector<1x1xf32> to vector<1x8xf32>
    %23 = arith.subf %19, %22 : vector<1x8xf32>
    %24 = math.exp %23 : vector<1x8xf32>
    %cst_13 = arith.constant dense<0.000000e+00> : vector<1xf32>
    %25 = vector.multi_reduction <add>, %24, %cst_13 [1] : vector<1x8xf32> to vector<1xf32>
    %26 = vector.shape_cast %25 : vector<1xf32> to vector<1x1xf32>
    %27 = vector.broadcast %26 : vector<1x1xf32> to vector<1x8xf32>
    %28 = arith.divf %24, %27 : vector<1x8xf32>
    %c0_14 = arith.constant 0 : index
    %c0_15 = arith.constant 0 : index
    %29 = vector.load %arg7[%c0_14, %c0_15] : memref<8x64xf32, #tpu.memory_space<vmem>>, vector<8x64xf32>
    %30 = arith.truncf %28 : vector<1x8xf32> to vector<1x8xbf16>
    %31 = arith.truncf %29 : vector<8x64xf32> to vector<8x64xbf16>
    %cst_16 = arith.constant dense<0.000000e+00> : vector<1x64xf32>
    %32 = tpu.matmul %30, %31, %cst_16 {dimension_numbers = #tpu.dot_dimension_numbers<[1], [0], [0], [1], [0, 0, 1, 1], [], []>} : vector<1x8xbf16>, vector<8x64xbf16>, vector<1x64xf32> -> vector<1x64xf32>
    %33 = vector.broadcast %32 : vector<1x64xf32> to vector<32x64xf32>
    %34 = arith.mulf %0, %33 : vector<32x64xf32>
    %cst_17 = arith.constant 0.000000e+00 : f32
    %35 = vector.broadcast %cst_17 : f32 to vector<32x64xf32>
    %36 = arith.maximumf %34, %35 : vector<32x64xf32>
    %c0_18 = arith.constant 0 : index
    %c0_19 = arith.constant 0 : index
    %37 = vector.load %arg8[%c0_18, %c0_19] : memref<64x64xf32, #tpu.memory_space<vmem>>, vector<64x64xf32>
    %38 = arith.truncf %36 : vector<32x64xf32> to vector<32x64xbf16>
    %39 = arith.truncf %37 : vector<64x64xf32> to vector<64x64xbf16>
    %cst_20 = arith.constant dense<0.000000e+00> : vector<32x64xf32>
    %40 = tpu.matmul %38, %39, %cst_20 {dimension_numbers = #tpu.dot_dimension_numbers<[1], [0], [0], [1], [0, 0, 1, 1], [], []>} : vector<32x64xbf16>, vector<64x64xbf16>, vector<32x64xf32> -> vector<32x64xf32>
    %c0_21 = arith.constant 0 : index
    %c0_22 = arith.constant 0 : index
    %41 = vector.load %arg9[%c0_21, %c0_22] : memref<1x64xf32, #tpu.memory_space<vmem>>, vector<1x64xf32>
    %42 = vector.broadcast %41 : vector<1x64xf32> to vector<32x64xf32>
    %43 = arith.addf %40, %42 : vector<32x64xf32>
    %44 = vector.extract_strided_slice %43 {offsets = [0, 0], sizes = [16, 64], strides = [1, 1]} : vector<32x64xf32> to vector<16x64xf32>
    %c0_23 = arith.constant 0 : index
    %c0_24 = arith.constant 0 : index
    %45 = vector.load %arg10[%c0_23, %c0_24] : memref<32x16xf32, #tpu.memory_space<vmem>>, vector<32x16xf32>
    %46 = arith.truncf %45 : vector<32x16xf32> to vector<32x16xbf16>
    %47 = arith.truncf %44 : vector<16x64xf32> to vector<16x64xbf16>
    %cst_25 = arith.constant dense<0.000000e+00> : vector<32x64xf32>
    %48 = tpu.matmul %46, %47, %cst_25 {dimension_numbers = #tpu.dot_dimension_numbers<[1], [0], [0], [1], [0, 0, 1, 1], [], []>} : vector<32x16xbf16>, vector<16x64xbf16>, vector<32x64xf32> -> vector<32x64xf32>
    %c0_26 = arith.constant 0 : index
    %c0_27 = arith.constant 0 : index
    %49 = vector.load %arg11[%c0_26, %c0_27] : memref<32x6xf32, #tpu.memory_space<vmem>>, vector<32x6xf32>
    %c0_28 = arith.constant 0 : index
    %c0_29 = arith.constant 0 : index
    %c0_30 = arith.constant 0 : index
    %50 = vector.load %arg2[%c0_28, %c0_29, %c0_30] : memref<2x6x64xf32, #tpu.memory_space<vmem>>, vector<1x6x64xf32>
    %51 = vector.shape_cast %50 : vector<1x6x64xf32> to vector<6x64xf32>
    %52 = arith.truncf %49 : vector<32x6xf32> to vector<32x6xbf16>
    %53 = arith.truncf %51 : vector<6x64xf32> to vector<6x64xbf16>
    %cst_31 = arith.constant dense<0.000000e+00> : vector<32x64xf32>
    %54 = tpu.matmul %52, %53, %cst_31 {dimension_numbers = #tpu.dot_dimension_numbers<[1], [0], [0], [1], [0, 0, 1, 1], [], []>} : vector<32x6xbf16>, vector<6x64xbf16>, vector<32x64xf32> -> vector<32x64xf32>
    %55 = arith.addf %48, %54 : vector<32x64xf32>
    %c0_32 = arith.constant 0 : index
    %c0_33 = arith.constant 0 : index
    %56 = vector.load %arg12[%c0_32, %c0_33] : memref<32x1xf32, #tpu.memory_space<vmem>>, vector<32x1xf32>
    %57 = vector.broadcast %56 : vector<32x1xf32> to vector<32x64xf32>
    %58 = arith.addf %55, %57 : vector<32x64xf32>
    %59 = vector.extract_strided_slice %58 {offsets = [0, 0], sizes = [16, 64], strides = [1, 1]} : vector<32x64xf32> to vector<16x64xf32>
    %60 = arith.negf %59 : vector<16x64xf32>
    %61 = math.exp %60 : vector<16x64xf32>
    %cst_34 = arith.constant 1.000000e+00 : f32
    %62 = vector.broadcast %cst_34 : f32 to vector<16x64xf32>
    %63 = arith.addf %62, %61 : vector<16x64xf32>
    %64 = arith.divf %62, %63 : vector<16x64xf32>
    %65 = vector.extract_strided_slice %58 {offsets = [16, 0], sizes = [16, 64], strides = [1, 1]} : vector<32x64xf32> to vector<16x64xf32>
    %66 = math.tanh %65 : vector<16x64xf32>
    %67 = arith.mulf %64, %66 : vector<16x64xf32>
    %c0_35 = arith.constant 0 : index
    %c0_36 = arith.constant 0 : index
    %c0_37 = arith.constant 0 : index
    %68 = vector.load %arg1[%c0_35, %c0_36, %c0_37] : memref<2x16x64xf32, #tpu.memory_space<vmem>>, vector<1x16x64xf32>
    %69 = vector.shape_cast %68 : vector<1x16x64xf32> to vector<16x64xf32>
    %c0_38 = arith.constant 0 : index
    %c0_39 = arith.constant 0 : index
    %70 = vector.load %arg13[%c0_38, %c0_39] : memref<16x16xf32, #tpu.memory_space<vmem>>, vector<16x16xf32>
    %71 = arith.truncf %70 : vector<16x16xf32> to vector<16x16xbf16>
    %72 = arith.truncf %67 : vector<16x64xf32> to vector<16x64xbf16>
    %cst_40 = arith.constant dense<0.000000e+00> : vector<16x64xf32>
    %73 = tpu.matmul %71, %72, %cst_40 {dimension_numbers = #tpu.dot_dimension_numbers<[1], [0], [0], [1], [0, 0, 1, 1], [], []>} : vector<16x16xbf16>, vector<16x64xbf16>, vector<16x64xf32> -> vector<16x64xf32>
    %74 = arith.addf %69, %73 : vector<16x64xf32>
    %c0_41 = arith.constant 0 : index
    %c0_42 = arith.constant 0 : index
    %75 = vector.load %arg14[%c0_41, %c0_42] : memref<16x1xf32, #tpu.memory_space<vmem>>, vector<16x1xf32>
    %76 = vector.broadcast %75 : vector<16x1xf32> to vector<16x64xf32>
    %77 = arith.addf %74, %76 : vector<16x64xf32>
    %cst_43 = arith.constant 0.707106769 : f32
    %78 = vector.broadcast %cst_43 : f32 to vector<16x64xf32>
    %79 = arith.mulf %77, %78 : vector<16x64xf32>
    %c0_44 = arith.constant 0 : index
    %c0_45 = arith.constant 0 : index
    %c0_46 = arith.constant 0 : index
    %80 = vector.load %arg17[%c0_44, %c0_45, %c0_46] : memref<2x16x64xf32, #tpu.memory_space<vmem>>, vector<1x16x64xf32>
    %81 = vector.shape_cast %80 : vector<1x16x64xf32> to vector<16x64xf32>
    %82 = vector.shape_cast %79 : vector<16x64xf32> to vector<1x16x64xf32>
    tpu.vector_store %arg17[%c0_44, %c0_45, %c0_46], %82 {strides = array<i32>} : memref<2x16x64xf32, #tpu.memory_space<vmem>>, vector<1x16x64xf32>,
    %c0_47 = arith.constant 0 : index
    %c0_48 = arith.constant 0 : index
    %83 = vector.load %arg15[%c0_47, %c0_48] : memref<16x16xf32, #tpu.memory_space<vmem>>, vector<16x16xf32>
    %84 = arith.truncf %83 : vector<16x16xf32> to vector<16x16xbf16>
    %85 = arith.truncf %67 : vector<16x64xf32> to vector<16x64xbf16>
    %cst_49 = arith.constant dense<0.000000e+00> : vector<16x64xf32>
    %86 = tpu.matmul %84, %85, %cst_49 {dimension_numbers = #tpu.dot_dimension_numbers<[1], [0], [0], [1], [0, 0, 1, 1], [], []>} : vector<16x16xbf16>, vector<16x64xbf16>, vector<16x64xf32> -> vector<16x64xf32>
    %c0_50 = arith.constant 0 : index
    %c0_51 = arith.constant 0 : index
    %87 = vector.load %arg16[%c0_50, %c0_51] : memref<16x1xf32, #tpu.memory_space<vmem>>, vector<16x1xf32>
    %88 = vector.broadcast %87 : vector<16x1xf32> to vector<16x64xf32>
    %89 = arith.addf %86, %88 : vector<16x64xf32>
    %c0_52 = arith.constant 0 : index
    %c0_53 = arith.constant 0 : index
    %c0_54 = arith.constant 0 : index
    %90 = vector.load %arg18[%c0_52, %c0_53, %c0_54] : memref<2x16x64xf32, #tpu.memory_space<vmem>>, vector<1x16x64xf32>
    %91 = vector.shape_cast %90 : vector<1x16x64xf32> to vector<16x64xf32>
    %92 = vector.shape_cast %89 : vector<16x64xf32> to vector<1x16x64xf32>
    tpu.vector_store %arg18[%c0_52, %c0_53, %c0_54], %92 {strides = array<i32>} : memref<2x16x64xf32, #tpu.memory_space<vmem>>, vector<1x16x64xf32>,
    %93 = vector.extract_strided_slice %43 {offsets = [16, 0], sizes = [16, 64], strides = [1, 1]} : vector<32x64xf32> to vector<16x64xf32>
    %c0_55 = arith.constant 0 : index
    %c0_56 = arith.constant 0 : index
    %94 = vector.load %arg10[%c0_55, %c0_56] : memref<32x16xf32, #tpu.memory_space<vmem>>, vector<32x16xf32>
    %95 = arith.truncf %94 : vector<32x16xf32> to vector<32x16xbf16>
    %96 = arith.truncf %93 : vector<16x64xf32> to vector<16x64xbf16>
    %cst_57 = arith.constant dense<0.000000e+00> : vector<32x64xf32>
    %97 = tpu.matmul %95, %96, %cst_57 {dimension_numbers = #tpu.dot_dimension_numbers<[1], [0], [0], [1], [0, 0, 1, 1], [], []>} : vector<32x16xbf16>, vector<16x64xbf16>, vector<32x64xf32> -> vector<32x64xf32>
    %c0_58 = arith.constant 0 : index
    %c0_59 = arith.constant 0 : index
    %98 = vector.load %arg11[%c0_58, %c0_59] : memref<32x6xf32, #tpu.memory_space<vmem>>, vector<32x6xf32>
    %c1 = arith.constant 1 : index
    %c0_60 = arith.constant 0 : index
    %c0_61 = arith.constant 0 : index
    %99 = vector.load %arg2[%c1, %c0_60, %c0_61] : memref<2x6x64xf32, #tpu.memory_space<vmem>>, vector<1x6x64xf32>
    %100 = vector.shape_cast %99 : vector<1x6x64xf32> to vector<6x64xf32>
    %101 = arith.truncf %98 : vector<32x6xf32> to vector<32x6xbf16>
    %102 = arith.truncf %100 : vector<6x64xf32> to vector<6x64xbf16>
    %cst_62 = arith.constant dense<0.000000e+00> : vector<32x64xf32>
    %103 = tpu.matmul %101, %102, %cst_62 {dimension_numbers = #tpu.dot_dimension_numbers<[1], [0], [0], [1], [0, 0, 1, 1], [], []>} : vector<32x6xbf16>, vector<6x64xbf16>, vector<32x64xf32> -> vector<32x64xf32>
    %104 = arith.addf %97, %103 : vector<32x64xf32>
    %c0_63 = arith.constant 0 : index
    %c0_64 = arith.constant 0 : index
    %105 = vector.load %arg12[%c0_63, %c0_64] : memref<32x1xf32, #tpu.memory_space<vmem>>, vector<32x1xf32>
    %106 = vector.broadcast %105 : vector<32x1xf32> to vector<32x64xf32>
    %107 = arith.addf %104, %106 : vector<32x64xf32>
    %108 = vector.extract_strided_slice %107 {offsets = [0, 0], sizes = [16, 64], strides = [1, 1]} : vector<32x64xf32> to vector<16x64xf32>
    %109 = arith.negf %108 : vector<16x64xf32>
    %110 = math.exp %109 : vector<16x64xf32>
    %cst_65 = arith.constant 1.000000e+00 : f32
    %111 = vector.broadcast %cst_65 : f32 to vector<16x64xf32>
    %112 = arith.addf %111, %110 : vector<16x64xf32>
    %113 = arith.divf %111, %112 : vector<16x64xf32>
    %114 = vector.extract_strided_slice %107 {offsets = [16, 0], sizes = [16, 64], strides = [1, 1]} : vector<32x64xf32> to vector<16x64xf32>
    %115 = math.tanh %114 : vector<16x64xf32>
    %116 = arith.mulf %113, %115 : vector<16x64xf32>
    %c1_66 = arith.constant 1 : index
    %c0_67 = arith.constant 0 : index
    %c0_68 = arith.constant 0 : index
    %117 = vector.load %arg1[%c1_66, %c0_67, %c0_68] : memref<2x16x64xf32, #tpu.memory_space<vmem>>, vector<1x16x64xf32>
    %118 = vector.shape_cast %117 : vector<1x16x64xf32> to vector<16x64xf32>
    %c0_69 = arith.constant 0 : index
    %c0_70 = arith.constant 0 : index
    %119 = vector.load %arg13[%c0_69, %c0_70] : memref<16x16xf32, #tpu.memory_space<vmem>>, vector<16x16xf32>
    %120 = arith.truncf %119 : vector<16x16xf32> to vector<16x16xbf16>
    %121 = arith.truncf %116 : vector<16x64xf32> to vector<16x64xbf16>
    %cst_71 = arith.constant dense<0.000000e+00> : vector<16x64xf32>
    %122 = tpu.matmul %120, %121, %cst_71 {dimension_numbers = #tpu.dot_dimension_numbers<[1], [0], [0], [1], [0, 0, 1, 1], [], []>} : vector<16x16xbf16>, vector<16x64xbf16>, vector<16x64xf32> -> vector<16x64xf32>
    %123 = arith.addf %118, %122 : vector<16x64xf32>
    %c0_72 = arith.constant 0 : index
    %c0_73 = arith.constant 0 : index
    %124 = vector.load %arg14[%c0_72, %c0_73] : memref<16x1xf32, #tpu.memory_space<vmem>>, vector<16x1xf32>
    %125 = vector.broadcast %124 : vector<16x1xf32> to vector<16x64xf32>
    %126 = arith.addf %123, %125 : vector<16x64xf32>
    %cst_74 = arith.constant 0.707106769 : f32
    %127 = vector.broadcast %cst_74 : f32 to vector<16x64xf32>
    %128 = arith.mulf %126, %127 : vector<16x64xf32>
    %c1_75 = arith.constant 1 : index
    %c0_76 = arith.constant 0 : index
    %c0_77 = arith.constant 0 : index
    %129 = vector.load %arg17[%c1_75, %c0_76, %c0_77] : memref<2x16x64xf32, #tpu.memory_space<vmem>>, vector<1x16x64xf32>
    %130 = vector.shape_cast %129 : vector<1x16x64xf32> to vector<16x64xf32>
    %131 = vector.shape_cast %128 : vector<16x64xf32> to vector<1x16x64xf32>
    tpu.vector_store %arg17[%c1_75, %c0_76, %c0_77], %131 {strides = array<i32>} : memref<2x16x64xf32, #tpu.memory_space<vmem>>, vector<1x16x64xf32>,
    %c0_78 = arith.constant 0 : index
    %c0_79 = arith.constant 0 : index
    %132 = vector.load %arg15[%c0_78, %c0_79] : memref<16x16xf32, #tpu.memory_space<vmem>>, vector<16x16xf32>
    %133 = arith.truncf %132 : vector<16x16xf32> to vector<16x16xbf16>
    %134 = arith.truncf %116 : vector<16x64xf32> to vector<16x64xbf16>
    %cst_80 = arith.constant dense<0.000000e+00> : vector<16x64xf32>
    %135 = tpu.matmul %133, %134, %cst_80 {dimension_numbers = #tpu.dot_dimension_numbers<[1], [0], [0], [1], [0, 0, 1, 1], [], []>} : vector<16x16xbf16>, vector<16x64xbf16>, vector<16x64xf32> -> vector<16x64xf32>
    %c0_81 = arith.constant 0 : index
    %c0_82 = arith.constant 0 : index
    %136 = vector.load %arg16[%c0_81, %c0_82] : memref<16x1xf32, #tpu.memory_space<vmem>>, vector<16x1xf32>
    %137 = vector.broadcast %136 : vector<16x1xf32> to vector<16x64xf32>
    %138 = arith.addf %135, %137 : vector<16x64xf32>
    %c1_83 = arith.constant 1 : index
    %c0_84 = arith.constant 0 : index
    %c0_85 = arith.constant 0 : index
    %139 = vector.load %arg18[%c1_83, %c0_84, %c0_85] : memref<2x16x64xf32, #tpu.memory_space<vmem>>, vector<1x16x64xf32>
    %140 = vector.shape_cast %139 : vector<1x16x64xf32> to vector<16x64xf32>
    %141 = vector.shape_cast %138 : vector<16x64xf32> to vector<1x16x64xf32>
    tpu.vector_store %arg18[%c1_83, %c0_84, %c0_85], %141 {strides = array<i32>} : memref<2x16x64xf32, #tpu.memory_space<vmem>>, vector<1x16x64xf32>,
    return
  }
}

module attributes {stable_mosaic.version = 11 : i64} {
  func.func @_inject_encoder_kernel(%arg0: i32, %arg1: memref<1x8x8x16xf32, #tpu.memory_space<vmem>>, %arg2: memref<1x1x32xf32, #tpu.memory_space<vmem>>, %arg3: memref<32x16xf32, #tpu.memory_space<vmem>>, %arg4: memref<1x16xf32, #tpu.memory_space<vmem>>, %arg5: memref<16x48xf32, #tpu.memory_space<vmem>>, %arg6: memref<1x48xf32, #tpu.memory_space<vmem>>, %arg7: memref<16x16xf32, #tpu.memory_space<vmem>>, %arg8: memref<1x16xf32, #tpu.memory_space<vmem>>, %arg9: memref<1x16xf32, #tpu.memory_space<vmem>>, %arg10: memref<1x16xf32, #tpu.memory_space<vmem>>, %arg11: memref<16x64xf32, #tpu.memory_space<vmem>>, %arg12: memref<1x64xf32, #tpu.memory_space<vmem>>, %arg13: memref<64x16xf32, #tpu.memory_space<vmem>>, %arg14: memref<1x16xf32, #tpu.memory_space<vmem>>, %arg15: memref<1x16xf32, #tpu.memory_space<vmem>>, %arg16: memref<1x16xf32, #tpu.memory_space<vmem>>, %arg17: memref<1x8x8x16xf32, #tpu.memory_space<vmem>>) attributes {dimension_semantics = [#tpu.dimension_semantics<parallel>], iteration_bounds = array<i64: 2>, scalar_prefetch = 0 : i64, scratch_operands = 0 : i64, tpu.core_type = #tpu.core_type<tc>, window_params = [{transform_indices = @transform_0, window_bounds = array<i64: 1, 8, 8, 16>}, {transform_indices = @transform_1, window_bounds = array<i64: 1, 1, 32>}, {pipeline_mode = #tpu.pipeline_mode<synchronous>, transform_indices = @transform_2, window_bounds = array<i64: 32, 16>}, {pipeline_mode = #tpu.pipeline_mode<synchronous>, transform_indices = @transform_3, window_bounds = array<i64: 1, 16>}, {pipeline_mode = #tpu.pipeline_mode<synchronous>, transform_indices = @transform_4, window_bounds = array<i64: 16, 48>}, {pipeline_mode = #tpu.pipeline_mode<synchronous>, transform_indices = @transform_5, window_bounds = array<i64: 1, 48>}, {pipeline_mode = #tpu.pipeline_mode<synchronous>, transform_indices = @transform_6, window_bounds = array<i64: 16, 16>}, {pipeline_mode = #tpu.pipeline_mode<synchronous>, transform_indices = @transform_7, window_bounds = array<i64: 1, 16>}, {pipeline_mode = #tpu.pipeline_mode<synchronous>, transform_indices = @transform_8, window_bounds = array<i64: 1, 16>}, {pipeline_mode = #tpu.pipeline_mode<synchronous>, transform_indices = @transform_9, window_bounds = array<i64: 1, 16>}, {pipeline_mode = #tpu.pipeline_mode<synchronous>, transform_indices = @transform_10, window_bounds = array<i64: 16, 64>}, {pipeline_mode = #tpu.pipeline_mode<synchronous>, transform_indices = @transform_11, window_bounds = array<i64: 1, 64>}, {pipeline_mode = #tpu.pipeline_mode<synchronous>, transform_indices = @transform_12, window_bounds = array<i64: 64, 16>}, {pipeline_mode = #tpu.pipeline_mode<synchronous>, transform_indices = @transform_13, window_bounds = array<i64: 1, 16>}, {pipeline_mode = #tpu.pipeline_mode<synchronous>, transform_indices = @transform_14, window_bounds = array<i64: 1, 16>}, {pipeline_mode = #tpu.pipeline_mode<synchronous>, transform_indices = @transform_15, window_bounds = array<i64: 1, 16>}, {transform_indices = @transform_16, window_bounds = array<i64: 1, 8, 8, 16>}]} {
    %c0 = arith.constant 0 : index
    %c0_0 = arith.constant 0 : index
    %c0_1 = arith.constant 0 : index
    %c0_2 = arith.constant 0 : index
    %0 = vector.load %arg1[%c0, %c0_0, %c0_1, %c0_2] : memref<1x8x8x16xf32, #tpu.memory_space<vmem>>, vector<1x8x8x16xf32>
    %1 = vector.shape_cast %0 : vector<1x8x8x16xf32> to vector<8x8x16xf32>
    %c0_3 = arith.constant 0 : index
    %c0_4 = arith.constant 0 : index
    %c0_5 = arith.constant 0 : index
    %2 = vector.load %arg2[%c0_3, %c0_4, %c0_5] : memref<1x1x32xf32, #tpu.memory_space<vmem>>, vector<1x1x32xf32>
    %3 = vector.shape_cast %2 : vector<1x1x32xf32> to vector<1x32xf32>
    %c0_6 = arith.constant 0 : index
    %c0_7 = arith.constant 0 : index
    %4 = vector.load %arg3[%c0_6, %c0_7] : memref<32x16xf32, #tpu.memory_space<vmem>>, vector<32x16xf32>
    %5 = arith.truncf %3 : vector<1x32xf32> to vector<1x32xbf16>
    %6 = arith.truncf %4 : vector<32x16xf32> to vector<32x16xbf16>
    %cst = arith.constant dense<0.000000e+00> : vector<1x16xf32>
    %7 = tpu.matmul %5, %6, %cst {dimension_numbers = #tpu.dot_dimension_numbers<[1], [0], [0], [1], [0, 0, 1, 1], [], []>} : vector<1x32xbf16>, vector<32x16xbf16>, vector<1x16xf32> -> vector<1x16xf32>
    %c0_8 = arith.constant 0 : index
    %c0_9 = arith.constant 0 : index
    %8 = vector.load %arg4[%c0_8, %c0_9] : memref<1x16xf32, #tpu.memory_space<vmem>>, vector<1x16xf32>
    %9 = arith.addf %7, %8 : vector<1x16xf32>
    %10 = vector.shape_cast %9 : vector<1x16xf32> to vector<1x1x16xf32>
    %11 = vector.broadcast %10 : vector<1x1x16xf32> to vector<8x8x16xf32>
    %12 = arith.addf %1, %11 : vector<8x8x16xf32>
    %c0_10 = arith.constant 0 : index
    %c0_11 = arith.constant 0 : index
    %13 = vector.load %arg5[%c0_10, %c0_11] : memref<16x48xf32, #tpu.memory_space<vmem>>, vector<16x48xf32>
    %c0_12 = arith.constant 0 : index
    %c0_13 = arith.constant 0 : index
    %14 = vector.load %arg6[%c0_12, %c0_13] : memref<1x48xf32, #tpu.memory_space<vmem>>, vector<1x48xf32>
    %c0_14 = arith.constant 0 : index
    %c0_15 = arith.constant 0 : index
    %15 = vector.load %arg7[%c0_14, %c0_15] : memref<16x16xf32, #tpu.memory_space<vmem>>, vector<16x16xf32>
    %c0_16 = arith.constant 0 : index
    %c0_17 = arith.constant 0 : index
    %16 = vector.load %arg8[%c0_16, %c0_17] : memref<1x16xf32, #tpu.memory_space<vmem>>, vector<1x16xf32>
    %c0_18 = arith.constant 0 : index
    %c0_19 = arith.constant 0 : index
    %17 = vector.load %arg9[%c0_18, %c0_19] : memref<1x16xf32, #tpu.memory_space<vmem>>, vector<1x16xf32>
    %c0_20 = arith.constant 0 : index
    %c0_21 = arith.constant 0 : index
    %18 = vector.load %arg10[%c0_20, %c0_21] : memref<1x16xf32, #tpu.memory_space<vmem>>, vector<1x16xf32>
    %c0_22 = arith.constant 0 : index
    %c0_23 = arith.constant 0 : index
    %19 = vector.load %arg11[%c0_22, %c0_23] : memref<16x64xf32, #tpu.memory_space<vmem>>, vector<16x64xf32>
    %c0_24 = arith.constant 0 : index
    %c0_25 = arith.constant 0 : index
    %20 = vector.load %arg12[%c0_24, %c0_25] : memref<1x64xf32, #tpu.memory_space<vmem>>, vector<1x64xf32>
    %c0_26 = arith.constant 0 : index
    %c0_27 = arith.constant 0 : index
    %21 = vector.load %arg13[%c0_26, %c0_27] : memref<64x16xf32, #tpu.memory_space<vmem>>, vector<64x16xf32>
    %c0_28 = arith.constant 0 : index
    %c0_29 = arith.constant 0 : index
    %22 = vector.load %arg14[%c0_28, %c0_29] : memref<1x16xf32, #tpu.memory_space<vmem>>, vector<1x16xf32>
    %c0_30 = arith.constant 0 : index
    %c0_31 = arith.constant 0 : index
    %23 = vector.load %arg15[%c0_30, %c0_31] : memref<1x16xf32, #tpu.memory_space<vmem>>, vector<1x16xf32>
    %c0_32 = arith.constant 0 : index
    %c0_33 = arith.constant 0 : index
    %24 = vector.load %arg16[%c0_32, %c0_33] : memref<1x16xf32, #tpu.memory_space<vmem>>, vector<1x16xf32>
    %25 = vector.shape_cast %12 : vector<8x8x16xf32> to vector<64x16xf32>
    %26 = arith.truncf %25 : vector<64x16xf32> to vector<64x16xbf16>
    %27 = arith.truncf %13 : vector<16x48xf32> to vector<16x48xbf16>
    %cst_34 = arith.constant dense<0.000000e+00> : vector<64x48xf32>
    %28 = tpu.matmul %26, %27, %cst_34 {dimension_numbers = #tpu.dot_dimension_numbers<[1], [0], [0], [1], [0, 0, 1, 1], [], []>} : vector<64x16xbf16>, vector<16x48xbf16>, vector<64x48xf32> -> vector<64x48xf32>
    %29 = vector.broadcast %14 : vector<1x48xf32> to vector<64x48xf32>
    %30 = arith.addf %28, %29 : vector<64x48xf32>
    %31 = vector.shape_cast %30 : vector<64x48xf32> to vector<8x8x48xf32>
    %cst_35 = arith.constant 0.000000e+00 : f32
    %32 = vector.broadcast %cst_35 : f32 to vector<64x16xf32>
    %33 = vector.extract_strided_slice %31 {offsets = [0, 0, 0], sizes = [8, 8, 4], strides = [1, 1, 1]} : vector<8x8x48xf32> to vector<8x8x4xf32>
    %34 = vector.extract_strided_slice %31 {offsets = [0, 0, 16], sizes = [8, 8, 4], strides = [1, 1, 1]} : vector<8x8x48xf32> to vector<8x8x4xf32>
    %35 = vector.extract_strided_slice %31 {offsets = [0, 0, 32], sizes = [8, 8, 4], strides = [1, 1, 1]} : vector<8x8x48xf32> to vector<8x8x4xf32>
    %36 = arith.truncf %33 : vector<8x8x4xf32> to vector<8x8x4xbf16>
    %37 = arith.truncf %34 : vector<8x8x4xf32> to vector<8x8x4xbf16>
    "tpu.trace_start"() <{level = 10 : i32, message = "nqd,nkd->nqk"}> : () -> ()
    %cst_36 = arith.constant dense<0.000000e+00> : vector<8x8x8xf32>
    %38 = tpu.matmul %36, %37, %cst_36 {dimension_numbers = #tpu.dot_dimension_numbers<[2], [2], [1], [1], [0, 0, 0, 1, 1, 1], [0], [0]>} : vector<8x8x4xbf16>, vector<8x8x4xbf16>, vector<8x8x8xf32> -> vector<8x8x8xf32>
    "tpu.trace_stop"() : () -> ()
    %cst_37 = arith.constant 5.000000e-01 : f32
    %39 = vector.broadcast %cst_37 : f32 to vector<8x8x8xf32>
    %40 = arith.mulf %38, %39 : vector<8x8x8xf32>
    %cst_38 = arith.constant dense<0xFF800000> : vector<8x8xf32>
    %41 = vector.multi_reduction <maximumf>, %40, %cst_38 [2] : vector<8x8x8xf32> to vector<8x8xf32>
    %42 = vector.shape_cast %41 : vector<8x8xf32> to vector<8x8x1xf32>
    %43 = vector.broadcast %42 : vector<8x8x1xf32> to vector<8x8x8xf32>
    %44 = arith.subf %40, %43 : vector<8x8x8xf32>
    %45 = math.exp %44 : vector<8x8x8xf32>
    %cst_39 = arith.constant dense<0.000000e+00> : vector<8x8xf32>
    %46 = vector.multi_reduction <add>, %45, %cst_39 [2] : vector<8x8x8xf32> to vector<8x8xf32>
    %47 = vector.shape_cast %46 : vector<8x8xf32> to vector<8x8x1xf32>
    %48 = vector.broadcast %47 : vector<8x8x1xf32> to vector<8x8x8xf32>
    %49 = arith.divf %45, %48 : vector<8x8x8xf32>
    %50 = arith.truncf %49 : vector<8x8x8xf32> to vector<8x8x8xbf16>
    %51 = arith.truncf %35 : vector<8x8x4xf32> to vector<8x8x4xbf16>
    "tpu.trace_start"() <{level = 10 : i32, message = "nqk,nkd->nqd"}> : () -> ()
    %cst_40 = arith.constant dense<0.000000e+00> : vector<8x8x4xf32>
    %52 = tpu.matmul %50, %51, %cst_40 {dimension_numbers = #tpu.dot_dimension_numbers<[2], [1], [1], [2], [0, 0, 0, 1, 1, 2], [0], [0]>} : vector<8x8x8xbf16>, vector<8x8x4xbf16>, vector<8x8x4xf32> -> vector<8x8x4xf32>
    "tpu.trace_stop"() : () -> ()
    %53 = vector.shape_cast %52 : vector<8x8x4xf32> to vector<64x4xf32>
    %54 = vector.extract_strided_slice %15 {offsets = [0, 0], sizes = [4, 16], strides = [1, 1]} : vector<16x16xf32> to vector<4x16xf32>
    %55 = arith.truncf %53 : vector<64x4xf32> to vector<64x4xbf16>
    %56 = arith.truncf %54 : vector<4x16xf32> to vector<4x16xbf16>
    %cst_41 = arith.constant dense<0.000000e+00> : vector<64x16xf32>
    %57 = tpu.matmul %55, %56, %cst_41 {dimension_numbers = #tpu.dot_dimension_numbers<[1], [0], [0], [1], [0, 0, 1, 1], [], []>} : vector<64x4xbf16>, vector<4x16xbf16>, vector<64x16xf32> -> vector<64x16xf32>
    %58 = arith.addf %32, %57 : vector<64x16xf32>
    %59 = vector.extract_strided_slice %31 {offsets = [0, 0, 4], sizes = [8, 8, 4], strides = [1, 1, 1]} : vector<8x8x48xf32> to vector<8x8x4xf32>
    %60 = vector.extract_strided_slice %31 {offsets = [0, 0, 20], sizes = [8, 8, 4], strides = [1, 1, 1]} : vector<8x8x48xf32> to vector<8x8x4xf32>
    %61 = vector.extract_strided_slice %31 {offsets = [0, 0, 36], sizes = [8, 8, 4], strides = [1, 1, 1]} : vector<8x8x48xf32> to vector<8x8x4xf32>
    %62 = arith.truncf %59 : vector<8x8x4xf32> to vector<8x8x4xbf16>
    %63 = arith.truncf %60 : vector<8x8x4xf32> to vector<8x8x4xbf16>
    "tpu.trace_start"() <{level = 10 : i32, message = "nqd,nkd->nqk"}> : () -> ()
    %cst_42 = arith.constant dense<0.000000e+00> : vector<8x8x8xf32>
    %64 = tpu.matmul %62, %63, %cst_42 {dimension_numbers = #tpu.dot_dimension_numbers<[2], [2], [1], [1], [0, 0, 0, 1, 1, 1], [0], [0]>} : vector<8x8x4xbf16>, vector<8x8x4xbf16>, vector<8x8x8xf32> -> vector<8x8x8xf32>
    "tpu.trace_stop"() : () -> ()
    %cst_43 = arith.constant 5.000000e-01 : f32
    %65 = vector.broadcast %cst_43 : f32 to vector<8x8x8xf32>
    %66 = arith.mulf %64, %65 : vector<8x8x8xf32>
    %cst_44 = arith.constant dense<0xFF800000> : vector<8x8xf32>
    %67 = vector.multi_reduction <maximumf>, %66, %cst_44 [2] : vector<8x8x8xf32> to vector<8x8xf32>
    %68 = vector.shape_cast %67 : vector<8x8xf32> to vector<8x8x1xf32>
    %69 = vector.broadcast %68 : vector<8x8x1xf32> to vector<8x8x8xf32>
    %70 = arith.subf %66, %69 : vector<8x8x8xf32>
    %71 = math.exp %70 : vector<8x8x8xf32>
    %cst_45 = arith.constant dense<0.000000e+00> : vector<8x8xf32>
    %72 = vector.multi_reduction <add>, %71, %cst_45 [2] : vector<8x8x8xf32> to vector<8x8xf32>
    %73 = vector.shape_cast %72 : vector<8x8xf32> to vector<8x8x1xf32>
    %74 = vector.broadcast %73 : vector<8x8x1xf32> to vector<8x8x8xf32>
    %75 = arith.divf %71, %74 : vector<8x8x8xf32>
    %76 = arith.truncf %75 : vector<8x8x8xf32> to vector<8x8x8xbf16>
    %77 = arith.truncf %61 : vector<8x8x4xf32> to vector<8x8x4xbf16>
    "tpu.trace_start"() <{level = 10 : i32, message = "nqk,nkd->nqd"}> : () -> ()
    %cst_46 = arith.constant dense<0.000000e+00> : vector<8x8x4xf32>
    %78 = tpu.matmul %76, %77, %cst_46 {dimension_numbers = #tpu.dot_dimension_numbers<[2], [1], [1], [2], [0, 0, 0, 1, 1, 2], [0], [0]>} : vector<8x8x8xbf16>, vector<8x8x4xbf16>, vector<8x8x4xf32> -> vector<8x8x4xf32>
    "tpu.trace_stop"() : () -> ()
    %79 = vector.shape_cast %78 : vector<8x8x4xf32> to vector<64x4xf32>
    %80 = vector.extract_strided_slice %15 {offsets = [4, 0], sizes = [4, 16], strides = [1, 1]} : vector<16x16xf32> to vector<4x16xf32>
    %81 = arith.truncf %79 : vector<64x4xf32> to vector<64x4xbf16>
    %82 = arith.truncf %80 : vector<4x16xf32> to vector<4x16xbf16>
    %cst_47 = arith.constant dense<0.000000e+00> : vector<64x16xf32>
    %83 = tpu.matmul %81, %82, %cst_47 {dimension_numbers = #tpu.dot_dimension_numbers<[1], [0], [0], [1], [0, 0, 1, 1], [], []>} : vector<64x4xbf16>, vector<4x16xbf16>, vector<64x16xf32> -> vector<64x16xf32>
    %84 = arith.addf %58, %83 : vector<64x16xf32>
    %85 = vector.extract_strided_slice %31 {offsets = [0, 0, 8], sizes = [8, 8, 4], strides = [1, 1, 1]} : vector<8x8x48xf32> to vector<8x8x4xf32>
    %86 = vector.extract_strided_slice %31 {offsets = [0, 0, 24], sizes = [8, 8, 4], strides = [1, 1, 1]} : vector<8x8x48xf32> to vector<8x8x4xf32>
    %87 = vector.extract_strided_slice %31 {offsets = [0, 0, 40], sizes = [8, 8, 4], strides = [1, 1, 1]} : vector<8x8x48xf32> to vector<8x8x4xf32>
    %88 = arith.truncf %85 : vector<8x8x4xf32> to vector<8x8x4xbf16>
    %89 = arith.truncf %86 : vector<8x8x4xf32> to vector<8x8x4xbf16>
    "tpu.trace_start"() <{level = 10 : i32, message = "nqd,nkd->nqk"}> : () -> ()
    %cst_48 = arith.constant dense<0.000000e+00> : vector<8x8x8xf32>
    %90 = tpu.matmul %88, %89, %cst_48 {dimension_numbers = #tpu.dot_dimension_numbers<[2], [2], [1], [1], [0, 0, 0, 1, 1, 1], [0], [0]>} : vector<8x8x4xbf16>, vector<8x8x4xbf16>, vector<8x8x8xf32> -> vector<8x8x8xf32>
    "tpu.trace_stop"() : () -> ()
    %cst_49 = arith.constant 5.000000e-01 : f32
    %91 = vector.broadcast %cst_49 : f32 to vector<8x8x8xf32>
    %92 = arith.mulf %90, %91 : vector<8x8x8xf32>
    %cst_50 = arith.constant dense<0xFF800000> : vector<8x8xf32>
    %93 = vector.multi_reduction <maximumf>, %92, %cst_50 [2] : vector<8x8x8xf32> to vector<8x8xf32>
    %94 = vector.shape_cast %93 : vector<8x8xf32> to vector<8x8x1xf32>
    %95 = vector.broadcast %94 : vector<8x8x1xf32> to vector<8x8x8xf32>
    %96 = arith.subf %92, %95 : vector<8x8x8xf32>
    %97 = math.exp %96 : vector<8x8x8xf32>
    %cst_51 = arith.constant dense<0.000000e+00> : vector<8x8xf32>
    %98 = vector.multi_reduction <add>, %97, %cst_51 [2] : vector<8x8x8xf32> to vector<8x8xf32>
    %99 = vector.shape_cast %98 : vector<8x8xf32> to vector<8x8x1xf32>
    %100 = vector.broadcast %99 : vector<8x8x1xf32> to vector<8x8x8xf32>
    %101 = arith.divf %97, %100 : vector<8x8x8xf32>
    %102 = arith.truncf %101 : vector<8x8x8xf32> to vector<8x8x8xbf16>
    %103 = arith.truncf %87 : vector<8x8x4xf32> to vector<8x8x4xbf16>
    "tpu.trace_start"() <{level = 10 : i32, message = "nqk,nkd->nqd"}> : () -> ()
    %cst_52 = arith.constant dense<0.000000e+00> : vector<8x8x4xf32>
    %104 = tpu.matmul %102, %103, %cst_52 {dimension_numbers = #tpu.dot_dimension_numbers<[2], [1], [1], [2], [0, 0, 0, 1, 1, 2], [0], [0]>} : vector<8x8x8xbf16>, vector<8x8x4xbf16>, vector<8x8x4xf32> -> vector<8x8x4xf32>
    "tpu.trace_stop"() : () -> ()
    %105 = vector.shape_cast %104 : vector<8x8x4xf32> to vector<64x4xf32>
    %106 = vector.extract_strided_slice %15 {offsets = [8, 0], sizes = [4, 16], strides = [1, 1]} : vector<16x16xf32> to vector<4x16xf32>
    %107 = arith.truncf %105 : vector<64x4xf32> to vector<64x4xbf16>
    %108 = arith.truncf %106 : vector<4x16xf32> to vector<4x16xbf16>
    %cst_53 = arith.constant dense<0.000000e+00> : vector<64x16xf32>
    %109 = tpu.matmul %107, %108, %cst_53 {dimension_numbers = #tpu.dot_dimension_numbers<[1], [0], [0], [1], [0, 0, 1, 1], [], []>} : vector<64x4xbf16>, vector<4x16xbf16>, vector<64x16xf32> -> vector<64x16xf32>
    %110 = arith.addf %84, %109 : vector<64x16xf32>
    %111 = vector.extract_strided_slice %31 {offsets = [0, 0, 12], sizes = [8, 8, 4], strides = [1, 1, 1]} : vector<8x8x48xf32> to vector<8x8x4xf32>
    %112 = vector.extract_strided_slice %31 {offsets = [0, 0, 28], sizes = [8, 8, 4], strides = [1, 1, 1]} : vector<8x8x48xf32> to vector<8x8x4xf32>
    %113 = vector.extract_strided_slice %31 {offsets = [0, 0, 44], sizes = [8, 8, 4], strides = [1, 1, 1]} : vector<8x8x48xf32> to vector<8x8x4xf32>
    %114 = arith.truncf %111 : vector<8x8x4xf32> to vector<8x8x4xbf16>
    %115 = arith.truncf %112 : vector<8x8x4xf32> to vector<8x8x4xbf16>
    "tpu.trace_start"() <{level = 10 : i32, message = "nqd,nkd->nqk"}> : () -> ()
    %cst_54 = arith.constant dense<0.000000e+00> : vector<8x8x8xf32>
    %116 = tpu.matmul %114, %115, %cst_54 {dimension_numbers = #tpu.dot_dimension_numbers<[2], [2], [1], [1], [0, 0, 0, 1, 1, 1], [0], [0]>} : vector<8x8x4xbf16>, vector<8x8x4xbf16>, vector<8x8x8xf32> -> vector<8x8x8xf32>
    "tpu.trace_stop"() : () -> ()
    %cst_55 = arith.constant 5.000000e-01 : f32
    %117 = vector.broadcast %cst_55 : f32 to vector<8x8x8xf32>
    %118 = arith.mulf %116, %117 : vector<8x8x8xf32>
    %cst_56 = arith.constant dense<0xFF800000> : vector<8x8xf32>
    %119 = vector.multi_reduction <maximumf>, %118, %cst_56 [2] : vector<8x8x8xf32> to vector<8x8xf32>
    %120 = vector.shape_cast %119 : vector<8x8xf32> to vector<8x8x1xf32>
    %121 = vector.broadcast %120 : vector<8x8x1xf32> to vector<8x8x8xf32>
    %122 = arith.subf %118, %121 : vector<8x8x8xf32>
    %123 = math.exp %122 : vector<8x8x8xf32>
    %cst_57 = arith.constant dense<0.000000e+00> : vector<8x8xf32>
    %124 = vector.multi_reduction <add>, %123, %cst_57 [2] : vector<8x8x8xf32> to vector<8x8xf32>
    %125 = vector.shape_cast %124 : vector<8x8xf32> to vector<8x8x1xf32>
    %126 = vector.broadcast %125 : vector<8x8x1xf32> to vector<8x8x8xf32>
    %127 = arith.divf %123, %126 : vector<8x8x8xf32>
    %128 = arith.truncf %127 : vector<8x8x8xf32> to vector<8x8x8xbf16>
    %129 = arith.truncf %113 : vector<8x8x4xf32> to vector<8x8x4xbf16>
    "tpu.trace_start"() <{level = 10 : i32, message = "nqk,nkd->nqd"}> : () -> ()
    %cst_58 = arith.constant dense<0.000000e+00> : vector<8x8x4xf32>
    %130 = tpu.matmul %128, %129, %cst_58 {dimension_numbers = #tpu.dot_dimension_numbers<[2], [1], [1], [2], [0, 0, 0, 1, 1, 2], [0], [0]>} : vector<8x8x8xbf16>, vector<8x8x4xbf16>, vector<8x8x4xf32> -> vector<8x8x4xf32>
    "tpu.trace_stop"() : () -> ()
    %131 = vector.shape_cast %130 : vector<8x8x4xf32> to vector<64x4xf32>
    %132 = vector.extract_strided_slice %15 {offsets = [12, 0], sizes = [4, 16], strides = [1, 1]} : vector<16x16xf32> to vector<4x16xf32>
    %133 = arith.truncf %131 : vector<64x4xf32> to vector<64x4xbf16>
    %134 = arith.truncf %132 : vector<4x16xf32> to vector<4x16xbf16>
    %cst_59 = arith.constant dense<0.000000e+00> : vector<64x16xf32>
    %135 = tpu.matmul %133, %134, %cst_59 {dimension_numbers = #tpu.dot_dimension_numbers<[1], [0], [0], [1], [0, 0, 1, 1], [], []>} : vector<64x4xbf16>, vector<4x16xbf16>, vector<64x16xf32> -> vector<64x16xf32>
    %136 = arith.addf %110, %135 : vector<64x16xf32>
    %137 = vector.broadcast %16 : vector<1x16xf32> to vector<64x16xf32>
    %138 = arith.addf %136, %137 : vector<64x16xf32>
    %139 = arith.addf %25, %138 : vector<64x16xf32>
    %cst_60 = arith.constant dense<0.000000e+00> : vector<64xf32>
    %140 = vector.multi_reduction <add>, %139, %cst_60 [1] : vector<64x16xf32> to vector<64xf32>
    %141 = vector.shape_cast %140 : vector<64xf32> to vector<64x1xf32>
    %cst_61 = arith.constant 1.600000e+01 : f32
    %142 = vector.broadcast %cst_61 : f32 to vector<64x1xf32>
    %143 = arith.divf %141, %142 : vector<64x1xf32>
    %144 = vector.broadcast %143 : vector<64x1xf32> to vector<64x16xf32>
    %145 = arith.subf %139, %144 : vector<64x16xf32>
    %146 = arith.mulf %145, %145 : vector<64x16xf32>
    %cst_62 = arith.constant dense<0.000000e+00> : vector<64xf32>
    %147 = vector.multi_reduction <add>, %146, %cst_62 [1] : vector<64x16xf32> to vector<64xf32>
    %148 = vector.shape_cast %147 : vector<64xf32> to vector<64x1xf32>
    %cst_63 = arith.constant 1.600000e+01 : f32
    %149 = vector.broadcast %cst_63 : f32 to vector<64x1xf32>
    %150 = arith.divf %148, %149 : vector<64x1xf32>
    %151 = vector.broadcast %143 : vector<64x1xf32> to vector<64x16xf32>
    %152 = arith.subf %139, %151 : vector<64x16xf32>
    %cst_64 = arith.constant 9.99999974E-6 : f32
    %153 = vector.broadcast %cst_64 : f32 to vector<64x1xf32>
    %154 = arith.addf %150, %153 : vector<64x1xf32>
    %155 = math.rsqrt %154 : vector<64x1xf32>
    %156 = vector.broadcast %155 : vector<64x1xf32> to vector<64x16xf32>
    %157 = arith.mulf %152, %156 : vector<64x16xf32>
    %158 = vector.broadcast %17 : vector<1x16xf32> to vector<64x16xf32>
    %159 = arith.mulf %157, %158 : vector<64x16xf32>
    %160 = vector.broadcast %18 : vector<1x16xf32> to vector<64x16xf32>
    %161 = arith.addf %159, %160 : vector<64x16xf32>
    %162 = arith.truncf %161 : vector<64x16xf32> to vector<64x16xbf16>
    %163 = arith.truncf %19 : vector<16x64xf32> to vector<16x64xbf16>
    %cst_65 = arith.constant dense<0.000000e+00> : vector<64x64xf32>
    %164 = tpu.matmul %162, %163, %cst_65 {dimension_numbers = #tpu.dot_dimension_numbers<[1], [0], [0], [1], [0, 0, 1, 1], [], []>} : vector<64x16xbf16>, vector<16x64xbf16>, vector<64x64xf32> -> vector<64x64xf32>
    %165 = vector.broadcast %20 : vector<1x64xf32> to vector<64x64xf32>
    %166 = arith.addf %164, %165 : vector<64x64xf32>
    %cst_66 = arith.constant 5.000000e-01 : f32
    %167 = vector.broadcast %cst_66 : f32 to vector<64x64xf32>
    %168 = arith.mulf %167, %166 : vector<64x64xf32>
    %cst_67 = arith.constant 4.471500e-02 : f32
    %169 = vector.broadcast %cst_67 : f32 to vector<64x64xf32>
    %170 = arith.mulf %169, %166 : vector<64x64xf32>
    %171 = arith.mulf %170, %166 : vector<64x64xf32>
    %172 = arith.mulf %171, %166 : vector<64x64xf32>
    %173 = arith.addf %166, %172 : vector<64x64xf32>
    %cst_68 = arith.constant 0.797884583 : f32
    %174 = vector.broadcast %cst_68 : f32 to vector<64x64xf32>
    %175 = arith.mulf %174, %173 : vector<64x64xf32>
    %176 = math.tanh %175 : vector<64x64xf32>
    %cst_69 = arith.constant 1.000000e+00 : f32
    %177 = vector.broadcast %cst_69 : f32 to vector<64x64xf32>
    %178 = arith.addf %177, %176 : vector<64x64xf32>
    %179 = arith.mulf %168, %178 : vector<64x64xf32>
    %180 = arith.truncf %179 : vector<64x64xf32> to vector<64x64xbf16>
    %181 = arith.truncf %21 : vector<64x16xf32> to vector<64x16xbf16>
    %cst_70 = arith.constant dense<0.000000e+00> : vector<64x16xf32>
    %182 = tpu.matmul %180, %181, %cst_70 {dimension_numbers = #tpu.dot_dimension_numbers<[1], [0], [0], [1], [0, 0, 1, 1], [], []>} : vector<64x64xbf16>, vector<64x16xbf16>, vector<64x16xf32> -> vector<64x16xf32>
    %183 = vector.broadcast %22 : vector<1x16xf32> to vector<64x16xf32>
    %184 = arith.addf %182, %183 : vector<64x16xf32>
    %185 = arith.addf %161, %184 : vector<64x16xf32>
    %cst_71 = arith.constant dense<0.000000e+00> : vector<64xf32>
    %186 = vector.multi_reduction <add>, %185, %cst_71 [1] : vector<64x16xf32> to vector<64xf32>
    %187 = vector.shape_cast %186 : vector<64xf32> to vector<64x1xf32>
    %cst_72 = arith.constant 1.600000e+01 : f32
    %188 = vector.broadcast %cst_72 : f32 to vector<64x1xf32>
    %189 = arith.divf %187, %188 : vector<64x1xf32>
    %190 = vector.broadcast %189 : vector<64x1xf32> to vector<64x16xf32>
    %191 = arith.subf %185, %190 : vector<64x16xf32>
    %192 = arith.mulf %191, %191 : vector<64x16xf32>
    %cst_73 = arith.constant dense<0.000000e+00> : vector<64xf32>
    %193 = vector.multi_reduction <add>, %192, %cst_73 [1] : vector<64x16xf32> to vector<64xf32>
    %194 = vector.shape_cast %193 : vector<64xf32> to vector<64x1xf32>
    %cst_74 = arith.constant 1.600000e+01 : f32
    %195 = vector.broadcast %cst_74 : f32 to vector<64x1xf32>
    %196 = arith.divf %194, %195 : vector<64x1xf32>
    %197 = vector.broadcast %189 : vector<64x1xf32> to vector<64x16xf32>
    %198 = arith.subf %185, %197 : vector<64x16xf32>
    %cst_75 = arith.constant 9.99999974E-6 : f32
    %199 = vector.broadcast %cst_75 : f32 to vector<64x1xf32>
    %200 = arith.addf %196, %199 : vector<64x1xf32>
    %201 = math.rsqrt %200 : vector<64x1xf32>
    %202 = vector.broadcast %201 : vector<64x1xf32> to vector<64x16xf32>
    %203 = arith.mulf %198, %202 : vector<64x16xf32>
    %204 = vector.broadcast %23 : vector<1x16xf32> to vector<64x16xf32>
    %205 = arith.mulf %203, %204 : vector<64x16xf32>
    %206 = vector.broadcast %24 : vector<1x16xf32> to vector<64x16xf32>
    %207 = arith.addf %205, %206 : vector<64x16xf32>
    %208 = vector.shape_cast %207 : vector<64x16xf32> to vector<8x8x16xf32>
    %209 = vector.shape_cast %208 : vector<8x8x16xf32> to vector<1x8x8x16xf32>
    %c0_76 = arith.constant 0 : index
    %c0_77 = arith.constant 0 : index
    %c0_78 = arith.constant 0 : index
    %c0_79 = arith.constant 0 : index
    %210 = vector.load %arg17[%c0_76, %c0_77, %c0_78, %c0_79] : memref<1x8x8x16xf32, #tpu.memory_space<vmem>>, vector<1x8x8x16xf32>
    tpu.vector_store %arg17[%c0_76, %c0_77, %c0_78, %c0_79], %209 {strides = array<i32>} : memref<1x8x8x16xf32, #tpu.memory_space<vmem>>, vector<1x8x8x16xf32>,
    return
  }
  func.func @transform_0(%arg0: i32) -> (i32, i32, i32, i32) {
    %c0_i32 = arith.constant 0 : i32
    %c0_i32_0 = arith.constant 0 : i32
    %c0_i32_1 = arith.constant 0 : i32
    %c0_i32_2 = arith.constant 0 : i32
    return %arg0, %c0_i32, %c0_i32_0, %c0_i32_1 : i32, i32, i32, i32
  }
  func.func @transform_1(%arg0: i32) -> (i32, i32, i32) {
    %c0_i32 = arith.constant 0 : i32
    %c0_i32_0 = arith.constant 0 : i32
    %c0_i32_1 = arith.constant 0 : i32
    return %arg0, %c0_i32, %c0_i32_0 : i32, i32, i32
  }
  func.func @transform_2(%arg0: i32) -> (i32, i32) {
    %c0_i32 = arith.constant 0 : i32
    %c0_i32_0 = arith.constant 0 : i32
    %c0_i32_1 = arith.constant 0 : i32
    return %c0_i32, %c0_i32_0 : i32, i32
  }
  func.func @transform_3(%arg0: i32) -> (i32, i32) {
    %c0_i32 = arith.constant 0 : i32
    %c0_i32_0 = arith.constant 0 : i32
    %c0_i32_1 = arith.constant 0 : i32
    return %c0_i32, %c0_i32_0 : i32, i32
  }
  func.func @transform_4(%arg0: i32) -> (i32, i32) {
    %c0_i32 = arith.constant 0 : i32
    %c0_i32_0 = arith.constant 0 : i32
    %c0_i32_1 = arith.constant 0 : i32
    return %c0_i32, %c0_i32_0 : i32, i32
  }
  func.func @transform_5(%arg0: i32) -> (i32, i32) {
    %c0_i32 = arith.constant 0 : i32
    %c0_i32_0 = arith.constant 0 : i32
    %c0_i32_1 = arith.constant 0 : i32
    return %c0_i32, %c0_i32_0 : i32, i32
  }
  func.func @transform_6(%arg0: i32) -> (i32, i32) {
    %c0_i32 = arith.constant 0 : i32
    %c0_i32_0 = arith.constant 0 : i32
    %c0_i32_1 = arith.constant 0 : i32
    return %c0_i32, %c0_i32_0 : i32, i32
  }
  func.func @transform_7(%arg0: i32) -> (i32, i32) {
    %c0_i32 = arith.constant 0 : i32
    %c0_i32_0 = arith.constant 0 : i32
    %c0_i32_1 = arith.constant 0 : i32
    return %c0_i32, %c0_i32_0 : i32, i32
  }
  func.func @transform_8(%arg0: i32) -> (i32, i32) {
    %c0_i32 = arith.constant 0 : i32
    %c0_i32_0 = arith.constant 0 : i32
    %c0_i32_1 = arith.constant 0 : i32
    return %c0_i32, %c0_i32_0 : i32, i32
  }
  func.func @transform_9(%arg0: i32) -> (i32, i32) {
    %c0_i32 = arith.constant 0 : i32
    %c0_i32_0 = arith.constant 0 : i32
    %c0_i32_1 = arith.constant 0 : i32
    return %c0_i32, %c0_i32_0 : i32, i32
  }
  func.func @transform_10(%arg0: i32) -> (i32, i32) {
    %c0_i32 = arith.constant 0 : i32
    %c0_i32_0 = arith.constant 0 : i32
    %c0_i32_1 = arith.constant 0 : i32
    return %c0_i32, %c0_i32_0 : i32, i32
  }
  func.func @transform_11(%arg0: i32) -> (i32, i32) {
    %c0_i32 = arith.constant 0 : i32
    %c0_i32_0 = arith.constant 0 : i32
    %c0_i32_1 = arith.constant 0 : i32
    return %c0_i32, %c0_i32_0 : i32, i32
  }
  func.func @transform_12(%arg0: i32) -> (i32, i32) {
    %c0_i32 = arith.constant 0 : i32
    %c0_i32_0 = arith.constant 0 : i32
    %c0_i32_1 = arith.constant 0 : i32
    return %c0_i32, %c0_i32_0 : i32, i32
  }
  func.func @transform_13(%arg0: i32) -> (i32, i32) {
    %c0_i32 = arith.constant 0 : i32
    %c0_i32_0 = arith.constant 0 : i32
    %c0_i32_1 = arith.constant 0 : i32
    return %c0_i32, %c0_i32_0 : i32, i32
  }
  func.func @transform_14(%arg0: i32) -> (i32, i32) {
    %c0_i32 = arith.constant 0 : i32
    %c0_i32_0 = arith.constant 0 : i32
    %c0_i32_1 = arith.constant 0 : i32
    return %c0_i32, %c0_i32_0 : i32, i32
  }
  func.func @transform_15(%arg0: i32) -> (i32, i32) {
    %c0_i32 = arith.constant 0 : i32
    %c0_i32_0 = arith.constant 0 : i32
    %c0_i32_1 = arith.constant 0 : i32
    return %c0_i32, %c0_i32_0 : i32, i32
  }
  func.func @transform_16(%arg0: i32) -> (i32, i32, i32, i32) {
    %c0_i32 = arith.constant 0 : i32
    %c0_i32_0 = arith.constant 0 : i32
    %c0_i32_1 = arith.constant 0 : i32
    %c0_i32_2 = arith.constant 0 : i32
    return %arg0, %c0_i32, %c0_i32_0, %c0_i32_1 : i32, i32, i32, i32
  }
}

</mosaic_0001>

<llo_original>
// kernel: tile.10
$region0: #{tile.10}
  #allocation0 [shape = 's32[1]{0}', space=sflag, size = 0x4, scoped, tag = 'scoped memory for tile.10']
  %s0 = inlined_call_operand.vmem [shape: f32[8], index: 0, kind: input, shape index: {}]
  %s1 = inlined_call_operand.vmem [shape: f32[8,8], index: 1, kind: output, shape index: {}]
  // Predicated region
  $region2: #{tile.10} parent=0 // pred_check
    _
  $region3: #{tile.10} parent=0 // pred_check_branch
    %3 = sbr.rel (0) target = $region5
  $region4: #{tile.10} parent=0 // pred_region
    _
  $region5: #{tile.10} parent=0 // pred_fallthru
    _
  %v4 = vld [vmem:[%s0] ss:$0 sm:$0xff]
  %5 = vst [vmem:[%s1] sm:$0xff] %v4

// kernel: tile.11
$region0: #{tile.11}
  %s0 = inlined_call_operand.vmem [shape: f32[8,8], index: 0, kind: input, shape index: {}]
  %s1 = inlined_call_operand.vmem [shape: f32[64], index: 1, kind: output, shape index: {}]
  $region1: #{tile.11} parent=0
    #allocation0 [shape = 'u8[4096]{0}', space=vmem, size = 0x1000, scoped, tag = 'scoped mem for output reshape']
    %v2 = vld [vmem:[%s0] sm:$0x1]
    %vm3 = vcmask 64512
    %4 = vst.msk [vmem:[#allocation0] sm:$0x1] %vm3, %v2
    %s5 = scalar_lea.vmem %s0, 7
    %v6 = vld [vmem:[%s5] sm:$0x1]
    %7 = vrot.lane.b32.xlu0 %v6, 56
    %v8 = vpop.permute.xlu0 %7
    %vm9 = vcmask 523712
    %10 = vst.msk [vmem:[#allocation0] sm:$0x1] %vm9, %v8
    %s11 = scalar_lea.vmem %s0, 6
    %v12 = vld [vmem:[%s11] sm:$0x1]
    %13 = vrot.lane.b32.xlu0 %v12, 48
    %v14 = vpop.permute.xlu0 %13
    %vm15 = vcmask 458112
    %16 = vst.msk [vmem:[#allocation0] sm:$0x1] %vm15, %v14
    %s17 = scalar_lea.vmem %s0, 5
    %v18 = vld [vmem:[%s17] sm:$0x1]
    %19 = vrot.lane.b32.xlu0 %v18, 40
    %v20 = vpop.permute.xlu0 %19
    %vm21 = vcmask 392512
    %22 = vst.msk [vmem:[#allocation0] sm:$0x1] %vm21, %v20
    %s23 = scalar_lea.vmem %s0, 4
    %v24 = vld [vmem:[%s23] sm:$0x1]
    %25 = vrot.lane.b32.xlu0 %v24, 32
    %v26 = vpop.permute.xlu0 %25
    %vm27 = vcmask 326912
    %28 = vst.msk [vmem:[#allocation0] sm:$0x1] %vm27, %v26
    %s29 = scalar_lea.vmem %s0, 3
    %v30 = vld [vmem:[%s29] sm:$0x1]
    %31 = vrot.lane.b32.xlu0 %v30, 24
    %v32 = vpop.permute.xlu0 %31
    %vm33 = vcmask 261312
    %34 = vst.msk [vmem:[#allocation0] sm:$0x1] %vm33, %v32
    %s35 = scalar_lea.vmem %s0, 2
    %v36 = vld [vmem:[%s35] sm:$0x1]
    %37 = vrot.lane.b32.xlu0 %v36, 16
    %v38 = vpop.permute.xlu0 %37
    %vm39 = vcmask 195712
    %40 = vst.msk [vmem:[#allocation0] sm:$0x1] %vm39, %v38
    %s41 = scalar_lea.vmem %s0, 1
    %v42 = vld [vmem:[%s41] sm:$0x1]
    %43 = vrot.lane.b32.xlu0 %v42, 8
    %v44 = vpop.permute.xlu0 %43
    %vm45 = vcmask 130112
    %46 = vst.msk [vmem:[#allocation0] sm:$0x1] %vm45, %v44
    %s48 = sshllo.u32 0, 1
    %v50 = vld [vmem:[#allocation0] sm:%s48]
    %s51 = sshllo.u32 0, 1
    %52 = vst [vmem:[%s1] sm:%s51] %v50

// kernel: tile.15
$region0: #{tile.15}
  %s0 = inlined_call_operand.vmem [shape: f32[8,8], index: 0, kind: input, shape index: {}]
  %s1 = inlined_call_operand.vmem [shape: f32[1,64], index: 1, kind: output, shape index: {}]
  $region1: #{tile.15} parent=0
    #allocation0 [shape = 'u8[4096]{0}', space=vmem, size = 0x1000, scoped, tag = 'scoped mem for output reshape']
    %v2 = vld [vmem:[%s0] sm:$0x1]
    %vm3 = vcmask 64512
    %4 = vst.msk [vmem:[#allocation0] sm:$0x1] %vm3, %v2
    %s5 = scalar_lea.vmem %s0, 7
    %v6 = vld [vmem:[%s5] sm:$0x1]
    %7 = vrot.lane.b32.xlu0 %v6, 56
    %v8 = vpop.permute.xlu0 %7
    %vm9 = vcmask 523712
    %10 = vst.msk [vmem:[#allocation0] sm:$0x1] %vm9, %v8
    %s11 = scalar_lea.vmem %s0, 6
    %v12 = vld [vmem:[%s11] sm:$0x1]
    %13 = vrot.lane.b32.xlu0 %v12, 48
    %v14 = vpop.permute.xlu0 %13
    %vm15 = vcmask 458112
    %16 = vst.msk [vmem:[#allocation0] sm:$0x1] %vm15, %v14
    %s17 = scalar_lea.vmem %s0, 5
    %v18 = vld [vmem:[%s17] sm:$0x1]
    %19 = vrot.lane.b32.xlu0 %v18, 40
    %v20 = vpop.permute.xlu0 %19
    %vm21 = vcmask 392512
    %22 = vst.msk [vmem:[#allocation0] sm:$0x1] %vm21, %v20
    %s23 = scalar_lea.vmem %s0, 4
    %v24 = vld [vmem:[%s23] sm:$0x1]
    %25 = vrot.lane.b32.xlu0 %v24, 32
    %v26 = vpop.permute.xlu0 %25
    %vm27 = vcmask 326912
    %28 = vst.msk [vmem:[#allocation0] sm:$0x1] %vm27, %v26
    %s29 = scalar_lea.vmem %s0, 3
    %v30 = vld [vmem:[%s29] sm:$0x1]
    %31 = vrot.lane.b32.xlu0 %v30, 24
    %v32 = vpop.permute.xlu0 %31
    %vm33 = vcmask 261312
    %34 = vst.msk [vmem:[#allocation0] sm:$0x1] %vm33, %v32
    %s35 = scalar_lea.vmem %s0, 2
    %v36 = vld [vmem:[%s35] sm:$0x1]
    %37 = vrot.lane.b32.xlu0 %v36, 16
    %v38 = vpop.permute.xlu0 %37
    %vm39 = vcmask 195712
    %40 = vst.msk [vmem:[#allocation0] sm:$0x1] %vm39, %v38
    %s41 = scalar_lea.vmem %s0, 1
    %v42 = vld [vmem:[%s41] sm:$0x1]
    %43 = vrot.lane.b32.xlu0 %v42, 8
    %v44 = vpop.permute.xlu0 %43
    %vm45 = vcmask 130112
    %46 = vst.msk [vmem:[#allocation0] sm:$0x1] %vm45, %v44
    %s48 = sshllo.u32 0, 1
    %v50 = vld [vmem:[#allocation0] sm:%s48]
    %s51 = sshllo.u32 0, 1
    %52 = vst [vmem:[%s1] sm:%s51] %v50

// kernel: forward.3
$region0: #{forward.3}
  #allocation0 [shape = 'u32[]', space=smem, size = 0x4, offset = 0x4, fixed_abs, tag = 'smem constant byte address 0x4 - core index']
  #allocation1 [shape = 'u32[144,128]{1,0:T(1,128)}', space=vmem, size = 0x12000, scoped, tag = 'internal scratch']
  #allocation2 [shape = 'f32[1,1]{1,0:T(1,128)S(1)}', space=vmem, size = 0x200, scoped, tag = 'scoped memory for forward.3']
  %s0 = inlined_call_operand.vmem [shape: f32[32,64], index: 0, kind: input, shape index: {}]
  %s1 = inlined_call_operand.vmem [shape: f32[2,16,64], index: 1, kind: input, shape index: {}]
  %s2 = inlined_call_operand.vmem [shape: f32[2,6,64], index: 2, kind: input, shape index: {}]
  %s3 = inlined_call_operand.vmem [shape: f32[1,64], index: 3, kind: input, shape index: {}]
  %s4 = inlined_call_operand.<no memory space> [shape: f32[1,1], index: 4, kind: input, shape index: {}]
  %s5 = inlined_call_operand.vmem [shape: f32[64,64], index: 5, kind: input, shape index: {}]
  %s6 = inlined_call_operand.vmem [shape: f32[64,8], index: 6, kind: input, shape index: {}]
  %s7 = inlined_call_operand.vmem [shape: f32[8,64], index: 7, kind: input, shape index: {}]
  %s8 = inlined_call_operand.vmem [shape: f32[64,64], index: 8, kind: input, shape index: {}]
  %s9 = inlined_call_operand.vmem [shape: f32[1,64], index: 9, kind: input, shape index: {}]
  %s10 = inlined_call_operand.vmem [shape: f32[32,16], index: 10, kind: input, shape index: {}]
  %s11 = inlined_call_operand.vmem [shape: f32[32,6], index: 11, kind: input, shape index: {}]
  %s12 = inlined_call_operand.vmem [shape: f32[32,1], index: 12, kind: input, shape index: {}]
  %s13 = inlined_call_operand.vmem [shape: f32[16,16], index: 13, kind: input, shape index: {}]
  %s14 = inlined_call_operand.vmem [shape: f32[16,1], index: 14, kind: input, shape index: {}]
  %s15 = inlined_call_operand.vmem [shape: f32[16,16], index: 15, kind: input, shape index: {}]
  %s16 = inlined_call_operand.vmem [shape: f32[16,1], index: 16, kind: input, shape index: {}]
  %s17 = inlined_call_operand.vmem [shape: f32[2,16,64], index: 17, kind: output, shape index: {0}]
  %s18 = inlined_call_operand.vmem [shape: f32[2,16,64], index: 18, kind: output, shape index: {1}]
  %19 = xla_tuple %s17, %s18
  %s20 = sld [smem:[#allocation0]]
  $region86: #{forward.3} parent=0
    _
  %s22 = ssub.s32 1, %s20
  %s23 = scalar_select 0, %s22, %s20
  %v24 = vstv %s4
  %25 = vst [vmem:[#allocation2] sm:$0x1] %v24
  // Predicated region
  $region2: #{forward.3} parent=0 // pred_check
    _
  $region3: #{forward.3} parent=0 // pred_check_branch
    %27 = sbr.rel (0) target = $region5
  $region4: #{forward.3} parent=0 // pred_region
    _
  $region5: #{forward.3} parent=0 // pred_fallthru
    _
  // Predicated region
  $region6: #{forward.3} parent=0 // pred_check
    _
  $region7: #{forward.3} parent=0 // pred_check_branch
    %29 = sbr.rel (0) target = $region9
  $region8: #{forward.3} parent=0 // pred_region
    _
  $region9: #{forward.3} parent=0 // pred_fallthru
    _
  // Predicated region
  $region10: #{forward.3} parent=0 // pred_check
    _
  $region11: #{forward.3} parent=0 // pred_check_branch
    %31 = sbr.rel (0) target = $region13
  $region12: #{forward.3} parent=0 // pred_region
    _
  $region13: #{forward.3} parent=0 // pred_fallthru
    _
  // Predicated region
  $region14: #{forward.3} parent=0 // pred_check
    _
  $region15: #{forward.3} parent=0 // pred_check_branch
    %33 = sbr.rel (0) target = $region17
  $region16: #{forward.3} parent=0 // pred_region
    _
  $region17: #{forward.3} parent=0 // pred_fallthru
    _
  // Predicated region
  $region18: #{forward.3} parent=0 // pred_check
    _
  $region19: #{forward.3} parent=0 // pred_check_branch
    %35 = sbr.rel (0) target = $region21
  $region20: #{forward.3} parent=0 // pred_region
    _
  $region21: #{forward.3} parent=0 // pred_fallthru
    _
  // Predicated region
  $region22: #{forward.3} parent=0 // pred_check
    _
  $region23: #{forward.3} parent=0 // pred_check_branch
    %37 = sbr.rel (0) target = $region25
  $region24: #{forward.3} parent=0 // pred_region
    _
  $region25: #{forward.3} parent=0 // pred_fallthru
    _
  // Predicated region
  $region26: #{forward.3} parent=0 // pred_check
    _
  $region27: #{forward.3} parent=0 // pred_check_branch
    %39 = sbr.rel (0) target = $region29
  $region28: #{forward.3} parent=0 // pred_region
    _
  $region29: #{forward.3} parent=0 // pred_fallthru
    _
  // Predicated region
  $region30: #{forward.3} parent=0 // pred_check
    _
  $region31: #{forward.3} parent=0 // pred_check_branch
    %41 = sbr.rel (0) target = $region33
  $region32: #{forward.3} parent=0 // pred_region
    _
  $region33: #{forward.3} parent=0 // pred_fallthru
    _
  // Predicated region
  $region34: #{forward.3} parent=0 // pred_check
    _
  $region35: #{forward.3} parent=0 // pred_check_branch
    %43 = sbr.rel (0) target = $region37
  $region36: #{forward.3} parent=0 // pred_region
    _
  $region37: #{forward.3} parent=0 // pred_fallthru
    _
  // Predicated region
  $region38: #{forward.3} parent=0 // pred_check
    _
  $region39: #{forward.3} parent=0 // pred_check_branch
    %45 = sbr.rel (0) target = $region41
  $region40: #{forward.3} parent=0 // pred_region
    _
  $region41: #{forward.3} parent=0 // pred_fallthru
    _
  // Predicated region
  $region42: #{forward.3} parent=0 // pred_check
    _
  $region43: #{forward.3} parent=0 // pred_check_branch
    %47 = sbr.rel (0) target = $region45
  $region44: #{forward.3} parent=0 // pred_region
    _
  $region45: #{forward.3} parent=0 // pred_fallthru
    _
  // Predicated region
  $region46: #{forward.3} parent=0 // pred_check
    _
  $region47: #{forward.3} parent=0 // pred_check_branch
    %49 = sbr.rel (0) target = $region49
  $region48: #{forward.3} parent=0 // pred_region
    _
  $region49: #{forward.3} parent=0 // pred_fallthru
    _
  // Predicated region
  $region50: #{forward.3} parent=0 // pred_check
    _
  $region51: #{forward.3} parent=0 // pred_check_branch
    %51 = sbr.rel (0) target = $region53
  $region52: #{forward.3} parent=0 // pred_region
    _
  $region53: #{forward.3} parent=0 // pred_fallthru
    _
  // Predicated region
  $region54: #{forward.3} parent=0 // pred_check
    _
  $region55: #{forward.3} parent=0 // pred_check_branch
    %53 = sbr.rel (0) target = $region57
  $region56: #{forward.3} parent=0 // pred_region
    _
  $region57: #{forward.3} parent=0 // pred_fallthru
    _
  // Predicated region
  $region58: #{forward.3} parent=0 // pred_check
    _
  $region59: #{forward.3} parent=0 // pred_check_branch
    %55 = sbr.rel (0) target = $region61
  $region60: #{forward.3} parent=0 // pred_region
    _
  $region61: #{forward.3} parent=0 // pred_fallthru
    _
  // Predicated region
  $region62: #{forward.3} parent=0 // pred_check
    _
  $region63: #{forward.3} parent=0 // pred_check_branch
    %57 = sbr.rel (0) target = $region65
  $region64: #{forward.3} parent=0 // pred_region
    _
  $region65: #{forward.3} parent=0 // pred_fallthru
    _
  // Predicated region
  $region66: #{forward.3} parent=0 // pred_check
    _
  $region67: #{forward.3} parent=0 // pred_check_branch
    %59 = sbr.rel (0) target = $region69
  $region68: #{forward.3} parent=0 // pred_region
    _
  $region69: #{forward.3} parent=0 // pred_fallthru
    _
  %v61 = vld [vmem:[%s0] sm:$0xff]
  %v62 = vld [vmem:[%s0 + $0x8] sm:$0xff]
  %v63 = vld [vmem:[%s0 + $0x10] sm:$0xff]
  %v64 = vld [vmem:[%s0 + $0x18] sm:$0xff]
  %v65 = vld [vmem:[%s3] sm:$0x1]
  %v67 = vlaneseq
  %v68 = vshrl.u32 %v67, 7
  %v69 = vsub.s32 0, %v68
  %v70 = vrot.slane %v65, %v69
  %v72 = vmul.f32 %v61, %v70
  %v73 = vmul.f32 %v62, %v70
  %v74 = vmul.f32 %v63, %v70
  %v75 = vmul.f32 %v64, %v70
  %v76 = vld [vmem:[%s5] sm:$0xff]
  %v77 = vld [vmem:[%s5 + $0x8] sm:$0xff]
  %v78 = vld [vmem:[%s5 + $0x10] sm:$0xff]
  %v79 = vld [vmem:[%s5 + $0x18] sm:$0xff]
  %v80 = vld [vmem:[%s5 + $0x20] sm:$0xff]
  %v81 = vld [vmem:[%s5 + $0x28] sm:$0xff]
  %v82 = vld [vmem:[%s5 + $0x30] sm:$0xff]
  %v83 = vld [vmem:[%s5 + $0x38] sm:$0xff]
  %v84 = vpack.c.bf16 %v73, %v72
  %v85 = vpack.c.bf16 %v75, %v74
  %v86 = vpack.c.bf16 %v77, %v76
  %v87 = vpack.c.bf16 %v79, %v78
  %v88 = vpack.c.bf16 %v81, %v80
  %v89 = vpack.c.bf16 %v83, %v82
  %v90 = vld [vmem:[#allocation2] sm:$0x1]
  %v92 = vlaneseq
  %v93 = vshrl.u32 %v92, 7
  %v94 = vsub.s32 0, %v93
  %v95 = vrot.slane %v90, %v94
  %96 = vset.pattern.permute.xlu0 0
  %97 = vperm.xlu0 %96, %v95
  %v98 = vpop.permute.xlu0 %97
  %vm100 = vcmask 523264
  %v102 = vsel %vm100, %v84, 0
  %v105 = vsel %vm100, %v85, 0
  %107 = vmatprep.subr.bf16.mxu0 0
  %108 = vmatpush1.bf16.msra.mxu0 %v86
  %109 = vmatprep.subr.bf16.mxu0 0
  %110 = vmatpush1.bf16.msra.mxu0 %v87
  %111 = vmatprep.subr.bf16.mxu0 0
  %112 = vmatpush1.bf16.msra.mxu0 %v88
  %113 = vmatprep.subr.bf16.mxu0 0
  %114 = vmatpush1.bf16.msra.mxu0 %v89
  %115 = vmatprep.subr.bf16.mxu0 0
  %116 = vmatpush1.bf16.msra.mxu0 0
  %117 = vmatprep.subr.bf16.mxu0 0
  %118 = vmatpush1.bf16.msra.mxu0 0
  %119 = vmatprep.subr.bf16.mxu0 0
  %120 = vmatpush1.bf16.msra.mxu0 0
  %121 = vmatprep.subr.bf16.mxu0 0
  %122 = vmatpush1.bf16.msra.mxu0 0
  %123 = vmatprep.subr.bf16.mxu0 0
  %124 = vmatpush1.bf16.msra.mxu0 0
  %125 = vmatprep.subr.bf16.mxu0 0
  %126 = vmatpush1.bf16.msra.mxu0 0
  %127 = vmatprep.subr.bf16.mxu0 0
  %128 = vmatpush1.bf16.msra.mxu0 0
  %129 = vmatprep.subr.bf16.mxu0 0
  %130 = vmatpush1.bf16.msra.mxu0 0
  %131 = vmatprep.subr.bf16.mxu0 0
  %132 = vmatpush1.bf16.msra.mxu0 0
  %133 = vmatprep.subr.bf16.mxu0 0
  %134 = vmatpush1.bf16.msra.mxu0 0
  %135 = vmatprep.subr.bf16.mxu0 0
  %136 = vmatpush1.bf16.msra.mxu0 0
  %137 = vmatprep.subr.bf16.mxu0 0
  %138 = vmatpush1.bf16.msra.mxu0 0
  %139 = vmatprep.mubr.bf16.mxu0 0
  %140 = vmatmul.mubr.bf16.gmra.mrb[0].mxu0 %v102
  %v141 = vpop.f32.mrb[0].mxu0
  %v142 = vadd.f32 %v98, %v141
  %v143 = vpop.f32.mrb[0].mxu0
  %v144 = vpop.f32.mrb[0].mxu0
  %v145 = vadd.f32 %v98, %v144
  %v146 = vpop.f32.mrb[0].mxu0
  %147 = vmatprep.mubr.bf16.mxu0 0
  %148 = vmatmul.mubr.bf16.gmra.mrb[0].mxu0 %v105
  %v149 = vpop.f32.mrb[0].mxu0
  %v150 = vadd.f32 %v98, %v149
  %v151 = vpop.f32.mrb[0].mxu0
  %v152 = vpop.f32.mrb[0].mxu0
  %v153 = vadd.f32 %v98, %v152
  %v154 = vpop.f32.mrb[0].mxu0
  %155 = vdwg.mxu0
  %v156 = vmul.f32 %v142, %v61
  %v157 = vmul.f32 %v145, %v62
  %v158 = vmul.f32 %v150, %v63
  %v159 = vmul.f32 %v153, %v64
  %v160 = vsel %vm100, %v156, 0.0
  %v161 = vsel %vm100, %v157, 0.0
  %v162 = vadd.f32 %v160, %v161
  %v163 = vsel %vm100, %v158, 0.0
  %v164 = vadd.f32 %v162, %v163
  %v165 = vsel %vm100, %v159, 0.0
  %v166 = vadd.f32 %v164, %v165
  %v167 = vrot.slane %v166, 4
  %v168 = vadd.f32 %v166, %v167
  %v169 = vrot.slane %v168, 2
  %v170 = vadd.f32 %v168, %v169
  %v171 = vrot.slane %v170, 1
  %v172 = vadd.f32 %v170, %v171
  %v173 = vld [vmem:[%s6] sm:$0xff]
  %v174 = vld [vmem:[%s6 + $0x8] sm:$0xff]
  %v175 = vld [vmem:[%s6 + $0x10] sm:$0xff]
  %v176 = vld [vmem:[%s6 + $0x18] sm:$0xff]
  %v177 = vld [vmem:[%s6 + $0x20] sm:$0xff]
  %v178 = vld [vmem:[%s6 + $0x28] sm:$0xff]
  %v179 = vld [vmem:[%s6 + $0x30] sm:$0xff]
  %v180 = vld [vmem:[%s6 + $0x38] sm:$0xff]
  %v181 = vpack.c.bf16 %v172, %v172
  %v182 = vpack.c.bf16 %v174, %v173
  %v183 = vpack.c.bf16 %v176, %v175
  %v184 = vpack.c.bf16 %v178, %v177
  %v185 = vpack.c.bf16 %v180, %v179
  %v187 = vsel %vm100, %v181, 0
  %189 = vmatprep.subr.bf16.mxu0 0
  %190 = vmatpush1.bf16.msra.mxu0 %v182
  %191 = vmatprep.subr.bf16.mxu0 0
  %192 = vmatpush1.bf16.msra.mxu0 %v183
  %193 = vmatprep.subr.bf16.mxu0 0
  %194 = vmatpush1.bf16.msra.mxu0 %v184
  %195 = vmatprep.subr.bf16.mxu0 0
  %196 = vmatpush1.bf16.msra.mxu0 %v185
  %197 = vmatprep.subr.bf16.mxu0 0
  %198 = vmatpush1.bf16.msra.mxu0 0
  %199 = vmatprep.subr.bf16.mxu0 0
  %200 = vmatpush1.bf16.msra.mxu0 0
  %201 = vmatprep.subr.bf16.mxu0 0
  %202 = vmatpush1.bf16.msra.mxu0 0
  %203 = vmatprep.subr.bf16.mxu0 0
  %204 = vmatpush1.bf16.msra.mxu0 0
  %205 = vmatprep.subr.bf16.mxu0 0
  %206 = vmatpush1.bf16.msra.mxu0 0
  %207 = vmatprep.subr.bf16.mxu0 0
  %208 = vmatpush1.bf16.msra.mxu0 0
  %209 = vmatprep.subr.bf16.mxu0 0
  %210 = vmatpush1.bf16.msra.mxu0 0
  %211 = vmatprep.subr.bf16.mxu0 0
  %212 = vmatpush1.bf16.msra.mxu0 0
  %213 = vmatprep.subr.bf16.mxu0 0
  %214 = vmatpush1.bf16.msra.mxu0 0
  %215 = vmatprep.subr.bf16.mxu0 0
  %216 = vmatpush1.bf16.msra.mxu0 0
  %217 = vmatprep.subr.bf16.mxu0 0
  %218 = vmatpush1.bf16.msra.mxu0 0
  %219 = vmatprep.subr.bf16.mxu0 0
  %220 = vmatpush1.bf16.msra.mxu0 0
  %221 = vmatprep.mubr.bf16.mxu0 0
  %222 = vmatmul.mubr.bf16.gmra.mrb[0].mxu0 %v187
  %v223 = vpop.f32.mrb[0].mxu0
  %v224 = vadd.f32 0.0, %v223
  %v225 = vpop.f32.mrb[0].mxu0
  %v226 = vpop.f32.mrb[0].mxu0
  %v227 = vpop.f32.mrb[0].mxu0
  %228 = vdwg.mxu0
  %v229 = vmul.f32 %v224, 0.35355338
  %vm230 = vcmask 57344
  %v231 = vsel %vm230, %v229, -inf
  %232 = vmax.xlane.f32.xlu0 %v231
  %v233 = vpop.xlane.xlu0 %232
  %v234 = vsub.f32 %v229, %v233
  %v235 = vmul.f32 %v234, 1.442695
  %v236 = vpow.pop %v235
  %v237 = vsel %vm230, %v236, 0.0
  %238 = vadd.xlane.f32.xlu0 %v237
  %v239 = vpop.xlane.xlu0 %238
  %v240 = vrcp.pop %v239
  %v241 = vmul.f32 %v236, %v240
  %v242 = vld [vmem:[%s7] sm:$0xff]
  %v243 = vpack.c.bf16 %v241, %v241
  %v244 = vpack.c.bf16 %v242, %v242
  %vm245 = vcmask 64512
  %v247 = vsel %vm245, %v243, 0
  %vm249 = vcmask 1043456
  %v251 = vsel %vm249, %v244, 0
  %253 = vmatprep.subr.bf16.mxu0 0
  %254 = vmatpush1.bf16.msra.mxu0 %v251
  %255 = vmatprep.subr.bf16.mxu0 0
  %256 = vmatpush1.bf16.msra.mxu0 0
  %257 = vmatprep.subr.bf16.mxu0 0
  %258 = vmatpush1.bf16.msra.mxu0 0
  %259 = vmatprep.subr.bf16.mxu0 0
  %260 = vmatpush1.bf16.msra.mxu0 0
  %261 = vmatprep.subr.bf16.mxu0 0
  %262 = vmatpush1.bf16.msra.mxu0 0
  %263 = vmatprep.subr.bf16.mxu0 0
  %264 = vmatpush1.bf16.msra.mxu0 0
  %265 = vmatprep.subr.bf16.mxu0 0
  %266 = vmatpush1.bf16.msra.mxu0 0
  %267 = vmatprep.subr.bf16.mxu0 0
  %268 = vmatpush1.bf16.msra.mxu0 0
  %269 = vmatprep.subr.bf16.mxu0 0
  %270 = vmatpush1.bf16.msra.mxu0 0
  %271 = vmatprep.subr.bf16.mxu0 0
  %272 = vmatpush1.bf16.msra.mxu0 0
  %273 = vmatprep.subr.bf16.mxu0 0
  %274 = vmatpush1.bf16.msra.mxu0 0
  %275 = vmatprep.subr.bf16.mxu0 0
  %276 = vmatpush1.bf16.msra.mxu0 0
  %277 = vmatprep.subr.bf16.mxu0 0
  %278 = vmatpush1.bf16.msra.mxu0 0
  %279 = vmatprep.subr.bf16.mxu0 0
  %280 = vmatpush1.bf16.msra.mxu0 0
  %281 = vmatprep.subr.bf16.mxu0 0
  %282 = vmatpush1.bf16.msra.mxu0 0
  %283 = vmatprep.subr.bf16.mxu0 0
  %284 = vmatpush1.bf16.msra.mxu0 0
  %285 = vmatprep.mubr.bf16.mxu0 0
  %286 = vmatmul.mubr.bf16.gmra.mrb[0].mxu0 %v247
  %v287 = vpop.f32.mrb[0].mxu0
  %v288 = vadd.f32 0.0, %v287
  %v289 = vpop.f32.mrb[0].mxu0
  %v290 = vpop.f32.mrb[0].mxu0
  %v291 = vpop.f32.mrb[0].mxu0
  %292 = vdwg.mxu0
  %v293 = vlaneseq
  %v294 = vshrl.u32 %v293, 7
  %v295 = vsub.s32 0, %v294
  %v296 = vrot.slane %v288, %v295
  %v297 = vmul.f32 %v61, %v296
  %v298 = vmul.f32 %v62, %v296
  %v299 = vmul.f32 %v63, %v296
  %v300 = vmul.f32 %v64, %v296
  %v301 = vmax.f32 %v297, 0.0
  %v302 = vmax.f32 %v298, 0.0
  %v303 = vmax.f32 %v299, 0.0
  %v304 = vmax.f32 %v300, 0.0
  %v305 = vld [vmem:[%s8] sm:$0xff]
  %v306 = vld [vmem:[%s8 + $0x8] sm:$0xff]
  %v307 = vld [vmem:[%s8 + $0x10] sm:$0xff]
  %v308 = vld [vmem:[%s8 + $0x18] sm:$0xff]
  %v309 = vld [vmem:[%s8 + $0x20] sm:$0xff]
  %v310 = vld [vmem:[%s8 + $0x28] sm:$0xff]
  %v311 = vld [vmem:[%s8 + $0x30] sm:$0xff]
  %v312 = vld [vmem:[%s8 + $0x38] sm:$0xff]
  %v313 = vpack.c.bf16 %v302, %v301
  %v314 = vpack.c.bf16 %v304, %v303
  %v315 = vpack.c.bf16 %v306, %v305
  %v316 = vpack.c.bf16 %v308, %v307
  %v317 = vpack.c.bf16 %v310, %v309
  %v318 = vpack.c.bf16 %v312, %v311
  %v319 = vld [vmem:[%s9] sm:$0x1]
  %v321 = vlaneseq
  %v322 = vshrl.u32 %v321, 7
  %v323 = vsub.s32 0, %v322
  %v324 = vrot.slane %v319, %v323
  %v327 = vsel %vm100, %v313, 0
  %v330 = vsel %vm100, %v314, 0
  %332 = vmatprep.subr.bf16.mxu0 0
  %333 = vmatpush1.bf16.msra.mxu0 %v315
  %334 = vmatprep.subr.bf16.mxu0 0
  %335 = vmatpush1.bf16.msra.mxu0 %v316
  %336 = vmatprep.subr.bf16.mxu0 0
  %337 = vmatpush1.bf16.msra.mxu0 %v317
  %338 = vmatprep.subr.bf16.mxu0 0
  %339 = vmatpush1.bf16.msra.mxu0 %v318
  %340 = vmatprep.subr.bf16.mxu0 0
  %341 = vmatpush1.bf16.msra.mxu0 0
  %342 = vmatprep.subr.bf16.mxu0 0
  %343 = vmatpush1.bf16.msra.mxu0 0
  %344 = vmatprep.subr.bf16.mxu0 0
  %345 = vmatpush1.bf16.msra.mxu0 0
  %346 = vmatprep.subr.bf16.mxu0 0
  %347 = vmatpush1.bf16.msra.mxu0 0
  %348 = vmatprep.subr.bf16.mxu0 0
  %349 = vmatpush1.bf16.msra.mxu0 0
  %350 = vmatprep.subr.bf16.mxu0 0
  %351 = vmatpush1.bf16.msra.mxu0 0
  %352 = vmatprep.subr.bf16.mxu0 0
  %353 = vmatpush1.bf16.msra.mxu0 0
  %354 = vmatprep.subr.bf16.mxu0 0
  %355 = vmatpush1.bf16.msra.mxu0 0
  %356 = vmatprep.subr.bf16.mxu0 0
  %357 = vmatpush1.bf16.msra.mxu0 0
  %358 = vmatprep.subr.bf16.mxu0 0
  %359 = vmatpush1.bf16.msra.mxu0 0
  %360 = vmatprep.subr.bf16.mxu0 0
  %361 = vmatpush1.bf16.msra.mxu0 0
  %362 = vmatprep.subr.bf16.mxu0 0
  %363 = vmatpush1.bf16.msra.mxu0 0
  %364 = vmatprep.mubr.bf16.mxu0 0
  %365 = vmatmul.mubr.bf16.gmra.mrb[0].mxu0 %v327
  %v366 = vpop.f32.mrb[0].mxu0
  %v367 = vadd.f32 %v324, %v366
  %v368 = vpop.f32.mrb[0].mxu0
  %v369 = vpop.f32.mrb[0].mxu0
  %v370 = vadd.f32 %v324, %v369
  %v371 = vpop.f32.mrb[0].mxu0
  %372 = vmatprep.mubr.bf16.mxu0 0
  %373 = vmatmul.mubr.bf16.gmra.mrb[0].mxu0 %v330
  %v374 = vpop.f32.mrb[0].mxu0
  %v375 = vadd.f32 %v324, %v374
  %v376 = vpop.f32.mrb[0].mxu0
  %v377 = vpop.f32.mrb[0].mxu0
  %v378 = vadd.f32 %v324, %v377
  %v379 = vpop.f32.mrb[0].mxu0
  %380 = vdwg.mxu0
  %v381 = vld [vmem:[%s10] sm:$0xff]
  %v382 = vld [vmem:[%s10 + $0x8] sm:$0xff]
  %v383 = vld [vmem:[%s10 + $0x10] sm:$0xff]
  %v384 = vld [vmem:[%s10 + $0x18] sm:$0xff]
  %v385 = vpack.c.bf16 %v382, %v381
  %v386 = vpack.c.bf16 %v384, %v383
  %v387 = vpack.c.bf16 %v370, %v367
  %v388 = vld [vmem:[%s11] sm:$0xff]
  %v389 = vld [vmem:[%s11 + $0x8] sm:$0xff]
  %v390 = vld [vmem:[%s11 + $0x10] sm:$0xff]
  %v391 = vld [vmem:[%s11 + $0x18] sm:$0xff]
  %v392 = vld [vmem:[%s2] sm:$0x3f]
  %v393 = vpack.c.bf16 %v389, %v388
  %v394 = vpack.c.bf16 %v391, %v390
  %v395 = vpack.c.bf16 %v392, %v392
  %vm396 = vcmask 48128
  %v398 = vsel %vm396, %v393, 0
  %v401 = vsel %vm396, %v394, 0
  %vm403 = vcmask 1042432
  %v405 = vsel %vm403, %v395, 0
  %407 = vmatprep.subr.bf16.mxu0 0
  %408 = vmatpush1.bf16.msra.mxu0 %v405
  %409 = vmatprep.subr.bf16.mxu0 0
  %410 = vmatpush1.bf16.msra.mxu0 0
  %411 = vmatprep.subr.bf16.mxu0 0
  %412 = vmatpush1.bf16.msra.mxu0 0
  %413 = vmatprep.subr.bf16.mxu0 0
  %414 = vmatpush1.bf16.msra.mxu0 0
  %415 = vmatprep.subr.bf16.mxu0 0
  %416 = vmatpush1.bf16.msra.mxu0 0
  %417 = vmatprep.subr.bf16.mxu0 0
  %418 = vmatpush1.bf16.msra.mxu0 0
  %419 = vmatprep.subr.bf16.mxu0 0
  %420 = vmatpush1.bf16.msra.mxu0 0
  %421 = vmatprep.subr.bf16.mxu0 0
  %422 = vmatpush1.bf16.msra.mxu0 0
  %423 = vmatprep.subr.bf16.mxu0 0
  %424 = vmatpush1.bf16.msra.mxu0 0
  %425 = vmatprep.subr.bf16.mxu0 0
  %426 = vmatpush1.bf16.msra.mxu0 0
  %427 = vmatprep.subr.bf16.mxu0 0
  %428 = vmatpush1.bf16.msra.mxu0 0
  %429 = vmatprep.subr.bf16.mxu0 0
  %430 = vmatpush1.bf16.msra.mxu0 0
  %431 = vmatprep.subr.bf16.mxu0 0
  %432 = vmatpush1.bf16.msra.mxu0 0
  %433 = vmatprep.subr.bf16.mxu0 0
  %434 = vmatpush1.bf16.msra.mxu0 0
  %435 = vmatprep.subr.bf16.mxu0 0
  %436 = vmatpush1.bf16.msra.mxu0 0
  %437 = vmatprep.subr.bf16.mxu0 0
  %438 = vmatpush1.bf16.msra.mxu0 0
  %439 = vmatprep.mubr.bf16.mxu0 0
  %440 = vmatmul.mubr.bf16.gmra.mrb[0].mxu0 %v398
  %v441 = vpop.f32.mrb[0].mxu0
  %v442 = vadd.f32 0.0, %v441
  %v443 = vpop.f32.mrb[0].mxu0
  %v444 = vpop.f32.mrb[0].mxu0
  %v445 = vadd.f32 0.0, %v444
  %v446 = vpop.f32.mrb[0].mxu0
  %447 = vmatprep.mubr.bf16.mxu0 0
  %448 = vmatmul.mubr.bf16.gmra.mrb[0].mxu0 %v401
  %v449 = vpop.f32.mrb[0].mxu0
  %v450 = vadd.f32 0.0, %v449
  %v451 = vpop.f32.mrb[0].mxu0
  %v452 = vpop.f32.mrb[0].mxu0
  %v453 = vadd.f32 0.0, %v452
  %v454 = vpop.f32.mrb[0].mxu0
  %455 = vdwg.mxu0
  %vm456 = vcmask 130048
  %v458 = vsel %vm456, %v385, 0
  %v461 = vsel %vm456, %v386, 0
  %463 = vmatprep.subr.bf16.mxu0 0
  %464 = vmatpush1.bf16.msra.mxu0 %v387
  %465 = vmatprep.subr.bf16.mxu0 0
  %466 = vmatpush1.bf16.msra.mxu0 0
  %467 = vmatprep.subr.bf16.mxu0 0
  %468 = vmatpush1.bf16.msra.mxu0 0
  %469 = vmatprep.subr.bf16.mxu0 0
  %470 = vmatpush1.bf16.msra.mxu0 0
  %471 = vmatprep.subr.bf16.mxu0 0
  %472 = vmatpush1.bf16.msra.mxu0 0
  %473 = vmatprep.subr.bf16.mxu0 0
  %474 = vmatpush1.bf16.msra.mxu0 0
  %475 = vmatprep.subr.bf16.mxu0 0
  %476 = vmatpush1.bf16.msra.mxu0 0
  %477 = vmatprep.subr.bf16.mxu0 0
  %478 = vmatpush1.bf16.msra.mxu0 0
  %479 = vmatprep.subr.bf16.mxu0 0
  %480 = vmatpush1.bf16.msra.mxu0 0
  %481 = vmatprep.subr.bf16.mxu0 0
  %482 = vmatpush1.bf16.msra.mxu0 0
  %483 = vmatprep.subr.bf16.mxu0 0
  %484 = vmatpush1.bf16.msra.mxu0 0
  %485 = vmatprep.subr.bf16.mxu0 0
  %486 = vmatpush1.bf16.msra.mxu0 0
  %487 = vmatprep.subr.bf16.mxu0 0
  %488 = vmatpush1.bf16.msra.mxu0 0
  %489 = vmatprep.subr.bf16.mxu0 0
  %490 = vmatpush1.bf16.msra.mxu0 0
  %491 = vmatprep.subr.bf16.mxu0 0
  %492 = vmatpush1.bf16.msra.mxu0 0
  %493 = vmatprep.subr.bf16.mxu0 0
  %494 = vmatpush1.bf16.msra.mxu0 0
  %495 = vmatprep.mubr.bf16.mxu0 0
  %496 = vmatmul.mubr.bf16.gmra.mrb[0].mxu0 %v458
  %v497 = vpop.f32.mrb[0].mxu0
  %v498 = vadd.f32 %v442, %v497
  %v499 = vpop.f32.mrb[0].mxu0
  %v500 = vpop.f32.mrb[0].mxu0
  %v501 = vadd.f32 %v445, %v500
  %v502 = vpop.f32.mrb[0].mxu0
  %503 = vmatprep.mubr.bf16.mxu0 0
  %504 = vmatmul.mubr.bf16.gmra.mrb[0].mxu0 %v461
  %v505 = vpop.f32.mrb[0].mxu0
  %v506 = vadd.f32 %v450, %v505
  %v507 = vpop.f32.mrb[0].mxu0
  %v508 = vpop.f32.mrb[0].mxu0
  %v509 = vadd.f32 %v453, %v508
  %v510 = vpop.f32.mrb[0].mxu0
  %511 = vdwg.mxu0
  %v512 = vld [vmem:[%s12] sm:$0xff]
  %v513 = vld [vmem:[%s12 + $0x8] sm:$0xff]
  %v514 = vld [vmem:[%s12 + $0x10] sm:$0xff]
  %v515 = vld [vmem:[%s12 + $0x18] sm:$0xff]
  %517 = vset.pattern.permute.xlu0 0
  %518 = vperm.xlu0 %517, %v512
  %v519 = vpop.permute.xlu0 %518
  %522 = vset.pattern.permute.xlu0 0
  %523 = vperm.xlu0 %522, %v513
  %v524 = vpop.permute.xlu0 %523
  %527 = vset.pattern.permute.xlu0 0
  %528 = vperm.xlu0 %527, %v514
  %v529 = vpop.permute.xlu0 %528
  %532 = vset.pattern.permute.xlu0 0
  %533 = vperm.xlu0 %532, %v515
  %v534 = vpop.permute.xlu0 %533
  %v536 = vadd.f32 %v498, %v519
  %v537 = vadd.f32 %v501, %v524
  %v538 = vadd.f32 %v506, %v529
  %v539 = vadd.f32 %v509, %v534
  %v540 = vxor.u32 %v536, 2147483648
  %v541 = vxor.u32 %v537, 2147483648
  %v542 = vmul.f32 %v540, 1.442695
  %v543 = vpow.pop %v542
  %v544 = vmul.f32 %v541, 1.442695
  %v545 = vpow.pop %v544
  %v546 = vadd.f32 %v543, 1.0
  %v547 = vadd.f32 %v545, 1.0
  %v548 = vrcp.pop %v546
  %v549 = vmul.f32 1.0, %v548
  %v550 = vrcp.pop %v547
  %v551 = vmul.f32 1.0, %v550
  %v552 = vtanh.pop %v538
  %v553 = vtanh.pop %v539
  %v554 = vmul.f32 %v549, %v552
  %v555 = vmul.f32 %v551, %v553
  %v556 = vld [vmem:[%s1] sm:$0xff]
  %v557 = vld [vmem:[%s1 + $0x8] sm:$0xff]
  %v558 = vld [vmem:[%s13] sm:$0xff]
  %v559 = vld [vmem:[%s13 + $0x8] sm:$0xff]
  %v560 = vpack.c.bf16 %v559, %v558
  %v561 = vpack.c.bf16 %v555, %v554
  %v563 = vsel %vm456, %v560, 0
  %565 = vmatprep.subr.bf16.mxu0 0
  %566 = vmatpush1.bf16.msra.mxu0 %v561
  %567 = vmatprep.subr.bf16.mxu0 0
  %568 = vmatpush1.bf16.msra.mxu0 0
  %569 = vmatprep.subr.bf16.mxu0 0
  %570 = vmatpush1.bf16.msra.mxu0 0
  %571 = vmatprep.subr.bf16.mxu0 0
  %572 = vmatpush1.bf16.msra.mxu0 0
  %573 = vmatprep.subr.bf16.mxu0 0
  %574 = vmatpush1.bf16.msra.mxu0 0
  %575 = vmatprep.subr.bf16.mxu0 0
  %576 = vmatpush1.bf16.msra.mxu0 0
  %577 = vmatprep.subr.bf16.mxu0 0
  %578 = vmatpush1.bf16.msra.mxu0 0
  %579 = vmatprep.subr.bf16.mxu0 0
  %580 = vmatpush1.bf16.msra.mxu0 0
  %581 = vmatprep.subr.bf16.mxu0 0
  %582 = vmatpush1.bf16.msra.mxu0 0
  %583 = vmatprep.subr.bf16.mxu0 0
  %584 = vmatpush1.bf16.msra.mxu0 0
  %585 = vmatprep.subr.bf16.mxu0 0
  %586 = vmatpush1.bf16.msra.mxu0 0
  %587 = vmatprep.subr.bf16.mxu0 0
  %588 = vmatpush1.bf16.msra.mxu0 0
  %589 = vmatprep.subr.bf16.mxu0 0
  %590 = vmatpush1.bf16.msra.mxu0 0
  %591 = vmatprep.subr.bf16.mxu0 0
  %592 = vmatpush1.bf16.msra.mxu0 0
  %593 = vmatprep.subr.bf16.mxu0 0
  %594 = vmatpush1.bf16.msra.mxu0 0
  %595 = vmatprep.subr.bf16.mxu0 0
  %596 = vmatpush1.bf16.msra.mxu0 0
  %597 = vmatprep.mubr.bf16.mxu0 0
  %598 = vmatmul.mubr.bf16.gmra.mrb[0].mxu0 %v563
  %v599 = vpop.f32.mrb[0].mxu0
  %v600 = vadd.f32 0.0, %v599
  %v601 = vpop.f32.mrb[0].mxu0
  %v602 = vpop.f32.mrb[0].mxu0
  %v603 = vadd.f32 0.0, %v602
  %v604 = vpop.f32.mrb[0].mxu0
  %605 = vdwg.mxu0
  %v606 = vadd.f32 %v556, %v600
  %v607 = vadd.f32 %v557, %v603
  %v608 = vld [vmem:[%s14] sm:$0xff]
  %v609 = vld [vmem:[%s14 + $0x8] sm:$0xff]
  %611 = vset.pattern.permute.xlu0 0
  %612 = vperm.xlu0 %611, %v608
  %v613 = vpop.permute.xlu0 %612
  %616 = vset.pattern.permute.xlu0 0
  %617 = vperm.xlu0 %616, %v609
  %v618 = vpop.permute.xlu0 %617
  %v620 = vadd.f32 %v606, %v613
  %v621 = vadd.f32 %v607, %v618
  %v622 = vmul.f32 %v620, 0.70710677
  %v623 = vmul.f32 %v621, 0.70710677
  %624 = vst.msk [vmem:[%s17] sm:$0xff] %vm100, %v622
  %625 = vst.msk [vmem:[%s17 + $0x8] sm:$0xff] %vm100, %v623
  %v626 = vld [vmem:[%s15] sm:$0xff]
  %v627 = vld [vmem:[%s15 + $0x8] sm:$0xff]
  %v628 = vpack.c.bf16 %v627, %v626
  %v629 = vld [vmem:[%s16] sm:$0xff]
  %v630 = vld [vmem:[%s16 + $0x8] sm:$0xff]
  %632 = vset.pattern.permute.xlu0 0
  %633 = vperm.xlu0 %632, %v629
  %v634 = vpop.permute.xlu0 %633
  %637 = vset.pattern.permute.xlu0 0
  %638 = vperm.xlu0 %637, %v630
  %v639 = vpop.permute.xlu0 %638
  %v642 = vsel %vm456, %v628, 0
  %644 = vmatprep.subr.bf16.mxu0 0
  %645 = vmatpush1.bf16.msra.mxu0 %v561
  %646 = vmatprep.subr.bf16.mxu0 0
  %647 = vmatpush1.bf16.msra.mxu0 0
  %648 = vmatprep.subr.bf16.mxu0 0
  %649 = vmatpush1.bf16.msra.mxu0 0
  %650 = vmatprep.subr.bf16.mxu0 0
  %651 = vmatpush1.bf16.msra.mxu0 0
  %652 = vmatprep.subr.bf16.mxu0 0
  %653 = vmatpush1.bf16.msra.mxu0 0
  %654 = vmatprep.subr.bf16.mxu0 0
  %655 = vmatpush1.bf16.msra.mxu0 0
  %656 = vmatprep.subr.bf16.mxu0 0
  %657 = vmatpush1.bf16.msra.mxu0 0
  %658 = vmatprep.subr.bf16.mxu0 0
  %659 = vmatpush1.bf16.msra.mxu0 0
  %660 = vmatprep.subr.bf16.mxu0 0
  %661 = vmatpush1.bf16.msra.mxu0 0
  %662 = vmatprep.subr.bf16.mxu0 0
  %663 = vmatpush1.bf16.msra.mxu0 0
  %664 = vmatprep.subr.bf16.mxu0 0
  %665 = vmatpush1.bf16.msra.mxu0 0
  %666 = vmatprep.subr.bf16.mxu0 0
  %667 = vmatpush1.bf16.msra.mxu0 0
  %668 = vmatprep.subr.bf16.mxu0 0
  %669 = vmatpush1.bf16.msra.mxu0 0
  %670 = vmatprep.subr.bf16.mxu0 0
  %671 = vmatpush1.bf16.msra.mxu0 0
  %672 = vmatprep.subr.bf16.mxu0 0
  %673 = vmatpush1.bf16.msra.mxu0 0
  %674 = vmatprep.subr.bf16.mxu0 0
  %675 = vmatpush1.bf16.msra.mxu0 0
  %676 = vmatprep.mubr.bf16.mxu0 0
  %677 = vmatmul.mubr.bf16.gmra.mrb[0].mxu0 %v642
  %v678 = vpop.f32.mrb[0].mxu0
  %v679 = vadd.f32 %v634, %v678
  %v680 = vpop.f32.mrb[0].mxu0
  %v681 = vpop.f32.mrb[0].mxu0
  %v682 = vadd.f32 %v639, %v681
  %v683 = vpop.f32.mrb[0].mxu0
  %684 = vdwg.mxu0
  %685 = vst.msk [vmem:[%s18] sm:$0xff] %vm100, %v679
  %686 = vst.msk [vmem:[%s18 + $0x8] sm:$0xff] %vm100, %v682
  %v687 = vld [vmem:[%s10] sm:$0xff]
  %v688 = vld [vmem:[%s10 + $0x8] sm:$0xff]
  %v689 = vld [vmem:[%s10 + $0x10] sm:$0xff]
  %v690 = vld [vmem:[%s10 + $0x18] sm:$0xff]
  %v691 = vpack.c.bf16 %v688, %v687
  %v692 = vpack.c.bf16 %v690, %v689
  %v693 = vpack.c.bf16 %v378, %v375
  %v694 = vld [vmem:[%s11] sm:$0xff]
  %v695 = vld [vmem:[%s11 + $0x8] sm:$0xff]
  %v696 = vld [vmem:[%s11 + $0x10] sm:$0xff]
  %v697 = vld [vmem:[%s11 + $0x18] sm:$0xff]
  %s698 = scalar_lea.vmem %s2, 8
  %v699 = vld [vmem:[%s698] sm:$0x3f]
  %v700 = vpack.c.bf16 %v695, %v694
  %v701 = vpack.c.bf16 %v697, %v696
  %v702 = vpack.c.bf16 %v699, %v699
  %v704 = vsel %vm396, %v700, 0
  %v707 = vsel %vm396, %v701, 0
  %v710 = vsel %vm403, %v702, 0
  %712 = vmatprep.subr.bf16.mxu0 0
  %713 = vmatpush1.bf16.msra.mxu0 %v710
  %714 = vmatprep.subr.bf16.mxu0 0
  %715 = vmatpush1.bf16.msra.mxu0 0
  %716 = vmatprep.subr.bf16.mxu0 0
  %717 = vmatpush1.bf16.msra.mxu0 0
  %718 = vmatprep.subr.bf16.mxu0 0
  %719 = vmatpush1.bf16.msra.mxu0 0
  %720 = vmatprep.subr.bf16.mxu0 0
  %721 = vmatpush1.bf16.msra.mxu0 0
  %722 = vmatprep.subr.bf16.mxu0 0
  %723 = vmatpush1.bf16.msra.mxu0 0
  %724 = vmatprep.subr.bf16.mxu0 0
  %725 = vmatpush1.bf16.msra.mxu0 0
  %726 = vmatprep.subr.bf16.mxu0 0
  %727 = vmatpush1.bf16.msra.mxu0 0
  %728 = vmatprep.subr.bf16.mxu0 0
  %729 = vmatpush1.bf16.msra.mxu0 0
  %730 = vmatprep.subr.bf16.mxu0 0
  %731 = vmatpush1.bf16.msra.mxu0 0
  %732 = vmatprep.subr.bf16.mxu0 0
  %733 = vmatpush1.bf16.msra.mxu0 0
  %734 = vmatprep.subr.bf16.mxu0 0
  %735 = vmatpush1.bf16.msra.mxu0 0
  %736 = vmatprep.subr.bf16.mxu0 0
  %737 = vmatpush1.bf16.msra.mxu0 0
  %738 = vmatprep.subr.bf16.mxu0 0
  %739 = vmatpush1.bf16.msra.mxu0 0
  %740 = vmatprep.subr.bf16.mxu0 0
  %741 = vmatpush1.bf16.msra.mxu0 0
  %742 = vmatprep.subr.bf16.mxu0 0
  %743 = vmatpush1.bf16.msra.mxu0 0
  %744 = vmatprep.mubr.bf16.mxu0 0
  %745 = vmatmul.mubr.bf16.gmra.mrb[0].mxu0 %v704
  %v746 = vpop.f32.mrb[0].mxu0
  %v747 = vadd.f32 0.0, %v746
  %v748 = vpop.f32.mrb[0].mxu0
  %v749 = vpop.f32.mrb[0].mxu0
  %v750 = vadd.f32 0.0, %v749
  %v751 = vpop.f32.mrb[0].mxu0
  %752 = vmatprep.mubr.bf16.mxu0 0
  %753 = vmatmul.mubr.bf16.gmra.mrb[0].mxu0 %v707
  %v754 = vpop.f32.mrb[0].mxu0
  %v755 = vadd.f32 0.0, %v754
  %v756 = vpop.f32.mrb[0].mxu0
  %v757 = vpop.f32.mrb[0].mxu0
  %v758 = vadd.f32 0.0, %v757
  %v759 = vpop.f32.mrb[0].mxu0
  %760 = vdwg.mxu0
  %v762 = vsel %vm456, %v691, 0
  %v765 = vsel %vm456, %v692, 0
  %767 = vmatprep.subr.bf16.mxu0 0
  %768 = vmatpush1.bf16.msra.mxu0 %v693
  %769 = vmatprep.subr.bf16.mxu0 0
  %770 = vmatpush1.bf16.msra.mxu0 0
  %771 = vmatprep.subr.bf16.mxu0 0
  %772 = vmatpush1.bf16.msra.mxu0 0
  %773 = vmatprep.subr.bf16.mxu0 0
  %774 = vmatpush1.bf16.msra.mxu0 0
  %775 = vmatprep.subr.bf16.mxu0 0
  %776 = vmatpush1.bf16.msra.mxu0 0
  %777 = vmatprep.subr.bf16.mxu0 0
  %778 = vmatpush1.bf16.msra.mxu0 0
  %779 = vmatprep.subr.bf16.mxu0 0
  %780 = vmatpush1.bf16.msra.mxu0 0
  %781 = vmatprep.subr.bf16.mxu0 0
  %782 = vmatpush1.bf16.msra.mxu0 0
  %783 = vmatprep.subr.bf16.mxu0 0
  %784 = vmatpush1.bf16.msra.mxu0 0
  %785 = vmatprep.subr.bf16.mxu0 0
  %786 = vmatpush1.bf16.msra.mxu0 0
  %787 = vmatprep.subr.bf16.mxu0 0
  %788 = vmatpush1.bf16.msra.mxu0 0
  %789 = vmatprep.subr.bf16.mxu0 0
  %790 = vmatpush1.bf16.msra.mxu0 0
  %791 = vmatprep.subr.bf16.mxu0 0
  %792 = vmatpush1.bf16.msra.mxu0 0
  %793 = vmatprep.subr.bf16.mxu0 0
  %794 = vmatpush1.bf16.msra.mxu0 0
  %795 = vmatprep.subr.bf16.mxu0 0
  %796 = vmatpush1.bf16.msra.mxu0 0
  %797 = vmatprep.subr.bf16.mxu0 0
  %798 = vmatpush1.bf16.msra.mxu0 0
  %799 = vmatprep.mubr.bf16.mxu0 0
  %800 = vmatmul.mubr.bf16.gmra.mrb[0].mxu0 %v762
  %v801 = vpop.f32.mrb[0].mxu0
  %v802 = vadd.f32 %v747, %v801
  %v803 = vpop.f32.mrb[0].mxu0
  %v804 = vpop.f32.mrb[0].mxu0
  %v805 = vadd.f32 %v750, %v804
  %v806 = vpop.f32.mrb[0].mxu0
  %807 = vmatprep.mubr.bf16.mxu0 0
  %808 = vmatmul.mubr.bf16.gmra.mrb[0].mxu0 %v765
  %v809 = vpop.f32.mrb[0].mxu0
  %v810 = vadd.f32 %v755, %v809
  %v811 = vpop.f32.mrb[0].mxu0
  %v812 = vpop.f32.mrb[0].mxu0
  %v813 = vadd.f32 %v758, %v812
  %v814 = vpop.f32.mrb[0].mxu0
  %815 = vdwg.mxu0
  %v816 = vld [vmem:[%s12] sm:$0xff]
  %v817 = vld [vmem:[%s12 + $0x8] sm:$0xff]
  %v818 = vld [vmem:[%s12 + $0x10] sm:$0xff]
  %v819 = vld [vmem:[%s12 + $0x18] sm:$0xff]
  %821 = vset.pattern.permute.xlu0 0
  %822 = vperm.xlu0 %821, %v816
  %v823 = vpop.permute.xlu0 %822
  %826 = vset.pattern.permute.xlu0 0
  %827 = vperm.xlu0 %826, %v817
  %v828 = vpop.permute.xlu0 %827
  %831 = vset.pattern.permute.xlu0 0
  %832 = vperm.xlu0 %831, %v818
  %v833 = vpop.permute.xlu0 %832
  %836 = vset.pattern.permute.xlu0 0
  %837 = vperm.xlu0 %836, %v819
  %v838 = vpop.permute.xlu0 %837
  %v840 = vadd.f32 %v802, %v823
  %v841 = vadd.f32 %v805, %v828
  %v842 = vadd.f32 %v810, %v833
  %v843 = vadd.f32 %v813, %v838
  %v844 = vxor.u32 %v840, 2147483648
  %v845 = vxor.u32 %v841, 2147483648
  %v846 = vmul.f32 %v844, 1.442695
  %v847 = vpow.pop %v846
  %v848 = vmul.f32 %v845, 1.442695
  %v849 = vpow.pop %v848
  %v850 = vadd.f32 %v847, 1.0
  %v851 = vadd.f32 %v849, 1.0
  %v852 = vrcp.pop %v850
  %v853 = vmul.f32 1.0, %v852
  %v854 = vrcp.pop %v851
  %v855 = vmul.f32 1.0, %v854
  %v856 = vtanh.pop %v842
  %v857 = vtanh.pop %v843
  %v858 = vmul.f32 %v853, %v856
  %v859 = vmul.f32 %v855, %v857
  %s860 = scalar_lea.vmem %s1, 16
  %v861 = vld [vmem:[%s860] sm:$0xff]
  %v862 = vld [vmem:[%s860 + $0x8] sm:$0xff]
  %v863 = vld [vmem:[%s13] sm:$0xff]
  %v864 = vld [vmem:[%s13 + $0x8] sm:$0xff]
  %v865 = vpack.c.bf16 %v864, %v863
  %v866 = vpack.c.bf16 %v859, %v858
  %v868 = vsel %vm456, %v865, 0
  %870 = vmatprep.subr.bf16.mxu0 0
  %871 = vmatpush1.bf16.msra.mxu0 %v866
  %872 = vmatprep.subr.bf16.mxu0 0
  %873 = vmatpush1.bf16.msra.mxu0 0
  %874 = vmatprep.subr.bf16.mxu0 0
  %875 = vmatpush1.bf16.msra.mxu0 0
  %876 = vmatprep.subr.bf16.mxu0 0
  %877 = vmatpush1.bf16.msra.mxu0 0
  %878 = vmatprep.subr.bf16.mxu0 0
  %879 = vmatpush1.bf16.msra.mxu0 0
  %880 = vmatprep.subr.bf16.mxu0 0
  %881 = vmatpush1.bf16.msra.mxu0 0
  %882 = vmatprep.subr.bf16.mxu0 0
  %883 = vmatpush1.bf16.msra.mxu0 0
  %884 = vmatprep.subr.bf16.mxu0 0
  %885 = vmatpush1.bf16.msra.mxu0 0
  %886 = vmatprep.subr.bf16.mxu0 0
  %887 = vmatpush1.bf16.msra.mxu0 0
  %888 = vmatprep.subr.bf16.mxu0 0
  %889 = vmatpush1.bf16.msra.mxu0 0
  %890 = vmatprep.subr.bf16.mxu0 0
  %891 = vmatpush1.bf16.msra.mxu0 0
  %892 = vmatprep.subr.bf16.mxu0 0
  %893 = vmatpush1.bf16.msra.mxu0 0
  %894 = vmatprep.subr.bf16.mxu0 0
  %895 = vmatpush1.bf16.msra.mxu0 0
  %896 = vmatprep.subr.bf16.mxu0 0
  %897 = vmatpush1.bf16.msra.mxu0 0
  %898 = vmatprep.subr.bf16.mxu0 0
  %899 = vmatpush1.bf16.msra.mxu0 0
  %900 = vmatprep.subr.bf16.mxu0 0
  %901 = vmatpush1.bf16.msra.mxu0 0
  %902 = vmatprep.mubr.bf16.mxu0 0
  %903 = vmatmul.mubr.bf16.gmra.mrb[0].mxu0 %v868
  %v904 = vpop.f32.mrb[0].mxu0
  %v905 = vadd.f32 0.0, %v904
  %v906 = vpop.f32.mrb[0].mxu0
  %v907 = vpop.f32.mrb[0].mxu0
  %v908 = vadd.f32 0.0, %v907
  %v909 = vpop.f32.mrb[0].mxu0
  %910 = vdwg.mxu0
  %v911 = vadd.f32 %v861, %v905
  %v912 = vadd.f32 %v862, %v908
  %v913 = vld [vmem:[%s14] sm:$0xff]
  %v914 = vld [vmem:[%s14 + $0x8] sm:$0xff]
  %916 = vset.pattern.permute.xlu0 0
  %917 = vperm.xlu0 %916, %v913
  %v918 = vpop.permute.xlu0 %917
  %921 = vset.pattern.permute.xlu0 0
  %922 = vperm.xlu0 %921, %v914
  %v923 = vpop.permute.xlu0 %922
  %v925 = vadd.f32 %v911, %v918
  %v926 = vadd.f32 %v912, %v923
  %v927 = vmul.f32 %v925, 0.70710677
  %v928 = vmul.f32 %v926, 0.70710677
  %s929 = scalar_lea.vmem %s17, 16
  %930 = vst.msk [vmem:[%s929] sm:$0xff] %vm100, %v927
  %931 = vst.msk [vmem:[%s929 + $0x8] sm:$0xff] %vm100, %v928
  %v932 = vld [vmem:[%s15] sm:$0xff]
  %v933 = vld [vmem:[%s15 + $0x8] sm:$0xff]
  %v934 = vpack.c.bf16 %v933, %v932
  %v935 = vld [vmem:[%s16] sm:$0xff]
  %v936 = vld [vmem:[%s16 + $0x8] sm:$0xff]
  %938 = vset.pattern.permute.xlu0 0
  %939 = vperm.xlu0 %938, %v935
  %v940 = vpop.permute.xlu0 %939
  %943 = vset.pattern.permute.xlu0 0
  %944 = vperm.xlu0 %943, %v936
  %v945 = vpop.permute.xlu0 %944
  %v948 = vsel %vm456, %v934, 0
  %950 = vmatprep.subr.bf16.mxu0 0
  %951 = vmatpush1.bf16.msra.mxu0 %v866
  %952 = vmatprep.subr.bf16.mxu0 0
  %953 = vmatpush1.bf16.msra.mxu0 0
  %954 = vmatprep.subr.bf16.mxu0 0
  %955 = vmatpush1.bf16.msra.mxu0 0
  %956 = vmatprep.subr.bf16.mxu0 0
  %957 = vmatpush1.bf16.msra.mxu0 0
  %958 = vmatprep.subr.bf16.mxu0 0
  %959 = vmatpush1.bf16.msra.mxu0 0
  %960 = vmatprep.subr.bf16.mxu0 0
  %961 = vmatpush1.bf16.msra.mxu0 0
  %962 = vmatprep.subr.bf16.mxu0 0
  %963 = vmatpush1.bf16.msra.mxu0 0
  %964 = vmatprep.subr.bf16.mxu0 0
  %965 = vmatpush1.bf16.msra.mxu0 0
  %966 = vmatprep.subr.bf16.mxu0 0
  %967 = vmatpush1.bf16.msra.mxu0 0
  %968 = vmatprep.subr.bf16.mxu0 0
  %969 = vmatpush1.bf16.msra.mxu0 0
  %970 = vmatprep.subr.bf16.mxu0 0
  %971 = vmatpush1.bf16.msra.mxu0 0
  %972 = vmatprep.subr.bf16.mxu0 0
  %973 = vmatpush1.bf16.msra.mxu0 0
  %974 = vmatprep.subr.bf16.mxu0 0
  %975 = vmatpush1.bf16.msra.mxu0 0
  %976 = vmatprep.subr.bf16.mxu0 0
  %977 = vmatpush1.bf16.msra.mxu0 0
  %978 = vmatprep.subr.bf16.mxu0 0
  %979 = vmatpush1.bf16.msra.mxu0 0
  %980 = vmatprep.subr.bf16.mxu0 0
  %981 = vmatpush1.bf16.msra.mxu0 0
  %982 = vmatprep.mubr.bf16.mxu0 0
  %983 = vmatmul.mubr.bf16.gmra.mrb[0].mxu0 %v948
  %v984 = vpop.f32.mrb[0].mxu0
  %v985 = vadd.f32 %v940, %v984
  %v986 = vpop.f32.mrb[0].mxu0
  %v987 = vpop.f32.mrb[0].mxu0
  %v988 = vadd.f32 %v945, %v987
  %v989 = vpop.f32.mrb[0].mxu0
  %990 = vdwg.mxu0
  %s991 = scalar_lea.vmem %s18, 16
  %992 = vst.msk [vmem:[%s991] sm:$0xff] %vm100, %v985
  %993 = vst.msk [vmem:[%s991 + $0x8] sm:$0xff] %vm100, %v988
  // Predicated region
  $region70: #{forward.3} parent=0 // pred_check
    _
  $region71: #{forward.3} parent=0 // pred_check_branch
    %995 = sbr.rel (0) target = $region73
  $region72: #{forward.3} parent=0 // pred_region
    _
  $region73: #{forward.3} parent=0 // pred_fallthru
    _
  // Predicated region
  $region74: #{forward.3} parent=0 // pred_check
    _
  $region75: #{forward.3} parent=0 // pred_check_branch
    %997 = sbr.rel (0) target = $region77
  $region76: #{forward.3} parent=0 // pred_region
    _
  $region77: #{forward.3} parent=0 // pred_fallthru
    _
  // Predicated region
  $region78: #{forward.3} parent=0 // pred_check
    _
  $region79: #{forward.3} parent=0 // pred_check_branch
    %999 = sbr.rel (0) target = $region81
  $region80: #{forward.3} parent=0 // pred_region
    _
  $region81: #{forward.3} parent=0 // pred_fallthru
    _
  // Predicated region
  $region82: #{forward.3} parent=0 // pred_check
    _
  $region83: #{forward.3} parent=0 // pred_check_branch
    %1001 = sbr.rel (0) target = $region85
  $region84: #{forward.3} parent=0 // pred_region
    _
  $region85: #{forward.3} parent=0 // pred_fallthru
    _

// kernel: forward.2
$region0: #{forward.2}
  #allocation0 [shape = 'u32[]', space=smem, size = 0x4, offset = 0x4, fixed_abs, tag = 'smem constant byte address 0x4 - core index']
  #allocation1 [shape = 'u32[144,128]{1,0:T(1,128)}', space=vmem, size = 0x12000, scoped, tag = 'internal scratch']
  %s0 = inlined_call_operand.vmem [shape: f32[2,8,8,16], index: 0, kind: input, shape index: {}]
  %s1 = inlined_call_operand.vmem [shape: f32[2,1,32], index: 1, kind: input, shape index: {}]
  %s2 = inlined_call_operand.vmem [shape: f32[32,16], index: 2, kind: input, shape index: {}]
  %s3 = inlined_call_operand.vmem [shape: f32[1,16], index: 3, kind: input, shape index: {}]
  %s4 = inlined_call_operand.vmem [shape: f32[16,48], index: 4, kind: input, shape index: {}]
  %s5 = inlined_call_operand.vmem [shape: f32[1,48], index: 5, kind: input, shape index: {}]
  %s6 = inlined_call_operand.vmem [shape: f32[16,16], index: 6, kind: input, shape index: {}]
  %s7 = inlined_call_operand.vmem [shape: f32[1,16], index: 7, kind: input, shape index: {}]
  %s8 = inlined_call_operand.vmem [shape: f32[1,16], index: 8, kind: input, shape index: {}, may-alias: {8,14}]
  %s9 = inlined_call_operand.vmem [shape: f32[1,16], index: 9, kind: input, shape index: {}, may-alias: {9,15}]
  %s10 = inlined_call_operand.vmem [shape: f32[16,64], index: 10, kind: input, shape index: {}]
  %s11 = inlined_call_operand.vmem [shape: f32[1,64], index: 11, kind: input, shape index: {}]
  %s12 = inlined_call_operand.vmem [shape: f32[64,16], index: 12, kind: input, shape index: {}]
  %s13 = inlined_call_operand.vmem [shape: f32[1,16], index: 13, kind: input, shape index: {}]
  %s14 = inlined_call_operand.vmem [shape: f32[1,16], index: 14, kind: input, shape index: {}, may-alias: {8,14}]
  %s15 = inlined_call_operand.vmem [shape: f32[1,16], index: 15, kind: input, shape index: {}, may-alias: {9,15}]
  %s16 = inlined_call_operand.vmem [shape: f32[2,8,8,16], index: 16, kind: output, shape index: {}]
  %s17 = sld [smem:[#allocation0]]
  $region97: #{forward.2} parent=0
    _
  %s19 = ssub.s32 1, %s17
  %s20 = scalar_select 0, %s19, %s17
  loop: start=0, step=1, limit=4
  $region2: #{forward.2} parent=0 // loop_pre_header
    _
  $region3: #{forward.2} parent=0 // loop_header
    %s22 = sphi 0, %s26
    %p23 = scmp.ge.s32.totalorder %s22, 4
    %s32 = sphi 0, %s34
    %s35 = sphi 0, %s32
    %s36 = sphi 0, %s35
    %s52 = sphi 0, %s36
    %s58 = sphi 0, %s60
    %s61 = sphi 0, %s58
    %s62 = sphi 0, %s61
    %s78 = sphi 0, %s62
    %s82 = sphi 0, %s82
    %s84 = sphi 0, %s82
    %s85 = sphi 0, %s84
    %s99 = sphi 0, %s85
    %s103 = sphi 0, %s103
    %s105 = sphi 0, %s103
    %s106 = sphi 0, %s105
    %s120 = sphi 0, %s106
    %s124 = sphi 0, %s124
    %s126 = sphi 0, %s124
    %s127 = sphi 0, %s126
    %s141 = sphi 0, %s127
    %s145 = sphi 0, %s145
    %s147 = sphi 0, %s145
    %s148 = sphi 0, %s147
    %s162 = sphi 0, %s148
    %s166 = sphi 0, %s166
    %s168 = sphi 0, %s166
    %s169 = sphi 0, %s168
    %s183 = sphi 0, %s169
    %s187 = sphi 0, %s187
    %s189 = sphi 0, %s187
    %s190 = sphi 0, %s189
    %s204 = sphi 0, %s190
    %s208 = sphi 0, %s208
    %s210 = sphi 0, %s208
    %s211 = sphi 0, %s210
    %s225 = sphi 0, %s211
    %s229 = sphi 0, %s229
    %s231 = sphi 0, %s229
    %s232 = sphi 0, %s231
    %s246 = sphi 0, %s232
    %s250 = sphi 0, %s250
    %s252 = sphi 0, %s250
    %s253 = sphi 0, %s252
    %s267 = sphi 0, %s253
    %s271 = sphi 0, %s271
    %s273 = sphi 0, %s271
    %s274 = sphi 0, %s273
    %s288 = sphi 0, %s274
    %s292 = sphi 0, %s292
    %s294 = sphi 0, %s292
    %s295 = sphi 0, %s294
    %s309 = sphi 0, %s295
    %s313 = sphi 0, %s313
    %s315 = sphi 0, %s313
    %s316 = sphi 0, %s315
    %s330 = sphi 0, %s316
    %s334 = sphi 0, %s334
    %s336 = sphi 0, %s334
    %s337 = sphi 0, %s336
    %s351 = sphi 0, %s337
    %s355 = sphi 0, %s355
    %s357 = sphi 0, %s355
    %s358 = sphi 0, %s357
    %s372 = sphi 0, %s358
    %s378 = sphi 0, %s380
    %s381 = sphi 0, %s378
    %s382 = sphi 0, %s381
    %s398 = sphi 0, %s382
  $region4: #{forward.2} parent=0 // loop_header_branch
    %25 = sbr.rel (%p23) target = $region8
  $region5: #{forward.2} parent=0 // loop_body
    %s27 = ssub.s32 %s22, 1
    %s28 = ssub.s32 %s22, 2
    %s29 = sadd.s32 %s22, 1
    %s30 = ssub.s32 %s22, %s29
    %p31 = scmp.eq.s32.totalorder %s30, 0
    %s33 = sadd.s32 %s32, 1
    %s34 = scalar_select %p31, %s32, %s33
    %p37 = pneg %p31
    %p38 = scmp.eq.s32.totalorder %s22, 1
    %p39 = por %p37, %p38
    %p40 = scmp.ne.s32.totalorder %s32, %s35
    %p41 = scmp.eq.s32.totalorder %s22, 0
    %p42 = por %p40, %p41
    %p43 = scmp.ne.s32.totalorder %s32, %s35
    %p44 = scmp.eq.s32.totalorder %s27, 1
    %p45 = por %p43, %p44
    %p46 = scmp.ne.s32.totalorder %s35, %s36
    %p47 = scmp.eq.s32.totalorder %s27, 0
    %p48 = por %p46, %p47
    %p49 = scmp.ne.s32.totalorder %s35, %s36
    %p50 = scmp.eq.s32.totalorder %s28, 1
    %p51 = por %p49, %p50
    %p53 = scmp.ne.s32.totalorder %s36, %s52
    %p54 = scmp.eq.s32.totalorder %s28, 0
    %p55 = por %p53, %p54
    %s56 = ssub.s32 %s22, %s29
    %p57 = scmp.eq.s32.totalorder %s56, 0
    %s59 = sadd.s32 %s58, 1
    %s60 = scalar_select %p57, %s58, %s59
    %p63 = pneg %p57
    %p64 = scmp.eq.s32.totalorder %s22, 1
    %p65 = por %p63, %p64
    %p66 = scmp.ne.s32.totalorder %s58, %s61
    %p67 = scmp.eq.s32.totalorder %s22, 0
    %p68 = por %p66, %p67
    %p69 = scmp.ne.s32.totalorder %s58, %s61
    %p70 = scmp.eq.s32.totalorder %s27, 1
    %p71 = por %p69, %p70
    %p72 = scmp.ne.s32.totalorder %s61, %s62
    %p73 = scmp.eq.s32.totalorder %s27, 0
    %p74 = por %p72, %p73
    %p75 = scmp.ne.s32.totalorder %s61, %s62
    %p76 = scmp.eq.s32.totalorder %s28, 1
    %p77 = por %p75, %p76
    %p79 = scmp.ne.s32.totalorder %s62, %s78
    %p80 = scmp.eq.s32.totalorder %s28, 0
    %p81 = por %p79, %p80
    %s83 = sadd.s32 %s82, 1
    %p86 = scmp.eq.s32.totalorder %s22, 1
    %p87 = scmp.ne.s32.totalorder %s82, %s84
    %p88 = scmp.eq.s32.totalorder %s22, 0
    %p89 = por %p87, %p88
    %p90 = scmp.ne.s32.totalorder %s82, %s84
    %p91 = scmp.eq.s32.totalorder %s27, 1
    %p92 = por %p90, %p91
    %p93 = scmp.ne.s32.totalorder %s84, %s85
    %p94 = scmp.eq.s32.totalorder %s27, 0
    %p95 = por %p93, %p94
    %p96 = scmp.ne.s32.totalorder %s84, %s85
    %p97 = scmp.eq.s32.totalorder %s28, 1
    %p98 = por %p96, %p97
    %p100 = scmp.ne.s32.totalorder %s85, %s99
    %p101 = scmp.eq.s32.totalorder %s28, 0
    %p102 = por %p100, %p101
    %s104 = sadd.s32 %s103, 1
    %p107 = scmp.eq.s32.totalorder %s22, 1
    %p108 = scmp.ne.s32.totalorder %s103, %s105
    %p109 = scmp.eq.s32.totalorder %s22, 0
    %p110 = por %p108, %p109
    %p111 = scmp.ne.s32.totalorder %s103, %s105
    %p112 = scmp.eq.s32.totalorder %s27, 1
    %p113 = por %p111, %p112
    %p114 = scmp.ne.s32.totalorder %s105, %s106
    %p115 = scmp.eq.s32.totalorder %s27, 0
    %p116 = por %p114, %p115
    %p117 = scmp.ne.s32.totalorder %s105, %s106
    %p118 = scmp.eq.s32.totalorder %s28, 1
    %p119 = por %p117, %p118
    %p121 = scmp.ne.s32.totalorder %s106, %s120
    %p122 = scmp.eq.s32.totalorder %s28, 0
    %p123 = por %p121, %p122
    %s125 = sadd.s32 %s124, 1
    %p128 = scmp.eq.s32.totalorder %s22, 1
    %p129 = scmp.ne.s32.totalorder %s124, %s126
    %p130 = scmp.eq.s32.totalorder %s22, 0
    %p131 = por %p129, %p130
    %p132 = scmp.ne.s32.totalorder %s124, %s126
    %p133 = scmp.eq.s32.totalorder %s27, 1
    %p134 = por %p132, %p133
    %p135 = scmp.ne.s32.totalorder %s126, %s127
    %p136 = scmp.eq.s32.totalorder %s27, 0
    %p137 = por %p135, %p136
    %p138 = scmp.ne.s32.totalorder %s126, %s127
    %p139 = scmp.eq.s32.totalorder %s28, 1
    %p140 = por %p138, %p139
    %p142 = scmp.ne.s32.totalorder %s127, %s141
    %p143 = scmp.eq.s32.totalorder %s28, 0
    %p144 = por %p142, %p143
    %s146 = sadd.s32 %s145, 1
    %p149 = scmp.eq.s32.totalorder %s22, 1
    %p150 = scmp.ne.s32.totalorder %s145, %s147
    %p151 = scmp.eq.s32.totalorder %s22, 0
    %p152 = por %p150, %p151
    %p153 = scmp.ne.s32.totalorder %s145, %s147
    %p154 = scmp.eq.s32.totalorder %s27, 1
    %p155 = por %p153, %p154
    %p156 = scmp.ne.s32.totalorder %s147, %s148
    %p157 = scmp.eq.s32.totalorder %s27, 0
    %p158 = por %p156, %p157
    %p159 = scmp.ne.s32.totalorder %s147, %s148
    %p160 = scmp.eq.s32.totalorder %s28, 1
    %p161 = por %p159, %p160
    %p163 = scmp.ne.s32.totalorder %s148, %s162
    %p164 = scmp.eq.s32.totalorder %s28, 0
    %p165 = por %p163, %p164
    %s167 = sadd.s32 %s166, 1
    %p170 = scmp.eq.s32.totalorder %s22, 1
    %p171 = scmp.ne.s32.totalorder %s166, %s168
    %p172 = scmp.eq.s32.totalorder %s22, 0
    %p173 = por %p171, %p172
    %p174 = scmp.ne.s32.totalorder %s166, %s168
    %p175 = scmp.eq.s32.totalorder %s27, 1
    %p176 = por %p174, %p175
    %p177 = scmp.ne.s32.totalorder %s168, %s169
    %p178 = scmp.eq.s32.totalorder %s27, 0
    %p179 = por %p177, %p178
    %p180 = scmp.ne.s32.totalorder %s168, %s169
    %p181 = scmp.eq.s32.totalorder %s28, 1
    %p182 = por %p180, %p181
    %p184 = scmp.ne.s32.totalorder %s169, %s183
    %p185 = scmp.eq.s32.totalorder %s28, 0
    %p186 = por %p184, %p185
    %s188 = sadd.s32 %s187, 1
    %p191 = scmp.eq.s32.totalorder %s22, 1
    %p192 = scmp.ne.s32.totalorder %s187, %s189
    %p193 = scmp.eq.s32.totalorder %s22, 0
    %p194 = por %p192, %p193
    %p195 = scmp.ne.s32.totalorder %s187, %s189
    %p196 = scmp.eq.s32.totalorder %s27, 1
    %p197 = por %p195, %p196
    %p198 = scmp.ne.s32.totalorder %s189, %s190
    %p199 = scmp.eq.s32.totalorder %s27, 0
    %p200 = por %p198, %p199
    %p201 = scmp.ne.s32.totalorder %s189, %s190
    %p202 = scmp.eq.s32.totalorder %s28, 1
    %p203 = por %p201, %p202
    %p205 = scmp.ne.s32.totalorder %s190, %s204
    %p206 = scmp.eq.s32.totalorder %s28, 0
    %p207 = por %p205, %p206
    %s209 = sadd.s32 %s208, 1
    %p212 = scmp.eq.s32.totalorder %s22, 1
    %p213 = scmp.ne.s32.totalorder %s208, %s210
    %p214 = scmp.eq.s32.totalorder %s22, 0
    %p215 = por %p213, %p214
    %p216 = scmp.ne.s32.totalorder %s208, %s210
    %p217 = scmp.eq.s32.totalorder %s27, 1
    %p218 = por %p216, %p217
    %p219 = scmp.ne.s32.totalorder %s210, %s211
    %p220 = scmp.eq.s32.totalorder %s27, 0
    %p221 = por %p219, %p220
    %p222 = scmp.ne.s32.totalorder %s210, %s211
    %p223 = scmp.eq.s32.totalorder %s28, 1
    %p224 = por %p222, %p223
    %p226 = scmp.ne.s32.totalorder %s211, %s225
    %p227 = scmp.eq.s32.totalorder %s28, 0
    %p228 = por %p226, %p227
    %s230 = sadd.s32 %s229, 1
    %p233 = scmp.eq.s32.totalorder %s22, 1
    %p234 = scmp.ne.s32.totalorder %s229, %s231
    %p235 = scmp.eq.s32.totalorder %s22, 0
    %p236 = por %p234, %p235
    %p237 = scmp.ne.s32.totalorder %s229, %s231
    %p238 = scmp.eq.s32.totalorder %s27, 1
    %p239 = por %p237, %p238
    %p240 = scmp.ne.s32.totalorder %s231, %s232
    %p241 = scmp.eq.s32.totalorder %s27, 0
    %p242 = por %p240, %p241
    %p243 = scmp.ne.s32.totalorder %s231, %s232
    %p244 = scmp.eq.s32.totalorder %s28, 1
    %p245 = por %p243, %p244
    %p247 = scmp.ne.s32.totalorder %s232, %s246
    %p248 = scmp.eq.s32.totalorder %s28, 0
    %p249 = por %p247, %p248
    %s251 = sadd.s32 %s250, 1
    %p254 = scmp.eq.s32.totalorder %s22, 1
    %p255 = scmp.ne.s32.totalorder %s250, %s252
    %p256 = scmp.eq.s32.totalorder %s22, 0
    %p257 = por %p255, %p256
    %p258 = scmp.ne.s32.totalorder %s250, %s252
    %p259 = scmp.eq.s32.totalorder %s27, 1
    %p260 = por %p258, %p259
    %p261 = scmp.ne.s32.totalorder %s252, %s253
    %p262 = scmp.eq.s32.totalorder %s27, 0
    %p263 = por %p261, %p262
    %p264 = scmp.ne.s32.totalorder %s252, %s253
    %p265 = scmp.eq.s32.totalorder %s28, 1
    %p266 = por %p264, %p265
    %p268 = scmp.ne.s32.totalorder %s253, %s267
    %p269 = scmp.eq.s32.totalorder %s28, 0
    %p270 = por %p268, %p269
    %s272 = sadd.s32 %s271, 1
    %p275 = scmp.eq.s32.totalorder %s22, 1
    %p276 = scmp.ne.s32.totalorder %s271, %s273
    %p277 = scmp.eq.s32.totalorder %s22, 0
    %p278 = por %p276, %p277
    %p279 = scmp.ne.s32.totalorder %s271, %s273
    %p280 = scmp.eq.s32.totalorder %s27, 1
    %p281 = por %p279, %p280
    %p282 = scmp.ne.s32.totalorder %s273, %s274
    %p283 = scmp.eq.s32.totalorder %s27, 0
    %p284 = por %p282, %p283
    %p285 = scmp.ne.s32.totalorder %s273, %s274
    %p286 = scmp.eq.s32.totalorder %s28, 1
    %p287 = por %p285, %p286
    %p289 = scmp.ne.s32.totalorder %s274, %s288
    %p290 = scmp.eq.s32.totalorder %s28, 0
    %p291 = por %p289, %p290
    %s293 = sadd.s32 %s292, 1
    %p296 = scmp.eq.s32.totalorder %s22, 1
    %p297 = scmp.ne.s32.totalorder %s292, %s294
    %p298 = scmp.eq.s32.totalorder %s22, 0
    %p299 = por %p297, %p298
    %p300 = scmp.ne.s32.totalorder %s292, %s294
    %p301 = scmp.eq.s32.totalorder %s27, 1
    %p302 = por %p300, %p301
    %p303 = scmp.ne.s32.totalorder %s294, %s295
    %p304 = scmp.eq.s32.totalorder %s27, 0
    %p305 = por %p303, %p304
    %p306 = scmp.ne.s32.totalorder %s294, %s295
    %p307 = scmp.eq.s32.totalorder %s28, 1
    %p308 = por %p306, %p307
    %p310 = scmp.ne.s32.totalorder %s295, %s309
    %p311 = scmp.eq.s32.totalorder %s28, 0
    %p312 = por %p310, %p311
    %s314 = sadd.s32 %s313, 1
    %p317 = scmp.eq.s32.totalorder %s22, 1
    %p318 = scmp.ne.s32.totalorder %s313, %s315
    %p319 = scmp.eq.s32.totalorder %s22, 0
    %p320 = por %p318, %p319
    %p321 = scmp.ne.s32.totalorder %s313, %s315
    %p322 = scmp.eq.s32.totalorder %s27, 1
    %p323 = por %p321, %p322
    %p324 = scmp.ne.s32.totalorder %s315, %s316
    %p325 = scmp.eq.s32.totalorder %s27, 0
    %p326 = por %p324, %p325
    %p327 = scmp.ne.s32.totalorder %s315, %s316
    %p328 = scmp.eq.s32.totalorder %s28, 1
    %p329 = por %p327, %p328
    %p331 = scmp.ne.s32.totalorder %s316, %s330
    %p332 = scmp.eq.s32.totalorder %s28, 0
    %p333 = por %p331, %p332
    %s335 = sadd.s32 %s334, 1
    %p338 = scmp.eq.s32.totalorder %s22, 1
    %p339 = scmp.ne.s32.totalorder %s334, %s336
    %p340 = scmp.eq.s32.totalorder %s22, 0
    %p341 = por %p339, %p340
    %p342 = scmp.ne.s32.totalorder %s334, %s336
    %p343 = scmp.eq.s32.totalorder %s27, 1
    %p344 = por %p342, %p343
    %p345 = scmp.ne.s32.totalorder %s336, %s337
    %p346 = scmp.eq.s32.totalorder %s27, 0
    %p347 = por %p345, %p346
    %p348 = scmp.ne.s32.totalorder %s336, %s337
    %p349 = scmp.eq.s32.totalorder %s28, 1
    %p350 = por %p348, %p349
    %p352 = scmp.ne.s32.totalorder %s337, %s351
    %p353 = scmp.eq.s32.totalorder %s28, 0
    %p354 = por %p352, %p353
    %s356 = sadd.s32 %s355, 1
    %p359 = scmp.eq.s32.totalorder %s22, 1
    %p360 = scmp.ne.s32.totalorder %s355, %s357
    %p361 = scmp.eq.s32.totalorder %s22, 0
    %p362 = por %p360, %p361
    %p363 = scmp.ne.s32.totalorder %s355, %s357
    %p364 = scmp.eq.s32.totalorder %s27, 1
    %p365 = por %p363, %p364
    %p366 = scmp.ne.s32.totalorder %s357, %s358
    %p367 = scmp.eq.s32.totalorder %s27, 0
    %p368 = por %p366, %p367
    %p369 = scmp.ne.s32.totalorder %s357, %s358
    %p370 = scmp.eq.s32.totalorder %s28, 1
    %p371 = por %p369, %p370
    %p373 = scmp.ne.s32.totalorder %s358, %s372
    %p374 = scmp.eq.s32.totalorder %s28, 0
    %p375 = por %p373, %p374
    %s376 = ssub.s32 %s22, %s29
    %p377 = scmp.eq.s32.totalorder %s376, 0
    %s379 = sadd.s32 %s378, 1
    %s380 = scalar_select %p377, %s378, %s379
    %p383 = pneg %p377
    %p384 = scmp.eq.s32.totalorder %s22, 1
    %p385 = por %p383, %p384
    %p386 = scmp.ne.s32.totalorder %s378, %s381
    %p387 = scmp.eq.s32.totalorder %s22, 0
    %p388 = por %p386, %p387
    %p389 = scmp.ne.s32.totalorder %s378, %s381
    %p390 = scmp.eq.s32.totalorder %s27, 1
    %p391 = por %p389, %p390
    %p392 = scmp.ne.s32.totalorder %s381, %s382
    %p393 = scmp.eq.s32.totalorder %s27, 0
    %p394 = por %p392, %p393
    %p395 = scmp.ne.s32.totalorder %s381, %s382
    %p396 = scmp.eq.s32.totalorder %s28, 1
    %p397 = por %p395, %p396
    %p399 = scmp.ne.s32.totalorder %s382, %s398
    %p400 = scmp.eq.s32.totalorder %s28, 0
    %p401 = por %p399, %p400
    %p402 = scmp.le.s32.totalorder 1, %s22
    %p403 = scmp.lt.s32.totalorder %s22, 3
    %p404 = pnand %p402, %p403
    %p405 = pneg %p404
    // Predicated region
    $region9: #{forward.2} parent=5 // pred_check
      _
    $region10: #{forward.2} parent=5 // pred_check_branch
      %407 = sbr.rel (%p404) target = $region12
    $region11: #{forward.2} parent=5 // pred_region
      %s408 = ssub.s32 %s22, 1
      // Predicated region
      $region13: #{forward.2} parent=11 // pred_check
        %p409 = pneg %p95
      $region14: #{forward.2} parent=11 // pred_check_branch
        %411 = sbr.rel (%p409) target = $region16
      $region15: #{forward.2} parent=11 // pred_region
        _
      $region16: #{forward.2} parent=11 // pred_fallthru
        _
      // Predicated region
      $region17: #{forward.2} parent=11 // pred_check
        %p412 = pneg %p116
      $region18: #{forward.2} parent=11 // pred_check_branch
        %414 = sbr.rel (%p412) target = $region20
      $region19: #{forward.2} parent=11 // pred_region
        _
      $region20: #{forward.2} parent=11 // pred_fallthru
        _
      // Predicated region
      $region21: #{forward.2} parent=11 // pred_check
        %p415 = pneg %p137
      $region22: #{forward.2} parent=11 // pred_check_branch
        %417 = sbr.rel (%p415) target = $region24
      $region23: #{forward.2} parent=11 // pred_region
        _
      $region24: #{forward.2} parent=11 // pred_fallthru
        _
      // Predicated region
      $region25: #{forward.2} parent=11 // pred_check
        %p418 = pneg %p158
      $region26: #{forward.2} parent=11 // pred_check_branch
        %420 = sbr.rel (%p418) target = $region28
      $region27: #{forward.2} parent=11 // pred_region
        _
      $region28: #{forward.2} parent=11 // pred_fallthru
        _
      // Predicated region
      $region29: #{forward.2} parent=11 // pred_check
        %p421 = pneg %p179
      $region30: #{forward.2} parent=11 // pred_check_branch
        %423 = sbr.rel (%p421) target = $region32
      $region31: #{forward.2} parent=11 // pred_region
        _
      $region32: #{forward.2} parent=11 // pred_fallthru
        _
      // Predicated region
      $region33: #{forward.2} parent=11 // pred_check
        %p424 = pneg %p200
      $region34: #{forward.2} parent=11 // pred_check_branch
        %426 = sbr.rel (%p424) target = $region36
      $region35: #{forward.2} parent=11 // pred_region
        _
      $region36: #{forward.2} parent=11 // pred_fallthru
        _
      // Predicated region
      $region37: #{forward.2} parent=11 // pred_check
        %p427 = pneg %p221
      $region38: #{forward.2} parent=11 // pred_check_branch
        %429 = sbr.rel (%p427) target = $region40
      $region39: #{forward.2} parent=11 // pred_region
        _
      $region40: #{forward.2} parent=11 // pred_fallthru
        _
      // Predicated region
      $region41: #{forward.2} parent=11 // pred_check
        %p430 = pneg %p242
      $region42: #{forward.2} parent=11 // pred_check_branch
        %432 = sbr.rel (%p430) target = $region44
      $region43: #{forward.2} parent=11 // pred_region
        _
      $region44: #{forward.2} parent=11 // pred_fallthru
        _
      // Predicated region
      $region45: #{forward.2} parent=11 // pred_check
        %p433 = pneg %p263
      $region46: #{forward.2} parent=11 // pred_check_branch
        %435 = sbr.rel (%p433) target = $region48
      $region47: #{forward.2} parent=11 // pred_region
        _
      $region48: #{forward.2} parent=11 // pred_fallthru
        _
      // Predicated region
      $region49: #{forward.2} parent=11 // pred_check
        %p436 = pneg %p284
      $region50: #{forward.2} parent=11 // pred_check_branch
        %438 = sbr.rel (%p436) target = $region52
      $region51: #{forward.2} parent=11 // pred_region
        _
      $region52: #{forward.2} parent=11 // pred_fallthru
        _
      // Predicated region
      $region53: #{forward.2} parent=11 // pred_check
        %p439 = pneg %p305
      $region54: #{forward.2} parent=11 // pred_check_branch
        %441 = sbr.rel (%p439) target = $region56
      $region55: #{forward.2} parent=11 // pred_region
        _
      $region56: #{forward.2} parent=11 // pred_fallthru
        _
      // Predicated region
      $region57: #{forward.2} parent=11 // pred_check
        %p442 = pneg %p326
      $region58: #{forward.2} parent=11 // pred_check_branch
        %444 = sbr.rel (%p442) target = $region60
      $region59: #{forward.2} parent=11 // pred_region
        _
      $region60: #{forward.2} parent=11 // pred_fallthru
        _
      // Predicated region
      $region61: #{forward.2} parent=11 // pred_check
        %p445 = pneg %p347
      $region62: #{forward.2} parent=11 // pred_check_branch
        %447 = sbr.rel (%p445) target = $region64
      $region63: #{forward.2} parent=11 // pred_region
        _
      $region64: #{forward.2} parent=11 // pred_fallthru
        _
      // Predicated region
      $region65: #{forward.2} parent=11 // pred_check
        %p448 = pneg %p368
      $region66: #{forward.2} parent=11 // pred_check_branch
        %450 = sbr.rel (%p448) target = $region68
      $region67: #{forward.2} parent=11 // pred_region
        _
      $region68: #{forward.2} parent=11 // pred_fallthru
        _
    $region12: #{forward.2} parent=5 // pred_fallthru
      _
    %p451 = scmp.lt.s32.totalorder %s22, 2
    // Predicated region
    $region69: #{forward.2} parent=5 // pred_check
      %p452 = pneg %p451
    $region70: #{forward.2} parent=5 // pred_check_branch
      %454 = sbr.rel (%p452) target = $region72
    $region71: #{forward.2} parent=5 // pred_region
      // Predicated region
      $region73: #{forward.2} parent=71 // pred_check
        %p455 = pneg %p42
      $region74: #{forward.2} parent=71 // pred_check_branch
        %457 = sbr.rel (%p455) target = $region76
      $region75: #{forward.2} parent=71 // pred_region
        %p458 = scmp.lt.s32.totalorder %s22, 1
        %s459 = scalar_select %p458, %s22, 1
        %s460 = smul.addr %s459, 8
        %s461 = smul.addr %s460, 8
        %s462 = scalar_lea.vmem %s0, %s461
      $region76: #{forward.2} parent=71 // pred_fallthru
        _
      // Predicated region
      $region77: #{forward.2} parent=71 // pred_check
        %p463 = pneg %p68
      $region78: #{forward.2} parent=71 // pred_check_branch
        %465 = sbr.rel (%p463) target = $region80
      $region79: #{forward.2} parent=71 // pred_region
        %p466 = scmp.lt.s32.totalorder %s22, 1
        %s467 = scalar_select %p466, %s22, 1
        %s468 = scalar_lea.vmem %s1, %s467
      $region80: #{forward.2} parent=71 // pred_fallthru
        _
    $region72: #{forward.2} parent=5 // pred_fallthru
      _
    %p469 = scmp.le.s32.totalorder 1, %s22
    %p470 = scmp.lt.s32.totalorder %s22, 3
    %p471 = pnand %p469, %p470
    %p472 = pneg %p471
    // Predicated region
    $region81: #{forward.2} parent=5 // pred_check
      _
    $region82: #{forward.2} parent=5 // pred_check_branch
      %474 = sbr.rel (%p471) target = $region84
    $region83: #{forward.2} parent=5 // pred_region
      %s475 = ssub.s32 %s22, 1
      %p476 = scmp.lt.s32.totalorder %s27, 1
      %s477 = scalar_select %p476, %s27, 1
      %s478 = smul.addr %s477, 8
      %s479 = smul.addr %s478, 8
      %s480 = scalar_lea.vmem %s0, %s479
      %p481 = pneg %p48
      %p482 = pneg %p45
      %p483 = scmp.lt.s32.totalorder %s27, 1
      %s484 = scalar_select %p483, %s27, 1
      %s485 = scalar_lea.vmem %s1, %s484
      %p486 = pneg %p74
      %p487 = pneg %p71
      %p488 = pneg %p95
      %p489 = pneg %p92
      %p490 = pneg %p116
      %p491 = pneg %p113
      %p492 = pneg %p137
      %p493 = pneg %p134
      %p494 = pneg %p158
      %p495 = pneg %p155
      %p496 = pneg %p179
      %p497 = pneg %p176
      %p498 = pneg %p200
      %p499 = pneg %p197
      %p500 = pneg %p221
      %p501 = pneg %p218
      %p502 = pneg %p242
      %p503 = pneg %p239
      %p504 = pneg %p263
      %p505 = pneg %p260
      %p506 = pneg %p284
      %p507 = pneg %p281
      %p508 = pneg %p305
      %p509 = pneg %p302
      %p510 = pneg %p326
      %p511 = pneg %p323
      %p512 = pneg %p347
      %p513 = pneg %p344
      %p514 = pneg %p368
      %p515 = pneg %p365
      %p516 = pneg %p394
      %p517 = pneg %p391
      %p518 = scmp.lt.s32.totalorder %s27, 1
      %s519 = scalar_select %p518, %s27, 1
      %s520 = smul.addr %s519, 8
      %s521 = smul.addr %s520, 8
      %s522 = scalar_lea.vmem %s16, %s521
      %p523 = scmp.lt.s32.totalorder %s27, 1
      %s524 = scalar_select %p523, %s27, 1
      %s525 = smul.addr %s524, 8
      %s526 = smul.addr %s525, 8
      %s527 = scalar_lea.vmem %s0, %s526
      %p528 = scmp.lt.s32.totalorder %s27, 1
      %s529 = scalar_select %p528, %s27, 1
      %s530 = scalar_lea.vmem %s1, %s529
      %p531 = scmp.lt.s32.totalorder %s27, 1
      %s532 = scalar_select %p531, %s27, 1
      %s533 = smul.addr %s532, 8
      %s534 = smul.addr %s533, 8
      %s535 = scalar_lea.vmem %s16, %s534
      %v537 = vld [vmem:[%s527] sm:$0xff]
      %v538 = vld [vmem:[%s527 + $0x8] sm:$0xff]
      %v539 = vld [vmem:[%s527 + $0x10] sm:$0xff]
      %v540 = vld [vmem:[%s527 + $0x18] sm:$0xff]
      %v541 = vld [vmem:[%s527 + $0x20] sm:$0xff]
      %v542 = vld [vmem:[%s527 + $0x28] sm:$0xff]
      %v543 = vld [vmem:[%s527 + $0x30] sm:$0xff]
      %v544 = vld [vmem:[%s527 + $0x38] sm:$0xff]
      %v545 = vld [vmem:[%s530] sm:$0x1]
      %v546 = vld [vmem:[%s2] sm:$0xff]
      %v547 = vld [vmem:[%s2 + $0x8] sm:$0xff]
      %v548 = vld [vmem:[%s2 + $0x10] sm:$0xff]
      %v549 = vld [vmem:[%s2 + $0x18] sm:$0xff]
      %v550 = vpack.c.bf16 %v545, %v545
      %v551 = vpack.c.bf16 %v547, %v546
      %v552 = vpack.c.bf16 %v549, %v548
      %v553 = vld [vmem:[%s3] sm:$0x1]
      %vm554 = vcmask 261120
      %v556 = vsel %vm554, %v550, 0
      %558 = vmatprep.subr.bf16.mxu0 0
      %559 = vmatpush1.bf16.msra.mxu0 %v551
      %560 = vmatprep.subr.bf16.mxu0 0
      %561 = vmatpush1.bf16.msra.mxu0 %v552
      %562 = vmatprep.subr.bf16.mxu0 0
      %563 = vmatpush1.bf16.msra.mxu0 0
      %564 = vmatprep.subr.bf16.mxu0 0
      %565 = vmatpush1.bf16.msra.mxu0 0
      %566 = vmatprep.subr.bf16.mxu0 0
      %567 = vmatpush1.bf16.msra.mxu0 0
      %568 = vmatprep.subr.bf16.mxu0 0
      %569 = vmatpush1.bf16.msra.mxu0 0
      %570 = vmatprep.subr.bf16.mxu0 0
      %571 = vmatpush1.bf16.msra.mxu0 0
      %572 = vmatprep.subr.bf16.mxu0 0
      %573 = vmatpush1.bf16.msra.mxu0 0
      %574 = vmatprep.subr.bf16.mxu0 0
      %575 = vmatpush1.bf16.msra.mxu0 0
      %576 = vmatprep.subr.bf16.mxu0 0
      %577 = vmatpush1.bf16.msra.mxu0 0
      %578 = vmatprep.subr.bf16.mxu0 0
      %579 = vmatpush1.bf16.msra.mxu0 0
      %580 = vmatprep.subr.bf16.mxu0 0
      %581 = vmatpush1.bf16.msra.mxu0 0
      %582 = vmatprep.subr.bf16.mxu0 0
      %583 = vmatpush1.bf16.msra.mxu0 0
      %584 = vmatprep.subr.bf16.mxu0 0
      %585 = vmatpush1.bf16.msra.mxu0 0
      %586 = vmatprep.subr.bf16.mxu0 0
      %587 = vmatpush1.bf16.msra.mxu0 0
      %588 = vmatprep.subr.bf16.mxu0 0
      %589 = vmatpush1.bf16.msra.mxu0 0
      %590 = vmatprep.mubr.bf16.mxu0 0
      %591 = vmatmul.mubr.bf16.gmra.mrb[0].mxu0 %v556
      %v592 = vpop.f32.mrb[0].mxu0
      %v593 = vadd.f32 %v553, %v592
      %v594 = vpop.f32.mrb[0].mxu0
      %v595 = vpop.f32.mrb[0].mxu0
      %v596 = vpop.f32.mrb[0].mxu0
      %597 = vdwg.mxu0
      %v598 = vlaneseq
      %v599 = vshrl.u32 %v598, 7
      %v600 = vsub.s32 0, %v599
      %v601 = vrot.slane %v593, %v600
      %v602 = vadd.f32 %v537, %v601
      %v603 = vadd.f32 %v538, %v601
      %v604 = vadd.f32 %v539, %v601
      %v605 = vadd.f32 %v540, %v601
      %v606 = vadd.f32 %v541, %v601
      %v607 = vadd.f32 %v542, %v601
      %v608 = vadd.f32 %v543, %v601
      %v609 = vadd.f32 %v544, %v601
      %v610 = vld [vmem:[%s4] sm:$0xff]
      %v611 = vld [vmem:[%s4 + $0x8] sm:$0xff]
      %v612 = vld [vmem:[%s5] sm:$0x1]
      %v613 = vld [vmem:[%s6] sm:$0xff]
      %v614 = vld [vmem:[%s6 + $0x8] sm:$0xff]
      %v615 = vld [vmem:[%s7] sm:$0x1]
      %v616 = vld [vmem:[%s8] sm:$0x1]
      %v617 = vld [vmem:[%s9] sm:$0x1]
      %v618 = vld [vmem:[%s10] sm:$0xff]
      %v619 = vld [vmem:[%s10 + $0x8] sm:$0xff]
      %v620 = vld [vmem:[%s11] sm:$0x1]
      %v621 = vld [vmem:[%s12] sm:$0xff]
      %v622 = vld [vmem:[%s12 + $0x8] sm:$0xff]
      %v623 = vld [vmem:[%s12 + $0x10] sm:$0xff]
      %v624 = vld [vmem:[%s12 + $0x18] sm:$0xff]
      %v625 = vld [vmem:[%s12 + $0x20] sm:$0xff]
      %v626 = vld [vmem:[%s12 + $0x28] sm:$0xff]
      %v627 = vld [vmem:[%s12 + $0x30] sm:$0xff]
      %v628 = vld [vmem:[%s12 + $0x38] sm:$0xff]
      %v629 = vld [vmem:[%s13] sm:$0x1]
      %v630 = vld [vmem:[%s14] sm:$0x1]
      %v631 = vld [vmem:[%s15] sm:$0x1]
      %v632 = vpack.c.bf16 %v603, %v602
      %v633 = vpack.c.bf16 %v605, %v604
      %v634 = vpack.c.bf16 %v607, %v606
      %v635 = vpack.c.bf16 %v609, %v608
      %v636 = vpack.c.bf16 %v611, %v610
      %v638 = vlaneseq
      %v639 = vshrl.u32 %v638, 7
      %v640 = vsub.s32 0, %v639
      %v641 = vrot.slane %v612, %v640
      %vm643 = vcmask 130048
      %v645 = vsel %vm643, %v632, 0
      %v648 = vsel %vm643, %v633, 0
      %v651 = vsel %vm643, %v634, 0
      %v654 = vsel %vm643, %v635, 0
      %656 = vmatprep.subr.bf16.mxu0 0
      %657 = vmatpush1.bf16.msra.mxu0 %v636
      %658 = vmatprep.subr.bf16.mxu0 0
      %659 = vmatpush1.bf16.msra.mxu0 0
      %660 = vmatprep.subr.bf16.mxu0 0
      %661 = vmatpush1.bf16.msra.mxu0 0
      %662 = vmatprep.subr.bf16.mxu0 0
      %663 = vmatpush1.bf16.msra.mxu0 0
      %664 = vmatprep.subr.bf16.mxu0 0
      %665 = vmatpush1.bf16.msra.mxu0 0
      %666 = vmatprep.subr.bf16.mxu0 0
      %667 = vmatpush1.bf16.msra.mxu0 0
      %668 = vmatprep.subr.bf16.mxu0 0
      %669 = vmatpush1.bf16.msra.mxu0 0
      %670 = vmatprep.subr.bf16.mxu0 0
      %671 = vmatpush1.bf16.msra.mxu0 0
      %672 = vmatprep.subr.bf16.mxu0 0
      %673 = vmatpush1.bf16.msra.mxu0 0
      %674 = vmatprep.subr.bf16.mxu0 0
      %675 = vmatpush1.bf16.msra.mxu0 0
      %676 = vmatprep.subr.bf16.mxu0 0
      %677 = vmatpush1.bf16.msra.mxu0 0
      %678 = vmatprep.subr.bf16.mxu0 0
      %679 = vmatpush1.bf16.msra.mxu0 0
      %680 = vmatprep.subr.bf16.mxu0 0
      %681 = vmatpush1.bf16.msra.mxu0 0
      %682 = vmatprep.subr.bf16.mxu0 0
      %683 = vmatpush1.bf16.msra.mxu0 0
      %684 = vmatprep.subr.bf16.mxu0 0
      %685 = vmatpush1.bf16.msra.mxu0 0
      %686 = vmatprep.subr.bf16.mxu0 0
      %687 = vmatpush1.bf16.msra.mxu0 0
      %688 = vmatprep.mubr.bf16.mxu0 0
      %689 = vmatmul.mubr.bf16.gmra.mrb[0].mxu0 %v645
      %v690 = vpop.f32.mrb[0].mxu0
      %v691 = vadd.f32 %v641, %v690
      %v692 = vpop.f32.mrb[0].mxu0
      %v693 = vpop.f32.mrb[0].mxu0
      %v694 = vadd.f32 %v641, %v693
      %v695 = vpop.f32.mrb[0].mxu0
      %696 = vmatprep.mubr.bf16.mxu0 0
      %697 = vmatmul.mubr.bf16.gmra.mrb[0].mxu0 %v648
      %v698 = vpop.f32.mrb[0].mxu0
      %v699 = vadd.f32 %v641, %v698
      %v700 = vpop.f32.mrb[0].mxu0
      %v701 = vpop.f32.mrb[0].mxu0
      %v702 = vadd.f32 %v641, %v701
      %v703 = vpop.f32.mrb[0].mxu0
      %704 = vmatprep.mubr.bf16.mxu0 0
      %705 = vmatmul.mubr.bf16.gmra.mrb[0].mxu0 %v651
      %v706 = vpop.f32.mrb[0].mxu0
      %v707 = vadd.f32 %v641, %v706
      %v708 = vpop.f32.mrb[0].mxu0
      %v709 = vpop.f32.mrb[0].mxu0
      %v710 = vadd.f32 %v641, %v709
      %v711 = vpop.f32.mrb[0].mxu0
      %712 = vmatprep.mubr.bf16.mxu0 0
      %713 = vmatmul.mubr.bf16.gmra.mrb[0].mxu0 %v654
      %v714 = vpop.f32.mrb[0].mxu0
      %v715 = vadd.f32 %v641, %v714
      %v716 = vpop.f32.mrb[0].mxu0
      %v717 = vpop.f32.mrb[0].mxu0
      %v718 = vadd.f32 %v641, %v717
      %v719 = vpop.f32.mrb[0].mxu0
      %720 = vdwg.mxu0
      %v721 = vpack.c.bf16 %v691, %v691
      %v722 = vpack.c.bf16 %v694, %v694
      %v723 = vpack.c.bf16 %v699, %v699
      %v724 = vpack.c.bf16 %v702, %v702
      %v725 = vpack.c.bf16 %v707, %v707
      %v726 = vpack.c.bf16 %v710, %v710
      %v727 = vpack.c.bf16 %v715, %v715
      %v728 = vpack.c.bf16 %v718, %v718
      %730 = vrot.lane.b32.xlu0 %v721, 112
      %v731 = vpop.permute.xlu0 %730
      %vm732 = vcmask 31744
      %v734 = vsel %vm732, %v721, 0
      %v737 = vsel %vm732, %v731, 0
      %739 = vmatprep.subr.bf16.mxu0 0
      %740 = vmatpush1.bf16.xpose.msra.mxu0 %v737
      %741 = vmatprep.subr.bf16.mxu0 0
      %742 = vmatpush1.bf16.xpose.msra.mxu0 0
      %743 = vmatprep.subr.bf16.mxu0 0
      %744 = vmatpush1.bf16.xpose.msra.mxu0 0
      %745 = vmatprep.subr.bf16.mxu0 0
      %746 = vmatpush1.bf16.xpose.msra.mxu0 0
      %747 = vmatprep.subr.bf16.mxu0 0
      %748 = vmatpush1.bf16.xpose.msra.mxu0 0
      %749 = vmatprep.subr.bf16.mxu0 0
      %750 = vmatpush1.bf16.xpose.msra.mxu0 0
      %751 = vmatprep.subr.bf16.mxu0 0
      %752 = vmatpush1.bf16.xpose.msra.mxu0 0
      %753 = vmatprep.subr.bf16.mxu0 0
      %754 = vmatpush1.bf16.xpose.msra.mxu0 0
      %755 = vmatprep.subr.bf16.mxu0 0
      %756 = vmatpush1.bf16.xpose.msra.mxu0 0
      %757 = vmatprep.subr.bf16.mxu0 0
      %758 = vmatpush1.bf16.xpose.msra.mxu0 0
      %759 = vmatprep.subr.bf16.mxu0 0
      %760 = vmatpush1.bf16.xpose.msra.mxu0 0
      %761 = vmatprep.subr.bf16.mxu0 0
      %762 = vmatpush1.bf16.xpose.msra.mxu0 0
      %763 = vmatprep.subr.bf16.mxu0 0
      %764 = vmatpush1.bf16.xpose.msra.mxu0 0
      %765 = vmatprep.subr.bf16.mxu0 0
      %766 = vmatpush1.bf16.xpose.msra.mxu0 0
      %767 = vmatprep.subr.bf16.mxu0 0
      %768 = vmatpush1.bf16.xpose.msra.mxu0 0
      %769 = vmatprep.subr.bf16.mxu0 0
      %770 = vmatpush1.bf16.xpose.msra.mxu0 0
      %771 = vmatprep.mubr.bf16.mxu0 0
      %772 = vmatmul.mubr.bf16.gmra.mrb[0].mxu0 %v734
      %v773 = vpop.f32.mrb[0].mxu0
      %v774 = vadd.f32 0.0, %v773
      %v775 = vpop.f32.mrb[0].mxu0
      %v776 = vpop.f32.mrb[0].mxu0
      %v777 = vpop.f32.mrb[0].mxu0
      %778 = vdwg.mxu0
      %780 = vrot.lane.b32.xlu0 %v722, 112
      %v781 = vpop.permute.xlu0 %780
      %v783 = vsel %vm732, %v722, 0
      %v786 = vsel %vm732, %v781, 0
      %788 = vmatprep.subr.bf16.mxu0 0
      %789 = vmatpush1.bf16.xpose.msra.mxu0 %v786
      %790 = vmatprep.subr.bf16.mxu0 0
      %791 = vmatpush1.bf16.xpose.msra.mxu0 0
      %792 = vmatprep.subr.bf16.mxu0 0
      %793 = vmatpush1.bf16.xpose.msra.mxu0 0
      %794 = vmatprep.subr.bf16.mxu0 0
      %795 = vmatpush1.bf16.xpose.msra.mxu0 0
      %796 = vmatprep.subr.bf16.mxu0 0
      %797 = vmatpush1.bf16.xpose.msra.mxu0 0
      %798 = vmatprep.subr.bf16.mxu0 0
      %799 = vmatpush1.bf16.xpose.msra.mxu0 0
      %800 = vmatprep.subr.bf16.mxu0 0
      %801 = vmatpush1.bf16.xpose.msra.mxu0 0
      %802 = vmatprep.subr.bf16.mxu0 0
      %803 = vmatpush1.bf16.xpose.msra.mxu0 0
      %804 = vmatprep.subr.bf16.mxu0 0
      %805 = vmatpush1.bf16.xpose.msra.mxu0 0
      %806 = vmatprep.subr.bf16.mxu0 0
      %807 = vmatpush1.bf16.xpose.msra.mxu0 0
      %808 = vmatprep.subr.bf16.mxu0 0
      %809 = vmatpush1.bf16.xpose.msra.mxu0 0
      %810 = vmatprep.subr.bf16.mxu0 0
      %811 = vmatpush1.bf16.xpose.msra.mxu0 0
      %812 = vmatprep.subr.bf16.mxu0 0
      %813 = vmatpush1.bf16.xpose.msra.mxu0 0
      %814 = vmatprep.subr.bf16.mxu0 0
      %815 = vmatpush1.bf16.xpose.msra.mxu0 0
      %816 = vmatprep.subr.bf16.mxu0 0
      %817 = vmatpush1.bf16.xpose.msra.mxu0 0
      %818 = vmatprep.subr.bf16.mxu0 0
      %819 = vmatpush1.bf16.xpose.msra.mxu0 0
      %820 = vmatprep.mubr.bf16.mxu0 0
      %821 = vmatmul.mubr.bf16.gmra.mrb[0].mxu0 %v783
      %v822 = vpop.f32.mrb[0].mxu0
      %v823 = vadd.f32 0.0, %v822
      %v824 = vpop.f32.mrb[0].mxu0
      %v825 = vpop.f32.mrb[0].mxu0
      %v826 = vpop.f32.mrb[0].mxu0
      %827 = vdwg.mxu0
      %829 = vrot.lane.b32.xlu0 %v723, 112
      %v830 = vpop.permute.xlu0 %829
      %v832 = vsel %vm732, %v723, 0
      %v835 = vsel %vm732, %v830, 0
      %837 = vmatprep.subr.bf16.mxu0 0
      %838 = vmatpush1.bf16.xpose.msra.mxu0 %v835
      %839 = vmatprep.subr.bf16.mxu0 0
      %840 = vmatpush1.bf16.xpose.msra.mxu0 0
      %841 = vmatprep.subr.bf16.mxu0 0
      %842 = vmatpush1.bf16.xpose.msra.mxu0 0
      %843 = vmatprep.subr.bf16.mxu0 0
      %844 = vmatpush1.bf16.xpose.msra.mxu0 0
      %845 = vmatprep.subr.bf16.mxu0 0
      %846 = vmatpush1.bf16.xpose.msra.mxu0 0
      %847 = vmatprep.subr.bf16.mxu0 0
      %848 = vmatpush1.bf16.xpose.msra.mxu0 0
      %849 = vmatprep.subr.bf16.mxu0 0
      %850 = vmatpush1.bf16.xpose.msra.mxu0 0
      %851 = vmatprep.subr.bf16.mxu0 0
      %852 = vmatpush1.bf16.xpose.msra.mxu0 0
      %853 = vmatprep.subr.bf16.mxu0 0
      %854 = vmatpush1.bf16.xpose.msra.mxu0 0
      %855 = vmatprep.subr.bf16.mxu0 0
      %856 = vmatpush1.bf16.xpose.msra.mxu0 0
      %857 = vmatprep.subr.bf16.mxu0 0
      %858 = vmatpush1.bf16.xpose.msra.mxu0 0
      %859 = vmatprep.subr.bf16.mxu0 0
      %860 = vmatpush1.bf16.xpose.msra.mxu0 0
      %861 = vmatprep.subr.bf16.mxu0 0
      %862 = vmatpush1.bf16.xpose.msra.mxu0 0
      %863 = vmatprep.subr.bf16.mxu0 0
      %864 = vmatpush1.bf16.xpose.msra.mxu0 0
      %865 = vmatprep.subr.bf16.mxu0 0
      %866 = vmatpush1.bf16.xpose.msra.mxu0 0
      %867 = vmatprep.subr.bf16.mxu0 0
      %868 = vmatpush1.bf16.xpose.msra.mxu0 0
      %869 = vmatprep.mubr.bf16.mxu0 0
      %870 = vmatmul.mubr.bf16.gmra.mrb[0].mxu0 %v832
      %v871 = vpop.f32.mrb[0].mxu0
      %v872 = vadd.f32 0.0, %v871
      %v873 = vpop.f32.mrb[0].mxu0
      %v874 = vpop.f32.mrb[0].mxu0
      %v875 = vpop.f32.mrb[0].mxu0
      %876 = vdwg.mxu0
      %878 = vrot.lane.b32.xlu0 %v724, 112
      %v879 = vpop.permute.xlu0 %878
      %v881 = vsel %vm732, %v724, 0
      %v884 = vsel %vm732, %v879, 0
      %886 = vmatprep.subr.bf16.mxu0 0
      %887 = vmatpush1.bf16.xpose.msra.mxu0 %v884
      %888 = vmatprep.subr.bf16.mxu0 0
      %889 = vmatpush1.bf16.xpose.msra.mxu0 0
      %890 = vmatprep.subr.bf16.mxu0 0
      %891 = vmatpush1.bf16.xpose.msra.mxu0 0
      %892 = vmatprep.subr.bf16.mxu0 0
      %893 = vmatpush1.bf16.xpose.msra.mxu0 0
      %894 = vmatprep.subr.bf16.mxu0 0
      %895 = vmatpush1.bf16.xpose.msra.mxu0 0
      %896 = vmatprep.subr.bf16.mxu0 0
      %897 = vmatpush1.bf16.xpose.msra.mxu0 0
      %898 = vmatprep.subr.bf16.mxu0 0
      %899 = vmatpush1.bf16.xpose.msra.mxu0 0
      %900 = vmatprep.subr.bf16.mxu0 0
      %901 = vmatpush1.bf16.xpose.msra.mxu0 0
      %902 = vmatprep.subr.bf16.mxu0 0
      %903 = vmatpush1.bf16.xpose.msra.mxu0 0
      %904 = vmatprep.subr.bf16.mxu0 0
      %905 = vmatpush1.bf16.xpose.msra.mxu0 0
      %906 = vmatprep.subr.bf16.mxu0 0
      %907 = vmatpush1.bf16.xpose.msra.mxu0 0
      %908 = vmatprep.subr.bf16.mxu0 0
      %909 = vmatpush1.bf16.xpose.msra.mxu0 0
      %910 = vmatprep.subr.bf16.mxu0 0
      %911 = vmatpush1.bf16.xpose.msra.mxu0 0
      %912 = vmatprep.subr.bf16.mxu0 0
      %913 = vmatpush1.bf16.xpose.msra.mxu0 0
      %914 = vmatprep.subr.bf16.mxu0 0
      %915 = vmatpush1.bf16.xpose.msra.mxu0 0
      %916 = vmatprep.subr.bf16.mxu0 0
      %917 = vmatpush1.bf16.xpose.msra.mxu0 0
      %918 = vmatprep.mubr.bf16.mxu0 0
      %919 = vmatmul.mubr.bf16.gmra.mrb[0].mxu0 %v881
      %v920 = vpop.f32.mrb[0].mxu0
      %v921 = vadd.f32 0.0, %v920
      %v922 = vpop.f32.mrb[0].mxu0
      %v923 = vpop.f32.mrb[0].mxu0
      %v924 = vpop.f32.mrb[0].mxu0
      %925 = vdwg.mxu0
      %927 = vrot.lane.b32.xlu0 %v725, 112
      %v928 = vpop.permute.xlu0 %927
      %v930 = vsel %vm732, %v725, 0
      %v933 = vsel %vm732, %v928, 0
      %935 = vmatprep.subr.bf16.mxu0 0
      %936 = vmatpush1.bf16.xpose.msra.mxu0 %v933
      %937 = vmatprep.subr.bf16.mxu0 0
      %938 = vmatpush1.bf16.xpose.msra.mxu0 0
      %939 = vmatprep.subr.bf16.mxu0 0
      %940 = vmatpush1.bf16.xpose.msra.mxu0 0
      %941 = vmatprep.subr.bf16.mxu0 0
      %942 = vmatpush1.bf16.xpose.msra.mxu0 0
      %943 = vmatprep.subr.bf16.mxu0 0
      %944 = vmatpush1.bf16.xpose.msra.mxu0 0
      %945 = vmatprep.subr.bf16.mxu0 0
      %946 = vmatpush1.bf16.xpose.msra.mxu0 0
      %947 = vmatprep.subr.bf16.mxu0 0
      %948 = vmatpush1.bf16.xpose.msra.mxu0 0
      %949 = vmatprep.subr.bf16.mxu0 0
      %950 = vmatpush1.bf16.xpose.msra.mxu0 0
      %951 = vmatprep.subr.bf16.mxu0 0
      %952 = vmatpush1.bf16.xpose.msra.mxu0 0
      %953 = vmatprep.subr.bf16.mxu0 0
      %954 = vmatpush1.bf16.xpose.msra.mxu0 0
      %955 = vmatprep.subr.bf16.mxu0 0
      %956 = vmatpush1.bf16.xpose.msra.mxu0 0
      %957 = vmatprep.subr.bf16.mxu0 0
      %958 = vmatpush1.bf16.xpose.msra.mxu0 0
      %959 = vmatprep.subr.bf16.mxu0 0
      %960 = vmatpush1.bf16.xpose.msra.mxu0 0
      %961 = vmatprep.subr.bf16.mxu0 0
      %962 = vmatpush1.bf16.xpose.msra.mxu0 0
      %963 = vmatprep.subr.bf16.mxu0 0
      %964 = vmatpush1.bf16.xpose.msra.mxu0 0
      %965 = vmatprep.subr.bf16.mxu0 0
      %966 = vmatpush1.bf16.xpose.msra.mxu0 0
      %967 = vmatprep.mubr.bf16.mxu0 0
      %968 = vmatmul.mubr.bf16.gmra.mrb[0].mxu0 %v930
      %v969 = vpop.f32.mrb[0].mxu0
      %v970 = vadd.f32 0.0, %v969
      %v971 = vpop.f32.mrb[0].mxu0
      %v972 = vpop.f32.mrb[0].mxu0
      %v973 = vpop.f32.mrb[0].mxu0
      %974 = vdwg.mxu0
      %976 = vrot.lane.b32.xlu0 %v726, 112
      %v977 = vpop.permute.xlu0 %976
      %v979 = vsel %vm732, %v726, 0
      %v982 = vsel %vm732, %v977, 0
      %984 = vmatprep.subr.bf16.mxu0 0
      %985 = vmatpush1.bf16.xpose.msra.mxu0 %v982
      %986 = vmatprep.subr.bf16.mxu0 0
      %987 = vmatpush1.bf16.xpose.msra.mxu0 0
      %988 = vmatprep.subr.bf16.mxu0 0
      %989 = vmatpush1.bf16.xpose.msra.mxu0 0
      %990 = vmatprep.subr.bf16.mxu0 0
      %991 = vmatpush1.bf16.xpose.msra.mxu0 0
      %992 = vmatprep.subr.bf16.mxu0 0
      %993 = vmatpush1.bf16.xpose.msra.mxu0 0
      %994 = vmatprep.subr.bf16.mxu0 0
      %995 = vmatpush1.bf16.xpose.msra.mxu0 0
      %996 = vmatprep.subr.bf16.mxu0 0
      %997 = vmatpush1.bf16.xpose.msra.mxu0 0
      %998 = vmatprep.subr.bf16.mxu0 0
      %999 = vmatpush1.bf16.xpose.msra.mxu0 0
      %1000 = vmatprep.subr.bf16.mxu0 0
      %1001 = vmatpush1.bf16.xpose.msra.mxu0 0
      %1002 = vmatprep.subr.bf16.mxu0 0
      %1003 = vmatpush1.bf16.xpose.msra.mxu0 0
      %1004 = vmatprep.subr.bf16.mxu0 0
      %1005 = vmatpush1.bf16.xpose.msra.mxu0 0
      %1006 = vmatprep.subr.bf16.mxu0 0
      %1007 = vmatpush1.bf16.xpose.msra.mxu0 0
      %1008 = vmatprep.subr.bf16.mxu0 0
      %1009 = vmatpush1.bf16.xpose.msra.mxu0 0
      %1010 = vmatprep.subr.bf16.mxu0 0
      %1011 = vmatpush1.bf16.xpose.msra.mxu0 0
      %1012 = vmatprep.subr.bf16.mxu0 0
      %1013 = vmatpush1.bf16.xpose.msra.mxu0 0
      %1014 = vmatprep.subr.bf16.mxu0 0
      %1015 = vmatpush1.bf16.xpose.msra.mxu0 0
      %1016 = vmatprep.mubr.bf16.mxu0 0
      %1017 = vmatmul.mubr.bf16.gmra.mrb[0].mxu0 %v979
      %v1018 = vpop.f32.mrb[0].mxu0
      %v1019 = vadd.f32 0.0, %v1018
      %v1020 = vpop.f32.mrb[0].mxu0
      %v1021 = vpop.f32.mrb[0].mxu0
      %v1022 = vpop.f32.mrb[0].mxu0
      %1023 = vdwg.mxu0
      %1025 = vrot.lane.b32.xlu0 %v727, 112
      %v1026 = vpop.permute.xlu0 %1025
      %v1028 = vsel %vm732, %v727, 0
      %v1031 = vsel %vm732, %v1026, 0
      %1033 = vmatprep.subr.bf16.mxu0 0
      %1034 = vmatpush1.bf16.xpose.msra.mxu0 %v1031
      %1035 = vmatprep.subr.bf16.mxu0 0
      %1036 = vmatpush1.bf16.xpose.msra.mxu0 0
      %1037 = vmatprep.subr.bf16.mxu0 0
      %1038 = vmatpush1.bf16.xpose.msra.mxu0 0
      %1039 = vmatprep.subr.bf16.mxu0 0
      %1040 = vmatpush1.bf16.xpose.msra.mxu0 0
      %1041 = vmatprep.subr.bf16.mxu0 0
      %1042 = vmatpush1.bf16.xpose.msra.mxu0 0
      %1043 = vmatprep.subr.bf16.mxu0 0
      %1044 = vmatpush1.bf16.xpose.msra.mxu0 0
      %1045 = vmatprep.subr.bf16.mxu0 0
      %1046 = vmatpush1.bf16.xpose.msra.mxu0 0
      %1047 = vmatprep.subr.bf16.mxu0 0
      %1048 = vmatpush1.bf16.xpose.msra.mxu0 0
      %1049 = vmatprep.subr.bf16.mxu0 0
      %1050 = vmatpush1.bf16.xpose.msra.mxu0 0
      %1051 = vmatprep.subr.bf16.mxu0 0
      %1052 = vmatpush1.bf16.xpose.msra.mxu0 0
      %1053 = vmatprep.subr.bf16.mxu0 0
      %1054 = vmatpush1.bf16.xpose.msra.mxu0 0
      %1055 = vmatprep.subr.bf16.mxu0 0
      %1056 = vmatpush1.bf16.xpose.msra.mxu0 0
      %1057 = vmatprep.subr.bf16.mxu0 0
      %1058 = vmatpush1.bf16.xpose.msra.mxu0 0
      %1059 = vmatprep.subr.bf16.mxu0 0
      %1060 = vmatpush1.bf16.xpose.msra.mxu0 0
      %1061 = vmatprep.subr.bf16.mxu0 0
      %1062 = vmatpush1.bf16.xpose.msra.mxu0 0
      %1063 = vmatprep.subr.bf16.mxu0 0
      %1064 = vmatpush1.bf16.xpose.msra.mxu0 0
      %1065 = vmatprep.mubr.bf16.mxu0 0
      %1066 = vmatmul.mubr.bf16.gmra.mrb[0].mxu0 %v1028
      %v1067 = vpop.f32.mrb[0].mxu0
      %v1068 = vadd.f32 0.0, %v1067
      %v1069 = vpop.f32.mrb[0].mxu0
      %v1070 = vpop.f32.mrb[0].mxu0
      %v1071 = vpop.f32.mrb[0].mxu0
      %1072 = vdwg.mxu0
      %1074 = vrot.lane.b32.xlu0 %v728, 112
      %v1075 = vpop.permute.xlu0 %1074
      %v1077 = vsel %vm732, %v728, 0
      %v1080 = vsel %vm732, %v1075, 0
      %1082 = vmatprep.subr.bf16.mxu0 0
      %1083 = vmatpush1.bf16.xpose.msra.mxu0 %v1080
      %1084 = vmatprep.subr.bf16.mxu0 0
      %1085 = vmatpush1.bf16.xpose.msra.mxu0 0
      %1086 = vmatprep.subr.bf16.mxu0 0
      %1087 = vmatpush1.bf16.xpose.msra.mxu0 0
      %1088 = vmatprep.subr.bf16.mxu0 0
      %1089 = vmatpush1.bf16.xpose.msra.mxu0 0
      %1090 = vmatprep.subr.bf16.mxu0 0
      %1091 = vmatpush1.bf16.xpose.msra.mxu0 0
      %1092 = vmatprep.subr.bf16.mxu0 0
      %1093 = vmatpush1.bf16.xpose.msra.mxu0 0
      %1094 = vmatprep.subr.bf16.mxu0 0
      %1095 = vmatpush1.bf16.xpose.msra.mxu0 0
      %1096 = vmatprep.subr.bf16.mxu0 0
      %1097 = vmatpush1.bf16.xpose.msra.mxu0 0
      %1098 = vmatprep.subr.bf16.mxu0 0
      %1099 = vmatpush1.bf16.xpose.msra.mxu0 0
      %1100 = vmatprep.subr.bf16.mxu0 0
      %1101 = vmatpush1.bf16.xpose.msra.mxu0 0
      %1102 = vmatprep.subr.bf16.mxu0 0
      %1103 = vmatpush1.bf16.xpose.msra.mxu0 0
      %1104 = vmatprep.subr.bf16.mxu0 0
      %1105 = vmatpush1.bf16.xpose.msra.mxu0 0
      %1106 = vmatprep.subr.bf16.mxu0 0
      %1107 = vmatpush1.bf16.xpose.msra.mxu0 0
      %1108 = vmatprep.subr.bf16.mxu0 0
      %1109 = vmatpush1.bf16.xpose.msra.mxu0 0
      %1110 = vmatprep.subr.bf16.mxu0 0
      %1111 = vmatpush1.bf16.xpose.msra.mxu0 0
      %1112 = vmatprep.subr.bf16.mxu0 0
      %1113 = vmatpush1.bf16.xpose.msra.mxu0 0
      %1114 = vmatprep.mubr.bf16.mxu0 0
      %1115 = vmatmul.mubr.bf16.gmra.mrb[0].mxu0 %v1077
      %v1116 = vpop.f32.mrb[0].mxu0
      %v1117 = vadd.f32 0.0, %v1116
      %v1118 = vpop.f32.mrb[0].mxu0
      %v1119 = vpop.f32.mrb[0].mxu0
      %v1120 = vpop.f32.mrb[0].mxu0
      %1121 = vdwg.mxu0
      %v1122 = vmul.f32 %v774, 0.5
      %v1123 = vmul.f32 %v823, 0.5
      %v1124 = vmul.f32 %v872, 0.5
      %v1125 = vmul.f32 %v921, 0.5
      %v1126 = vmul.f32 %v970, 0.5
      %v1127 = vmul.f32 %v1019, 0.5
      %v1128 = vmul.f32 %v1068, 0.5
      %v1129 = vmul.f32 %v1117, 0.5
      %vm1130 = vcmask 64512
      %v1131 = vsel %vm1130, %v1122, -inf
      %1132 = vmax.xlane.f32.xlu0 %v1131
      %v1133 = vpop.xlane.xlu0 %1132
      %v1134 = vsel %vm1130, %v1123, -inf
      %1135 = vmax.xlane.f32.xlu0 %v1134
      %v1136 = vpop.xlane.xlu0 %1135
      %v1137 = vsel %vm1130, %v1124, -inf
      %1138 = vmax.xlane.f32.xlu0 %v1137
      %v1139 = vpop.xlane.xlu0 %1138
      %v1140 = vsel %vm1130, %v1125, -inf
      %1141 = vmax.xlane.f32.xlu0 %v1140
      %v1142 = vpop.xlane.xlu0 %1141
      %v1143 = vsel %vm1130, %v1126, -inf
      %1144 = vmax.xlane.f32.xlu0 %v1143
      %v1145 = vpop.xlane.xlu0 %1144
      %v1146 = vsel %vm1130, %v1127, -inf
      %1147 = vmax.xlane.f32.xlu0 %v1146
      %v1148 = vpop.xlane.xlu0 %1147
      %v1149 = vsel %vm1130, %v1128, -inf
      %1150 = vmax.xlane.f32.xlu0 %v1149
      %v1151 = vpop.xlane.xlu0 %1150
      %v1152 = vsel %vm1130, %v1129, -inf
      %1153 = vmax.xlane.f32.xlu0 %v1152
      %v1154 = vpop.xlane.xlu0 %1153
      %v1155 = vsub.f32 %v1122, %v1133
      %v1156 = vsub.f32 %v1123, %v1136
      %v1157 = vsub.f32 %v1124, %v1139
      %v1158 = vsub.f32 %v1125, %v1142
      %v1159 = vsub.f32 %v1126, %v1145
      %v1160 = vsub.f32 %v1127, %v1148
      %v1161 = vsub.f32 %v1128, %v1151
      %v1162 = vsub.f32 %v1129, %v1154
      %v1163 = vmul.f32 %v1155, 1.442695
      %v1164 = vpow.pop %v1163
      %v1165 = vmul.f32 %v1156, 1.442695
      %v1166 = vpow.pop %v1165
      %v1167 = vmul.f32 %v1157, 1.442695
      %v1168 = vpow.pop %v1167
      %v1169 = vmul.f32 %v1158, 1.442695
      %v1170 = vpow.pop %v1169
      %v1171 = vmul.f32 %v1159, 1.442695
      %v1172 = vpow.pop %v1171
      %v1173 = vmul.f32 %v1160, 1.442695
      %v1174 = vpow.pop %v1173
      %v1175 = vmul.f32 %v1161, 1.442695
      %v1176 = vpow.pop %v1175
      %v1177 = vmul.f32 %v1162, 1.442695
      %v1178 = vpow.pop %v1177
      %v1179 = vsel %vm1130, %v1164, 0.0
      %1180 = vadd.xlane.f32.xlu0 %v1179
      %v1181 = vpop.xlane.xlu0 %1180
      %v1182 = vsel %vm1130, %v1166, 0.0
      %1183 = vadd.xlane.f32.xlu0 %v1182
      %v1184 = vpop.xlane.xlu0 %1183
      %v1185 = vsel %vm1130, %v1168, 0.0
      %1186 = vadd.xlane.f32.xlu0 %v1185
      %v1187 = vpop.xlane.xlu0 %1186
      %v1188 = vsel %vm1130, %v1170, 0.0
      %1189 = vadd.xlane.f32.xlu0 %v1188
      %v1190 = vpop.xlane.xlu0 %1189
      %v1191 = vsel %vm1130, %v1172, 0.0
      %1192 = vadd.xlane.f32.xlu0 %v1191
      %v1193 = vpop.xlane.xlu0 %1192
      %v1194 = vsel %vm1130, %v1174, 0.0
      %1195 = vadd.xlane.f32.xlu0 %v1194
      %v1196 = vpop.xlane.xlu0 %1195
      %v1197 = vsel %vm1130, %v1176, 0.0
      %1198 = vadd.xlane.f32.xlu0 %v1197
      %v1199 = vpop.xlane.xlu0 %1198
      %v1200 = vsel %vm1130, %v1178, 0.0
      %1201 = vadd.xlane.f32.xlu0 %v1200
      %v1202 = vpop.xlane.xlu0 %1201
      %v1203 = vrcp.pop %v1181
      %v1204 = vmul.f32 %v1164, %v1203
      %v1205 = vrcp.pop %v1184
      %v1206 = vmul.f32 %v1166, %v1205
      %v1207 = vrcp.pop %v1187
      %v1208 = vmul.f32 %v1168, %v1207
      %v1209 = vrcp.pop %v1190
      %v1210 = vmul.f32 %v1170, %v1209
      %v1211 = vrcp.pop %v1193
      %v1212 = vmul.f32 %v1172, %v1211
      %v1213 = vrcp.pop %v1196
      %v1214 = vmul.f32 %v1174, %v1213
      %v1215 = vrcp.pop %v1199
      %v1216 = vmul.f32 %v1176, %v1215
      %v1217 = vrcp.pop %v1202
      %v1218 = vmul.f32 %v1178, %v1217
      %v1219 = vpack.c.bf16 %v1204, %v1204
      %v1220 = vpack.c.bf16 %v1206, %v1206
      %v1221 = vpack.c.bf16 %v1208, %v1208
      %v1222 = vpack.c.bf16 %v1210, %v1210
      %v1223 = vpack.c.bf16 %v1212, %v1212
      %v1224 = vpack.c.bf16 %v1214, %v1214
      %v1225 = vpack.c.bf16 %v1216, %v1216
      %v1226 = vpack.c.bf16 %v1218, %v1218
      %1227 = vrot.lane.b32.xlu0 %v721, 96
      %v1228 = vpop.permute.xlu0 %1227
      %v1230 = vsel %vm1130, %v1219, 0
      %vm1232 = vcmask 1043456
      %v1234 = vsel %vm1232, %v1228, 0
      %1236 = vmatprep.subr.bf16.mxu0 0
      %1237 = vmatpush1.bf16.msra.mxu0 %v1234
      %1238 = vmatprep.subr.bf16.mxu0 0
      %1239 = vmatpush1.bf16.msra.mxu0 0
      %1240 = vmatprep.subr.bf16.mxu0 0
      %1241 = vmatpush1.bf16.msra.mxu0 0
      %1242 = vmatprep.subr.bf16.mxu0 0
      %1243 = vmatpush1.bf16.msra.mxu0 0
      %1244 = vmatprep.subr.bf16.mxu0 0
      %1245 = vmatpush1.bf16.msra.mxu0 0
      %1246 = vmatprep.subr.bf16.mxu0 0
      %1247 = vmatpush1.bf16.msra.mxu0 0
      %1248 = vmatprep.subr.bf16.mxu0 0
      %1249 = vmatpush1.bf16.msra.mxu0 0
      %1250 = vmatprep.subr.bf16.mxu0 0
      %1251 = vmatpush1.bf16.msra.mxu0 0
      %1252 = vmatprep.subr.bf16.mxu0 0
      %1253 = vmatpush1.bf16.msra.mxu0 0
      %1254 = vmatprep.subr.bf16.mxu0 0
      %1255 = vmatpush1.bf16.msra.mxu0 0
      %1256 = vmatprep.subr.bf16.mxu0 0
      %1257 = vmatpush1.bf16.msra.mxu0 0
      %1258 = vmatprep.subr.bf16.mxu0 0
      %1259 = vmatpush1.bf16.msra.mxu0 0
      %1260 = vmatprep.subr.bf16.mxu0 0
      %1261 = vmatpush1.bf16.msra.mxu0 0
      %1262 = vmatprep.subr.bf16.mxu0 0
      %1263 = vmatpush1.bf16.msra.mxu0 0
      %1264 = vmatprep.subr.bf16.mxu0 0
      %1265 = vmatpush1.bf16.msra.mxu0 0
      %1266 = vmatprep.subr.bf16.mxu0 0
      %1267 = vmatpush1.bf16.msra.mxu0 0
      %1268 = vmatprep.mubr.bf16.mxu0 0
      %1269 = vmatmul.mubr.bf16.gmra.mrb[0].mxu0 %v1230
      %v1270 = vpop.f32.mrb[0].mxu0
      %v1271 = vadd.f32 0.0, %v1270
      %v1272 = vpop.f32.mrb[0].mxu0
      %v1273 = vpop.f32.mrb[0].mxu0
      %v1274 = vpop.f32.mrb[0].mxu0
      %1275 = vdwg.mxu0
      %1276 = vrot.lane.b32.xlu0 %v722, 96
      %v1277 = vpop.permute.xlu0 %1276
      %v1279 = vsel %vm1130, %v1220, 0
      %v1282 = vsel %vm1232, %v1277, 0
      %1284 = vmatprep.subr.bf16.mxu0 0
      %1285 = vmatpush1.bf16.msra.mxu0 %v1282
      %1286 = vmatprep.subr.bf16.mxu0 0
      %1287 = vmatpush1.bf16.msra.mxu0 0
      %1288 = vmatprep.subr.bf16.mxu0 0
      %1289 = vmatpush1.bf16.msra.mxu0 0
      %1290 = vmatprep.subr.bf16.mxu0 0
      %1291 = vmatpush1.bf16.msra.mxu0 0
      %1292 = vmatprep.subr.bf16.mxu0 0
      %1293 = vmatpush1.bf16.msra.mxu0 0
      %1294 = vmatprep.subr.bf16.mxu0 0
      %1295 = vmatpush1.bf16.msra.mxu0 0
      %1296 = vmatprep.subr.bf16.mxu0 0
      %1297 = vmatpush1.bf16.msra.mxu0 0
      %1298 = vmatprep.subr.bf16.mxu0 0
      %1299 = vmatpush1.bf16.msra.mxu0 0
      %1300 = vmatprep.subr.bf16.mxu0 0
      %1301 = vmatpush1.bf16.msra.mxu0 0
      %1302 = vmatprep.subr.bf16.mxu0 0
      %1303 = vmatpush1.bf16.msra.mxu0 0
      %1304 = vmatprep.subr.bf16.mxu0 0
      %1305 = vmatpush1.bf16.msra.mxu0 0
      %1306 = vmatprep.subr.bf16.mxu0 0
      %1307 = vmatpush1.bf16.msra.mxu0 0
      %1308 = vmatprep.subr.bf16.mxu0 0
      %1309 = vmatpush1.bf16.msra.mxu0 0
      %1310 = vmatprep.subr.bf16.mxu0 0
      %1311 = vmatpush1.bf16.msra.mxu0 0
      %1312 = vmatprep.subr.bf16.mxu0 0
      %1313 = vmatpush1.bf16.msra.mxu0 0
      %1314 = vmatprep.subr.bf16.mxu0 0
      %1315 = vmatpush1.bf16.msra.mxu0 0
      %1316 = vmatprep.mubr.bf16.mxu0 0
      %1317 = vmatmul.mubr.bf16.gmra.mrb[0].mxu0 %v1279
      %v1318 = vpop.f32.mrb[0].mxu0
      %v1319 = vadd.f32 0.0, %v1318
      %v1320 = vpop.f32.mrb[0].mxu0
      %v1321 = vpop.f32.mrb[0].mxu0
      %v1322 = vpop.f32.mrb[0].mxu0
      %1323 = vdwg.mxu0
      %1324 = vrot.lane.b32.xlu0 %v723, 96
      %v1325 = vpop.permute.xlu0 %1324
      %v1327 = vsel %vm1130, %v1221, 0
      %v1330 = vsel %vm1232, %v1325, 0
      %1332 = vmatprep.subr.bf16.mxu0 0
      %1333 = vmatpush1.bf16.msra.mxu0 %v1330
      %1334 = vmatprep.subr.bf16.mxu0 0
      %1335 = vmatpush1.bf16.msra.mxu0 0
      %1336 = vmatprep.subr.bf16.mxu0 0
      %1337 = vmatpush1.bf16.msra.mxu0 0
      %1338 = vmatprep.subr.bf16.mxu0 0
      %1339 = vmatpush1.bf16.msra.mxu0 0
      %1340 = vmatprep.subr.bf16.mxu0 0
      %1341 = vmatpush1.bf16.msra.mxu0 0
      %1342 = vmatprep.subr.bf16.mxu0 0
      %1343 = vmatpush1.bf16.msra.mxu0 0
      %1344 = vmatprep.subr.bf16.mxu0 0
      %1345 = vmatpush1.bf16.msra.mxu0 0
      %1346 = vmatprep.subr.bf16.mxu0 0
      %1347 = vmatpush1.bf16.msra.mxu0 0
      %1348 = vmatprep.subr.bf16.mxu0 0
      %1349 = vmatpush1.bf16.msra.mxu0 0
      %1350 = vmatprep.subr.bf16.mxu0 0
      %1351 = vmatpush1.bf16.msra.mxu0 0
      %1352 = vmatprep.subr.bf16.mxu0 0
      %1353 = vmatpush1.bf16.msra.mxu0 0
      %1354 = vmatprep.subr.bf16.mxu0 0
      %1355 = vmatpush1.bf16.msra.mxu0 0
      %1356 = vmatprep.subr.bf16.mxu0 0
      %1357 = vmatpush1.bf16.msra.mxu0 0
      %1358 = vmatprep.subr.bf16.mxu0 0
      %1359 = vmatpush1.bf16.msra.mxu0 0
      %1360 = vmatprep.subr.bf16.mxu0 0
      %1361 = vmatpush1.bf16.msra.mxu0 0
      %1362 = vmatprep.subr.bf16.mxu0 0
      %1363 = vmatpush1.bf16.msra.mxu0 0
      %1364 = vmatprep.mubr.bf16.mxu0 0
      %1365 = vmatmul.mubr.bf16.gmra.mrb[0].mxu0 %v1327
      %v1366 = vpop.f32.mrb[0].mxu0
      %v1367 = vadd.f32 0.0, %v1366
      %v1368 = vpop.f32.mrb[0].mxu0
      %v1369 = vpop.f32.mrb[0].mxu0
      %v1370 = vpop.f32.mrb[0].mxu0
      %1371 = vdwg.mxu0
      %1372 = vrot.lane.b32.xlu0 %v724, 96
      %v1373 = vpop.permute.xlu0 %1372
      %v1375 = vsel %vm1130, %v1222, 0
      %v1378 = vsel %vm1232, %v1373, 0
      %1380 = vmatprep.subr.bf16.mxu0 0
      %1381 = vmatpush1.bf16.msra.mxu0 %v1378
      %1382 = vmatprep.subr.bf16.mxu0 0
      %1383 = vmatpush1.bf16.msra.mxu0 0
      %1384 = vmatprep.subr.bf16.mxu0 0
      %1385 = vmatpush1.bf16.msra.mxu0 0
      %1386 = vmatprep.subr.bf16.mxu0 0
      %1387 = vmatpush1.bf16.msra.mxu0 0
      %1388 = vmatprep.subr.bf16.mxu0 0
      %1389 = vmatpush1.bf16.msra.mxu0 0
      %1390 = vmatprep.subr.bf16.mxu0 0
      %1391 = vmatpush1.bf16.msra.mxu0 0
      %1392 = vmatprep.subr.bf16.mxu0 0
      %1393 = vmatpush1.bf16.msra.mxu0 0
      %1394 = vmatprep.subr.bf16.mxu0 0
      %1395 = vmatpush1.bf16.msra.mxu0 0
      %1396 = vmatprep.subr.bf16.mxu0 0
      %1397 = vmatpush1.bf16.msra.mxu0 0
      %1398 = vmatprep.subr.bf16.mxu0 0
      %1399 = vmatpush1.bf16.msra.mxu0 0
      %1400 = vmatprep.subr.bf16.mxu0 0
      %1401 = vmatpush1.bf16.msra.mxu0 0
      %1402 = vmatprep.subr.bf16.mxu0 0
      %1403 = vmatpush1.bf16.msra.mxu0 0
      %1404 = vmatprep.subr.bf16.mxu0 0
      %1405 = vmatpush1.bf16.msra.mxu0 0
      %1406 = vmatprep.subr.bf16.mxu0 0
      %1407 = vmatpush1.bf16.msra.mxu0 0
      %1408 = vmatprep.subr.bf16.mxu0 0
      %1409 = vmatpush1.bf16.msra.mxu0 0
      %1410 = vmatprep.subr.bf16.mxu0 0
      %1411 = vmatpush1.bf16.msra.mxu0 0
      %1412 = vmatprep.mubr.bf16.mxu0 0
      %1413 = vmatmul.mubr.bf16.gmra.mrb[0].mxu0 %v1375
      %v1414 = vpop.f32.mrb[0].mxu0
      %v1415 = vadd.f32 0.0, %v1414
      %v1416 = vpop.f32.mrb[0].mxu0
      %v1417 = vpop.f32.mrb[0].mxu0
      %v1418 = vpop.f32.mrb[0].mxu0
      %1419 = vdwg.mxu0
      %1420 = vrot.lane.b32.xlu0 %v725, 96
      %v1421 = vpop.permute.xlu0 %1420
      %v1423 = vsel %vm1130, %v1223, 0
      %v1426 = vsel %vm1232, %v1421, 0
      %1428 = vmatprep.subr.bf16.mxu0 0
      %1429 = vmatpush1.bf16.msra.mxu0 %v1426
      %1430 = vmatprep.subr.bf16.mxu0 0
      %1431 = vmatpush1.bf16.msra.mxu0 0
      %1432 = vmatprep.subr.bf16.mxu0 0
      %1433 = vmatpush1.bf16.msra.mxu0 0
      %1434 = vmatprep.subr.bf16.mxu0 0
      %1435 = vmatpush1.bf16.msra.mxu0 0
      %1436 = vmatprep.subr.bf16.mxu0 0
      %1437 = vmatpush1.bf16.msra.mxu0 0
      %1438 = vmatprep.subr.bf16.mxu0 0
      %1439 = vmatpush1.bf16.msra.mxu0 0
      %1440 = vmatprep.subr.bf16.mxu0 0
      %1441 = vmatpush1.bf16.msra.mxu0 0
      %1442 = vmatprep.subr.bf16.mxu0 0
      %1443 = vmatpush1.bf16.msra.mxu0 0
      %1444 = vmatprep.subr.bf16.mxu0 0
      %1445 = vmatpush1.bf16.msra.mxu0 0
      %1446 = vmatprep.subr.bf16.mxu0 0
      %1447 = vmatpush1.bf16.msra.mxu0 0
      %1448 = vmatprep.subr.bf16.mxu0 0
      %1449 = vmatpush1.bf16.msra.mxu0 0
      %1450 = vmatprep.subr.bf16.mxu0 0
      %1451 = vmatpush1.bf16.msra.mxu0 0
      %1452 = vmatprep.subr.bf16.mxu0 0
      %1453 = vmatpush1.bf16.msra.mxu0 0
      %1454 = vmatprep.subr.bf16.mxu0 0
      %1455 = vmatpush1.bf16.msra.mxu0 0
      %1456 = vmatprep.subr.bf16.mxu0 0
      %1457 = vmatpush1.bf16.msra.mxu0 0
      %1458 = vmatprep.subr.bf16.mxu0 0
      %1459 = vmatpush1.bf16.msra.mxu0 0
      %1460 = vmatprep.mubr.bf16.mxu0 0
      %1461 = vmatmul.mubr.bf16.gmra.mrb[0].mxu0 %v1423
      %v1462 = vpop.f32.mrb[0].mxu0
      %v1463 = vadd.f32 0.0, %v1462
      %v1464 = vpop.f32.mrb[0].mxu0
      %v1465 = vpop.f32.mrb[0].mxu0
      %v1466 = vpop.f32.mrb[0].mxu0
      %1467 = vdwg.mxu0
      %1468 = vrot.lane.b32.xlu0 %v726, 96
      %v1469 = vpop.permute.xlu0 %1468
      %v1471 = vsel %vm1130, %v1224, 0
      %v1474 = vsel %vm1232, %v1469, 0
      %1476 = vmatprep.subr.bf16.mxu0 0
      %1477 = vmatpush1.bf16.msra.mxu0 %v1474
      %1478 = vmatprep.subr.bf16.mxu0 0
      %1479 = vmatpush1.bf16.msra.mxu0 0
      %1480 = vmatprep.subr.bf16.mxu0 0
      %1481 = vmatpush1.bf16.msra.mxu0 0
      %1482 = vmatprep.subr.bf16.mxu0 0
      %1483 = vmatpush1.bf16.msra.mxu0 0
      %1484 = vmatprep.subr.bf16.mxu0 0
      %1485 = vmatpush1.bf16.msra.mxu0 0
      %1486 = vmatprep.subr.bf16.mxu0 0
      %1487 = vmatpush1.bf16.msra.mxu0 0
      %1488 = vmatprep.subr.bf16.mxu0 0
      %1489 = vmatpush1.bf16.msra.mxu0 0
      %1490 = vmatprep.subr.bf16.mxu0 0
      %1491 = vmatpush1.bf16.msra.mxu0 0
      %1492 = vmatprep.subr.bf16.mxu0 0
      %1493 = vmatpush1.bf16.msra.mxu0 0
      %1494 = vmatprep.subr.bf16.mxu0 0
      %1495 = vmatpush1.bf16.msra.mxu0 0
      %1496 = vmatprep.subr.bf16.mxu0 0
      %1497 = vmatpush1.bf16.msra.mxu0 0
      %1498 = vmatprep.subr.bf16.mxu0 0
      %1499 = vmatpush1.bf16.msra.mxu0 0
      %1500 = vmatprep.subr.bf16.mxu0 0
      %1501 = vmatpush1.bf16.msra.mxu0 0
      %1502 = vmatprep.subr.bf16.mxu0 0
      %1503 = vmatpush1.bf16.msra.mxu0 0
      %1504 = vmatprep.subr.bf16.mxu0 0
      %1505 = vmatpush1.bf16.msra.mxu0 0
      %1506 = vmatprep.subr.bf16.mxu0 0
      %1507 = vmatpush1.bf16.msra.mxu0 0
      %1508 = vmatprep.mubr.bf16.mxu0 0
      %1509 = vmatmul.mubr.bf16.gmra.mrb[0].mxu0 %v1471
      %v1510 = vpop.f32.mrb[0].mxu0
      %v1511 = vadd.f32 0.0, %v1510
      %v1512 = vpop.f32.mrb[0].mxu0
      %v1513 = vpop.f32.mrb[0].mxu0
      %v1514 = vpop.f32.mrb[0].mxu0
      %1515 = vdwg.mxu0
      %1516 = vrot.lane.b32.xlu0 %v727, 96
      %v1517 = vpop.permute.xlu0 %1516
      %v1519 = vsel %vm1130, %v1225, 0
      %v1522 = vsel %vm1232, %v1517, 0
      %1524 = vmatprep.subr.bf16.mxu0 0
      %1525 = vmatpush1.bf16.msra.mxu0 %v1522
      %1526 = vmatprep.subr.bf16.mxu0 0
      %1527 = vmatpush1.bf16.msra.mxu0 0
      %1528 = vmatprep.subr.bf16.mxu0 0
      %1529 = vmatpush1.bf16.msra.mxu0 0
      %1530 = vmatprep.subr.bf16.mxu0 0
      %1531 = vmatpush1.bf16.msra.mxu0 0
      %1532 = vmatprep.subr.bf16.mxu0 0
      %1533 = vmatpush1.bf16.msra.mxu0 0
      %1534 = vmatprep.subr.bf16.mxu0 0
      %1535 = vmatpush1.bf16.msra.mxu0 0
      %1536 = vmatprep.subr.bf16.mxu0 0
      %1537 = vmatpush1.bf16.msra.mxu0 0
      %1538 = vmatprep.subr.bf16.mxu0 0
      %1539 = vmatpush1.bf16.msra.mxu0 0
      %1540 = vmatprep.subr.bf16.mxu0 0
      %1541 = vmatpush1.bf16.msra.mxu0 0
      %1542 = vmatprep.subr.bf16.mxu0 0
      %1543 = vmatpush1.bf16.msra.mxu0 0
      %1544 = vmatprep.subr.bf16.mxu0 0
      %1545 = vmatpush1.bf16.msra.mxu0 0
      %1546 = vmatprep.subr.bf16.mxu0 0
      %1547 = vmatpush1.bf16.msra.mxu0 0
      %1548 = vmatprep.subr.bf16.mxu0 0
      %1549 = vmatpush1.bf16.msra.mxu0 0
      %1550 = vmatprep.subr.bf16.mxu0 0
      %1551 = vmatpush1.bf16.msra.mxu0 0
      %1552 = vmatprep.subr.bf16.mxu0 0
      %1553 = vmatpush1.bf16.msra.mxu0 0
      %1554 = vmatprep.subr.bf16.mxu0 0
      %1555 = vmatpush1.bf16.msra.mxu0 0
      %1556 = vmatprep.mubr.bf16.mxu0 0
      %1557 = vmatmul.mubr.bf16.gmra.mrb[0].mxu0 %v1519
      %v1558 = vpop.f32.mrb[0].mxu0
      %v1559 = vadd.f32 0.0, %v1558
      %v1560 = vpop.f32.mrb[0].mxu0
      %v1561 = vpop.f32.mrb[0].mxu0
      %v1562 = vpop.f32.mrb[0].mxu0
      %1563 = vdwg.mxu0
      %1564 = vrot.lane.b32.xlu0 %v728, 96
      %v1565 = vpop.permute.xlu0 %1564
      %v1567 = vsel %vm1130, %v1226, 0
      %v1570 = vsel %vm1232, %v1565, 0
      %1572 = vmatprep.subr.bf16.mxu0 0
      %1573 = vmatpush1.bf16.msra.mxu0 %v1570
      %1574 = vmatprep.subr.bf16.mxu0 0
      %1575 = vmatpush1.bf16.msra.mxu0 0
      %1576 = vmatprep.subr.bf16.mxu0 0
      %1577 = vmatpush1.bf16.msra.mxu0 0
      %1578 = vmatprep.subr.bf16.mxu0 0
      %1579 = vmatpush1.bf16.msra.mxu0 0
      %1580 = vmatprep.subr.bf16.mxu0 0
      %1581 = vmatpush1.bf16.msra.mxu0 0
      %1582 = vmatprep.subr.bf16.mxu0 0
      %1583 = vmatpush1.bf16.msra.mxu0 0
      %1584 = vmatprep.subr.bf16.mxu0 0
      %1585 = vmatpush1.bf16.msra.mxu0 0
      %1586 = vmatprep.subr.bf16.mxu0 0
      %1587 = vmatpush1.bf16.msra.mxu0 0
      %1588 = vmatprep.subr.bf16.mxu0 0
      %1589 = vmatpush1.bf16.msra.mxu0 0
      %1590 = vmatprep.subr.bf16.mxu0 0
      %1591 = vmatpush1.bf16.msra.mxu0 0
      %1592 = vmatprep.subr.bf16.mxu0 0
      %1593 = vmatpush1.bf16.msra.mxu0 0
      %1594 = vmatprep.subr.bf16.mxu0 0
      %1595 = vmatpush1.bf16.msra.mxu0 0
      %1596 = vmatprep.subr.bf16.mxu0 0
      %1597 = vmatpush1.bf16.msra.mxu0 0
      %1598 = vmatprep.subr.bf16.mxu0 0
      %1599 = vmatpush1.bf16.msra.mxu0 0
      %1600 = vmatprep.subr.bf16.mxu0 0
      %1601 = vmatpush1.bf16.msra.mxu0 0
      %1602 = vmatprep.subr.bf16.mxu0 0
      %1603 = vmatpush1.bf16.msra.mxu0 0
      %1604 = vmatprep.mubr.bf16.mxu0 0
      %1605 = vmatmul.mubr.bf16.gmra.mrb[0].mxu0 %v1567
      %v1606 = vpop.f32.mrb[0].mxu0
      %v1607 = vadd.f32 0.0, %v1606
      %v1608 = vpop.f32.mrb[0].mxu0
      %v1609 = vpop.f32.mrb[0].mxu0
      %v1610 = vpop.f32.mrb[0].mxu0
      %1611 = vdwg.mxu0
      %v1612 = vpack.c.bf16 %v1319, %v1271
      %v1613 = vpack.c.bf16 %v1415, %v1367
      %v1614 = vpack.c.bf16 %v1511, %v1463
      %v1615 = vpack.c.bf16 %v1607, %v1559
      %v1616 = vpack.c.bf16 %v613, %v613
      %1617 = vrot.lane.b32.xlu0 %v721, 124
      %v1618 = vpop.permute.xlu0 %1617
      %1619 = vrot.lane.b32.xlu0 %v721, 108
      %v1620 = vpop.permute.xlu0 %1619
      %v1622 = vsel %vm732, %v1618, 0
      %v1625 = vsel %vm732, %v1620, 0
      %1627 = vmatprep.subr.bf16.mxu0 0
      %1628 = vmatpush1.bf16.xpose.msra.mxu0 %v1625
      %1629 = vmatprep.subr.bf16.mxu0 0
      %1630 = vmatpush1.bf16.xpose.msra.mxu0 0
      %1631 = vmatprep.subr.bf16.mxu0 0
      %1632 = vmatpush1.bf16.xpose.msra.mxu0 0
      %1633 = vmatprep.subr.bf16.mxu0 0
      %1634 = vmatpush1.bf16.xpose.msra.mxu0 0
      %1635 = vmatprep.subr.bf16.mxu0 0
      %1636 = vmatpush1.bf16.xpose.msra.mxu0 0
      %1637 = vmatprep.subr.bf16.mxu0 0
      %1638 = vmatpush1.bf16.xpose.msra.mxu0 0
      %1639 = vmatprep.subr.bf16.mxu0 0
      %1640 = vmatpush1.bf16.xpose.msra.mxu0 0
      %1641 = vmatprep.subr.bf16.mxu0 0
      %1642 = vmatpush1.bf16.xpose.msra.mxu0 0
      %1643 = vmatprep.subr.bf16.mxu0 0
      %1644 = vmatpush1.bf16.xpose.msra.mxu0 0
      %1645 = vmatprep.subr.bf16.mxu0 0
      %1646 = vmatpush1.bf16.xpose.msra.mxu0 0
      %1647 = vmatprep.subr.bf16.mxu0 0
      %1648 = vmatpush1.bf16.xpose.msra.mxu0 0
      %1649 = vmatprep.subr.bf16.mxu0 0
      %1650 = vmatpush1.bf16.xpose.msra.mxu0 0
      %1651 = vmatprep.subr.bf16.mxu0 0
      %1652 = vmatpush1.bf16.xpose.msra.mxu0 0
      %1653 = vmatprep.subr.bf16.mxu0 0
      %1654 = vmatpush1.bf16.xpose.msra.mxu0 0
      %1655 = vmatprep.subr.bf16.mxu0 0
      %1656 = vmatpush1.bf16.xpose.msra.mxu0 0
      %1657 = vmatprep.subr.bf16.mxu0 0
      %1658 = vmatpush1.bf16.xpose.msra.mxu0 0
      %1659 = vmatprep.mubr.bf16.mxu0 0
      %1660 = vmatmul.mubr.bf16.gmra.mrb[0].mxu0 %v1622
      %v1661 = vpop.f32.mrb[0].mxu0
      %v1662 = vadd.f32 0.0, %v1661
      %v1663 = vpop.f32.mrb[0].mxu0
      %v1664 = vpop.f32.mrb[0].mxu0
      %v1665 = vpop.f32.mrb[0].mxu0
      %1666 = vdwg.mxu0
      %1667 = vrot.lane.b32.xlu0 %v722, 124
      %v1668 = vpop.permute.xlu0 %1667
      %1669 = vrot.lane.b32.xlu0 %v722, 108
      %v1670 = vpop.permute.xlu0 %1669
      %v1672 = vsel %vm732, %v1668, 0
      %v1675 = vsel %vm732, %v1670, 0
      %1677 = vmatprep.subr.bf16.mxu0 0
      %1678 = vmatpush1.bf16.xpose.msra.mxu0 %v1675
      %1679 = vmatprep.subr.bf16.mxu0 0
      %1680 = vmatpush1.bf16.xpose.msra.mxu0 0
      %1681 = vmatprep.subr.bf16.mxu0 0
      %1682 = vmatpush1.bf16.xpose.msra.mxu0 0
      %1683 = vmatprep.subr.bf16.mxu0 0
      %1684 = vmatpush1.bf16.xpose.msra.mxu0 0
      %1685 = vmatprep.subr.bf16.mxu0 0
      %1686 = vmatpush1.bf16.xpose.msra.mxu0 0
      %1687 = vmatprep.subr.bf16.mxu0 0
      %1688 = vmatpush1.bf16.xpose.msra.mxu0 0
      %1689 = vmatprep.subr.bf16.mxu0 0
      %1690 = vmatpush1.bf16.xpose.msra.mxu0 0
      %1691 = vmatprep.subr.bf16.mxu0 0
      %1692 = vmatpush1.bf16.xpose.msra.mxu0 0
      %1693 = vmatprep.subr.bf16.mxu0 0
      %1694 = vmatpush1.bf16.xpose.msra.mxu0 0
      %1695 = vmatprep.subr.bf16.mxu0 0
      %1696 = vmatpush1.bf16.xpose.msra.mxu0 0
      %1697 = vmatprep.subr.bf16.mxu0 0
      %1698 = vmatpush1.bf16.xpose.msra.mxu0 0
      %1699 = vmatprep.subr.bf16.mxu0 0
      %1700 = vmatpush1.bf16.xpose.msra.mxu0 0
      %1701 = vmatprep.subr.bf16.mxu0 0
      %1702 = vmatpush1.bf16.xpose.msra.mxu0 0
      %1703 = vmatprep.subr.bf16.mxu0 0
      %1704 = vmatpush1.bf16.xpose.msra.mxu0 0
      %1705 = vmatprep.subr.bf16.mxu0 0
      %1706 = vmatpush1.bf16.xpose.msra.mxu0 0
      %1707 = vmatprep.subr.bf16.mxu0 0
      %1708 = vmatpush1.bf16.xpose.msra.mxu0 0
      %1709 = vmatprep.mubr.bf16.mxu0 0
      %1710 = vmatmul.mubr.bf16.gmra.mrb[0].mxu0 %v1672
      %v1711 = vpop.f32.mrb[0].mxu0
      %v1712 = vadd.f32 0.0, %v1711
      %v1713 = vpop.f32.mrb[0].mxu0
      %v1714 = vpop.f32.mrb[0].mxu0
      %v1715 = vpop.f32.mrb[0].mxu0
      %1716 = vdwg.mxu0
      %1717 = vrot.lane.b32.xlu0 %v723, 124
      %v1718 = vpop.permute.xlu0 %1717
      %1719 = vrot.lane.b32.xlu0 %v723, 108
      %v1720 = vpop.permute.xlu0 %1719
      %v1722 = vsel %vm732, %v1718, 0
      %v1725 = vsel %vm732, %v1720, 0
      %1727 = vmatprep.subr.bf16.mxu0 0
      %1728 = vmatpush1.bf16.xpose.msra.mxu0 %v1725
      %1729 = vmatprep.subr.bf16.mxu0 0
      %1730 = vmatpush1.bf16.xpose.msra.mxu0 0
      %1731 = vmatprep.subr.bf16.mxu0 0
      %1732 = vmatpush1.bf16.xpose.msra.mxu0 0
      %1733 = vmatprep.subr.bf16.mxu0 0
      %1734 = vmatpush1.bf16.xpose.msra.mxu0 0
      %1735 = vmatprep.subr.bf16.mxu0 0
      %1736 = vmatpush1.bf16.xpose.msra.mxu0 0
      %1737 = vmatprep.subr.bf16.mxu0 0
      %1738 = vmatpush1.bf16.xpose.msra.mxu0 0
      %1739 = vmatprep.subr.bf16.mxu0 0
      %1740 = vmatpush1.bf16.xpose.msra.mxu0 0
      %1741 = vmatprep.subr.bf16.mxu0 0
      %1742 = vmatpush1.bf16.xpose.msra.mxu0 0
      %1743 = vmatprep.subr.bf16.mxu0 0
      %1744 = vmatpush1.bf16.xpose.msra.mxu0 0
      %1745 = vmatprep.subr.bf16.mxu0 0
      %1746 = vmatpush1.bf16.xpose.msra.mxu0 0
      %1747 = vmatprep.subr.bf16.mxu0 0
      %1748 = vmatpush1.bf16.xpose.msra.mxu0 0
      %1749 = vmatprep.subr.bf16.mxu0 0
      %1750 = vmatpush1.bf16.xpose.msra.mxu0 0
      %1751 = vmatprep.subr.bf16.mxu0 0
      %1752 = vmatpush1.bf16.xpose.msra.mxu0 0
      %1753 = vmatprep.subr.bf16.mxu0 0
      %1754 = vmatpush1.bf16.xpose.msra.mxu0 0
      %1755 = vmatprep.subr.bf16.mxu0 0
      %1756 = vmatpush1.bf16.xpose.msra.mxu0 0
      %1757 = vmatprep.subr.bf16.mxu0 0
      %1758 = vmatpush1.bf16.xpose.msra.mxu0 0
      %1759 = vmatprep.mubr.bf16.mxu0 0
      %1760 = vmatmul.mubr.bf16.gmra.mrb[0].mxu0 %v1722
      %v1761 = vpop.f32.mrb[0].mxu0
      %v1762 = vadd.f32 0.0, %v1761
      %v1763 = vpop.f32.mrb[0].mxu0
      %v1764 = vpop.f32.mrb[0].mxu0
      %v1765 = vpop.f32.mrb[0].mxu0
      %1766 = vdwg.mxu0
      %1767 = vrot.lane.b32.xlu0 %v724, 124
      %v1768 = vpop.permute.xlu0 %1767
      %1769 = vrot.lane.b32.xlu0 %v724, 108
      %v1770 = vpop.permute.xlu0 %1769
      %v1772 = vsel %vm732, %v1768, 0
      %v1775 = vsel %vm732, %v1770, 0
      %1777 = vmatprep.subr.bf16.mxu0 0
      %1778 = vmatpush1.bf16.xpose.msra.mxu0 %v1775
      %1779 = vmatprep.subr.bf16.mxu0 0
      %1780 = vmatpush1.bf16.xpose.msra.mxu0 0
      %1781 = vmatprep.subr.bf16.mxu0 0
      %1782 = vmatpush1.bf16.xpose.msra.mxu0 0
      %1783 = vmatprep.subr.bf16.mxu0 0
      %1784 = vmatpush1.bf16.xpose.msra.mxu0 0
      %1785 = vmatprep.subr.bf16.mxu0 0
      %1786 = vmatpush1.bf16.xpose.msra.mxu0 0
      %1787 = vmatprep.subr.bf16.mxu0 0
      %1788 = vmatpush1.bf16.xpose.msra.mxu0 0
      %1789 = vmatprep.subr.bf16.mxu0 0
      %1790 = vmatpush1.bf16.xpose.msra.mxu0 0
      %1791 = vmatprep.subr.bf16.mxu0 0
      %1792 = vmatpush1.bf16.xpose.msra.mxu0 0
      %1793 = vmatprep.subr.bf16.mxu0 0
      %1794 = vmatpush1.bf16.xpose.msra.mxu0 0
      %1795 = vmatprep.subr.bf16.mxu0 0
      %1796 = vmatpush1.bf16.xpose.msra.mxu0 0
      %1797 = vmatprep.subr.bf16.mxu0 0
      %1798 = vmatpush1.bf16.xpose.msra.mxu0 0
      %1799 = vmatprep.subr.bf16.mxu0 0
      %1800 = vmatpush1.bf16.xpose.msra.mxu0 0
      %1801 = vmatprep.subr.bf16.mxu0 0
      %1802 = vmatpush1.bf16.xpose.msra.mxu0 0
      %1803 = vmatprep.subr.bf16.mxu0 0
      %1804 = vmatpush1.bf16.xpose.msra.mxu0 0
      %1805 = vmatprep.subr.bf16.mxu0 0
      %1806 = vmatpush1.bf16.xpose.msra.mxu0 0
      %1807 = vmatprep.subr.bf16.mxu0 0
      %1808 = vmatpush1.bf16.xpose.msra.mxu0 0
      %1809 = vmatprep.mubr.bf16.mxu0 0
      %1810 = vmatmul.mubr.bf16.gmra.mrb[0].mxu0 %v1772
      %v1811 = vpop.f32.mrb[0].mxu0
      %v1812 = vadd.f32 0.0, %v1811
      %v1813 = vpop.f32.mrb[0].mxu0
      %v1814 = vpop.f32.mrb[0].mxu0
      %v1815 = vpop.f32.mrb[0].mxu0
      %1816 = vdwg.mxu0
      %1817 = vrot.lane.b32.xlu0 %v725, 124
      %v1818 = vpop.permute.xlu0 %1817
      %1819 = vrot.lane.b32.xlu0 %v725, 108
      %v1820 = vpop.permute.xlu0 %1819
      %v1822 = vsel %vm732, %v1818, 0
      %v1825 = vsel %vm732, %v1820, 0
      %1827 = vmatprep.subr.bf16.mxu0 0
      %1828 = vmatpush1.bf16.xpose.msra.mxu0 %v1825
      %1829 = vmatprep.subr.bf16.mxu0 0
      %1830 = vmatpush1.bf16.xpose.msra.mxu0 0
      %1831 = vmatprep.subr.bf16.mxu0 0
      %1832 = vmatpush1.bf16.xpose.msra.mxu0 0
      %1833 = vmatprep.subr.bf16.mxu0 0
      %1834 = vmatpush1.bf16.xpose.msra.mxu0 0
      %1835 = vmatprep.subr.bf16.mxu0 0
      %1836 = vmatpush1.bf16.xpose.msra.mxu0 0
      %1837 = vmatprep.subr.bf16.mxu0 0
      %1838 = vmatpush1.bf16.xpose.msra.mxu0 0
      %1839 = vmatprep.subr.bf16.mxu0 0
      %1840 = vmatpush1.bf16.xpose.msra.mxu0 0
      %1841 = vmatprep.subr.bf16.mxu0 0
      %1842 = vmatpush1.bf16.xpose.msra.mxu0 0
      %1843 = vmatprep.subr.bf16.mxu0 0
      %1844 = vmatpush1.bf16.xpose.msra.mxu0 0
      %1845 = vmatprep.subr.bf16.mxu0 0
      %1846 = vmatpush1.bf16.xpose.msra.mxu0 0
      %1847 = vmatprep.subr.bf16.mxu0 0
      %1848 = vmatpush1.bf16.xpose.msra.mxu0 0
      %1849 = vmatprep.subr.bf16.mxu0 0
      %1850 = vmatpush1.bf16.xpose.msra.mxu0 0
      %1851 = vmatprep.subr.bf16.mxu0 0
      %1852 = vmatpush1.bf16.xpose.msra.mxu0 0
      %1853 = vmatprep.subr.bf16.mxu0 0
      %1854 = vmatpush1.bf16.xpose.msra.mxu0 0
      %1855 = vmatprep.subr.bf16.mxu0 0
      %1856 = vmatpush1.bf16.xpose.msra.mxu0 0
      %1857 = vmatprep.subr.bf16.mxu0 0
      %1858 = vmatpush1.bf16.xpose.msra.mxu0 0
      %1859 = vmatprep.mubr.bf16.mxu0 0
      %1860 = vmatmul.mubr.bf16.gmra.mrb[0].mxu0 %v1822
      %v1861 = vpop.f32.mrb[0].mxu0
      %v1862 = vadd.f32 0.0, %v1861
      %v1863 = vpop.f32.mrb[0].mxu0
      %v1864 = vpop.f32.mrb[0].mxu0
      %v1865 = vpop.f32.mrb[0].mxu0
      %1866 = vdwg.mxu0
      %1867 = vrot.lane.b32.xlu0 %v726, 124
      %v1868 = vpop.permute.xlu0 %1867
      %1869 = vrot.lane.b32.xlu0 %v726, 108
      %v1870 = vpop.permute.xlu0 %1869
      %v1872 = vsel %vm732, %v1868, 0
      %v1875 = vsel %vm732, %v1870, 0
      %1877 = vmatprep.subr.bf16.mxu0 0
      %1878 = vmatpush1.bf16.xpose.msra.mxu0 %v1875
      %1879 = vmatprep.subr.bf16.mxu0 0
      %1880 = vmatpush1.bf16.xpose.msra.mxu0 0
      %1881 = vmatprep.subr.bf16.mxu0 0
      %1882 = vmatpush1.bf16.xpose.msra.mxu0 0
      %1883 = vmatprep.subr.bf16.mxu0 0
      %1884 = vmatpush1.bf16.xpose.msra.mxu0 0
      %1885 = vmatprep.subr.bf16.mxu0 0
      %1886 = vmatpush1.bf16.xpose.msra.mxu0 0
      %1887 = vmatprep.subr.bf16.mxu0 0
      %1888 = vmatpush1.bf16.xpose.msra.mxu0 0
      %1889 = vmatprep.subr.bf16.mxu0 0
      %1890 = vmatpush1.bf16.xpose.msra.mxu0 0
      %1891 = vmatprep.subr.bf16.mxu0 0
      %1892 = vmatpush1.bf16.xpose.msra.mxu0 0
      %1893 = vmatprep.subr.bf16.mxu0 0
      %1894 = vmatpush1.bf16.xpose.msra.mxu0 0
      %1895 = vmatprep.subr.bf16.mxu0 0
      %1896 = vmatpush1.bf16.xpose.msra.mxu0 0
      %1897 = vmatprep.subr.bf16.mxu0 0
      %1898 = vmatpush1.bf16.xpose.msra.mxu0 0
      %1899 = vmatprep.subr.bf16.mxu0 0
      %1900 = vmatpush1.bf16.xpose.msra.mxu0 0
      %1901 = vmatprep.subr.bf16.mxu0 0
      %1902 = vmatpush1.bf16.xpose.msra.mxu0 0
      %1903 = vmatprep.subr.bf16.mxu0 0
      %1904 = vmatpush1.bf16.xpose.msra.mxu0 0
      %1905 = vmatprep.subr.bf16.mxu0 0
      %1906 = vmatpush1.bf16.xpose.msra.mxu0 0
      %1907 = vmatprep.subr.bf16.mxu0 0
      %1908 = vmatpush1.bf16.xpose.msra.mxu0 0
      %1909 = vmatprep.mubr.bf16.mxu0 0
      %1910 = vmatmul.mubr.bf16.gmra.mrb[0].mxu0 %v1872
      %v1911 = vpop.f32.mrb[0].mxu0
      %v1912 = vadd.f32 0.0, %v1911
      %v1913 = vpop.f32.mrb[0].mxu0
      %v1914 = vpop.f32.mrb[0].mxu0
      %v1915 = vpop.f32.mrb[0].mxu0
      %1916 = vdwg.mxu0
      %1917 = vrot.lane.b32.xlu0 %v727, 124
      %v1918 = vpop.permute.xlu0 %1917
      %1919 = vrot.lane.b32.xlu0 %v727, 108
      %v1920 = vpop.permute.xlu0 %1919
      %v1922 = vsel %vm732, %v1918, 0
      %v1925 = vsel %vm732, %v1920, 0
      %1927 = vmatprep.subr.bf16.mxu0 0
      %1928 = vmatpush1.bf16.xpose.msra.mxu0 %v1925
      %1929 = vmatprep.subr.bf16.mxu0 0
      %1930 = vmatpush1.bf16.xpose.msra.mxu0 0
      %1931 = vmatprep.subr.bf16.mxu0 0
      %1932 = vmatpush1.bf16.xpose.msra.mxu0 0
      %1933 = vmatprep.subr.bf16.mxu0 0
      %1934 = vmatpush1.bf16.xpose.msra.mxu0 0
      %1935 = vmatprep.subr.bf16.mxu0 0
      %1936 = vmatpush1.bf16.xpose.msra.mxu0 0
      %1937 = vmatprep.subr.bf16.mxu0 0
      %1938 = vmatpush1.bf16.xpose.msra.mxu0 0
      %1939 = vmatprep.subr.bf16.mxu0 0
      %1940 = vmatpush1.bf16.xpose.msra.mxu0 0
      %1941 = vmatprep.subr.bf16.mxu0 0
      %1942 = vmatpush1.bf16.xpose.msra.mxu0 0
      %1943 = vmatprep.subr.bf16.mxu0 0
      %1944 = vmatpush1.bf16.xpose.msra.mxu0 0
      %1945 = vmatprep.subr.bf16.mxu0 0
      %1946 = vmatpush1.bf16.xpose.msra.mxu0 0
      %1947 = vmatprep.subr.bf16.mxu0 0
      %1948 = vmatpush1.bf16.xpose.msra.mxu0 0
      %1949 = vmatprep.subr.bf16.mxu0 0
      %1950 = vmatpush1.bf16.xpose.msra.mxu0 0
      %1951 = vmatprep.subr.bf16.mxu0 0
      %1952 = vmatpush1.bf16.xpose.msra.mxu0 0
      %1953 = vmatprep.subr.bf16.mxu0 0
      %1954 = vmatpush1.bf16.xpose.msra.mxu0 0
      %1955 = vmatprep.subr.bf16.mxu0 0
      %1956 = vmatpush1.bf16.xpose.msra.mxu0 0
      %1957 = vmatprep.subr.bf16.mxu0 0
      %1958 = vmatpush1.bf16.xpose.msra.mxu0 0
      %1959 = vmatprep.mubr.bf16.mxu0 0
      %1960 = vmatmul.mubr.bf16.gmra.mrb[0].mxu0 %v1922
      %v1961 = vpop.f32.mrb[0].mxu0
      %v1962 = vadd.f32 0.0, %v1961
      %v1963 = vpop.f32.mrb[0].mxu0
      %v1964 = vpop.f32.mrb[0].mxu0
      %v1965 = vpop.f32.mrb[0].mxu0
      %1966 = vdwg.mxu0
      %1967 = vrot.lane.b32.xlu0 %v728, 124
      %v1968 = vpop.permute.xlu0 %1967
      %1969 = vrot.lane.b32.xlu0 %v728, 108
      %v1970 = vpop.permute.xlu0 %1969
      %v1972 = vsel %vm732, %v1968, 0
      %v1975 = vsel %vm732, %v1970, 0
      %1977 = vmatprep.subr.bf16.mxu0 0
      %1978 = vmatpush1.bf16.xpose.msra.mxu0 %v1975
      %1979 = vmatprep.subr.bf16.mxu0 0
      %1980 = vmatpush1.bf16.xpose.msra.mxu0 0
      %1981 = vmatprep.subr.bf16.mxu0 0
      %1982 = vmatpush1.bf16.xpose.msra.mxu0 0
      %1983 = vmatprep.subr.bf16.mxu0 0
      %1984 = vmatpush1.bf16.xpose.msra.mxu0 0
      %1985 = vmatprep.subr.bf16.mxu0 0
      %1986 = vmatpush1.bf16.xpose.msra.mxu0 0
      %1987 = vmatprep.subr.bf16.mxu0 0
      %1988 = vmatpush1.bf16.xpose.msra.mxu0 0
      %1989 = vmatprep.subr.bf16.mxu0 0
      %1990 = vmatpush1.bf16.xpose.msra.mxu0 0
      %1991 = vmatprep.subr.bf16.mxu0 0
      %1992 = vmatpush1.bf16.xpose.msra.mxu0 0
      %1993 = vmatprep.subr.bf16.mxu0 0
      %1994 = vmatpush1.bf16.xpose.msra.mxu0 0
      %1995 = vmatprep.subr.bf16.mxu0 0
      %1996 = vmatpush1.bf16.xpose.msra.mxu0 0
      %1997 = vmatprep.subr.bf16.mxu0 0
      %1998 = vmatpush1.bf16.xpose.msra.mxu0 0
      %1999 = vmatprep.subr.bf16.mxu0 0
      %2000 = vmatpush1.bf16.xpose.msra.mxu0 0
      %2001 = vmatprep.subr.bf16.mxu0 0
      %2002 = vmatpush1.bf16.xpose.msra.mxu0 0
      %2003 = vmatprep.subr.bf16.mxu0 0
      %2004 = vmatpush1.bf16.xpose.msra.mxu0 0
      %2005 = vmatprep.subr.bf16.mxu0 0
      %2006 = vmatpush1.bf16.xpose.msra.mxu0 0
      %2007 = vmatprep.subr.bf16.mxu0 0
      %2008 = vmatpush1.bf16.xpose.msra.mxu0 0
      %2009 = vmatprep.mubr.bf16.mxu0 0
      %2010 = vmatmul.mubr.bf16.gmra.mrb[0].mxu0 %v1972
      %v2011 = vpop.f32.mrb[0].mxu0
      %v2012 = vadd.f32 0.0, %v2011
      %v2013 = vpop.f32.mrb[0].mxu0
      %v2014 = vpop.f32.mrb[0].mxu0
      %v2015 = vpop.f32.mrb[0].mxu0
      %2016 = vdwg.mxu0
      %v2017 = vmul.f32 %v1662, 0.5
      %v2018 = vmul.f32 %v1712, 0.5
      %v2019 = vmul.f32 %v1762, 0.5
      %v2020 = vmul.f32 %v1812, 0.5
      %v2021 = vmul.f32 %v1862, 0.5
      %v2022 = vmul.f32 %v1912, 0.5
      %v2023 = vmul.f32 %v1962, 0.5
      %v2024 = vmul.f32 %v2012, 0.5
      %v2025 = vsel %vm1130, %v2017, -inf
      %2026 = vmax.xlane.f32.xlu0 %v2025
      %v2027 = vpop.xlane.xlu0 %2026
      %v2028 = vsel %vm1130, %v2018, -inf
      %2029 = vmax.xlane.f32.xlu0 %v2028
      %v2030 = vpop.xlane.xlu0 %2029
      %v2031 = vsel %vm1130, %v2019, -inf
      %2032 = vmax.xlane.f32.xlu0 %v2031
      %v2033 = vpop.xlane.xlu0 %2032
      %v2034 = vsel %vm1130, %v2020, -inf
      %2035 = vmax.xlane.f32.xlu0 %v2034
      %v2036 = vpop.xlane.xlu0 %2035
      %v2037 = vsel %vm1130, %v2021, -inf
      %2038 = vmax.xlane.f32.xlu0 %v2037
      %v2039 = vpop.xlane.xlu0 %2038
      %v2040 = vsel %vm1130, %v2022, -inf
      %2041 = vmax.xlane.f32.xlu0 %v2040
      %v2042 = vpop.xlane.xlu0 %2041
      %v2043 = vsel %vm1130, %v2023, -inf
      %2044 = vmax.xlane.f32.xlu0 %v2043
      %v2045 = vpop.xlane.xlu0 %2044
      %v2046 = vsel %vm1130, %v2024, -inf
      %2047 = vmax.xlane.f32.xlu0 %v2046
      %v2048 = vpop.xlane.xlu0 %2047
      %v2049 = vsub.f32 %v2017, %v2027
      %v2050 = vsub.f32 %v2018, %v2030
      %v2051 = vsub.f32 %v2019, %v2033
      %v2052 = vsub.f32 %v2020, %v2036
      %v2053 = vsub.f32 %v2021, %v2039
      %v2054 = vsub.f32 %v2022, %v2042
      %v2055 = vsub.f32 %v2023, %v2045
      %v2056 = vsub.f32 %v2024, %v2048
      %v2057 = vmul.f32 %v2049, 1.442695
      %v2058 = vpow.pop %v2057
      %v2059 = vmul.f32 %v2050, 1.442695
      %v2060 = vpow.pop %v2059
      %v2061 = vmul.f32 %v2051, 1.442695
      %v2062 = vpow.pop %v2061
      %v2063 = vmul.f32 %v2052, 1.442695
      %v2064 = vpow.pop %v2063
      %v2065 = vmul.f32 %v2053, 1.442695
      %v2066 = vpow.pop %v2065
      %v2067 = vmul.f32 %v2054, 1.442695
      %v2068 = vpow.pop %v2067
      %v2069 = vmul.f32 %v2055, 1.442695
      %v2070 = vpow.pop %v2069
      %v2071 = vmul.f32 %v2056, 1.442695
      %v2072 = vpow.pop %v2071
      %v2073 = vsel %vm1130, %v2058, 0.0
      %2074 = vadd.xlane.f32.xlu0 %v2073
      %v2075 = vpop.xlane.xlu0 %2074
      %v2076 = vsel %vm1130, %v2060, 0.0
      %2077 = vadd.xlane.f32.xlu0 %v2076
      %v2078 = vpop.xlane.xlu0 %2077
      %v2079 = vsel %vm1130, %v2062, 0.0
      %2080 = vadd.xlane.f32.xlu0 %v2079
      %v2081 = vpop.xlane.xlu0 %2080
      %v2082 = vsel %vm1130, %v2064, 0.0
      %2083 = vadd.xlane.f32.xlu0 %v2082
      %v2084 = vpop.xlane.xlu0 %2083
      %v2085 = vsel %vm1130, %v2066, 0.0
      %2086 = vadd.xlane.f32.xlu0 %v2085
      %v2087 = vpop.xlane.xlu0 %2086
      %v2088 = vsel %vm1130, %v2068, 0.0
      %2089 = vadd.xlane.f32.xlu0 %v2088
      %v2090 = vpop.xlane.xlu0 %2089
      %v2091 = vsel %vm1130, %v2070, 0.0
      %2092 = vadd.xlane.f32.xlu0 %v2091
      %v2093 = vpop.xlane.xlu0 %2092
      %v2094 = vsel %vm1130, %v2072, 0.0
      %2095 = vadd.xlane.f32.xlu0 %v2094
      %v2096 = vpop.xlane.xlu0 %2095
      %v2097 = vrcp.pop %v2075
      %v2098 = vmul.f32 %v2058, %v2097
      %v2099 = vrcp.pop %v2078
      %v2100 = vmul.f32 %v2060, %v2099
      %v2101 = vrcp.pop %v2081
      %v2102 = vmul.f32 %v2062, %v2101
      %v2103 = vrcp.pop %v2084
      %v2104 = vmul.f32 %v2064, %v2103
      %v2105 = vrcp.pop %v2087
      %v2106 = vmul.f32 %v2066, %v2105
      %v2107 = vrcp.pop %v2090
      %v2108 = vmul.f32 %v2068, %v2107
      %v2109 = vrcp.pop %v2093
      %v2110 = vmul.f32 %v2070, %v2109
      %v2111 = vrcp.pop %v2096
      %v2112 = vmul.f32 %v2072, %v2111
      %v2113 = vpack.c.bf16 %v2098, %v2098
      %v2114 = vpack.c.bf16 %v2100, %v2100
      %v2115 = vpack.c.bf16 %v2102, %v2102
      %v2116 = vpack.c.bf16 %v2104, %v2104
      %v2117 = vpack.c.bf16 %v2106, %v2106
      %v2118 = vpack.c.bf16 %v2108, %v2108
      %v2119 = vpack.c.bf16 %v2110, %v2110
      %v2120 = vpack.c.bf16 %v2112, %v2112
      %2121 = vrot.lane.b32.xlu0 %v721, 92
      %v2122 = vpop.permute.xlu0 %2121
      %v2124 = vsel %vm1130, %v2113, 0
      %v2127 = vsel %vm1232, %v2122, 0
      %2129 = vmatprep.subr.bf16.mxu0 0
      %2130 = vmatpush1.bf16.msra.mxu0 %v2127
      %2131 = vmatprep.subr.bf16.mxu0 0
      %2132 = vmatpush1.bf16.msra.mxu0 0
      %2133 = vmatprep.subr.bf16.mxu0 0
      %2134 = vmatpush1.bf16.msra.mxu0 0
      %2135 = vmatprep.subr.bf16.mxu0 0
      %2136 = vmatpush1.bf16.msra.mxu0 0
      %2137 = vmatprep.subr.bf16.mxu0 0
      %2138 = vmatpush1.bf16.msra.mxu0 0
      %2139 = vmatprep.subr.bf16.mxu0 0
      %2140 = vmatpush1.bf16.msra.mxu0 0
      %2141 = vmatprep.subr.bf16.mxu0 0
      %2142 = vmatpush1.bf16.msra.mxu0 0
      %2143 = vmatprep.subr.bf16.mxu0 0
      %2144 = vmatpush1.bf16.msra.mxu0 0
      %2145 = vmatprep.subr.bf16.mxu0 0
      %2146 = vmatpush1.bf16.msra.mxu0 0
      %2147 = vmatprep.subr.bf16.mxu0 0
      %2148 = vmatpush1.bf16.msra.mxu0 0
      %2149 = vmatprep.subr.bf16.mxu0 0
      %2150 = vmatpush1.bf16.msra.mxu0 0
      %2151 = vmatprep.subr.bf16.mxu0 0
      %2152 = vmatpush1.bf16.msra.mxu0 0
      %2153 = vmatprep.subr.bf16.mxu0 0
      %2154 = vmatpush1.bf16.msra.mxu0 0
      %2155 = vmatprep.subr.bf16.mxu0 0
      %2156 = vmatpush1.bf16.msra.mxu0 0
      %2157 = vmatprep.subr.bf16.mxu0 0
      %2158 = vmatpush1.bf16.msra.mxu0 0
      %2159 = vmatprep.subr.bf16.mxu0 0
      %2160 = vmatpush1.bf16.msra.mxu0 0
      %2161 = vmatprep.mubr.bf16.mxu0 0
      %2162 = vmatmul.mubr.bf16.gmra.mrb[0].mxu0 %v2124
      %v2163 = vpop.f32.mrb[0].mxu0
      %v2164 = vadd.f32 0.0, %v2163
      %v2165 = vpop.f32.mrb[0].mxu0
      %v2166 = vpop.f32.mrb[0].mxu0
      %v2167 = vpop.f32.mrb[0].mxu0
      %2168 = vdwg.mxu0
      %2169 = vrot.lane.b32.xlu0 %v722, 92
      %v2170 = vpop.permute.xlu0 %2169
      %v2172 = vsel %vm1130, %v2114, 0
      %v2175 = vsel %vm1232, %v2170, 0
      %2177 = vmatprep.subr.bf16.mxu0 0
      %2178 = vmatpush1.bf16.msra.mxu0 %v2175
      %2179 = vmatprep.subr.bf16.mxu0 0
      %2180 = vmatpush1.bf16.msra.mxu0 0
      %2181 = vmatprep.subr.bf16.mxu0 0
      %2182 = vmatpush1.bf16.msra.mxu0 0
      %2183 = vmatprep.subr.bf16.mxu0 0
      %2184 = vmatpush1.bf16.msra.mxu0 0
      %2185 = vmatprep.subr.bf16.mxu0 0
      %2186 = vmatpush1.bf16.msra.mxu0 0
      %2187 = vmatprep.subr.bf16.mxu0 0
      %2188 = vmatpush1.bf16.msra.mxu0 0
      %2189 = vmatprep.subr.bf16.mxu0 0
      %2190 = vmatpush1.bf16.msra.mxu0 0
      %2191 = vmatprep.subr.bf16.mxu0 0
      %2192 = vmatpush1.bf16.msra.mxu0 0
      %2193 = vmatprep.subr.bf16.mxu0 0
      %2194 = vmatpush1.bf16.msra.mxu0 0
      %2195 = vmatprep.subr.bf16.mxu0 0
      %2196 = vmatpush1.bf16.msra.mxu0 0
      %2197 = vmatprep.subr.bf16.mxu0 0
      %2198 = vmatpush1.bf16.msra.mxu0 0
      %2199 = vmatprep.subr.bf16.mxu0 0
      %2200 = vmatpush1.bf16.msra.mxu0 0
      %2201 = vmatprep.subr.bf16.mxu0 0
      %2202 = vmatpush1.bf16.msra.mxu0 0
      %2203 = vmatprep.subr.bf16.mxu0 0
      %2204 = vmatpush1.bf16.msra.mxu0 0
      %2205 = vmatprep.subr.bf16.mxu0 0
      %2206 = vmatpush1.bf16.msra.mxu0 0
      %2207 = vmatprep.subr.bf16.mxu0 0
      %2208 = vmatpush1.bf16.msra.mxu0 0
      %2209 = vmatprep.mubr.bf16.mxu0 0
      %2210 = vmatmul.mubr.bf16.gmra.mrb[0].mxu0 %v2172
      %v2211 = vpop.f32.mrb[0].mxu0
      %v2212 = vadd.f32 0.0, %v2211
      %v2213 = vpop.f32.mrb[0].mxu0
      %v2214 = vpop.f32.mrb[0].mxu0
      %v2215 = vpop.f32.mrb[0].mxu0
      %2216 = vdwg.mxu0
      %2217 = vrot.lane.b32.xlu0 %v723, 92
      %v2218 = vpop.permute.xlu0 %2217
      %v2220 = vsel %vm1130, %v2115, 0
      %v2223 = vsel %vm1232, %v2218, 0
      %2225 = vmatprep.subr.bf16.mxu0 0
      %2226 = vmatpush1.bf16.msra.mxu0 %v2223
      %2227 = vmatprep.subr.bf16.mxu0 0
      %2228 = vmatpush1.bf16.msra.mxu0 0
      %2229 = vmatprep.subr.bf16.mxu0 0
      %2230 = vmatpush1.bf16.msra.mxu0 0
      %2231 = vmatprep.subr.bf16.mxu0 0
      %2232 = vmatpush1.bf16.msra.mxu0 0
      %2233 = vmatprep.subr.bf16.mxu0 0
      %2234 = vmatpush1.bf16.msra.mxu0 0
      %2235 = vmatprep.subr.bf16.mxu0 0
      %2236 = vmatpush1.bf16.msra.mxu0 0
      %2237 = vmatprep.subr.bf16.mxu0 0
      %2238 = vmatpush1.bf16.msra.mxu0 0
      %2239 = vmatprep.subr.bf16.mxu0 0
      %2240 = vmatpush1.bf16.msra.mxu0 0
      %2241 = vmatprep.subr.bf16.mxu0 0
      %2242 = vmatpush1.bf16.msra.mxu0 0
      %2243 = vmatprep.subr.bf16.mxu0 0
      %2244 = vmatpush1.bf16.msra.mxu0 0
      %2245 = vmatprep.subr.bf16.mxu0 0
      %2246 = vmatpush1.bf16.msra.mxu0 0
      %2247 = vmatprep.subr.bf16.mxu0 0
      %2248 = vmatpush1.bf16.msra.mxu0 0
      %2249 = vmatprep.subr.bf16.mxu0 0
      %2250 = vmatpush1.bf16.msra.mxu0 0
      %2251 = vmatprep.subr.bf16.mxu0 0
      %2252 = vmatpush1.bf16.msra.mxu0 0
      %2253 = vmatprep.subr.bf16.mxu0 0
      %2254 = vmatpush1.bf16.msra.mxu0 0
      %2255 = vmatprep.subr.bf16.mxu0 0
      %2256 = vmatpush1.bf16.msra.mxu0 0
      %2257 = vmatprep.mubr.bf16.mxu0 0
      %2258 = vmatmul.mubr.bf16.gmra.mrb[0].mxu0 %v2220
      %v2259 = vpop.f32.mrb[0].mxu0
      %v2260 = vadd.f32 0.0, %v2259
      %v2261 = vpop.f32.mrb[0].mxu0
      %v2262 = vpop.f32.mrb[0].mxu0
      %v2263 = vpop.f32.mrb[0].mxu0
      %2264 = vdwg.mxu0
      %2265 = vrot.lane.b32.xlu0 %v724, 92
      %v2266 = vpop.permute.xlu0 %2265
      %v2268 = vsel %vm1130, %v2116, 0
      %v2271 = vsel %vm1232, %v2266, 0
      %2273 = vmatprep.subr.bf16.mxu0 0
      %2274 = vmatpush1.bf16.msra.mxu0 %v2271
      %2275 = vmatprep.subr.bf16.mxu0 0
      %2276 = vmatpush1.bf16.msra.mxu0 0
      %2277 = vmatprep.subr.bf16.mxu0 0
      %2278 = vmatpush1.bf16.msra.mxu0 0
      %2279 = vmatprep.subr.bf16.mxu0 0
      %2280 = vmatpush1.bf16.msra.mxu0 0
      %2281 = vmatprep.subr.bf16.mxu0 0
      %2282 = vmatpush1.bf16.msra.mxu0 0
      %2283 = vmatprep.subr.bf16.mxu0 0
      %2284 = vmatpush1.bf16.msra.mxu0 0
      %2285 = vmatprep.subr.bf16.mxu0 0
      %2286 = vmatpush1.bf16.msra.mxu0 0
      %2287 = vmatprep.subr.bf16.mxu0 0
      %2288 = vmatpush1.bf16.msra.mxu0 0
      %2289 = vmatprep.subr.bf16.mxu0 0
      %2290 = vmatpush1.bf16.msra.mxu0 0
      %2291 = vmatprep.subr.bf16.mxu0 0
      %2292 = vmatpush1.bf16.msra.mxu0 0
      %2293 = vmatprep.subr.bf16.mxu0 0
      %2294 = vmatpush1.bf16.msra.mxu0 0
      %2295 = vmatprep.subr.bf16.mxu0 0
      %2296 = vmatpush1.bf16.msra.mxu0 0
      %2297 = vmatprep.subr.bf16.mxu0 0
      %2298 = vmatpush1.bf16.msra.mxu0 0
      %2299 = vmatprep.subr.bf16.mxu0 0
      %2300 = vmatpush1.bf16.msra.mxu0 0
      %2301 = vmatprep.subr.bf16.mxu0 0
      %2302 = vmatpush1.bf16.msra.mxu0 0
      %2303 = vmatprep.subr.bf16.mxu0 0
      %2304 = vmatpush1.bf16.msra.mxu0 0
      %2305 = vmatprep.mubr.bf16.mxu0 0
      %2306 = vmatmul.mubr.bf16.gmra.mrb[0].mxu0 %v2268
      %v2307 = vpop.f32.mrb[0].mxu0
      %v2308 = vadd.f32 0.0, %v2307
      %v2309 = vpop.f32.mrb[0].mxu0
      %v2310 = vpop.f32.mrb[0].mxu0
      %v2311 = vpop.f32.mrb[0].mxu0
      %2312 = vdwg.mxu0
      %2313 = vrot.lane.b32.xlu0 %v725, 92
      %v2314 = vpop.permute.xlu0 %2313
      %v2316 = vsel %vm1130, %v2117, 0
      %v2319 = vsel %vm1232, %v2314, 0
      %2321 = vmatprep.subr.bf16.mxu0 0
      %2322 = vmatpush1.bf16.msra.mxu0 %v2319
      %2323 = vmatprep.subr.bf16.mxu0 0
      %2324 = vmatpush1.bf16.msra.mxu0 0
      %2325 = vmatprep.subr.bf16.mxu0 0
      %2326 = vmatpush1.bf16.msra.mxu0 0
      %2327 = vmatprep.subr.bf16.mxu0 0
      %2328 = vmatpush1.bf16.msra.mxu0 0
      %2329 = vmatprep.subr.bf16.mxu0 0
      %2330 = vmatpush1.bf16.msra.mxu0 0
      %2331 = vmatprep.subr.bf16.mxu0 0
      %2332 = vmatpush1.bf16.msra.mxu0 0
      %2333 = vmatprep.subr.bf16.mxu0 0
      %2334 = vmatpush1.bf16.msra.mxu0 0
      %2335 = vmatprep.subr.bf16.mxu0 0
      %2336 = vmatpush1.bf16.msra.mxu0 0
      %2337 = vmatprep.subr.bf16.mxu0 0
      %2338 = vmatpush1.bf16.msra.mxu0 0
      %2339 = vmatprep.subr.bf16.mxu0 0
      %2340 = vmatpush1.bf16.msra.mxu0 0
      %2341 = vmatprep.subr.bf16.mxu0 0
      %2342 = vmatpush1.bf16.msra.mxu0 0
      %2343 = vmatprep.subr.bf16.mxu0 0
      %2344 = vmatpush1.bf16.msra.mxu0 0
      %2345 = vmatprep.subr.bf16.mxu0 0
      %2346 = vmatpush1.bf16.msra.mxu0 0
      %2347 = vmatprep.subr.bf16.mxu0 0
      %2348 = vmatpush1.bf16.msra.mxu0 0
      %2349 = vmatprep.subr.bf16.mxu0 0
      %2350 = vmatpush1.bf16.msra.mxu0 0
      %2351 = vmatprep.subr.bf16.mxu0 0
      %2352 = vmatpush1.bf16.msra.mxu0 0
      %2353 = vmatprep.mubr.bf16.mxu0 0
      %2354 = vmatmul.mubr.bf16.gmra.mrb[0].mxu0 %v2316
      %v2355 = vpop.f32.mrb[0].mxu0
      %v2356 = vadd.f32 0.0, %v2355
      %v2357 = vpop.f32.mrb[0].mxu0
      %v2358 = vpop.f32.mrb[0].mxu0
      %v2359 = vpop.f32.mrb[0].mxu0
      %2360 = vdwg.mxu0
      %2361 = vrot.lane.b32.xlu0 %v726, 92
      %v2362 = vpop.permute.xlu0 %2361
      %v2364 = vsel %vm1130, %v2118, 0
      %v2367 = vsel %vm1232, %v2362, 0
      %2369 = vmatprep.subr.bf16.mxu0 0
      %2370 = vmatpush1.bf16.msra.mxu0 %v2367
      %2371 = vmatprep.subr.bf16.mxu0 0
      %2372 = vmatpush1.bf16.msra.mxu0 0
      %2373 = vmatprep.subr.bf16.mxu0 0
      %2374 = vmatpush1.bf16.msra.mxu0 0
      %2375 = vmatprep.subr.bf16.mxu0 0
      %2376 = vmatpush1.bf16.msra.mxu0 0
      %2377 = vmatprep.subr.bf16.mxu0 0
      %2378 = vmatpush1.bf16.msra.mxu0 0
      %2379 = vmatprep.subr.bf16.mxu0 0
      %2380 = vmatpush1.bf16.msra.mxu0 0
      %2381 = vmatprep.subr.bf16.mxu0 0
      %2382 = vmatpush1.bf16.msra.mxu0 0
      %2383 = vmatprep.subr.bf16.mxu0 0
      %2384 = vmatpush1.bf16.msra.mxu0 0
      %2385 = vmatprep.subr.bf16.mxu0 0
      %2386 = vmatpush1.bf16.msra.mxu0 0
      %2387 = vmatprep.subr.bf16.mxu0 0
      %2388 = vmatpush1.bf16.msra.mxu0 0
      %2389 = vmatprep.subr.bf16.mxu0 0
      %2390 = vmatpush1.bf16.msra.mxu0 0
      %2391 = vmatprep.subr.bf16.mxu0 0
      %2392 = vmatpush1.bf16.msra.mxu0 0
      %2393 = vmatprep.subr.bf16.mxu0 0
      %2394 = vmatpush1.bf16.msra.mxu0 0
      %2395 = vmatprep.subr.bf16.mxu0 0
      %2396 = vmatpush1.bf16.msra.mxu0 0
      %2397 = vmatprep.subr.bf16.mxu0 0
      %2398 = vmatpush1.bf16.msra.mxu0 0
      %2399 = vmatprep.subr.bf16.mxu0 0
      %2400 = vmatpush1.bf16.msra.mxu0 0
      %2401 = vmatprep.mubr.bf16.mxu0 0
      %2402 = vmatmul.mubr.bf16.gmra.mrb[0].mxu0 %v2364
      %v2403 = vpop.f32.mrb[0].mxu0
      %v2404 = vadd.f32 0.0, %v2403
      %v2405 = vpop.f32.mrb[0].mxu0
      %v2406 = vpop.f32.mrb[0].mxu0
      %v2407 = vpop.f32.mrb[0].mxu0
      %2408 = vdwg.mxu0
      %2409 = vrot.lane.b32.xlu0 %v727, 92
      %v2410 = vpop.permute.xlu0 %2409
      %v2412 = vsel %vm1130, %v2119, 0
      %v2415 = vsel %vm1232, %v2410, 0
      %2417 = vmatprep.subr.bf16.mxu0 0
      %2418 = vmatpush1.bf16.msra.mxu0 %v2415
      %2419 = vmatprep.subr.bf16.mxu0 0
      %2420 = vmatpush1.bf16.msra.mxu0 0
      %2421 = vmatprep.subr.bf16.mxu0 0
      %2422 = vmatpush1.bf16.msra.mxu0 0
      %2423 = vmatprep.subr.bf16.mxu0 0
      %2424 = vmatpush1.bf16.msra.mxu0 0
      %2425 = vmatprep.subr.bf16.mxu0 0
      %2426 = vmatpush1.bf16.msra.mxu0 0
      %2427 = vmatprep.subr.bf16.mxu0 0
      %2428 = vmatpush1.bf16.msra.mxu0 0
      %2429 = vmatprep.subr.bf16.mxu0 0
      %2430 = vmatpush1.bf16.msra.mxu0 0
      %2431 = vmatprep.subr.bf16.mxu0 0
      %2432 = vmatpush1.bf16.msra.mxu0 0
      %2433 = vmatprep.subr.bf16.mxu0 0
      %2434 = vmatpush1.bf16.msra.mxu0 0
      %2435 = vmatprep.subr.bf16.mxu0 0
      %2436 = vmatpush1.bf16.msra.mxu0 0
      %2437 = vmatprep.subr.bf16.mxu0 0
      %2438 = vmatpush1.bf16.msra.mxu0 0
      %2439 = vmatprep.subr.bf16.mxu0 0
      %2440 = vmatpush1.bf16.msra.mxu0 0
      %2441 = vmatprep.subr.bf16.mxu0 0
      %2442 = vmatpush1.bf16.msra.mxu0 0
      %2443 = vmatprep.subr.bf16.mxu0 0
      %2444 = vmatpush1.bf16.msra.mxu0 0
      %2445 = vmatprep.subr.bf16.mxu0 0
      %2446 = vmatpush1.bf16.msra.mxu0 0
      %2447 = vmatprep.subr.bf16.mxu0 0
      %2448 = vmatpush1.bf16.msra.mxu0 0
      %2449 = vmatprep.mubr.bf16.mxu0 0
      %2450 = vmatmul.mubr.bf16.gmra.mrb[0].mxu0 %v2412
      %v2451 = vpop.f32.mrb[0].mxu0
      %v2452 = vadd.f32 0.0, %v2451
      %v2453 = vpop.f32.mrb[0].mxu0
      %v2454 = vpop.f32.mrb[0].mxu0
      %v2455 = vpop.f32.mrb[0].mxu0
      %2456 = vdwg.mxu0
      %2457 = vrot.lane.b32.xlu0 %v728, 92
      %v2458 = vpop.permute.xlu0 %2457
      %v2460 = vsel %vm1130, %v2120, 0
      %v2463 = vsel %vm1232, %v2458, 0
      %2465 = vmatprep.subr.bf16.mxu0 0
      %2466 = vmatpush1.bf16.msra.mxu0 %v2463
      %2467 = vmatprep.subr.bf16.mxu0 0
      %2468 = vmatpush1.bf16.msra.mxu0 0
      %2469 = vmatprep.subr.bf16.mxu0 0
      %2470 = vmatpush1.bf16.msra.mxu0 0
      %2471 = vmatprep.subr.bf16.mxu0 0
      %2472 = vmatpush1.bf16.msra.mxu0 0
      %2473 = vmatprep.subr.bf16.mxu0 0
      %2474 = vmatpush1.bf16.msra.mxu0 0
      %2475 = vmatprep.subr.bf16.mxu0 0
      %2476 = vmatpush1.bf16.msra.mxu0 0
      %2477 = vmatprep.subr.bf16.mxu0 0
      %2478 = vmatpush1.bf16.msra.mxu0 0
      %2479 = vmatprep.subr.bf16.mxu0 0
      %2480 = vmatpush1.bf16.msra.mxu0 0
      %2481 = vmatprep.subr.bf16.mxu0 0
      %2482 = vmatpush1.bf16.msra.mxu0 0
      %2483 = vmatprep.subr.bf16.mxu0 0
      %2484 = vmatpush1.bf16.msra.mxu0 0
      %2485 = vmatprep.subr.bf16.mxu0 0
      %2486 = vmatpush1.bf16.msra.mxu0 0
      %2487 = vmatprep.subr.bf16.mxu0 0
      %2488 = vmatpush1.bf16.msra.mxu0 0
      %2489 = vmatprep.subr.bf16.mxu0 0
      %2490 = vmatpush1.bf16.msra.mxu0 0
      %2491 = vmatprep.subr.bf16.mxu0 0
      %2492 = vmatpush1.bf16.msra.mxu0 0
      %2493 = vmatprep.subr.bf16.mxu0 0
      %2494 = vmatpush1.bf16.msra.mxu0 0
      %2495 = vmatprep.subr.bf16.mxu0 0
      %2496 = vmatpush1.bf16.msra.mxu0 0
      %2497 = vmatprep.mubr.bf16.mxu0 0
      %2498 = vmatmul.mubr.bf16.gmra.mrb[0].mxu0 %v2460
      %v2499 = vpop.f32.mrb[0].mxu0
      %v2500 = vadd.f32 0.0, %v2499
      %v2501 = vpop.f32.mrb[0].mxu0
      %v2502 = vpop.f32.mrb[0].mxu0
      %v2503 = vpop.f32.mrb[0].mxu0
      %2504 = vdwg.mxu0
      %v2505 = vpack.c.bf16 %v2212, %v2164
      %v2506 = vpack.c.bf16 %v2308, %v2260
      %v2507 = vpack.c.bf16 %v2404, %v2356
      %v2508 = vpack.c.bf16 %v2500, %v2452
      %v2510 = vrot.slane %v1616, 2
      %v2512 = vsel %vm732, %v2505, 0
      %v2515 = vsel %vm732, %v2506, 0
      %v2518 = vsel %vm732, %v2507, 0
      %v2521 = vsel %vm732, %v2508, 0
      %vm2523 = vcmask 1041408
      %v2525 = vsel %vm2523, %v2510, 0
      %2527 = vmatprep.subr.bf16.mxu0 0
      %2528 = vmatpush1.bf16.msra.mxu0 %v2525
      %2529 = vmatprep.subr.bf16.mxu0 0
      %2530 = vmatpush1.bf16.msra.mxu0 0
      %2531 = vmatprep.subr.bf16.mxu0 0
      %2532 = vmatpush1.bf16.msra.mxu0 0
      %2533 = vmatprep.subr.bf16.mxu0 0
      %2534 = vmatpush1.bf16.msra.mxu0 0
      %2535 = vmatprep.subr.bf16.mxu0 0
      %2536 = vmatpush1.bf16.msra.mxu0 0
      %2537 = vmatprep.subr.bf16.mxu0 0
      %2538 = vmatpush1.bf16.msra.mxu0 0
      %2539 = vmatprep.subr.bf16.mxu0 0
      %2540 = vmatpush1.bf16.msra.mxu0 0
      %2541 = vmatprep.subr.bf16.mxu0 0
      %2542 = vmatpush1.bf16.msra.mxu0 0
      %2543 = vmatprep.subr.bf16.mxu0 0
      %2544 = vmatpush1.bf16.msra.mxu0 0
      %2545 = vmatprep.subr.bf16.mxu0 0
      %2546 = vmatpush1.bf16.msra.mxu0 0
      %2547 = vmatprep.subr.bf16.mxu0 0
      %2548 = vmatpush1.bf16.msra.mxu0 0
      %2549 = vmatprep.subr.bf16.mxu0 0
      %2550 = vmatpush1.bf16.msra.mxu0 0
      %2551 = vmatprep.subr.bf16.mxu0 0
      %2552 = vmatpush1.bf16.msra.mxu0 0
      %2553 = vmatprep.subr.bf16.mxu0 0
      %2554 = vmatpush1.bf16.msra.mxu0 0
      %2555 = vmatprep.subr.bf16.mxu0 0
      %2556 = vmatpush1.bf16.msra.mxu0 0
      %2557 = vmatprep.subr.bf16.mxu0 0
      %2558 = vmatpush1.bf16.msra.mxu0 0
      %2559 = vmatprep.mubr.bf16.mxu0 0
      %2560 = vmatmul.mubr.bf16.gmra.mrb[0].mxu0 %v2512
      %v2561 = vpop.f32.mrb[0].mxu0
      %v2562 = vadd.f32 0.0, %v2561
      %v2563 = vpop.f32.mrb[0].mxu0
      %v2564 = vpop.f32.mrb[0].mxu0
      %v2565 = vadd.f32 0.0, %v2564
      %v2566 = vpop.f32.mrb[0].mxu0
      %2567 = vmatprep.mubr.bf16.mxu0 0
      %2568 = vmatmul.mubr.bf16.gmra.mrb[0].mxu0 %v2515
      %v2569 = vpop.f32.mrb[0].mxu0
      %v2570 = vadd.f32 0.0, %v2569
      %v2571 = vpop.f32.mrb[0].mxu0
      %v2572 = vpop.f32.mrb[0].mxu0
      %v2573 = vadd.f32 0.0, %v2572
      %v2574 = vpop.f32.mrb[0].mxu0
      %2575 = vmatprep.mubr.bf16.mxu0 0
      %2576 = vmatmul.mubr.bf16.gmra.mrb[0].mxu0 %v2518
      %v2577 = vpop.f32.mrb[0].mxu0
      %v2578 = vadd.f32 0.0, %v2577
      %v2579 = vpop.f32.mrb[0].mxu0
      %v2580 = vpop.f32.mrb[0].mxu0
      %v2581 = vadd.f32 0.0, %v2580
      %v2582 = vpop.f32.mrb[0].mxu0
      %2583 = vmatprep.mubr.bf16.mxu0 0
      %2584 = vmatmul.mubr.bf16.gmra.mrb[0].mxu0 %v2521
      %v2585 = vpop.f32.mrb[0].mxu0
      %v2586 = vadd.f32 0.0, %v2585
      %v2587 = vpop.f32.mrb[0].mxu0
      %v2588 = vpop.f32.mrb[0].mxu0
      %v2589 = vadd.f32 0.0, %v2588
      %v2590 = vpop.f32.mrb[0].mxu0
      %2591 = vdwg.mxu0
      %v2593 = vsel %vm732, %v1612, 0
      %v2596 = vsel %vm732, %v1613, 0
      %v2599 = vsel %vm732, %v1614, 0
      %v2602 = vsel %vm732, %v1615, 0
      %v2605 = vsel %vm2523, %v1616, 0
      %2607 = vmatprep.subr.bf16.mxu0 0
      %2608 = vmatpush1.bf16.msra.mxu0 %v2605
      %2609 = vmatprep.subr.bf16.mxu0 0
      %2610 = vmatpush1.bf16.msra.mxu0 0
      %2611 = vmatprep.subr.bf16.mxu0 0
      %2612 = vmatpush1.bf16.msra.mxu0 0
      %2613 = vmatprep.subr.bf16.mxu0 0
      %2614 = vmatpush1.bf16.msra.mxu0 0
      %2615 = vmatprep.subr.bf16.mxu0 0
      %2616 = vmatpush1.bf16.msra.mxu0 0
      %2617 = vmatprep.subr.bf16.mxu0 0
      %2618 = vmatpush1.bf16.msra.mxu0 0
      %2619 = vmatprep.subr.bf16.mxu0 0
      %2620 = vmatpush1.bf16.msra.mxu0 0
      %2621 = vmatprep.subr.bf16.mxu0 0
      %2622 = vmatpush1.bf16.msra.mxu0 0
      %2623 = vmatprep.subr.bf16.mxu0 0
      %2624 = vmatpush1.bf16.msra.mxu0 0
      %2625 = vmatprep.subr.bf16.mxu0 0
      %2626 = vmatpush1.bf16.msra.mxu0 0
      %2627 = vmatprep.subr.bf16.mxu0 0
      %2628 = vmatpush1.bf16.msra.mxu0 0
      %2629 = vmatprep.subr.bf16.mxu0 0
      %2630 = vmatpush1.bf16.msra.mxu0 0
      %2631 = vmatprep.subr.bf16.mxu0 0
      %2632 = vmatpush1.bf16.msra.mxu0 0
      %2633 = vmatprep.subr.bf16.mxu0 0
      %2634 = vmatpush1.bf16.msra.mxu0 0
      %2635 = vmatprep.subr.bf16.mxu0 0
      %2636 = vmatpush1.bf16.msra.mxu0 0
      %2637 = vmatprep.subr.bf16.mxu0 0
      %2638 = vmatpush1.bf16.msra.mxu0 0
      %2639 = vmatprep.mubr.bf16.mxu0 0
      %2640 = vmatmul.mubr.bf16.gmra.mrb[0].mxu0 %v2593
      %v2641 = vpop.f32.mrb[0].mxu0
      %v2642 = vadd.f32 %v2562, %v2641
      %v2643 = vpop.f32.mrb[0].mxu0
      %v2644 = vpop.f32.mrb[0].mxu0
      %v2645 = vadd.f32 %v2565, %v2644
      %v2646 = vpop.f32.mrb[0].mxu0
      %2647 = vmatprep.mubr.bf16.mxu0 0
      %2648 = vmatmul.mubr.bf16.gmra.mrb[0].mxu0 %v2596
      %v2649 = vpop.f32.mrb[0].mxu0
      %v2650 = vadd.f32 %v2570, %v2649
      %v2651 = vpop.f32.mrb[0].mxu0
      %v2652 = vpop.f32.mrb[0].mxu0
      %v2653 = vadd.f32 %v2573, %v2652
      %v2654 = vpop.f32.mrb[0].mxu0
      %2655 = vmatprep.mubr.bf16.mxu0 0
      %2656 = vmatmul.mubr.bf16.gmra.mrb[0].mxu0 %v2599
      %v2657 = vpop.f32.mrb[0].mxu0
      %v2658 = vadd.f32 %v2578, %v2657
      %v2659 = vpop.f32.mrb[0].mxu0
      %v2660 = vpop.f32.mrb[0].mxu0
      %v2661 = vadd.f32 %v2581, %v2660
      %v2662 = vpop.f32.mrb[0].mxu0
      %2663 = vmatprep.mubr.bf16.mxu0 0
      %2664 = vmatmul.mubr.bf16.gmra.mrb[0].mxu0 %v2602
      %v2665 = vpop.f32.mrb[0].mxu0
      %v2666 = vadd.f32 %v2586, %v2665
      %v2667 = vpop.f32.mrb[0].mxu0
      %v2668 = vpop.f32.mrb[0].mxu0
      %v2669 = vadd.f32 %v2589, %v2668
      %v2670 = vpop.f32.mrb[0].mxu0
      %2671 = vdwg.mxu0
      %2672 = vrot.lane.b32.xlu0 %v721, 120
      %v2673 = vpop.permute.xlu0 %2672
      %2674 = vrot.lane.b32.xlu0 %v721, 104
      %v2675 = vpop.permute.xlu0 %2674
      %v2677 = vsel %vm732, %v2673, 0
      %v2680 = vsel %vm732, %v2675, 0
      %2682 = vmatprep.subr.bf16.mxu0 0
      %2683 = vmatpush1.bf16.xpose.msra.mxu0 %v2680
      %2684 = vmatprep.subr.bf16.mxu0 0
      %2685 = vmatpush1.bf16.xpose.msra.mxu0 0
      %2686 = vmatprep.subr.bf16.mxu0 0
      %2687 = vmatpush1.bf16.xpose.msra.mxu0 0
      %2688 = vmatprep.subr.bf16.mxu0 0
      %2689 = vmatpush1.bf16.xpose.msra.mxu0 0
      %2690 = vmatprep.subr.bf16.mxu0 0
      %2691 = vmatpush1.bf16.xpose.msra.mxu0 0
      %2692 = vmatprep.subr.bf16.mxu0 0
      %2693 = vmatpush1.bf16.xpose.msra.mxu0 0
      %2694 = vmatprep.subr.bf16.mxu0 0
      %2695 = vmatpush1.bf16.xpose.msra.mxu0 0
      %2696 = vmatprep.subr.bf16.mxu0 0
      %2697 = vmatpush1.bf16.xpose.msra.mxu0 0
      %2698 = vmatprep.subr.bf16.mxu0 0
      %2699 = vmatpush1.bf16.xpose.msra.mxu0 0
      %2700 = vmatprep.subr.bf16.mxu0 0
      %2701 = vmatpush1.bf16.xpose.msra.mxu0 0
      %2702 = vmatprep.subr.bf16.mxu0 0
      %2703 = vmatpush1.bf16.xpose.msra.mxu0 0
      %2704 = vmatprep.subr.bf16.mxu0 0
      %2705 = vmatpush1.bf16.xpose.msra.mxu0 0
      %2706 = vmatprep.subr.bf16.mxu0 0
      %2707 = vmatpush1.bf16.xpose.msra.mxu0 0
      %2708 = vmatprep.subr.bf16.mxu0 0
      %2709 = vmatpush1.bf16.xpose.msra.mxu0 0
      %2710 = vmatprep.subr.bf16.mxu0 0
      %2711 = vmatpush1.bf16.xpose.msra.mxu0 0
      %2712 = vmatprep.subr.bf16.mxu0 0
      %2713 = vmatpush1.bf16.xpose.msra.mxu0 0
      %2714 = vmatprep.mubr.bf16.mxu0 0
      %2715 = vmatmul.mubr.bf16.gmra.mrb[0].mxu0 %v2677
      %v2716 = vpop.f32.mrb[0].mxu0
      %v2717 = vadd.f32 0.0, %v2716
      %v2718 = vpop.f32.mrb[0].mxu0
      %v2719 = vpop.f32.mrb[0].mxu0
      %v2720 = vpop.f32.mrb[0].mxu0
      %2721 = vdwg.mxu0
      %2722 = vrot.lane.b32.xlu0 %v722, 120
      %v2723 = vpop.permute.xlu0 %2722
      %2724 = vrot.lane.b32.xlu0 %v722, 104
      %v2725 = vpop.permute.xlu0 %2724
      %v2727 = vsel %vm732, %v2723, 0
      %v2730 = vsel %vm732, %v2725, 0
      %2732 = vmatprep.subr.bf16.mxu0 0
      %2733 = vmatpush1.bf16.xpose.msra.mxu0 %v2730
      %2734 = vmatprep.subr.bf16.mxu0 0
      %2735 = vmatpush1.bf16.xpose.msra.mxu0 0
      %2736 = vmatprep.subr.bf16.mxu0 0
      %2737 = vmatpush1.bf16.xpose.msra.mxu0 0
      %2738 = vmatprep.subr.bf16.mxu0 0
      %2739 = vmatpush1.bf16.xpose.msra.mxu0 0
      %2740 = vmatprep.subr.bf16.mxu0 0
      %2741 = vmatpush1.bf16.xpose.msra.mxu0 0
      %2742 = vmatprep.subr.bf16.mxu0 0
      %2743 = vmatpush1.bf16.xpose.msra.mxu0 0
      %2744 = vmatprep.subr.bf16.mxu0 0
      %2745 = vmatpush1.bf16.xpose.msra.mxu0 0
      %2746 = vmatprep.subr.bf16.mxu0 0
      %2747 = vmatpush1.bf16.xpose.msra.mxu0 0
      %2748 = vmatprep.subr.bf16.mxu0 0
      %2749 = vmatpush1.bf16.xpose.msra.mxu0 0
      %2750 = vmatprep.subr.bf16.mxu0 0
      %2751 = vmatpush1.bf16.xpose.msra.mxu0 0
      %2752 = vmatprep.subr.bf16.mxu0 0
      %2753 = vmatpush1.bf16.xpose.msra.mxu0 0
      %2754 = vmatprep.subr.bf16.mxu0 0
      %2755 = vmatpush1.bf16.xpose.msra.mxu0 0
      %2756 = vmatprep.subr.bf16.mxu0 0
      %2757 = vmatpush1.bf16.xpose.msra.mxu0 0
      %2758 = vmatprep.subr.bf16.mxu0 0
      %2759 = vmatpush1.bf16.xpose.msra.mxu0 0
      %2760 = vmatprep.subr.bf16.mxu0 0
      %2761 = vmatpush1.bf16.xpose.msra.mxu0 0
      %2762 = vmatprep.subr.bf16.mxu0 0
      %2763 = vmatpush1.bf16.xpose.msra.mxu0 0
      %2764 = vmatprep.mubr.bf16.mxu0 0
      %2765 = vmatmul.mubr.bf16.gmra.mrb[0].mxu0 %v2727
      %v2766 = vpop.f32.mrb[0].mxu0
      %v2767 = vadd.f32 0.0, %v2766
      %v2768 = vpop.f32.mrb[0].mxu0
      %v2769 = vpop.f32.mrb[0].mxu0
      %v2770 = vpop.f32.mrb[0].mxu0
      %2771 = vdwg.mxu0
      %2772 = vrot.lane.b32.xlu0 %v723, 120
      %v2773 = vpop.permute.xlu0 %2772
      %2774 = vrot.lane.b32.xlu0 %v723, 104
      %v2775 = vpop.permute.xlu0 %2774
      %v2777 = vsel %vm732, %v2773, 0
      %v2780 = vsel %vm732, %v2775, 0
      %2782 = vmatprep.subr.bf16.mxu0 0
      %2783 = vmatpush1.bf16.xpose.msra.mxu0 %v2780
      %2784 = vmatprep.subr.bf16.mxu0 0
      %2785 = vmatpush1.bf16.xpose.msra.mxu0 0
      %2786 = vmatprep.subr.bf16.mxu0 0
      %2787 = vmatpush1.bf16.xpose.msra.mxu0 0
      %2788 = vmatprep.subr.bf16.mxu0 0
      %2789 = vmatpush1.bf16.xpose.msra.mxu0 0
      %2790 = vmatprep.subr.bf16.mxu0 0
      %2791 = vmatpush1.bf16.xpose.msra.mxu0 0
      %2792 = vmatprep.subr.bf16.mxu0 0
      %2793 = vmatpush1.bf16.xpose.msra.mxu0 0
      %2794 = vmatprep.subr.bf16.mxu0 0
      %2795 = vmatpush1.bf16.xpose.msra.mxu0 0
      %2796 = vmatprep.subr.bf16.mxu0 0
      %2797 = vmatpush1.bf16.xpose.msra.mxu0 0
      %2798 = vmatprep.subr.bf16.mxu0 0
      %2799 = vmatpush1.bf16.xpose.msra.mxu0 0
      %2800 = vmatprep.subr.bf16.mxu0 0
      %2801 = vmatpush1.bf16.xpose.msra.mxu0 0
      %2802 = vmatprep.subr.bf16.mxu0 0
      %2803 = vmatpush1.bf16.xpose.msra.mxu0 0
      %2804 = vmatprep.subr.bf16.mxu0 0
      %2805 = vmatpush1.bf16.xpose.msra.mxu0 0
      %2806 = vmatprep.subr.bf16.mxu0 0
      %2807 = vmatpush1.bf16.xpose.msra.mxu0 0
      %2808 = vmatprep.subr.bf16.mxu0 0
      %2809 = vmatpush1.bf16.xpose.msra.mxu0 0
      %2810 = vmatprep.subr.bf16.mxu0 0
      %2811 = vmatpush1.bf16.xpose.msra.mxu0 0
      %2812 = vmatprep.subr.bf16.mxu0 0
      %2813 = vmatpush1.bf16.xpose.msra.mxu0 0
      %2814 = vmatprep.mubr.bf16.mxu0 0
      %2815 = vmatmul.mubr.bf16.gmra.mrb[0].mxu0 %v2777
      %v2816 = vpop.f32.mrb[0].mxu0
      %v2817 = vadd.f32 0.0, %v2816
      %v2818 = vpop.f32.mrb[0].mxu0
      %v2819 = vpop.f32.mrb[0].mxu0
      %v2820 = vpop.f32.mrb[0].mxu0
      %2821 = vdwg.mxu0
      %2822 = vrot.lane.b32.xlu0 %v724, 120
      %v2823 = vpop.permute.xlu0 %2822
      %2824 = vrot.lane.b32.xlu0 %v724, 104
      %v2825 = vpop.permute.xlu0 %2824
      %v2827 = vsel %vm732, %v2823, 0
      %v2830 = vsel %vm732, %v2825, 0
      %2832 = vmatprep.subr.bf16.mxu0 0
      %2833 = vmatpush1.bf16.xpose.msra.mxu0 %v2830
      %2834 = vmatprep.subr.bf16.mxu0 0
      %2835 = vmatpush1.bf16.xpose.msra.mxu0 0
      %2836 = vmatprep.subr.bf16.mxu0 0
      %2837 = vmatpush1.bf16.xpose.msra.mxu0 0
      %2838 = vmatprep.subr.bf16.mxu0 0
      %2839 = vmatpush1.bf16.xpose.msra.mxu0 0
      %2840 = vmatprep.subr.bf16.mxu0 0
      %2841 = vmatpush1.bf16.xpose.msra.mxu0 0
      %2842 = vmatprep.subr.bf16.mxu0 0
      %2843 = vmatpush1.bf16.xpose.msra.mxu0 0
      %2844 = vmatprep.subr.bf16.mxu0 0
      %2845 = vmatpush1.bf16.xpose.msra.mxu0 0
      %2846 = vmatprep.subr.bf16.mxu0 0
      %2847 = vmatpush1.bf16.xpose.msra.mxu0 0
      %2848 = vmatprep.subr.bf16.mxu0 0
      %2849 = vmatpush1.bf16.xpose.msra.mxu0 0
      %2850 = vmatprep.subr.bf16.mxu0 0
      %2851 = vmatpush1.bf16.xpose.msra.mxu0 0
      %2852 = vmatprep.subr.bf16.mxu0 0
      %2853 = vmatpush1.bf16.xpose.msra.mxu0 0
      %2854 = vmatprep.subr.bf16.mxu0 0
      %2855 = vmatpush1.bf16.xpose.msra.mxu0 0
      %2856 = vmatprep.subr.bf16.mxu0 0
      %2857 = vmatpush1.bf16.xpose.msra.mxu0 0
      %2858 = vmatprep.subr.bf16.mxu0 0
      %2859 = vmatpush1.bf16.xpose.msra.mxu0 0
      %2860 = vmatprep.subr.bf16.mxu0 0
      %2861 = vmatpush1.bf16.xpose.msra.mxu0 0
      %2862 = vmatprep.subr.bf16.mxu0 0
      %2863 = vmatpush1.bf16.xpose.msra.mxu0 0
      %2864 = vmatprep.mubr.bf16.mxu0 0
      %2865 = vmatmul.mubr.bf16.gmra.mrb[0].mxu0 %v2827
      %v2866 = vpop.f32.mrb[0].mxu0
      %v2867 = vadd.f32 0.0, %v2866
      %v2868 = vpop.f32.mrb[0].mxu0
      %v2869 = vpop.f32.mrb[0].mxu0
      %v2870 = vpop.f32.mrb[0].mxu0
      %2871 = vdwg.mxu0
      %2872 = vrot.lane.b32.xlu0 %v725, 120
      %v2873 = vpop.permute.xlu0 %2872
      %2874 = vrot.lane.b32.xlu0 %v725, 104
      %v2875 = vpop.permute.xlu0 %2874
      %v2877 = vsel %vm732, %v2873, 0
      %v2880 = vsel %vm732, %v2875, 0
      %2882 = vmatprep.subr.bf16.mxu0 0
      %2883 = vmatpush1.bf16.xpose.msra.mxu0 %v2880
      %2884 = vmatprep.subr.bf16.mxu0 0
      %2885 = vmatpush1.bf16.xpose.msra.mxu0 0
      %2886 = vmatprep.subr.bf16.mxu0 0
      %2887 = vmatpush1.bf16.xpose.msra.mxu0 0
      %2888 = vmatprep.subr.bf16.mxu0 0
      %2889 = vmatpush1.bf16.xpose.msra.mxu0 0
      %2890 = vmatprep.subr.bf16.mxu0 0
      %2891 = vmatpush1.bf16.xpose.msra.mxu0 0
      %2892 = vmatprep.subr.bf16.mxu0 0
      %2893 = vmatpush1.bf16.xpose.msra.mxu0 0
      %2894 = vmatprep.subr.bf16.mxu0 0
      %2895 = vmatpush1.bf16.xpose.msra.mxu0 0
      %2896 = vmatprep.subr.bf16.mxu0 0
      %2897 = vmatpush1.bf16.xpose.msra.mxu0 0
      %2898 = vmatprep.subr.bf16.mxu0 0
      %2899 = vmatpush1.bf16.xpose.msra.mxu0 0
      %2900 = vmatprep.subr.bf16.mxu0 0
      %2901 = vmatpush1.bf16.xpose.msra.mxu0 0
      %2902 = vmatprep.subr.bf16.mxu0 0
      %2903 = vmatpush1.bf16.xpose.msra.mxu0 0
      %2904 = vmatprep.subr.bf16.mxu0 0
      %2905 = vmatpush1.bf16.xpose.msra.mxu0 0
      %2906 = vmatprep.subr.bf16.mxu0 0
      %2907 = vmatpush1.bf16.xpose.msra.mxu0 0
      %2908 = vmatprep.subr.bf16.mxu0 0
      %2909 = vmatpush1.bf16.xpose.msra.mxu0 0
      %2910 = vmatprep.subr.bf16.mxu0 0
      %2911 = vmatpush1.bf16.xpose.msra.mxu0 0
      %2912 = vmatprep.subr.bf16.mxu0 0
      %2913 = vmatpush1.bf16.xpose.msra.mxu0 0
      %2914 = vmatprep.mubr.bf16.mxu0 0
      %2915 = vmatmul.mubr.bf16.gmra.mrb[0].mxu0 %v2877
      %v2916 = vpop.f32.mrb[0].mxu0
      %v2917 = vadd.f32 0.0, %v2916
      %v2918 = vpop.f32.mrb[0].mxu0
      %v2919 = vpop.f32.mrb[0].mxu0
      %v2920 = vpop.f32.mrb[0].mxu0
      %2921 = vdwg.mxu0
      %2922 = vrot.lane.b32.xlu0 %v726, 120
      %v2923 = vpop.permute.xlu0 %2922
      %2924 = vrot.lane.b32.xlu0 %v726, 104
      %v2925 = vpop.permute.xlu0 %2924
      %v2927 = vsel %vm732, %v2923, 0
      %v2930 = vsel %vm732, %v2925, 0
      %2932 = vmatprep.subr.bf16.mxu0 0
      %2933 = vmatpush1.bf16.xpose.msra.mxu0 %v2930
      %2934 = vmatprep.subr.bf16.mxu0 0
      %2935 = vmatpush1.bf16.xpose.msra.mxu0 0
      %2936 = vmatprep.subr.bf16.mxu0 0
      %2937 = vmatpush1.bf16.xpose.msra.mxu0 0
      %2938 = vmatprep.subr.bf16.mxu0 0
      %2939 = vmatpush1.bf16.xpose.msra.mxu0 0
      %2940 = vmatprep.subr.bf16.mxu0 0
      %2941 = vmatpush1.bf16.xpose.msra.mxu0 0
      %2942 = vmatprep.subr.bf16.mxu0 0
      %2943 = vmatpush1.bf16.xpose.msra.mxu0 0
      %2944 = vmatprep.subr.bf16.mxu0 0
      %2945 = vmatpush1.bf16.xpose.msra.mxu0 0
      %2946 = vmatprep.subr.bf16.mxu0 0
      %2947 = vmatpush1.bf16.xpose.msra.mxu0 0
      %2948 = vmatprep.subr.bf16.mxu0 0
      %2949 = vmatpush1.bf16.xpose.msra.mxu0 0
      %2950 = vmatprep.subr.bf16.mxu0 0
      %2951 = vmatpush1.bf16.xpose.msra.mxu0 0
      %2952 = vmatprep.subr.bf16.mxu0 0
      %2953 = vmatpush1.bf16.xpose.msra.mxu0 0
      %2954 = vmatprep.subr.bf16.mxu0 0
      %2955 = vmatpush1.bf16.xpose.msra.mxu0 0
      %2956 = vmatprep.subr.bf16.mxu0 0
      %2957 = vmatpush1.bf16.xpose.msra.mxu0 0
      %2958 = vmatprep.subr.bf16.mxu0 0
      %2959 = vmatpush1.bf16.xpose.msra.mxu0 0
      %2960 = vmatprep.subr.bf16.mxu0 0
      %2961 = vmatpush1.bf16.xpose.msra.mxu0 0
      %2962 = vmatprep.subr.bf16.mxu0 0
      %2963 = vmatpush1.bf16.xpose.msra.mxu0 0
      %2964 = vmatprep.mubr.bf16.mxu0 0
      %2965 = vmatmul.mubr.bf16.gmra.mrb[0].mxu0 %v2927
      %v2966 = vpop.f32.mrb[0].mxu0
      %v2967 = vadd.f32 0.0, %v2966
      %v2968 = vpop.f32.mrb[0].mxu0
      %v2969 = vpop.f32.mrb[0].mxu0
      %v2970 = vpop.f32.mrb[0].mxu0
      %2971 = vdwg.mxu0
      %2972 = vrot.lane.b32.xlu0 %v727, 120
      %v2973 = vpop.permute.xlu0 %2972
      %2974 = vrot.lane.b32.xlu0 %v727, 104
      %v2975 = vpop.permute.xlu0 %2974
      %v2977 = vsel %vm732, %v2973, 0
      %v2980 = vsel %vm732, %v2975, 0
      %2982 = vmatprep.subr.bf16.mxu0 0
      %2983 = vmatpush1.bf16.xpose.msra.mxu0 %v2980
      %2984 = vmatprep.subr.bf16.mxu0 0
      %2985 = vmatpush1.bf16.xpose.msra.mxu0 0
      %2986 = vmatprep.subr.bf16.mxu0 0
      %2987 = vmatpush1.bf16.xpose.msra.mxu0 0
      %2988 = vmatprep.subr.bf16.mxu0 0
      %2989 = vmatpush1.bf16.xpose.msra.mxu0 0
      %2990 = vmatprep.subr.bf16.mxu0 0
      %2991 = vmatpush1.bf16.xpose.msra.mxu0 0
      %2992 = vmatprep.subr.bf16.mxu0 0
      %2993 = vmatpush1.bf16.xpose.msra.mxu0 0
      %2994 = vmatprep.subr.bf16.mxu0 0
      %2995 = vmatpush1.bf16.xpose.msra.mxu0 0
      %2996 = vmatprep.subr.bf16.mxu0 0
      %2997 = vmatpush1.bf16.xpose.msra.mxu0 0
      %2998 = vmatprep.subr.bf16.mxu0 0
      %2999 = vmatpush1.bf16.xpose.msra.mxu0 0
      %3000 = vmatprep.subr.bf16.mxu0 0
      %3001 = vmatpush1.bf16.xpose.msra.mxu0 0
      %3002 = vmatprep.subr.bf16.mxu0 0
      %3003 = vmatpush1.bf16.xpose.msra.mxu0 0
      %3004 = vmatprep.subr.bf16.mxu0 0
      %3005 = vmatpush1.bf16.xpose.msra.mxu0 0
      %3006 = vmatprep.subr.bf16.mxu0 0
      %3007 = vmatpush1.bf16.xpose.msra.mxu0 0
      %3008 = vmatprep.subr.bf16.mxu0 0
      %3009 = vmatpush1.bf16.xpose.msra.mxu0 0
      %3010 = vmatprep.subr.bf16.mxu0 0
      %3011 = vmatpush1.bf16.xpose.msra.mxu0 0
      %3012 = vmatprep.subr.bf16.mxu0 0
      %3013 = vmatpush1.bf16.xpose.msra.mxu0 0
      %3014 = vmatprep.mubr.bf16.mxu0 0
      %3015 = vmatmul.mubr.bf16.gmra.mrb[0].mxu0 %v2977
      %v3016 = vpop.f32.mrb[0].mxu0
      %v3017 = vadd.f32 0.0, %v3016
      %v3018 = vpop.f32.mrb[0].mxu0
      %v3019 = vpop.f32.mrb[0].mxu0
      %v3020 = vpop.f32.mrb[0].mxu0
      %3021 = vdwg.mxu0
      %3022 = vrot.lane.b32.xlu0 %v728, 120
      %v3023 = vpop.permute.xlu0 %3022
      %3024 = vrot.lane.b32.xlu0 %v728, 104
      %v3025 = vpop.permute.xlu0 %3024
      %v3027 = vsel %vm732, %v3023, 0
      %v3030 = vsel %vm732, %v3025, 0
      %3032 = vmatprep.subr.bf16.mxu0 0
      %3033 = vmatpush1.bf16.xpose.msra.mxu0 %v3030
      %3034 = vmatprep.subr.bf16.mxu0 0
      %3035 = vmatpush1.bf16.xpose.msra.mxu0 0
      %3036 = vmatprep.subr.bf16.mxu0 0
      %3037 = vmatpush1.bf16.xpose.msra.mxu0 0
      %3038 = vmatprep.subr.bf16.mxu0 0
      %3039 = vmatpush1.bf16.xpose.msra.mxu0 0
      %3040 = vmatprep.subr.bf16.mxu0 0
      %3041 = vmatpush1.bf16.xpose.msra.mxu0 0
      %3042 = vmatprep.subr.bf16.mxu0 0
      %3043 = vmatpush1.bf16.xpose.msra.mxu0 0
      %3044 = vmatprep.subr.bf16.mxu0 0
      %3045 = vmatpush1.bf16.xpose.msra.mxu0 0
      %3046 = vmatprep.subr.bf16.mxu0 0
      %3047 = vmatpush1.bf16.xpose.msra.mxu0 0
      %3048 = vmatprep.subr.bf16.mxu0 0
      %3049 = vmatpush1.bf16.xpose.msra.mxu0 0
      %3050 = vmatprep.subr.bf16.mxu0 0
      %3051 = vmatpush1.bf16.xpose.msra.mxu0 0
      %3052 = vmatprep.subr.bf16.mxu0 0
      %3053 = vmatpush1.bf16.xpose.msra.mxu0 0
      %3054 = vmatprep.subr.bf16.mxu0 0
      %3055 = vmatpush1.bf16.xpose.msra.mxu0 0
      %3056 = vmatprep.subr.bf16.mxu0 0
      %3057 = vmatpush1.bf16.xpose.msra.mxu0 0
      %3058 = vmatprep.subr.bf16.mxu0 0
      %3059 = vmatpush1.bf16.xpose.msra.mxu0 0
      %3060 = vmatprep.subr.bf16.mxu0 0
      %3061 = vmatpush1.bf16.xpose.msra.mxu0 0
      %3062 = vmatprep.subr.bf16.mxu0 0
      %3063 = vmatpush1.bf16.xpose.msra.mxu0 0
      %3064 = vmatprep.mubr.bf16.mxu0 0
      %3065 = vmatmul.mubr.bf16.gmra.mrb[0].mxu0 %v3027
      %v3066 = vpop.f32.mrb[0].mxu0
      %v3067 = vadd.f32 0.0, %v3066
      %v3068 = vpop.f32.mrb[0].mxu0
      %v3069 = vpop.f32.mrb[0].mxu0
      %v3070 = vpop.f32.mrb[0].mxu0
      %3071 = vdwg.mxu0
      %v3072 = vmul.f32 %v2717, 0.5
      %v3073 = vmul.f32 %v2767, 0.5
      %v3074 = vmul.f32 %v2817, 0.5
      %v3075 = vmul.f32 %v2867, 0.5
      %v3076 = vmul.f32 %v2917, 0.5
      %v3077 = vmul.f32 %v2967, 0.5
      %v3078 = vmul.f32 %v3017, 0.5
      %v3079 = vmul.f32 %v3067, 0.5
      %v3080 = vsel %vm1130, %v3072, -inf
      %3081 = vmax.xlane.f32.xlu0 %v3080
      %v3082 = vpop.xlane.xlu0 %3081
      %v3083 = vsel %vm1130, %v3073, -inf
      %3084 = vmax.xlane.f32.xlu0 %v3083
      %v3085 = vpop.xlane.xlu0 %3084
      %v3086 = vsel %vm1130, %v3074, -inf
      %3087 = vmax.xlane.f32.xlu0 %v3086
      %v3088 = vpop.xlane.xlu0 %3087
      %v3089 = vsel %vm1130, %v3075, -inf
      %3090 = vmax.xlane.f32.xlu0 %v3089
      %v3091 = vpop.xlane.xlu0 %3090
      %v3092 = vsel %vm1130, %v3076, -inf
      %3093 = vmax.xlane.f32.xlu0 %v3092
      %v3094 = vpop.xlane.xlu0 %3093
      %v3095 = vsel %vm1130, %v3077, -inf
      %3096 = vmax.xlane.f32.xlu0 %v3095
      %v3097 = vpop.xlane.xlu0 %3096
      %v3098 = vsel %vm1130, %v3078, -inf
      %3099 = vmax.xlane.f32.xlu0 %v3098
      %v3100 = vpop.xlane.xlu0 %3099
      %v3101 = vsel %vm1130, %v3079, -inf
      %3102 = vmax.xlane.f32.xlu0 %v3101
      %v3103 = vpop.xlane.xlu0 %3102
      %v3104 = vsub.f32 %v3072, %v3082
      %v3105 = vsub.f32 %v3073, %v3085
      %v3106 = vsub.f32 %v3074, %v3088
      %v3107 = vsub.f32 %v3075, %v3091
      %v3108 = vsub.f32 %v3076, %v3094
      %v3109 = vsub.f32 %v3077, %v3097
      %v3110 = vsub.f32 %v3078, %v3100
      %v3111 = vsub.f32 %v3079, %v3103
      %v3112 = vmul.f32 %v3104, 1.442695
      %v3113 = vpow.pop %v3112
      %v3114 = vmul.f32 %v3105, 1.442695
      %v3115 = vpow.pop %v3114
      %v3116 = vmul.f32 %v3106, 1.442695
      %v3117 = vpow.pop %v3116
      %v3118 = vmul.f32 %v3107, 1.442695
      %v3119 = vpow.pop %v3118
      %v3120 = vmul.f32 %v3108, 1.442695
      %v3121 = vpow.pop %v3120
      %v3122 = vmul.f32 %v3109, 1.442695
      %v3123 = vpow.pop %v3122
      %v3124 = vmul.f32 %v3110, 1.442695
      %v3125 = vpow.pop %v3124
      %v3126 = vmul.f32 %v3111, 1.442695
      %v3127 = vpow.pop %v3126
      %v3128 = vsel %vm1130, %v3113, 0.0
      %3129 = vadd.xlane.f32.xlu0 %v3128
      %v3130 = vpop.xlane.xlu0 %3129
      %v3131 = vsel %vm1130, %v3115, 0.0
      %3132 = vadd.xlane.f32.xlu0 %v3131
      %v3133 = vpop.xlane.xlu0 %3132
      %v3134 = vsel %vm1130, %v3117, 0.0
      %3135 = vadd.xlane.f32.xlu0 %v3134
      %v3136 = vpop.xlane.xlu0 %3135
      %v3137 = vsel %vm1130, %v3119, 0.0
      %3138 = vadd.xlane.f32.xlu0 %v3137
      %v3139 = vpop.xlane.xlu0 %3138
      %v3140 = vsel %vm1130, %v3121, 0.0
      %3141 = vadd.xlane.f32.xlu0 %v3140
      %v3142 = vpop.xlane.xlu0 %3141
      %v3143 = vsel %vm1130, %v3123, 0.0
      %3144 = vadd.xlane.f32.xlu0 %v3143
      %v3145 = vpop.xlane.xlu0 %3144
      %v3146 = vsel %vm1130, %v3125, 0.0
      %3147 = vadd.xlane.f32.xlu0 %v3146
      %v3148 = vpop.xlane.xlu0 %3147
      %v3149 = vsel %vm1130, %v3127, 0.0
      %3150 = vadd.xlane.f32.xlu0 %v3149
      %v3151 = vpop.xlane.xlu0 %3150
      %v3152 = vrcp.pop %v3130
      %v3153 = vmul.f32 %v3113, %v3152
      %v3154 = vrcp.pop %v3133
      %v3155 = vmul.f32 %v3115, %v3154
      %v3156 = vrcp.pop %v3136
      %v3157 = vmul.f32 %v3117, %v3156
      %v3158 = vrcp.pop %v3139
      %v3159 = vmul.f32 %v3119, %v3158
      %v3160 = vrcp.pop %v3142
      %v3161 = vmul.f32 %v3121, %v3160
      %v3162 = vrcp.pop %v3145
      %v3163 = vmul.f32 %v3123, %v3162
      %v3164 = vrcp.pop %v3148
      %v3165 = vmul.f32 %v3125, %v3164
      %v3166 = vrcp.pop %v3151
      %v3167 = vmul.f32 %v3127, %v3166
      %v3168 = vpack.c.bf16 %v3153, %v3153
      %v3169 = vpack.c.bf16 %v3155, %v3155
      %v3170 = vpack.c.bf16 %v3157, %v3157
      %v3171 = vpack.c.bf16 %v3159, %v3159
      %v3172 = vpack.c.bf16 %v3161, %v3161
      %v3173 = vpack.c.bf16 %v3163, %v3163
      %v3174 = vpack.c.bf16 %v3165, %v3165
      %v3175 = vpack.c.bf16 %v3167, %v3167
      %3176 = vrot.lane.b32.xlu0 %v721, 88
      %v3177 = vpop.permute.xlu0 %3176
      %v3179 = vsel %vm1130, %v3168, 0
      %v3182 = vsel %vm1232, %v3177, 0
      %3184 = vmatprep.subr.bf16.mxu0 0
      %3185 = vmatpush1.bf16.msra.mxu0 %v3182
      %3186 = vmatprep.subr.bf16.mxu0 0
      %3187 = vmatpush1.bf16.msra.mxu0 0
      %3188 = vmatprep.subr.bf16.mxu0 0
      %3189 = vmatpush1.bf16.msra.mxu0 0
      %3190 = vmatprep.subr.bf16.mxu0 0
      %3191 = vmatpush1.bf16.msra.mxu0 0
      %3192 = vmatprep.subr.bf16.mxu0 0
      %3193 = vmatpush1.bf16.msra.mxu0 0
      %3194 = vmatprep.subr.bf16.mxu0 0
      %3195 = vmatpush1.bf16.msra.mxu0 0
      %3196 = vmatprep.subr.bf16.mxu0 0
      %3197 = vmatpush1.bf16.msra.mxu0 0
      %3198 = vmatprep.subr.bf16.mxu0 0
      %3199 = vmatpush1.bf16.msra.mxu0 0
      %3200 = vmatprep.subr.bf16.mxu0 0
      %3201 = vmatpush1.bf16.msra.mxu0 0
      %3202 = vmatprep.subr.bf16.mxu0 0
      %3203 = vmatpush1.bf16.msra.mxu0 0
      %3204 = vmatprep.subr.bf16.mxu0 0
      %3205 = vmatpush1.bf16.msra.mxu0 0
      %3206 = vmatprep.subr.bf16.mxu0 0
      %3207 = vmatpush1.bf16.msra.mxu0 0
      %3208 = vmatprep.subr.bf16.mxu0 0
      %3209 = vmatpush1.bf16.msra.mxu0 0
      %3210 = vmatprep.subr.bf16.mxu0 0
      %3211 = vmatpush1.bf16.msra.mxu0 0
      %3212 = vmatprep.subr.bf16.mxu0 0
      %3213 = vmatpush1.bf16.msra.mxu0 0
      %3214 = vmatprep.subr.bf16.mxu0 0
      %3215 = vmatpush1.bf16.msra.mxu0 0
      %3216 = vmatprep.mubr.bf16.mxu0 0
      %3217 = vmatmul.mubr.bf16.gmra.mrb[0].mxu0 %v3179
      %v3218 = vpop.f32.mrb[0].mxu0
      %v3219 = vadd.f32 0.0, %v3218
      %v3220 = vpop.f32.mrb[0].mxu0
      %v3221 = vpop.f32.mrb[0].mxu0
      %v3222 = vpop.f32.mrb[0].mxu0
      %3223 = vdwg.mxu0
      %3224 = vrot.lane.b32.xlu0 %v722, 88
      %v3225 = vpop.permute.xlu0 %3224
      %v3227 = vsel %vm1130, %v3169, 0
      %v3230 = vsel %vm1232, %v3225, 0
      %3232 = vmatprep.subr.bf16.mxu0 0
      %3233 = vmatpush1.bf16.msra.mxu0 %v3230
      %3234 = vmatprep.subr.bf16.mxu0 0
      %3235 = vmatpush1.bf16.msra.mxu0 0
      %3236 = vmatprep.subr.bf16.mxu0 0
      %3237 = vmatpush1.bf16.msra.mxu0 0
      %3238 = vmatprep.subr.bf16.mxu0 0
      %3239 = vmatpush1.bf16.msra.mxu0 0
      %3240 = vmatprep.subr.bf16.mxu0 0
      %3241 = vmatpush1.bf16.msra.mxu0 0
      %3242 = vmatprep.subr.bf16.mxu0 0
      %3243 = vmatpush1.bf16.msra.mxu0 0
      %3244 = vmatprep.subr.bf16.mxu0 0
      %3245 = vmatpush1.bf16.msra.mxu0 0
      %3246 = vmatprep.subr.bf16.mxu0 0
      %3247 = vmatpush1.bf16.msra.mxu0 0
      %3248 = vmatprep.subr.bf16.mxu0 0
      %3249 = vmatpush1.bf16.msra.mxu0 0
      %3250 = vmatprep.subr.bf16.mxu0 0
      %3251 = vmatpush1.bf16.msra.mxu0 0
      %3252 = vmatprep.subr.bf16.mxu0 0
      %3253 = vmatpush1.bf16.msra.mxu0 0
      %3254 = vmatprep.subr.bf16.mxu0 0
      %3255 = vmatpush1.bf16.msra.mxu0 0
      %3256 = vmatprep.subr.bf16.mxu0 0
      %3257 = vmatpush1.bf16.msra.mxu0 0
      %3258 = vmatprep.subr.bf16.mxu0 0
      %3259 = vmatpush1.bf16.msra.mxu0 0
      %3260 = vmatprep.subr.bf16.mxu0 0
      %3261 = vmatpush1.bf16.msra.mxu0 0
      %3262 = vmatprep.subr.bf16.mxu0 0
      %3263 = vmatpush1.bf16.msra.mxu0 0
      %3264 = vmatprep.mubr.bf16.mxu0 0
      %3265 = vmatmul.mubr.bf16.gmra.mrb[0].mxu0 %v3227
      %v3266 = vpop.f32.mrb[0].mxu0
      %v3267 = vadd.f32 0.0, %v3266
      %v3268 = vpop.f32.mrb[0].mxu0
      %v3269 = vpop.f32.mrb[0].mxu0
      %v3270 = vpop.f32.mrb[0].mxu0
      %3271 = vdwg.mxu0
      %3272 = vrot.lane.b32.xlu0 %v723, 88
      %v3273 = vpop.permute.xlu0 %3272
      %v3275 = vsel %vm1130, %v3170, 0
      %v3278 = vsel %vm1232, %v3273, 0
      %3280 = vmatprep.subr.bf16.mxu0 0
      %3281 = vmatpush1.bf16.msra.mxu0 %v3278
      %3282 = vmatprep.subr.bf16.mxu0 0
      %3283 = vmatpush1.bf16.msra.mxu0 0
      %3284 = vmatprep.subr.bf16.mxu0 0
      %3285 = vmatpush1.bf16.msra.mxu0 0
      %3286 = vmatprep.subr.bf16.mxu0 0
      %3287 = vmatpush1.bf16.msra.mxu0 0
      %3288 = vmatprep.subr.bf16.mxu0 0
      %3289 = vmatpush1.bf16.msra.mxu0 0
      %3290 = vmatprep.subr.bf16.mxu0 0
      %3291 = vmatpush1.bf16.msra.mxu0 0
      %3292 = vmatprep.subr.bf16.mxu0 0
      %3293 = vmatpush1.bf16.msra.mxu0 0
      %3294 = vmatprep.subr.bf16.mxu0 0
      %3295 = vmatpush1.bf16.msra.mxu0 0
      %3296 = vmatprep.subr.bf16.mxu0 0
      %3297 = vmatpush1.bf16.msra.mxu0 0
      %3298 = vmatprep.subr.bf16.mxu0 0
      %3299 = vmatpush1.bf16.msra.mxu0 0
      %3300 = vmatprep.subr.bf16.mxu0 0
      %3301 = vmatpush1.bf16.msra.mxu0 0
      %3302 = vmatprep.subr.bf16.mxu0 0
      %3303 = vmatpush1.bf16.msra.mxu0 0
      %3304 = vmatprep.subr.bf16.mxu0 0
      %3305 = vmatpush1.bf16.msra.mxu0 0
      %3306 = vmatprep.subr.bf16.mxu0 0
      %3307 = vmatpush1.bf16.msra.mxu0 0
      %3308 = vmatprep.subr.bf16.mxu0 0
      %3309 = vmatpush1.bf16.msra.mxu0 0
      %3310 = vmatprep.subr.bf16.mxu0 0
      %3311 = vmatpush1.bf16.msra.mxu0 0
      %3312 = vmatprep.mubr.bf16.mxu0 0
      %3313 = vmatmul.mubr.bf16.gmra.mrb[0].mxu0 %v3275
      %v3314 = vpop.f32.mrb[0].mxu0
      %v3315 = vadd.f32 0.0, %v3314
      %v3316 = vpop.f32.mrb[0].mxu0
      %v3317 = vpop.f32.mrb[0].mxu0
      %v3318 = vpop.f32.mrb[0].mxu0
      %3319 = vdwg.mxu0
      %3320 = vrot.lane.b32.xlu0 %v724, 88
      %v3321 = vpop.permute.xlu0 %3320
      %v3323 = vsel %vm1130, %v3171, 0
      %v3326 = vsel %vm1232, %v3321, 0
      %3328 = vmatprep.subr.bf16.mxu0 0
      %3329 = vmatpush1.bf16.msra.mxu0 %v3326
      %3330 = vmatprep.subr.bf16.mxu0 0
      %3331 = vmatpush1.bf16.msra.mxu0 0
      %3332 = vmatprep.subr.bf16.mxu0 0
      %3333 = vmatpush1.bf16.msra.mxu0 0
      %3334 = vmatprep.subr.bf16.mxu0 0
      %3335 = vmatpush1.bf16.msra.mxu0 0
      %3336 = vmatprep.subr.bf16.mxu0 0
      %3337 = vmatpush1.bf16.msra.mxu0 0
      %3338 = vmatprep.subr.bf16.mxu0 0
      %3339 = vmatpush1.bf16.msra.mxu0 0
      %3340 = vmatprep.subr.bf16.mxu0 0
      %3341 = vmatpush1.bf16.msra.mxu0 0
      %3342 = vmatprep.subr.bf16.mxu0 0
      %3343 = vmatpush1.bf16.msra.mxu0 0
      %3344 = vmatprep.subr.bf16.mxu0 0
      %3345 = vmatpush1.bf16.msra.mxu0 0
      %3346 = vmatprep.subr.bf16.mxu0 0
      %3347 = vmatpush1.bf16.msra.mxu0 0
      %3348 = vmatprep.subr.bf16.mxu0 0
      %3349 = vmatpush1.bf16.msra.mxu0 0
      %3350 = vmatprep.subr.bf16.mxu0 0
      %3351 = vmatpush1.bf16.msra.mxu0 0
      %3352 = vmatprep.subr.bf16.mxu0 0
      %3353 = vmatpush1.bf16.msra.mxu0 0
      %3354 = vmatprep.subr.bf16.mxu0 0
      %3355 = vmatpush1.bf16.msra.mxu0 0
      %3356 = vmatprep.subr.bf16.mxu0 0
      %3357 = vmatpush1.bf16.msra.mxu0 0
      %3358 = vmatprep.subr.bf16.mxu0 0
      %3359 = vmatpush1.bf16.msra.mxu0 0
      %3360 = vmatprep.mubr.bf16.mxu0 0
      %3361 = vmatmul.mubr.bf16.gmra.mrb[0].mxu0 %v3323
      %v3362 = vpop.f32.mrb[0].mxu0
      %v3363 = vadd.f32 0.0, %v3362
      %v3364 = vpop.f32.mrb[0].mxu0
      %v3365 = vpop.f32.mrb[0].mxu0
      %v3366 = vpop.f32.mrb[0].mxu0
      %3367 = vdwg.mxu0
      %3368 = vrot.lane.b32.xlu0 %v725, 88
      %v3369 = vpop.permute.xlu0 %3368
      %v3371 = vsel %vm1130, %v3172, 0
      %v3374 = vsel %vm1232, %v3369, 0
      %3376 = vmatprep.subr.bf16.mxu0 0
      %3377 = vmatpush1.bf16.msra.mxu0 %v3374
      %3378 = vmatprep.subr.bf16.mxu0 0
      %3379 = vmatpush1.bf16.msra.mxu0 0
      %3380 = vmatprep.subr.bf16.mxu0 0
      %3381 = vmatpush1.bf16.msra.mxu0 0
      %3382 = vmatprep.subr.bf16.mxu0 0
      %3383 = vmatpush1.bf16.msra.mxu0 0
      %3384 = vmatprep.subr.bf16.mxu0 0
      %3385 = vmatpush1.bf16.msra.mxu0 0
      %3386 = vmatprep.subr.bf16.mxu0 0
      %3387 = vmatpush1.bf16.msra.mxu0 0
      %3388 = vmatprep.subr.bf16.mxu0 0
      %3389 = vmatpush1.bf16.msra.mxu0 0
      %3390 = vmatprep.subr.bf16.mxu0 0
      %3391 = vmatpush1.bf16.msra.mxu0 0
      %3392 = vmatprep.subr.bf16.mxu0 0
      %3393 = vmatpush1.bf16.msra.mxu0 0
      %3394 = vmatprep.subr.bf16.mxu0 0
      %3395 = vmatpush1.bf16.msra.mxu0 0
      %3396 = vmatprep.subr.bf16.mxu0 0
      %3397 = vmatpush1.bf16.msra.mxu0 0
      %3398 = vmatprep.subr.bf16.mxu0 0
      %3399 = vmatpush1.bf16.msra.mxu0 0
      %3400 = vmatprep.subr.bf16.mxu0 0
      %3401 = vmatpush1.bf16.msra.mxu0 0
      %3402 = vmatprep.subr.bf16.mxu0 0
      %3403 = vmatpush1.bf16.msra.mxu0 0
      %3404 = vmatprep.subr.bf16.mxu0 0
      %3405 = vmatpush1.bf16.msra.mxu0 0
      %3406 = vmatprep.subr.bf16.mxu0 0
      %3407 = vmatpush1.bf16.msra.mxu0 0
      %3408 = vmatprep.mubr.bf16.mxu0 0
      %3409 = vmatmul.mubr.bf16.gmra.mrb[0].mxu0 %v3371
      %v3410 = vpop.f32.mrb[0].mxu0
      %v3411 = vadd.f32 0.0, %v3410
      %v3412 = vpop.f32.mrb[0].mxu0
      %v3413 = vpop.f32.mrb[0].mxu0
      %v3414 = vpop.f32.mrb[0].mxu0
      %3415 = vdwg.mxu0
      %3416 = vrot.lane.b32.xlu0 %v726, 88
      %v3417 = vpop.permute.xlu0 %3416
      %v3419 = vsel %vm1130, %v3173, 0
      %v3422 = vsel %vm1232, %v3417, 0
      %3424 = vmatprep.subr.bf16.mxu0 0
      %3425 = vmatpush1.bf16.msra.mxu0 %v3422
      %3426 = vmatprep.subr.bf16.mxu0 0
      %3427 = vmatpush1.bf16.msra.mxu0 0
      %3428 = vmatprep.subr.bf16.mxu0 0
      %3429 = vmatpush1.bf16.msra.mxu0 0
      %3430 = vmatprep.subr.bf16.mxu0 0
      %3431 = vmatpush1.bf16.msra.mxu0 0
      %3432 = vmatprep.subr.bf16.mxu0 0
      %3433 = vmatpush1.bf16.msra.mxu0 0
      %3434 = vmatprep.subr.bf16.mxu0 0
      %3435 = vmatpush1.bf16.msra.mxu0 0
      %3436 = vmatprep.subr.bf16.mxu0 0
      %3437 = vmatpush1.bf16.msra.mxu0 0
      %3438 = vmatprep.subr.bf16.mxu0 0
      %3439 = vmatpush1.bf16.msra.mxu0 0
      %3440 = vmatprep.subr.bf16.mxu0 0
      %3441 = vmatpush1.bf16.msra.mxu0 0
      %3442 = vmatprep.subr.bf16.mxu0 0
      %3443 = vmatpush1.bf16.msra.mxu0 0
      %3444 = vmatprep.subr.bf16.mxu0 0
      %3445 = vmatpush1.bf16.msra.mxu0 0
      %3446 = vmatprep.subr.bf16.mxu0 0
      %3447 = vmatpush1.bf16.msra.mxu0 0
      %3448 = vmatprep.subr.bf16.mxu0 0
      %3449 = vmatpush1.bf16.msra.mxu0 0
      %3450 = vmatprep.subr.bf16.mxu0 0
      %3451 = vmatpush1.bf16.msra.mxu0 0
      %3452 = vmatprep.subr.bf16.mxu0 0
      %3453 = vmatpush1.bf16.msra.mxu0 0
      %3454 = vmatprep.subr.bf16.mxu0 0
      %3455 = vmatpush1.bf16.msra.mxu0 0
      %3456 = vmatprep.mubr.bf16.mxu0 0
      %3457 = vmatmul.mubr.bf16.gmra.mrb[0].mxu0 %v3419
      %v3458 = vpop.f32.mrb[0].mxu0
      %v3459 = vadd.f32 0.0, %v3458
      %v3460 = vpop.f32.mrb[0].mxu0
      %v3461 = vpop.f32.mrb[0].mxu0
      %v3462 = vpop.f32.mrb[0].mxu0
      %3463 = vdwg.mxu0
      %3464 = vrot.lane.b32.xlu0 %v727, 88
      %v3465 = vpop.permute.xlu0 %3464
      %v3467 = vsel %vm1130, %v3174, 0
      %v3470 = vsel %vm1232, %v3465, 0
      %3472 = vmatprep.subr.bf16.mxu0 0
      %3473 = vmatpush1.bf16.msra.mxu0 %v3470
      %3474 = vmatprep.subr.bf16.mxu0 0
      %3475 = vmatpush1.bf16.msra.mxu0 0
      %3476 = vmatprep.subr.bf16.mxu0 0
      %3477 = vmatpush1.bf16.msra.mxu0 0
      %3478 = vmatprep.subr.bf16.mxu0 0
      %3479 = vmatpush1.bf16.msra.mxu0 0
      %3480 = vmatprep.subr.bf16.mxu0 0
      %3481 = vmatpush1.bf16.msra.mxu0 0
      %3482 = vmatprep.subr.bf16.mxu0 0
      %3483 = vmatpush1.bf16.msra.mxu0 0
      %3484 = vmatprep.subr.bf16.mxu0 0
      %3485 = vmatpush1.bf16.msra.mxu0 0
      %3486 = vmatprep.subr.bf16.mxu0 0
      %3487 = vmatpush1.bf16.msra.mxu0 0
      %3488 = vmatprep.subr.bf16.mxu0 0
      %3489 = vmatpush1.bf16.msra.mxu0 0
      %3490 = vmatprep.subr.bf16.mxu0 0
      %3491 = vmatpush1.bf16.msra.mxu0 0
      %3492 = vmatprep.subr.bf16.mxu0 0
      %3493 = vmatpush1.bf16.msra.mxu0 0
      %3494 = vmatprep.subr.bf16.mxu0 0
      %3495 = vmatpush1.bf16.msra.mxu0 0
      %3496 = vmatprep.subr.bf16.mxu0 0
      %3497 = vmatpush1.bf16.msra.mxu0 0
      %3498 = vmatprep.subr.bf16.mxu0 0
      %3499 = vmatpush1.bf16.msra.mxu0 0
      %3500 = vmatprep.subr.bf16.mxu0 0
      %3501 = vmatpush1.bf16.msra.mxu0 0
      %3502 = vmatprep.subr.bf16.mxu0 0
      %3503 = vmatpush1.bf16.msra.mxu0 0
      %3504 = vmatprep.mubr.bf16.mxu0 0
      %3505 = vmatmul.mubr.bf16.gmra.mrb[0].mxu0 %v3467
      %v3506 = vpop.f32.mrb[0].mxu0
      %v3507 = vadd.f32 0.0, %v3506
      %v3508 = vpop.f32.mrb[0].mxu0
      %v3509 = vpop.f32.mrb[0].mxu0
      %v3510 = vpop.f32.mrb[0].mxu0
      %3511 = vdwg.mxu0
      %3512 = vrot.lane.b32.xlu0 %v728, 88
      %v3513 = vpop.permute.xlu0 %3512
      %v3515 = vsel %vm1130, %v3175, 0
      %v3518 = vsel %vm1232, %v3513, 0
      %3520 = vmatprep.subr.bf16.mxu0 0
      %3521 = vmatpush1.bf16.msra.mxu0 %v3518
      %3522 = vmatprep.subr.bf16.mxu0 0
      %3523 = vmatpush1.bf16.msra.mxu0 0
      %3524 = vmatprep.subr.bf16.mxu0 0
      %3525 = vmatpush1.bf16.msra.mxu0 0
      %3526 = vmatprep.subr.bf16.mxu0 0
      %3527 = vmatpush1.bf16.msra.mxu0 0
      %3528 = vmatprep.subr.bf16.mxu0 0
      %3529 = vmatpush1.bf16.msra.mxu0 0
      %3530 = vmatprep.subr.bf16.mxu0 0
      %3531 = vmatpush1.bf16.msra.mxu0 0
      %3532 = vmatprep.subr.bf16.mxu0 0
      %3533 = vmatpush1.bf16.msra.mxu0 0
      %3534 = vmatprep.subr.bf16.mxu0 0
      %3535 = vmatpush1.bf16.msra.mxu0 0
      %3536 = vmatprep.subr.bf16.mxu0 0
      %3537 = vmatpush1.bf16.msra.mxu0 0
      %3538 = vmatprep.subr.bf16.mxu0 0
      %3539 = vmatpush1.bf16.msra.mxu0 0
      %3540 = vmatprep.subr.bf16.mxu0 0
      %3541 = vmatpush1.bf16.msra.mxu0 0
      %3542 = vmatprep.subr.bf16.mxu0 0
      %3543 = vmatpush1.bf16.msra.mxu0 0
      %3544 = vmatprep.subr.bf16.mxu0 0
      %3545 = vmatpush1.bf16.msra.mxu0 0
      %3546 = vmatprep.subr.bf16.mxu0 0
      %3547 = vmatpush1.bf16.msra.mxu0 0
      %3548 = vmatprep.subr.bf16.mxu0 0
      %3549 = vmatpush1.bf16.msra.mxu0 0
      %3550 = vmatprep.subr.bf16.mxu0 0
      %3551 = vmatpush1.bf16.msra.mxu0 0
      %3552 = vmatprep.mubr.bf16.mxu0 0
      %3553 = vmatmul.mubr.bf16.gmra.mrb[0].mxu0 %v3515
      %v3554 = vpop.f32.mrb[0].mxu0
      %v3555 = vadd.f32 0.0, %v3554
      %v3556 = vpop.f32.mrb[0].mxu0
      %v3557 = vpop.f32.mrb[0].mxu0
      %v3558 = vpop.f32.mrb[0].mxu0
      %3559 = vdwg.mxu0
      %v3560 = vpack.c.bf16 %v3267, %v3219
      %v3561 = vpack.c.bf16 %v3363, %v3315
      %v3562 = vpack.c.bf16 %v3459, %v3411
      %v3563 = vpack.c.bf16 %v3555, %v3507
      %v3564 = vpack.c.bf16 %v614, %v614
      %v3566 = vsel %vm732, %v3560, 0
      %v3569 = vsel %vm732, %v3561, 0
      %v3572 = vsel %vm732, %v3562, 0
      %v3575 = vsel %vm732, %v3563, 0
      %v3578 = vsel %vm2523, %v3564, 0
      %3580 = vmatprep.subr.bf16.mxu0 0
      %3581 = vmatpush1.bf16.msra.mxu0 %v3578
      %3582 = vmatprep.subr.bf16.mxu0 0
      %3583 = vmatpush1.bf16.msra.mxu0 0
      %3584 = vmatprep.subr.bf16.mxu0 0
      %3585 = vmatpush1.bf16.msra.mxu0 0
      %3586 = vmatprep.subr.bf16.mxu0 0
      %3587 = vmatpush1.bf16.msra.mxu0 0
      %3588 = vmatprep.subr.bf16.mxu0 0
      %3589 = vmatpush1.bf16.msra.mxu0 0
      %3590 = vmatprep.subr.bf16.mxu0 0
      %3591 = vmatpush1.bf16.msra.mxu0 0
      %3592 = vmatprep.subr.bf16.mxu0 0
      %3593 = vmatpush1.bf16.msra.mxu0 0
      %3594 = vmatprep.subr.bf16.mxu0 0
      %3595 = vmatpush1.bf16.msra.mxu0 0
      %3596 = vmatprep.subr.bf16.mxu0 0
      %3597 = vmatpush1.bf16.msra.mxu0 0
      %3598 = vmatprep.subr.bf16.mxu0 0
      %3599 = vmatpush1.bf16.msra.mxu0 0
      %3600 = vmatprep.subr.bf16.mxu0 0
      %3601 = vmatpush1.bf16.msra.mxu0 0
      %3602 = vmatprep.subr.bf16.mxu0 0
      %3603 = vmatpush1.bf16.msra.mxu0 0
      %3604 = vmatprep.subr.bf16.mxu0 0
      %3605 = vmatpush1.bf16.msra.mxu0 0
      %3606 = vmatprep.subr.bf16.mxu0 0
      %3607 = vmatpush1.bf16.msra.mxu0 0
      %3608 = vmatprep.subr.bf16.mxu0 0
      %3609 = vmatpush1.bf16.msra.mxu0 0
      %3610 = vmatprep.subr.bf16.mxu0 0
      %3611 = vmatpush1.bf16.msra.mxu0 0
      %3612 = vmatprep.mubr.bf16.mxu0 0
      %3613 = vmatmul.mubr.bf16.gmra.mrb[0].mxu0 %v3566
      %v3614 = vpop.f32.mrb[0].mxu0
      %v3615 = vadd.f32 0.0, %v3614
      %v3616 = vpop.f32.mrb[0].mxu0
      %v3617 = vpop.f32.mrb[0].mxu0
      %v3618 = vadd.f32 0.0, %v3617
      %v3619 = vpop.f32.mrb[0].mxu0
      %3620 = vmatprep.mubr.bf16.mxu0 0
      %3621 = vmatmul.mubr.bf16.gmra.mrb[0].mxu0 %v3569
      %v3622 = vpop.f32.mrb[0].mxu0
      %v3623 = vadd.f32 0.0, %v3622
      %v3624 = vpop.f32.mrb[0].mxu0
      %v3625 = vpop.f32.mrb[0].mxu0
      %v3626 = vadd.f32 0.0, %v3625
      %v3627 = vpop.f32.mrb[0].mxu0
      %3628 = vmatprep.mubr.bf16.mxu0 0
      %3629 = vmatmul.mubr.bf16.gmra.mrb[0].mxu0 %v3572
      %v3630 = vpop.f32.mrb[0].mxu0
      %v3631 = vadd.f32 0.0, %v3630
      %v3632 = vpop.f32.mrb[0].mxu0
      %v3633 = vpop.f32.mrb[0].mxu0
      %v3634 = vadd.f32 0.0, %v3633
      %v3635 = vpop.f32.mrb[0].mxu0
      %3636 = vmatprep.mubr.bf16.mxu0 0
      %3637 = vmatmul.mubr.bf16.gmra.mrb[0].mxu0 %v3575
      %v3638 = vpop.f32.mrb[0].mxu0
      %v3639 = vadd.f32 0.0, %v3638
      %v3640 = vpop.f32.mrb[0].mxu0
      %v3641 = vpop.f32.mrb[0].mxu0
      %v3642 = vadd.f32 0.0, %v3641
      %v3643 = vpop.f32.mrb[0].mxu0
      %3644 = vdwg.mxu0
      %v3645 = vadd.f32 %v2642, %v3615
      %v3646 = vadd.f32 %v2645, %v3618
      %v3647 = vadd.f32 %v2650, %v3623
      %v3648 = vadd.f32 %v2653, %v3626
      %v3649 = vadd.f32 %v2658, %v3631
      %v3650 = vadd.f32 %v2661, %v3634
      %v3651 = vadd.f32 %v2666, %v3639
      %v3652 = vadd.f32 %v2669, %v3642
      %3653 = vrot.lane.b32.xlu0 %v721, 116
      %v3654 = vpop.permute.xlu0 %3653
      %3655 = vrot.lane.b32.xlu0 %v721, 100
      %v3656 = vpop.permute.xlu0 %3655
      %v3658 = vsel %vm732, %v3654, 0
      %v3661 = vsel %vm732, %v3656, 0
      %3663 = vmatprep.subr.bf16.mxu0 0
      %3664 = vmatpush1.bf16.xpose.msra.mxu0 %v3661
      %3665 = vmatprep.subr.bf16.mxu0 0
      %3666 = vmatpush1.bf16.xpose.msra.mxu0 0
      %3667 = vmatprep.subr.bf16.mxu0 0
      %3668 = vmatpush1.bf16.xpose.msra.mxu0 0
      %3669 = vmatprep.subr.bf16.mxu0 0
      %3670 = vmatpush1.bf16.xpose.msra.mxu0 0
      %3671 = vmatprep.subr.bf16.mxu0 0
      %3672 = vmatpush1.bf16.xpose.msra.mxu0 0
      %3673 = vmatprep.subr.bf16.mxu0 0
      %3674 = vmatpush1.bf16.xpose.msra.mxu0 0
      %3675 = vmatprep.subr.bf16.mxu0 0
      %3676 = vmatpush1.bf16.xpose.msra.mxu0 0
      %3677 = vmatprep.subr.bf16.mxu0 0
      %3678 = vmatpush1.bf16.xpose.msra.mxu0 0
      %3679 = vmatprep.subr.bf16.mxu0 0
      %3680 = vmatpush1.bf16.xpose.msra.mxu0 0
      %3681 = vmatprep.subr.bf16.mxu0 0
      %3682 = vmatpush1.bf16.xpose.msra.mxu0 0
      %3683 = vmatprep.subr.bf16.mxu0 0
      %3684 = vmatpush1.bf16.xpose.msra.mxu0 0
      %3685 = vmatprep.subr.bf16.mxu0 0
      %3686 = vmatpush1.bf16.xpose.msra.mxu0 0
      %3687 = vmatprep.subr.bf16.mxu0 0
      %3688 = vmatpush1.bf16.xpose.msra.mxu0 0
      %3689 = vmatprep.subr.bf16.mxu0 0
      %3690 = vmatpush1.bf16.xpose.msra.mxu0 0
      %3691 = vmatprep.subr.bf16.mxu0 0
      %3692 = vmatpush1.bf16.xpose.msra.mxu0 0
      %3693 = vmatprep.subr.bf16.mxu0 0
      %3694 = vmatpush1.bf16.xpose.msra.mxu0 0
      %3695 = vmatprep.mubr.bf16.mxu0 0
      %3696 = vmatmul.mubr.bf16.gmra.mrb[0].mxu0 %v3658
      %v3697 = vpop.f32.mrb[0].mxu0
      %v3698 = vadd.f32 0.0, %v3697
      %v3699 = vpop.f32.mrb[0].mxu0
      %v3700 = vpop.f32.mrb[0].mxu0
      %v3701 = vpop.f32.mrb[0].mxu0
      %3702 = vdwg.mxu0
      %3703 = vrot.lane.b32.xlu0 %v722, 116
      %v3704 = vpop.permute.xlu0 %3703
      %3705 = vrot.lane.b32.xlu0 %v722, 100
      %v3706 = vpop.permute.xlu0 %3705
      %v3708 = vsel %vm732, %v3704, 0
      %v3711 = vsel %vm732, %v3706, 0
      %3713 = vmatprep.subr.bf16.mxu0 0
      %3714 = vmatpush1.bf16.xpose.msra.mxu0 %v3711
      %3715 = vmatprep.subr.bf16.mxu0 0
      %3716 = vmatpush1.bf16.xpose.msra.mxu0 0
      %3717 = vmatprep.subr.bf16.mxu0 0
      %3718 = vmatpush1.bf16.xpose.msra.mxu0 0
      %3719 = vmatprep.subr.bf16.mxu0 0
      %3720 = vmatpush1.bf16.xpose.msra.mxu0 0
      %3721 = vmatprep.subr.bf16.mxu0 0
      %3722 = vmatpush1.bf16.xpose.msra.mxu0 0
      %3723 = vmatprep.subr.bf16.mxu0 0
      %3724 = vmatpush1.bf16.xpose.msra.mxu0 0
      %3725 = vmatprep.subr.bf16.mxu0 0
      %3726 = vmatpush1.bf16.xpose.msra.mxu0 0
      %3727 = vmatprep.subr.bf16.mxu0 0
      %3728 = vmatpush1.bf16.xpose.msra.mxu0 0
      %3729 = vmatprep.subr.bf16.mxu0 0
      %3730 = vmatpush1.bf16.xpose.msra.mxu0 0
      %3731 = vmatprep.subr.bf16.mxu0 0
      %3732 = vmatpush1.bf16.xpose.msra.mxu0 0
      %3733 = vmatprep.subr.bf16.mxu0 0
      %3734 = vmatpush1.bf16.xpose.msra.mxu0 0
      %3735 = vmatprep.subr.bf16.mxu0 0
      %3736 = vmatpush1.bf16.xpose.msra.mxu0 0
      %3737 = vmatprep.subr.bf16.mxu0 0
      %3738 = vmatpush1.bf16.xpose.msra.mxu0 0
      %3739 = vmatprep.subr.bf16.mxu0 0
      %3740 = vmatpush1.bf16.xpose.msra.mxu0 0
      %3741 = vmatprep.subr.bf16.mxu0 0
      %3742 = vmatpush1.bf16.xpose.msra.mxu0 0
      %3743 = vmatprep.subr.bf16.mxu0 0
      %3744 = vmatpush1.bf16.xpose.msra.mxu0 0
      %3745 = vmatprep.mubr.bf16.mxu0 0
      %3746 = vmatmul.mubr.bf16.gmra.mrb[0].mxu0 %v3708
      %v3747 = vpop.f32.mrb[0].mxu0
      %v3748 = vadd.f32 0.0, %v3747
      %v3749 = vpop.f32.mrb[0].mxu0
      %v3750 = vpop.f32.mrb[0].mxu0
      %v3751 = vpop.f32.mrb[0].mxu0
      %3752 = vdwg.mxu0
      %3753 = vrot.lane.b32.xlu0 %v723, 116
      %v3754 = vpop.permute.xlu0 %3753
      %3755 = vrot.lane.b32.xlu0 %v723, 100
      %v3756 = vpop.permute.xlu0 %3755
      %v3758 = vsel %vm732, %v3754, 0
      %v3761 = vsel %vm732, %v3756, 0
      %3763 = vmatprep.subr.bf16.mxu0 0
      %3764 = vmatpush1.bf16.xpose.msra.mxu0 %v3761
      %3765 = vmatprep.subr.bf16.mxu0 0
      %3766 = vmatpush1.bf16.xpose.msra.mxu0 0
      %3767 = vmatprep.subr.bf16.mxu0 0
      %3768 = vmatpush1.bf16.xpose.msra.mxu0 0
      %3769 = vmatprep.subr.bf16.mxu0 0
      %3770 = vmatpush1.bf16.xpose.msra.mxu0 0
      %3771 = vmatprep.subr.bf16.mxu0 0
      %3772 = vmatpush1.bf16.xpose.msra.mxu0 0
      %3773 = vmatprep.subr.bf16.mxu0 0
      %3774 = vmatpush1.bf16.xpose.msra.mxu0 0
      %3775 = vmatprep.subr.bf16.mxu0 0
      %3776 = vmatpush1.bf16.xpose.msra.mxu0 0
      %3777 = vmatprep.subr.bf16.mxu0 0
      %3778 = vmatpush1.bf16.xpose.msra.mxu0 0
      %3779 = vmatprep.subr.bf16.mxu0 0
      %3780 = vmatpush1.bf16.xpose.msra.mxu0 0
      %3781 = vmatprep.subr.bf16.mxu0 0
      %3782 = vmatpush1.bf16.xpose.msra.mxu0 0
      %3783 = vmatprep.subr.bf16.mxu0 0
      %3784 = vmatpush1.bf16.xpose.msra.mxu0 0
      %3785 = vmatprep.subr.bf16.mxu0 0
      %3786 = vmatpush1.bf16.xpose.msra.mxu0 0
      %3787 = vmatprep.subr.bf16.mxu0 0
      %3788 = vmatpush1.bf16.xpose.msra.mxu0 0
      %3789 = vmatprep.subr.bf16.mxu0 0
      %3790 = vmatpush1.bf16.xpose.msra.mxu0 0
      %3791 = vmatprep.subr.bf16.mxu0 0
      %3792 = vmatpush1.bf16.xpose.msra.mxu0 0
      %3793 = vmatprep.subr.bf16.mxu0 0
      %3794 = vmatpush1.bf16.xpose.msra.mxu0 0
      %3795 = vmatprep.mubr.bf16.mxu0 0
      %3796 = vmatmul.mubr.bf16.gmra.mrb[0].mxu0 %v3758
      %v3797 = vpop.f32.mrb[0].mxu0
      %v3798 = vadd.f32 0.0, %v3797
      %v3799 = vpop.f32.mrb[0].mxu0
      %v3800 = vpop.f32.mrb[0].mxu0
      %v3801 = vpop.f32.mrb[0].mxu0
      %3802 = vdwg.mxu0
      %3803 = vrot.lane.b32.xlu0 %v724, 116
      %v3804 = vpop.permute.xlu0 %3803
      %3805 = vrot.lane.b32.xlu0 %v724, 100
      %v3806 = vpop.permute.xlu0 %3805
      %v3808 = vsel %vm732, %v3804, 0
      %v3811 = vsel %vm732, %v3806, 0
      %3813 = vmatprep.subr.bf16.mxu0 0
      %3814 = vmatpush1.bf16.xpose.msra.mxu0 %v3811
      %3815 = vmatprep.subr.bf16.mxu0 0
      %3816 = vmatpush1.bf16.xpose.msra.mxu0 0
      %3817 = vmatprep.subr.bf16.mxu0 0
      %3818 = vmatpush1.bf16.xpose.msra.mxu0 0
      %3819 = vmatprep.subr.bf16.mxu0 0
      %3820 = vmatpush1.bf16.xpose.msra.mxu0 0
      %3821 = vmatprep.subr.bf16.mxu0 0
      %3822 = vmatpush1.bf16.xpose.msra.mxu0 0
      %3823 = vmatprep.subr.bf16.mxu0 0
      %3824 = vmatpush1.bf16.xpose.msra.mxu0 0
      %3825 = vmatprep.subr.bf16.mxu0 0
      %3826 = vmatpush1.bf16.xpose.msra.mxu0 0
      %3827 = vmatprep.subr.bf16.mxu0 0
      %3828 = vmatpush1.bf16.xpose.msra.mxu0 0
      %3829 = vmatprep.subr.bf16.mxu0 0
      %3830 = vmatpush1.bf16.xpose.msra.mxu0 0
      %3831 = vmatprep.subr.bf16.mxu0 0
      %3832 = vmatpush1.bf16.xpose.msra.mxu0 0
      %3833 = vmatprep.subr.bf16.mxu0 0
      %3834 = vmatpush1.bf16.xpose.msra.mxu0 0
      %3835 = vmatprep.subr.bf16.mxu0 0
      %3836 = vmatpush1.bf16.xpose.msra.mxu0 0
      %3837 = vmatprep.subr.bf16.mxu0 0
      %3838 = vmatpush1.bf16.xpose.msra.mxu0 0
      %3839 = vmatprep.subr.bf16.mxu0 0
      %3840 = vmatpush1.bf16.xpose.msra.mxu0 0
      %3841 = vmatprep.subr.bf16.mxu0 0
      %3842 = vmatpush1.bf16.xpose.msra.mxu0 0
      %3843 = vmatprep.subr.bf16.mxu0 0
      %3844 = vmatpush1.bf16.xpose.msra.mxu0 0
      %3845 = vmatprep.mubr.bf16.mxu0 0
      %3846 = vmatmul.mubr.bf16.gmra.mrb[0].mxu0 %v3808
      %v3847 = vpop.f32.mrb[0].mxu0
      %v3848 = vadd.f32 0.0, %v3847
      %v3849 = vpop.f32.mrb[0].mxu0
      %v3850 = vpop.f32.mrb[0].mxu0
      %v3851 = vpop.f32.mrb[0].mxu0
      %3852 = vdwg.mxu0
      %3853 = vrot.lane.b32.xlu0 %v725, 116
      %v3854 = vpop.permute.xlu0 %3853
      %3855 = vrot.lane.b32.xlu0 %v725, 100
      %v3856 = vpop.permute.xlu0 %3855
      %v3858 = vsel %vm732, %v3854, 0
      %v3861 = vsel %vm732, %v3856, 0
      %3863 = vmatprep.subr.bf16.mxu0 0
      %3864 = vmatpush1.bf16.xpose.msra.mxu0 %v3861
      %3865 = vmatprep.subr.bf16.mxu0 0
      %3866 = vmatpush1.bf16.xpose.msra.mxu0 0
      %3867 = vmatprep.subr.bf16.mxu0 0
      %3868 = vmatpush1.bf16.xpose.msra.mxu0 0
      %3869 = vmatprep.subr.bf16.mxu0 0
      %3870 = vmatpush1.bf16.xpose.msra.mxu0 0
      %3871 = vmatprep.subr.bf16.mxu0 0
      %3872 = vmatpush1.bf16.xpose.msra.mxu0 0
      %3873 = vmatprep.subr.bf16.mxu0 0
      %3874 = vmatpush1.bf16.xpose.msra.mxu0 0
      %3875 = vmatprep.subr.bf16.mxu0 0
      %3876 = vmatpush1.bf16.xpose.msra.mxu0 0
      %3877 = vmatprep.subr.bf16.mxu0 0
      %3878 = vmatpush1.bf16.xpose.msra.mxu0 0
      %3879 = vmatprep.subr.bf16.mxu0 0
      %3880 = vmatpush1.bf16.xpose.msra.mxu0 0
      %3881 = vmatprep.subr.bf16.mxu0 0
      %3882 = vmatpush1.bf16.xpose.msra.mxu0 0
      %3883 = vmatprep.subr.bf16.mxu0 0
      %3884 = vmatpush1.bf16.xpose.msra.mxu0 0
      %3885 = vmatprep.subr.bf16.mxu0 0
      %3886 = vmatpush1.bf16.xpose.msra.mxu0 0
      %3887 = vmatprep.subr.bf16.mxu0 0
      %3888 = vmatpush1.bf16.xpose.msra.mxu0 0
      %3889 = vmatprep.subr.bf16.mxu0 0
      %3890 = vmatpush1.bf16.xpose.msra.mxu0 0
      %3891 = vmatprep.subr.bf16.mxu0 0
      %3892 = vmatpush1.bf16.xpose.msra.mxu0 0
      %3893 = vmatprep.subr.bf16.mxu0 0
      %3894 = vmatpush1.bf16.xpose.msra.mxu0 0
      %3895 = vmatprep.mubr.bf16.mxu0 0
      %3896 = vmatmul.mubr.bf16.gmra.mrb[0].mxu0 %v3858
      %v3897 = vpop.f32.mrb[0].mxu0
      %v3898 = vadd.f32 0.0, %v3897
      %v3899 = vpop.f32.mrb[0].mxu0
      %v3900 = vpop.f32.mrb[0].mxu0
      %v3901 = vpop.f32.mrb[0].mxu0
      %3902 = vdwg.mxu0
      %3903 = vrot.lane.b32.xlu0 %v726, 116
      %v3904 = vpop.permute.xlu0 %3903
      %3905 = vrot.lane.b32.xlu0 %v726, 100
      %v3906 = vpop.permute.xlu0 %3905
      %v3908 = vsel %vm732, %v3904, 0
      %v3911 = vsel %vm732, %v3906, 0
      %3913 = vmatprep.subr.bf16.mxu0 0
      %3914 = vmatpush1.bf16.xpose.msra.mxu0 %v3911
      %3915 = vmatprep.subr.bf16.mxu0 0
      %3916 = vmatpush1.bf16.xpose.msra.mxu0 0
      %3917 = vmatprep.subr.bf16.mxu0 0
      %3918 = vmatpush1.bf16.xpose.msra.mxu0 0
      %3919 = vmatprep.subr.bf16.mxu0 0
      %3920 = vmatpush1.bf16.xpose.msra.mxu0 0
      %3921 = vmatprep.subr.bf16.mxu0 0
      %3922 = vmatpush1.bf16.xpose.msra.mxu0 0
      %3923 = vmatprep.subr.bf16.mxu0 0
      %3924 = vmatpush1.bf16.xpose.msra.mxu0 0
      %3925 = vmatprep.subr.bf16.mxu0 0
      %3926 = vmatpush1.bf16.xpose.msra.mxu0 0
      %3927 = vmatprep.subr.bf16.mxu0 0
      %3928 = vmatpush1.bf16.xpose.msra.mxu0 0
      %3929 = vmatprep.subr.bf16.mxu0 0
      %3930 = vmatpush1.bf16.xpose.msra.mxu0 0
      %3931 = vmatprep.subr.bf16.mxu0 0
      %3932 = vmatpush1.bf16.xpose.msra.mxu0 0
      %3933 = vmatprep.subr.bf16.mxu0 0
      %3934 = vmatpush1.bf16.xpose.msra.mxu0 0
      %3935 = vmatprep.subr.bf16.mxu0 0
      %3936 = vmatpush1.bf16.xpose.msra.mxu0 0
      %3937 = vmatprep.subr.bf16.mxu0 0
      %3938 = vmatpush1.bf16.xpose.msra.mxu0 0
      %3939 = vmatprep.subr.bf16.mxu0 0
      %3940 = vmatpush1.bf16.xpose.msra.mxu0 0
      %3941 = vmatprep.subr.bf16.mxu0 0
      %3942 = vmatpush1.bf16.xpose.msra.mxu0 0
      %3943 = vmatprep.subr.bf16.mxu0 0
      %3944 = vmatpush1.bf16.xpose.msra.mxu0 0
      %3945 = vmatprep.mubr.bf16.mxu0 0
      %3946 = vmatmul.mubr.bf16.gmra.mrb[0].mxu0 %v3908
      %v3947 = vpop.f32.mrb[0].mxu0
      %v3948 = vadd.f32 0.0, %v3947
      %v3949 = vpop.f32.mrb[0].mxu0
      %v3950 = vpop.f32.mrb[0].mxu0
      %v3951 = vpop.f32.mrb[0].mxu0
      %3952 = vdwg.mxu0
      %3953 = vrot.lane.b32.xlu0 %v727, 116
      %v3954 = vpop.permute.xlu0 %3953
      %3955 = vrot.lane.b32.xlu0 %v727, 100
      %v3956 = vpop.permute.xlu0 %3955
      %v3958 = vsel %vm732, %v3954, 0
      %v3961 = vsel %vm732, %v3956, 0
      %3963 = vmatprep.subr.bf16.mxu0 0
      %3964 = vmatpush1.bf16.xpose.msra.mxu0 %v3961
      %3965 = vmatprep.subr.bf16.mxu0 0
      %3966 = vmatpush1.bf16.xpose.msra.mxu0 0
      %3967 = vmatprep.subr.bf16.mxu0 0
      %3968 = vmatpush1.bf16.xpose.msra.mxu0 0
      %3969 = vmatprep.subr.bf16.mxu0 0
      %3970 = vmatpush1.bf16.xpose.msra.mxu0 0
      %3971 = vmatprep.subr.bf16.mxu0 0
      %3972 = vmatpush1.bf16.xpose.msra.mxu0 0
      %3973 = vmatprep.subr.bf16.mxu0 0
      %3974 = vmatpush1.bf16.xpose.msra.mxu0 0
      %3975 = vmatprep.subr.bf16.mxu0 0
      %3976 = vmatpush1.bf16.xpose.msra.mxu0 0
      %3977 = vmatprep.subr.bf16.mxu0 0
      %3978 = vmatpush1.bf16.xpose.msra.mxu0 0
      %3979 = vmatprep.subr.bf16.mxu0 0
      %3980 = vmatpush1.bf16.xpose.msra.mxu0 0
      %3981 = vmatprep.subr.bf16.mxu0 0
      %3982 = vmatpush1.bf16.xpose.msra.mxu0 0
      %3983 = vmatprep.subr.bf16.mxu0 0
      %3984 = vmatpush1.bf16.xpose.msra.mxu0 0
      %3985 = vmatprep.subr.bf16.mxu0 0
      %3986 = vmatpush1.bf16.xpose.msra.mxu0 0
      %3987 = vmatprep.subr.bf16.mxu0 0
      %3988 = vmatpush1.bf16.xpose.msra.mxu0 0
      %3989 = vmatprep.subr.bf16.mxu0 0
      %3990 = vmatpush1.bf16.xpose.msra.mxu0 0
      %3991 = vmatprep.subr.bf16.mxu0 0
      %3992 = vmatpush1.bf16.xpose.msra.mxu0 0
      %3993 = vmatprep.subr.bf16.mxu0 0
      %3994 = vmatpush1.bf16.xpose.msra.mxu0 0
      %3995 = vmatprep.mubr.bf16.mxu0 0
      %3996 = vmatmul.mubr.bf16.gmra.mrb[0].mxu0 %v3958
      %v3997 = vpop.f32.mrb[0].mxu0
      %v3998 = vadd.f32 0.0, %v3997
      %v3999 = vpop.f32.mrb[0].mxu0
      %v4000 = vpop.f32.mrb[0].mxu0
      %v4001 = vpop.f32.mrb[0].mxu0
      %4002 = vdwg.mxu0
      %4003 = vrot.lane.b32.xlu0 %v728, 116
      %v4004 = vpop.permute.xlu0 %4003
      %4005 = vrot.lane.b32.xlu0 %v728, 100
      %v4006 = vpop.permute.xlu0 %4005
      %v4008 = vsel %vm732, %v4004, 0
      %v4011 = vsel %vm732, %v4006, 0
      %4013 = vmatprep.subr.bf16.mxu0 0
      %4014 = vmatpush1.bf16.xpose.msra.mxu0 %v4011
      %4015 = vmatprep.subr.bf16.mxu0 0
      %4016 = vmatpush1.bf16.xpose.msra.mxu0 0
      %4017 = vmatprep.subr.bf16.mxu0 0
      %4018 = vmatpush1.bf16.xpose.msra.mxu0 0
      %4019 = vmatprep.subr.bf16.mxu0 0
      %4020 = vmatpush1.bf16.xpose.msra.mxu0 0
      %4021 = vmatprep.subr.bf16.mxu0 0
      %4022 = vmatpush1.bf16.xpose.msra.mxu0 0
      %4023 = vmatprep.subr.bf16.mxu0 0
      %4024 = vmatpush1.bf16.xpose.msra.mxu0 0
      %4025 = vmatprep.subr.bf16.mxu0 0
      %4026 = vmatpush1.bf16.xpose.msra.mxu0 0
      %4027 = vmatprep.subr.bf16.mxu0 0
      %4028 = vmatpush1.bf16.xpose.msra.mxu0 0
      %4029 = vmatprep.subr.bf16.mxu0 0
      %4030 = vmatpush1.bf16.xpose.msra.mxu0 0
      %4031 = vmatprep.subr.bf16.mxu0 0
      %4032 = vmatpush1.bf16.xpose.msra.mxu0 0
      %4033 = vmatprep.subr.bf16.mxu0 0
      %4034 = vmatpush1.bf16.xpose.msra.mxu0 0
      %4035 = vmatprep.subr.bf16.mxu0 0
      %4036 = vmatpush1.bf16.xpose.msra.mxu0 0
      %4037 = vmatprep.subr.bf16.mxu0 0
      %4038 = vmatpush1.bf16.xpose.msra.mxu0 0
      %4039 = vmatprep.subr.bf16.mxu0 0
      %4040 = vmatpush1.bf16.xpose.msra.mxu0 0
      %4041 = vmatprep.subr.bf16.mxu0 0
      %4042 = vmatpush1.bf16.xpose.msra.mxu0 0
      %4043 = vmatprep.subr.bf16.mxu0 0
      %4044 = vmatpush1.bf16.xpose.msra.mxu0 0
      %4045 = vmatprep.mubr.bf16.mxu0 0
      %4046 = vmatmul.mubr.bf16.gmra.mrb[0].mxu0 %v4008
      %v4047 = vpop.f32.mrb[0].mxu0
      %v4048 = vadd.f32 0.0, %v4047
      %v4049 = vpop.f32.mrb[0].mxu0
      %v4050 = vpop.f32.mrb[0].mxu0
      %v4051 = vpop.f32.mrb[0].mxu0
      %4052 = vdwg.mxu0
      %v4053 = vmul.f32 %v3698, 0.5
      %v4054 = vmul.f32 %v3748, 0.5
      %v4055 = vmul.f32 %v3798, 0.5
      %v4056 = vmul.f32 %v3848, 0.5
      %v4057 = vmul.f32 %v3898, 0.5
      %v4058 = vmul.f32 %v3948, 0.5
      %v4059 = vmul.f32 %v3998, 0.5
      %v4060 = vmul.f32 %v4048, 0.5
      %v4061 = vsel %vm1130, %v4053, -inf
      %4062 = vmax.xlane.f32.xlu0 %v4061
      %v4063 = vpop.xlane.xlu0 %4062
      %v4064 = vsel %vm1130, %v4054, -inf
      %4065 = vmax.xlane.f32.xlu0 %v4064
      %v4066 = vpop.xlane.xlu0 %4065
      %v4067 = vsel %vm1130, %v4055, -inf
      %4068 = vmax.xlane.f32.xlu0 %v4067
      %v4069 = vpop.xlane.xlu0 %4068
      %v4070 = vsel %vm1130, %v4056, -inf
      %4071 = vmax.xlane.f32.xlu0 %v4070
      %v4072 = vpop.xlane.xlu0 %4071
      %v4073 = vsel %vm1130, %v4057, -inf
      %4074 = vmax.xlane.f32.xlu0 %v4073
      %v4075 = vpop.xlane.xlu0 %4074
      %v4076 = vsel %vm1130, %v4058, -inf
      %4077 = vmax.xlane.f32.xlu0 %v4076
      %v4078 = vpop.xlane.xlu0 %4077
      %v4079 = vsel %vm1130, %v4059, -inf
      %4080 = vmax.xlane.f32.xlu0 %v4079
      %v4081 = vpop.xlane.xlu0 %4080
      %v4082 = vsel %vm1130, %v4060, -inf
      %4083 = vmax.xlane.f32.xlu0 %v4082
      %v4084 = vpop.xlane.xlu0 %4083
      %v4085 = vsub.f32 %v4053, %v4063
      %v4086 = vsub.f32 %v4054, %v4066
      %v4087 = vsub.f32 %v4055, %v4069
      %v4088 = vsub.f32 %v4056, %v4072
      %v4089 = vsub.f32 %v4057, %v4075
      %v4090 = vsub.f32 %v4058, %v4078
      %v4091 = vsub.f32 %v4059, %v4081
      %v4092 = vsub.f32 %v4060, %v4084
      %v4093 = vmul.f32 %v4085, 1.442695
      %v4094 = vpow.pop %v4093
      %v4095 = vmul.f32 %v4086, 1.442695
      %v4096 = vpow.pop %v4095
      %v4097 = vmul.f32 %v4087, 1.442695
      %v4098 = vpow.pop %v4097
      %v4099 = vmul.f32 %v4088, 1.442695
      %v4100 = vpow.pop %v4099
      %v4101 = vmul.f32 %v4089, 1.442695
      %v4102 = vpow.pop %v4101
      %v4103 = vmul.f32 %v4090, 1.442695
      %v4104 = vpow.pop %v4103
      %v4105 = vmul.f32 %v4091, 1.442695
      %v4106 = vpow.pop %v4105
      %v4107 = vmul.f32 %v4092, 1.442695
      %v4108 = vpow.pop %v4107
      %v4109 = vsel %vm1130, %v4094, 0.0
      %4110 = vadd.xlane.f32.xlu0 %v4109
      %v4111 = vpop.xlane.xlu0 %4110
      %v4112 = vsel %vm1130, %v4096, 0.0
      %4113 = vadd.xlane.f32.xlu0 %v4112
      %v4114 = vpop.xlane.xlu0 %4113
      %v4115 = vsel %vm1130, %v4098, 0.0
      %4116 = vadd.xlane.f32.xlu0 %v4115
      %v4117 = vpop.xlane.xlu0 %4116
      %v4118 = vsel %vm1130, %v4100, 0.0
      %4119 = vadd.xlane.f32.xlu0 %v4118
      %v4120 = vpop.xlane.xlu0 %4119
      %v4121 = vsel %vm1130, %v4102, 0.0
      %4122 = vadd.xlane.f32.xlu0 %v4121
      %v4123 = vpop.xlane.xlu0 %4122
      %v4124 = vsel %vm1130, %v4104, 0.0
      %4125 = vadd.xlane.f32.xlu0 %v4124
      %v4126 = vpop.xlane.xlu0 %4125
      %v4127 = vsel %vm1130, %v4106, 0.0
      %4128 = vadd.xlane.f32.xlu0 %v4127
      %v4129 = vpop.xlane.xlu0 %4128
      %v4130 = vsel %vm1130, %v4108, 0.0
      %4131 = vadd.xlane.f32.xlu0 %v4130
      %v4132 = vpop.xlane.xlu0 %4131
      %v4133 = vrcp.pop %v4111
      %v4134 = vmul.f32 %v4094, %v4133
      %v4135 = vrcp.pop %v4114
      %v4136 = vmul.f32 %v4096, %v4135
      %v4137 = vrcp.pop %v4117
      %v4138 = vmul.f32 %v4098, %v4137
      %v4139 = vrcp.pop %v4120
      %v4140 = vmul.f32 %v4100, %v4139
      %v4141 = vrcp.pop %v4123
      %v4142 = vmul.f32 %v4102, %v4141
      %v4143 = vrcp.pop %v4126
      %v4144 = vmul.f32 %v4104, %v4143
      %v4145 = vrcp.pop %v4129
      %v4146 = vmul.f32 %v4106, %v4145
      %v4147 = vrcp.pop %v4132
      %v4148 = vmul.f32 %v4108, %v4147
      %v4149 = vpack.c.bf16 %v4134, %v4134
      %v4150 = vpack.c.bf16 %v4136, %v4136
      %v4151 = vpack.c.bf16 %v4138, %v4138
      %v4152 = vpack.c.bf16 %v4140, %v4140
      %v4153 = vpack.c.bf16 %v4142, %v4142
      %v4154 = vpack.c.bf16 %v4144, %v4144
      %v4155 = vpack.c.bf16 %v4146, %v4146
      %v4156 = vpack.c.bf16 %v4148, %v4148
      %4157 = vrot.lane.b32.xlu0 %v721, 84
      %v4158 = vpop.permute.xlu0 %4157
      %v4160 = vsel %vm1130, %v4149, 0
      %v4163 = vsel %vm1232, %v4158, 0
      %4165 = vmatprep.subr.bf16.mxu0 0
      %4166 = vmatpush1.bf16.msra.mxu0 %v4163
      %4167 = vmatprep.subr.bf16.mxu0 0
      %4168 = vmatpush1.bf16.msra.mxu0 0
      %4169 = vmatprep.subr.bf16.mxu0 0
      %4170 = vmatpush1.bf16.msra.mxu0 0
      %4171 = vmatprep.subr.bf16.mxu0 0
      %4172 = vmatpush1.bf16.msra.mxu0 0
      %4173 = vmatprep.subr.bf16.mxu0 0
      %4174 = vmatpush1.bf16.msra.mxu0 0
      %4175 = vmatprep.subr.bf16.mxu0 0
      %4176 = vmatpush1.bf16.msra.mxu0 0
      %4177 = vmatprep.subr.bf16.mxu0 0
      %4178 = vmatpush1.bf16.msra.mxu0 0
      %4179 = vmatprep.subr.bf16.mxu0 0
      %4180 = vmatpush1.bf16.msra.mxu0 0
      %4181 = vmatprep.subr.bf16.mxu0 0
      %4182 = vmatpush1.bf16.msra.mxu0 0
      %4183 = vmatprep.subr.bf16.mxu0 0
      %4184 = vmatpush1.bf16.msra.mxu0 0
      %4185 = vmatprep.subr.bf16.mxu0 0
      %4186 = vmatpush1.bf16.msra.mxu0 0
      %4187 = vmatprep.subr.bf16.mxu0 0
      %4188 = vmatpush1.bf16.msra.mxu0 0
      %4189 = vmatprep.subr.bf16.mxu0 0
      %4190 = vmatpush1.bf16.msra.mxu0 0
      %4191 = vmatprep.subr.bf16.mxu0 0
      %4192 = vmatpush1.bf16.msra.mxu0 0
      %4193 = vmatprep.subr.bf16.mxu0 0
      %4194 = vmatpush1.bf16.msra.mxu0 0
      %4195 = vmatprep.subr.bf16.mxu0 0
      %4196 = vmatpush1.bf16.msra.mxu0 0
      %4197 = vmatprep.mubr.bf16.mxu0 0
      %4198 = vmatmul.mubr.bf16.gmra.mrb[0].mxu0 %v4160
      %v4199 = vpop.f32.mrb[0].mxu0
      %v4200 = vadd.f32 0.0, %v4199
      %v4201 = vpop.f32.mrb[0].mxu0
      %v4202 = vpop.f32.mrb[0].mxu0
      %v4203 = vpop.f32.mrb[0].mxu0
      %4204 = vdwg.mxu0
      %4205 = vrot.lane.b32.xlu0 %v722, 84
      %v4206 = vpop.permute.xlu0 %4205
      %v4208 = vsel %vm1130, %v4150, 0
      %v4211 = vsel %vm1232, %v4206, 0
      %4213 = vmatprep.subr.bf16.mxu0 0
      %4214 = vmatpush1.bf16.msra.mxu0 %v4211
      %4215 = vmatprep.subr.bf16.mxu0 0
      %4216 = vmatpush1.bf16.msra.mxu0 0
      %4217 = vmatprep.subr.bf16.mxu0 0
      %4218 = vmatpush1.bf16.msra.mxu0 0
      %4219 = vmatprep.subr.bf16.mxu0 0
      %4220 = vmatpush1.bf16.msra.mxu0 0
      %4221 = vmatprep.subr.bf16.mxu0 0
      %4222 = vmatpush1.bf16.msra.mxu0 0
      %4223 = vmatprep.subr.bf16.mxu0 0
      %4224 = vmatpush1.bf16.msra.mxu0 0
      %4225 = vmatprep.subr.bf16.mxu0 0
      %4226 = vmatpush1.bf16.msra.mxu0 0
      %4227 = vmatprep.subr.bf16.mxu0 0
      %4228 = vmatpush1.bf16.msra.mxu0 0
      %4229 = vmatprep.subr.bf16.mxu0 0
      %4230 = vmatpush1.bf16.msra.mxu0 0
      %4231 = vmatprep.subr.bf16.mxu0 0
      %4232 = vmatpush1.bf16.msra.mxu0 0
      %4233 = vmatprep.subr.bf16.mxu0 0
      %4234 = vmatpush1.bf16.msra.mxu0 0
      %4235 = vmatprep.subr.bf16.mxu0 0
      %4236 = vmatpush1.bf16.msra.mxu0 0
      %4237 = vmatprep.subr.bf16.mxu0 0
      %4238 = vmatpush1.bf16.msra.mxu0 0
      %4239 = vmatprep.subr.bf16.mxu0 0
      %4240 = vmatpush1.bf16.msra.mxu0 0
      %4241 = vmatprep.subr.bf16.mxu0 0
      %4242 = vmatpush1.bf16.msra.mxu0 0
      %4243 = vmatprep.subr.bf16.mxu0 0
      %4244 = vmatpush1.bf16.msra.mxu0 0
      %4245 = vmatprep.mubr.bf16.mxu0 0
      %4246 = vmatmul.mubr.bf16.gmra.mrb[0].mxu0 %v4208
      %v4247 = vpop.f32.mrb[0].mxu0
      %v4248 = vadd.f32 0.0, %v4247
      %v4249 = vpop.f32.mrb[0].mxu0
      %v4250 = vpop.f32.mrb[0].mxu0
      %v4251 = vpop.f32.mrb[0].mxu0
      %4252 = vdwg.mxu0
      %4253 = vrot.lane.b32.xlu0 %v723, 84
      %v4254 = vpop.permute.xlu0 %4253
      %v4256 = vsel %vm1130, %v4151, 0
      %v4259 = vsel %vm1232, %v4254, 0
      %4261 = vmatprep.subr.bf16.mxu0 0
      %4262 = vmatpush1.bf16.msra.mxu0 %v4259
      %4263 = vmatprep.subr.bf16.mxu0 0
      %4264 = vmatpush1.bf16.msra.mxu0 0
      %4265 = vmatprep.subr.bf16.mxu0 0
      %4266 = vmatpush1.bf16.msra.mxu0 0
      %4267 = vmatprep.subr.bf16.mxu0 0
      %4268 = vmatpush1.bf16.msra.mxu0 0
      %4269 = vmatprep.subr.bf16.mxu0 0
      %4270 = vmatpush1.bf16.msra.mxu0 0
      %4271 = vmatprep.subr.bf16.mxu0 0
      %4272 = vmatpush1.bf16.msra.mxu0 0
      %4273 = vmatprep.subr.bf16.mxu0 0
      %4274 = vmatpush1.bf16.msra.mxu0 0
      %4275 = vmatprep.subr.bf16.mxu0 0
      %4276 = vmatpush1.bf16.msra.mxu0 0
      %4277 = vmatprep.subr.bf16.mxu0 0
      %4278 = vmatpush1.bf16.msra.mxu0 0
      %4279 = vmatprep.subr.bf16.mxu0 0
      %4280 = vmatpush1.bf16.msra.mxu0 0
      %4281 = vmatprep.subr.bf16.mxu0 0
      %4282 = vmatpush1.bf16.msra.mxu0 0
      %4283 = vmatprep.subr.bf16.mxu0 0
      %4284 = vmatpush1.bf16.msra.mxu0 0
      %4285 = vmatprep.subr.bf16.mxu0 0
      %4286 = vmatpush1.bf16.msra.mxu0 0
      %4287 = vmatprep.subr.bf16.mxu0 0
      %4288 = vmatpush1.bf16.msra.mxu0 0
      %4289 = vmatprep.subr.bf16.mxu0 0
      %4290 = vmatpush1.bf16.msra.mxu0 0
      %4291 = vmatprep.subr.bf16.mxu0 0
      %4292 = vmatpush1.bf16.msra.mxu0 0
      %4293 = vmatprep.mubr.bf16.mxu0 0
      %4294 = vmatmul.mubr.bf16.gmra.mrb[0].mxu0 %v4256
      %v4295 = vpop.f32.mrb[0].mxu0
      %v4296 = vadd.f32 0.0, %v4295
      %v4297 = vpop.f32.mrb[0].mxu0
      %v4298 = vpop.f32.mrb[0].mxu0
      %v4299 = vpop.f32.mrb[0].mxu0
      %4300 = vdwg.mxu0
      %4301 = vrot.lane.b32.xlu0 %v724, 84
      %v4302 = vpop.permute.xlu0 %4301
      %v4304 = vsel %vm1130, %v4152, 0
      %v4307 = vsel %vm1232, %v4302, 0
      %4309 = vmatprep.subr.bf16.mxu0 0
      %4310 = vmatpush1.bf16.msra.mxu0 %v4307
      %4311 = vmatprep.subr.bf16.mxu0 0
      %4312 = vmatpush1.bf16.msra.mxu0 0
      %4313 = vmatprep.subr.bf16.mxu0 0
      %4314 = vmatpush1.bf16.msra.mxu0 0
      %4315 = vmatprep.subr.bf16.mxu0 0
      %4316 = vmatpush1.bf16.msra.mxu0 0
      %4317 = vmatprep.subr.bf16.mxu0 0
      %4318 = vmatpush1.bf16.msra.mxu0 0
      %4319 = vmatprep.subr.bf16.mxu0 0
      %4320 = vmatpush1.bf16.msra.mxu0 0
      %4321 = vmatprep.subr.bf16.mxu0 0
      %4322 = vmatpush1.bf16.msra.mxu0 0
      %4323 = vmatprep.subr.bf16.mxu0 0
      %4324 = vmatpush1.bf16.msra.mxu0 0
      %4325 = vmatprep.subr.bf16.mxu0 0
      %4326 = vmatpush1.bf16.msra.mxu0 0
      %4327 = vmatprep.subr.bf16.mxu0 0
      %4328 = vmatpush1.bf16.msra.mxu0 0
      %4329 = vmatprep.subr.bf16.mxu0 0
      %4330 = vmatpush1.bf16.msra.mxu0 0
      %4331 = vmatprep.subr.bf16.mxu0 0
      %4332 = vmatpush1.bf16.msra.mxu0 0
      %4333 = vmatprep.subr.bf16.mxu0 0
      %4334 = vmatpush1.bf16.msra.mxu0 0
      %4335 = vmatprep.subr.bf16.mxu0 0
      %4336 = vmatpush1.bf16.msra.mxu0 0
      %4337 = vmatprep.subr.bf16.mxu0 0
      %4338 = vmatpush1.bf16.msra.mxu0 0
      %4339 = vmatprep.subr.bf16.mxu0 0
      %4340 = vmatpush1.bf16.msra.mxu0 0
      %4341 = vmatprep.mubr.bf16.mxu0 0
      %4342 = vmatmul.mubr.bf16.gmra.mrb[0].mxu0 %v4304
      %v4343 = vpop.f32.mrb[0].mxu0
      %v4344 = vadd.f32 0.0, %v4343
      %v4345 = vpop.f32.mrb[0].mxu0
      %v4346 = vpop.f32.mrb[0].mxu0
      %v4347 = vpop.f32.mrb[0].mxu0
      %4348 = vdwg.mxu0
      %4349 = vrot.lane.b32.xlu0 %v725, 84
      %v4350 = vpop.permute.xlu0 %4349
      %v4352 = vsel %vm1130, %v4153, 0
      %v4355 = vsel %vm1232, %v4350, 0
      %4357 = vmatprep.subr.bf16.mxu0 0
      %4358 = vmatpush1.bf16.msra.mxu0 %v4355
      %4359 = vmatprep.subr.bf16.mxu0 0
      %4360 = vmatpush1.bf16.msra.mxu0 0
      %4361 = vmatprep.subr.bf16.mxu0 0
      %4362 = vmatpush1.bf16.msra.mxu0 0
      %4363 = vmatprep.subr.bf16.mxu0 0
      %4364 = vmatpush1.bf16.msra.mxu0 0
      %4365 = vmatprep.subr.bf16.mxu0 0
      %4366 = vmatpush1.bf16.msra.mxu0 0
      %4367 = vmatprep.subr.bf16.mxu0 0
      %4368 = vmatpush1.bf16.msra.mxu0 0
      %4369 = vmatprep.subr.bf16.mxu0 0
      %4370 = vmatpush1.bf16.msra.mxu0 0
      %4371 = vmatprep.subr.bf16.mxu0 0
      %4372 = vmatpush1.bf16.msra.mxu0 0
      %4373 = vmatprep.subr.bf16.mxu0 0
      %4374 = vmatpush1.bf16.msra.mxu0 0
      %4375 = vmatprep.subr.bf16.mxu0 0
      %4376 = vmatpush1.bf16.msra.mxu0 0
      %4377 = vmatprep.subr.bf16.mxu0 0
      %4378 = vmatpush1.bf16.msra.mxu0 0
      %4379 = vmatprep.subr.bf16.mxu0 0
      %4380 = vmatpush1.bf16.msra.mxu0 0
      %4381 = vmatprep.subr.bf16.mxu0 0
      %4382 = vmatpush1.bf16.msra.mxu0 0
      %4383 = vmatprep.subr.bf16.mxu0 0
      %4384 = vmatpush1.bf16.msra.mxu0 0
      %4385 = vmatprep.subr.bf16.mxu0 0
      %4386 = vmatpush1.bf16.msra.mxu0 0
      %4387 = vmatprep.subr.bf16.mxu0 0
      %4388 = vmatpush1.bf16.msra.mxu0 0
      %4389 = vmatprep.mubr.bf16.mxu0 0
      %4390 = vmatmul.mubr.bf16.gmra.mrb[0].mxu0 %v4352
      %v4391 = vpop.f32.mrb[0].mxu0
      %v4392 = vadd.f32 0.0, %v4391
      %v4393 = vpop.f32.mrb[0].mxu0
      %v4394 = vpop.f32.mrb[0].mxu0
      %v4395 = vpop.f32.mrb[0].mxu0
      %4396 = vdwg.mxu0
      %4397 = vrot.lane.b32.xlu0 %v726, 84
      %v4398 = vpop.permute.xlu0 %4397
      %v4400 = vsel %vm1130, %v4154, 0
      %v4403 = vsel %vm1232, %v4398, 0
      %4405 = vmatprep.subr.bf16.mxu0 0
      %4406 = vmatpush1.bf16.msra.mxu0 %v4403
      %4407 = vmatprep.subr.bf16.mxu0 0
      %4408 = vmatpush1.bf16.msra.mxu0 0
      %4409 = vmatprep.subr.bf16.mxu0 0
      %4410 = vmatpush1.bf16.msra.mxu0 0
      %4411 = vmatprep.subr.bf16.mxu0 0
      %4412 = vmatpush1.bf16.msra.mxu0 0
      %4413 = vmatprep.subr.bf16.mxu0 0
      %4414 = vmatpush1.bf16.msra.mxu0 0
      %4415 = vmatprep.subr.bf16.mxu0 0
      %4416 = vmatpush1.bf16.msra.mxu0 0
      %4417 = vmatprep.subr.bf16.mxu0 0
      %4418 = vmatpush1.bf16.msra.mxu0 0
      %4419 = vmatprep.subr.bf16.mxu0 0
      %4420 = vmatpush1.bf16.msra.mxu0 0
      %4421 = vmatprep.subr.bf16.mxu0 0
      %4422 = vmatpush1.bf16.msra.mxu0 0
      %4423 = vmatprep.subr.bf16.mxu0 0
      %4424 = vmatpush1.bf16.msra.mxu0 0
      %4425 = vmatprep.subr.bf16.mxu0 0
      %4426 = vmatpush1.bf16.msra.mxu0 0
      %4427 = vmatprep.subr.bf16.mxu0 0
      %4428 = vmatpush1.bf16.msra.mxu0 0
      %4429 = vmatprep.subr.bf16.mxu0 0
      %4430 = vmatpush1.bf16.msra.mxu0 0
      %4431 = vmatprep.subr.bf16.mxu0 0
      %4432 = vmatpush1.bf16.msra.mxu0 0
      %4433 = vmatprep.subr.bf16.mxu0 0
      %4434 = vmatpush1.bf16.msra.mxu0 0
      %4435 = vmatprep.subr.bf16.mxu0 0
      %4436 = vmatpush1.bf16.msra.mxu0 0
      %4437 = vmatprep.mubr.bf16.mxu0 0
      %4438 = vmatmul.mubr.bf16.gmra.mrb[0].mxu0 %v4400
      %v4439 = vpop.f32.mrb[0].mxu0
      %v4440 = vadd.f32 0.0, %v4439
      %v4441 = vpop.f32.mrb[0].mxu0
      %v4442 = vpop.f32.mrb[0].mxu0
      %v4443 = vpop.f32.mrb[0].mxu0
      %4444 = vdwg.mxu0
      %4445 = vrot.lane.b32.xlu0 %v727, 84
      %v4446 = vpop.permute.xlu0 %4445
      %v4448 = vsel %vm1130, %v4155, 0
      %v4451 = vsel %vm1232, %v4446, 0
      %4453 = vmatprep.subr.bf16.mxu0 0
      %4454 = vmatpush1.bf16.msra.mxu0 %v4451
      %4455 = vmatprep.subr.bf16.mxu0 0
      %4456 = vmatpush1.bf16.msra.mxu0 0
      %4457 = vmatprep.subr.bf16.mxu0 0
      %4458 = vmatpush1.bf16.msra.mxu0 0
      %4459 = vmatprep.subr.bf16.mxu0 0
      %4460 = vmatpush1.bf16.msra.mxu0 0
      %4461 = vmatprep.subr.bf16.mxu0 0
      %4462 = vmatpush1.bf16.msra.mxu0 0
      %4463 = vmatprep.subr.bf16.mxu0 0
      %4464 = vmatpush1.bf16.msra.mxu0 0
      %4465 = vmatprep.subr.bf16.mxu0 0
      %4466 = vmatpush1.bf16.msra.mxu0 0
      %4467 = vmatprep.subr.bf16.mxu0 0
      %4468 = vmatpush1.bf16.msra.mxu0 0
      %4469 = vmatprep.subr.bf16.mxu0 0
      %4470 = vmatpush1.bf16.msra.mxu0 0
      %4471 = vmatprep.subr.bf16.mxu0 0
      %4472 = vmatpush1.bf16.msra.mxu0 0
      %4473 = vmatprep.subr.bf16.mxu0 0
      %4474 = vmatpush1.bf16.msra.mxu0 0
      %4475 = vmatprep.subr.bf16.mxu0 0
      %4476 = vmatpush1.bf16.msra.mxu0 0
      %4477 = vmatprep.subr.bf16.mxu0 0
      %4478 = vmatpush1.bf16.msra.mxu0 0
      %4479 = vmatprep.subr.bf16.mxu0 0
      %4480 = vmatpush1.bf16.msra.mxu0 0
      %4481 = vmatprep.subr.bf16.mxu0 0
      %4482 = vmatpush1.bf16.msra.mxu0 0
      %4483 = vmatprep.subr.bf16.mxu0 0
      %4484 = vmatpush1.bf16.msra.mxu0 0
      %4485 = vmatprep.mubr.bf16.mxu0 0
      %4486 = vmatmul.mubr.bf16.gmra.mrb[0].mxu0 %v4448
      %v4487 = vpop.f32.mrb[0].mxu0
      %v4488 = vadd.f32 0.0, %v4487
      %v4489 = vpop.f32.mrb[0].mxu0
      %v4490 = vpop.f32.mrb[0].mxu0
      %v4491 = vpop.f32.mrb[0].mxu0
      %4492 = vdwg.mxu0
      %4493 = vrot.lane.b32.xlu0 %v728, 84
      %v4494 = vpop.permute.xlu0 %4493
      %v4496 = vsel %vm1130, %v4156, 0
      %v4499 = vsel %vm1232, %v4494, 0
      %4501 = vmatprep.subr.bf16.mxu0 0
      %4502 = vmatpush1.bf16.msra.mxu0 %v4499
      %4503 = vmatprep.subr.bf16.mxu0 0
      %4504 = vmatpush1.bf16.msra.mxu0 0
      %4505 = vmatprep.subr.bf16.mxu0 0
      %4506 = vmatpush1.bf16.msra.mxu0 0
      %4507 = vmatprep.subr.bf16.mxu0 0
      %4508 = vmatpush1.bf16.msra.mxu0 0
      %4509 = vmatprep.subr.bf16.mxu0 0
      %4510 = vmatpush1.bf16.msra.mxu0 0
      %4511 = vmatprep.subr.bf16.mxu0 0
      %4512 = vmatpush1.bf16.msra.mxu0 0
      %4513 = vmatprep.subr.bf16.mxu0 0
      %4514 = vmatpush1.bf16.msra.mxu0 0
      %4515 = vmatprep.subr.bf16.mxu0 0
      %4516 = vmatpush1.bf16.msra.mxu0 0
      %4517 = vmatprep.subr.bf16.mxu0 0
      %4518 = vmatpush1.bf16.msra.mxu0 0
      %4519 = vmatprep.subr.bf16.mxu0 0
      %4520 = vmatpush1.bf16.msra.mxu0 0
      %4521 = vmatprep.subr.bf16.mxu0 0
      %4522 = vmatpush1.bf16.msra.mxu0 0
      %4523 = vmatprep.subr.bf16.mxu0 0
      %4524 = vmatpush1.bf16.msra.mxu0 0
      %4525 = vmatprep.subr.bf16.mxu0 0
      %4526 = vmatpush1.bf16.msra.mxu0 0
      %4527 = vmatprep.subr.bf16.mxu0 0
      %4528 = vmatpush1.bf16.msra.mxu0 0
      %4529 = vmatprep.subr.bf16.mxu0 0
      %4530 = vmatpush1.bf16.msra.mxu0 0
      %4531 = vmatprep.subr.bf16.mxu0 0
      %4532 = vmatpush1.bf16.msra.mxu0 0
      %4533 = vmatprep.mubr.bf16.mxu0 0
      %4534 = vmatmul.mubr.bf16.gmra.mrb[0].mxu0 %v4496
      %v4535 = vpop.f32.mrb[0].mxu0
      %v4536 = vadd.f32 0.0, %v4535
      %v4537 = vpop.f32.mrb[0].mxu0
      %v4538 = vpop.f32.mrb[0].mxu0
      %v4539 = vpop.f32.mrb[0].mxu0
      %4540 = vdwg.mxu0
      %v4541 = vpack.c.bf16 %v4248, %v4200
      %v4542 = vpack.c.bf16 %v4344, %v4296
      %v4543 = vpack.c.bf16 %v4440, %v4392
      %v4544 = vpack.c.bf16 %v4536, %v4488
      %v4546 = vrot.slane %v3564, 2
      %v4548 = vsel %vm732, %v4541, 0
      %v4551 = vsel %vm732, %v4542, 0
      %v4554 = vsel %vm732, %v4543, 0
      %v4557 = vsel %vm732, %v4544, 0
      %v4560 = vsel %vm2523, %v4546, 0
      %4562 = vmatprep.subr.bf16.mxu0 0
      %4563 = vmatpush1.bf16.msra.mxu0 %v4560
      %4564 = vmatprep.subr.bf16.mxu0 0
      %4565 = vmatpush1.bf16.msra.mxu0 0
      %4566 = vmatprep.subr.bf16.mxu0 0
      %4567 = vmatpush1.bf16.msra.mxu0 0
      %4568 = vmatprep.subr.bf16.mxu0 0
      %4569 = vmatpush1.bf16.msra.mxu0 0
      %4570 = vmatprep.subr.bf16.mxu0 0
      %4571 = vmatpush1.bf16.msra.mxu0 0
      %4572 = vmatprep.subr.bf16.mxu0 0
      %4573 = vmatpush1.bf16.msra.mxu0 0
      %4574 = vmatprep.subr.bf16.mxu0 0
      %4575 = vmatpush1.bf16.msra.mxu0 0
      %4576 = vmatprep.subr.bf16.mxu0 0
      %4577 = vmatpush1.bf16.msra.mxu0 0
      %4578 = vmatprep.subr.bf16.mxu0 0
      %4579 = vmatpush1.bf16.msra.mxu0 0
      %4580 = vmatprep.subr.bf16.mxu0 0
      %4581 = vmatpush1.bf16.msra.mxu0 0
      %4582 = vmatprep.subr.bf16.mxu0 0
      %4583 = vmatpush1.bf16.msra.mxu0 0
      %4584 = vmatprep.subr.bf16.mxu0 0
      %4585 = vmatpush1.bf16.msra.mxu0 0
      %4586 = vmatprep.subr.bf16.mxu0 0
      %4587 = vmatpush1.bf16.msra.mxu0 0
      %4588 = vmatprep.subr.bf16.mxu0 0
      %4589 = vmatpush1.bf16.msra.mxu0 0
      %4590 = vmatprep.subr.bf16.mxu0 0
      %4591 = vmatpush1.bf16.msra.mxu0 0
      %4592 = vmatprep.subr.bf16.mxu0 0
      %4593 = vmatpush1.bf16.msra.mxu0 0
      %4594 = vmatprep.mubr.bf16.mxu0 0
      %4595 = vmatmul.mubr.bf16.gmra.mrb[0].mxu0 %v4548
      %v4596 = vpop.f32.mrb[0].mxu0
      %v4597 = vadd.f32 0.0, %v4596
      %v4598 = vpop.f32.mrb[0].mxu0
      %v4599 = vpop.f32.mrb[0].mxu0
      %v4600 = vadd.f32 0.0, %v4599
      %v4601 = vpop.f32.mrb[0].mxu0
      %4602 = vmatprep.mubr.bf16.mxu0 0
      %4603 = vmatmul.mubr.bf16.gmra.mrb[0].mxu0 %v4551
      %v4604 = vpop.f32.mrb[0].mxu0
      %v4605 = vadd.f32 0.0, %v4604
      %v4606 = vpop.f32.mrb[0].mxu0
      %v4607 = vpop.f32.mrb[0].mxu0
      %v4608 = vadd.f32 0.0, %v4607
      %v4609 = vpop.f32.mrb[0].mxu0
      %4610 = vmatprep.mubr.bf16.mxu0 0
      %4611 = vmatmul.mubr.bf16.gmra.mrb[0].mxu0 %v4554
      %v4612 = vpop.f32.mrb[0].mxu0
      %v4613 = vadd.f32 0.0, %v4612
      %v4614 = vpop.f32.mrb[0].mxu0
      %v4615 = vpop.f32.mrb[0].mxu0
      %v4616 = vadd.f32 0.0, %v4615
      %v4617 = vpop.f32.mrb[0].mxu0
      %4618 = vmatprep.mubr.bf16.mxu0 0
      %4619 = vmatmul.mubr.bf16.gmra.mrb[0].mxu0 %v4557
      %v4620 = vpop.f32.mrb[0].mxu0
      %v4621 = vadd.f32 0.0, %v4620
      %v4622 = vpop.f32.mrb[0].mxu0
      %v4623 = vpop.f32.mrb[0].mxu0
      %v4624 = vadd.f32 0.0, %v4623
      %v4625 = vpop.f32.mrb[0].mxu0
      %4626 = vdwg.mxu0
      %v4627 = vadd.f32 %v3645, %v4597
      %v4628 = vadd.f32 %v3646, %v4600
      %v4629 = vadd.f32 %v3647, %v4605
      %v4630 = vadd.f32 %v3648, %v4608
      %v4631 = vadd.f32 %v3649, %v4613
      %v4632 = vadd.f32 %v3650, %v4616
      %v4633 = vadd.f32 %v3651, %v4621
      %v4634 = vadd.f32 %v3652, %v4624
      %v4636 = vlaneseq
      %v4637 = vshrl.u32 %v4636, 7
      %v4638 = vsub.s32 0, %v4637
      %v4639 = vrot.slane %v615, %v4638
      %v4641 = vadd.f32 %v4627, %v4639
      %v4642 = vadd.f32 %v4628, %v4639
      %v4643 = vadd.f32 %v4629, %v4639
      %v4644 = vadd.f32 %v4630, %v4639
      %v4645 = vadd.f32 %v4631, %v4639
      %v4646 = vadd.f32 %v4632, %v4639
      %v4647 = vadd.f32 %v4633, %v4639
      %v4648 = vadd.f32 %v4634, %v4639
      %v4649 = vadd.f32 %v602, %v4641
      %v4650 = vadd.f32 %v603, %v4642
      %v4651 = vadd.f32 %v604, %v4643
      %v4652 = vadd.f32 %v605, %v4644
      %v4653 = vadd.f32 %v606, %v4645
      %v4654 = vadd.f32 %v607, %v4646
      %v4655 = vadd.f32 %v608, %v4647
      %v4656 = vadd.f32 %v609, %v4648
      %v4657 = vsel %vm643, %v4649, 0.0
      %4658 = vadd.xlane.f32.xlu0 %v4657
      %v4659 = vpop.xlane.xlu0 %4658
      %v4660 = vsel %vm643, %v4650, 0.0
      %4661 = vadd.xlane.f32.xlu0 %v4660
      %v4662 = vpop.xlane.xlu0 %4661
      %v4663 = vsel %vm643, %v4651, 0.0
      %4664 = vadd.xlane.f32.xlu0 %v4663
      %v4665 = vpop.xlane.xlu0 %4664
      %v4666 = vsel %vm643, %v4652, 0.0
      %4667 = vadd.xlane.f32.xlu0 %v4666
      %v4668 = vpop.xlane.xlu0 %4667
      %v4669 = vsel %vm643, %v4653, 0.0
      %4670 = vadd.xlane.f32.xlu0 %v4669
      %v4671 = vpop.xlane.xlu0 %4670
      %v4672 = vsel %vm643, %v4654, 0.0
      %4673 = vadd.xlane.f32.xlu0 %v4672
      %v4674 = vpop.xlane.xlu0 %4673
      %v4675 = vsel %vm643, %v4655, 0.0
      %4676 = vadd.xlane.f32.xlu0 %v4675
      %v4677 = vpop.xlane.xlu0 %4676
      %v4678 = vsel %vm643, %v4656, 0.0
      %4679 = vadd.xlane.f32.xlu0 %v4678
      %v4680 = vpop.xlane.xlu0 %4679
      %v4681 = vrcp.pop 16.0
      %v4682 = vmul.f32 %v4659, %v4681
      %v4683 = vmul.f32 %v4662, %v4681
      %v4684 = vmul.f32 %v4665, %v4681
      %v4685 = vmul.f32 %v4668, %v4681
      %v4686 = vmul.f32 %v4671, %v4681
      %v4687 = vmul.f32 %v4674, %v4681
      %v4688 = vmul.f32 %v4677, %v4681
      %v4689 = vmul.f32 %v4680, %v4681
      %v4690 = vsub.f32 %v4649, %v4682
      %v4691 = vsub.f32 %v4650, %v4683
      %v4692 = vsub.f32 %v4651, %v4684
      %v4693 = vsub.f32 %v4652, %v4685
      %v4694 = vsub.f32 %v4653, %v4686
      %v4695 = vsub.f32 %v4654, %v4687
      %v4696 = vsub.f32 %v4655, %v4688
      %v4697 = vsub.f32 %v4656, %v4689
      %v4698 = vmul.f32 %v4690, %v4690
      %v4699 = vmul.f32 %v4691, %v4691
      %v4700 = vmul.f32 %v4692, %v4692
      %v4701 = vmul.f32 %v4693, %v4693
      %v4702 = vmul.f32 %v4694, %v4694
      %v4703 = vmul.f32 %v4695, %v4695
      %v4704 = vmul.f32 %v4696, %v4696
      %v4705 = vmul.f32 %v4697, %v4697
      %v4706 = vsel %vm643, %v4698, 0.0
      %4707 = vadd.xlane.f32.xlu0 %v4706
      %v4708 = vpop.xlane.xlu0 %4707
      %v4709 = vsel %vm643, %v4699, 0.0
      %4710 = vadd.xlane.f32.xlu0 %v4709
      %v4711 = vpop.xlane.xlu0 %4710
      %v4712 = vsel %vm643, %v4700, 0.0
      %4713 = vadd.xlane.f32.xlu0 %v4712
      %v4714 = vpop.xlane.xlu0 %4713
      %v4715 = vsel %vm643, %v4701, 0.0
      %4716 = vadd.xlane.f32.xlu0 %v4715
      %v4717 = vpop.xlane.xlu0 %4716
      %v4718 = vsel %vm643, %v4702, 0.0
      %4719 = vadd.xlane.f32.xlu0 %v4718
      %v4720 = vpop.xlane.xlu0 %4719
      %v4721 = vsel %vm643, %v4703, 0.0
      %4722 = vadd.xlane.f32.xlu0 %v4721
      %v4723 = vpop.xlane.xlu0 %4722
      %v4724 = vsel %vm643, %v4704, 0.0
      %4725 = vadd.xlane.f32.xlu0 %v4724
      %v4726 = vpop.xlane.xlu0 %4725
      %v4727 = vsel %vm643, %v4705, 0.0
      %4728 = vadd.xlane.f32.xlu0 %v4727
      %v4729 = vpop.xlane.xlu0 %4728
      %v4730 = vmul.f32 %v4708, %v4681
      %v4731 = vmul.f32 %v4711, %v4681
      %v4732 = vmul.f32 %v4714, %v4681
      %v4733 = vmul.f32 %v4717, %v4681
      %v4734 = vmul.f32 %v4720, %v4681
      %v4735 = vmul.f32 %v4723, %v4681
      %v4736 = vmul.f32 %v4726, %v4681
      %v4737 = vmul.f32 %v4729, %v4681
      %v4738 = vadd.f32 %v4730, 1e-05
      %v4739 = vadd.f32 %v4731, 1e-05
      %v4740 = vadd.f32 %v4732, 1e-05
      %v4741 = vadd.f32 %v4733, 1e-05
      %v4742 = vadd.f32 %v4734, 1e-05
      %v4743 = vadd.f32 %v4735, 1e-05
      %v4744 = vadd.f32 %v4736, 1e-05
      %v4745 = vadd.f32 %v4737, 1e-05
      %v4746 = vrsqrt.pop %v4738
      %v4747 = vrsqrt.pop %v4739
      %v4748 = vrsqrt.pop %v4740
      %v4749 = vrsqrt.pop %v4741
      %v4750 = vrsqrt.pop %v4742
      %v4751 = vrsqrt.pop %v4743
      %v4752 = vrsqrt.pop %v4744
      %v4753 = vrsqrt.pop %v4745
      %v4754 = vmul.f32 %v4690, %v4746
      %v4755 = vmul.f32 %v4691, %v4747
      %v4756 = vmul.f32 %v4692, %v4748
      %v4757 = vmul.f32 %v4693, %v4749
      %v4758 = vmul.f32 %v4694, %v4750
      %v4759 = vmul.f32 %v4695, %v4751
      %v4760 = vmul.f32 %v4696, %v4752
      %v4761 = vmul.f32 %v4697, %v4753
      %v4763 = vlaneseq
      %v4764 = vshrl.u32 %v4763, 7
      %v4765 = vsub.s32 0, %v4764
      %v4766 = vrot.slane %v616, %v4765
      %v4768 = vmul.f32 %v4754, %v4766
      %v4769 = vmul.f32 %v4755, %v4766
      %v4770 = vmul.f32 %v4756, %v4766
      %v4771 = vmul.f32 %v4757, %v4766
      %v4772 = vmul.f32 %v4758, %v4766
      %v4773 = vmul.f32 %v4759, %v4766
      %v4774 = vmul.f32 %v4760, %v4766
      %v4775 = vmul.f32 %v4761, %v4766
      %v4777 = vlaneseq
      %v4778 = vshrl.u32 %v4777, 7
      %v4779 = vsub.s32 0, %v4778
      %v4780 = vrot.slane %v617, %v4779
      %v4782 = vadd.f32 %v4768, %v4780
      %v4783 = vadd.f32 %v4769, %v4780
      %v4784 = vadd.f32 %v4770, %v4780
      %v4785 = vadd.f32 %v4771, %v4780
      %v4786 = vadd.f32 %v4772, %v4780
      %v4787 = vadd.f32 %v4773, %v4780
      %v4788 = vadd.f32 %v4774, %v4780
      %v4789 = vadd.f32 %v4775, %v4780
      %v4790 = vpack.c.bf16 %v4783, %v4782
      %v4791 = vpack.c.bf16 %v4785, %v4784
      %v4792 = vpack.c.bf16 %v4787, %v4786
      %v4793 = vpack.c.bf16 %v4789, %v4788
      %v4794 = vpack.c.bf16 %v619, %v618
      %v4796 = vlaneseq
      %v4797 = vshrl.u32 %v4796, 7
      %v4798 = vsub.s32 0, %v4797
      %v4799 = vrot.slane %v620, %v4798
      %v4802 = vsel %vm643, %v4790, 0
      %v4805 = vsel %vm643, %v4791, 0
      %v4808 = vsel %vm643, %v4792, 0
      %v4811 = vsel %vm643, %v4793, 0
      %4813 = vmatprep.subr.bf16.mxu0 0
      %4814 = vmatpush1.bf16.msra.mxu0 %v4794
      %4815 = vmatprep.subr.bf16.mxu0 0
      %4816 = vmatpush1.bf16.msra.mxu0 0
      %4817 = vmatprep.subr.bf16.mxu0 0
      %4818 = vmatpush1.bf16.msra.mxu0 0
      %4819 = vmatprep.subr.bf16.mxu0 0
      %4820 = vmatpush1.bf16.msra.mxu0 0
      %4821 = vmatprep.subr.bf16.mxu0 0
      %4822 = vmatpush1.bf16.msra.mxu0 0
      %4823 = vmatprep.subr.bf16.mxu0 0
      %4824 = vmatpush1.bf16.msra.mxu0 0
      %4825 = vmatprep.subr.bf16.mxu0 0
      %4826 = vmatpush1.bf16.msra.mxu0 0
      %4827 = vmatprep.subr.bf16.mxu0 0
      %4828 = vmatpush1.bf16.msra.mxu0 0
      %4829 = vmatprep.subr.bf16.mxu0 0
      %4830 = vmatpush1.bf16.msra.mxu0 0
      %4831 = vmatprep.subr.bf16.mxu0 0
      %4832 = vmatpush1.bf16.msra.mxu0 0
      %4833 = vmatprep.subr.bf16.mxu0 0
      %4834 = vmatpush1.bf16.msra.mxu0 0
      %4835 = vmatprep.subr.bf16.mxu0 0
      %4836 = vmatpush1.bf16.msra.mxu0 0
      %4837 = vmatprep.subr.bf16.mxu0 0
      %4838 = vmatpush1.bf16.msra.mxu0 0
      %4839 = vmatprep.subr.bf16.mxu0 0
      %4840 = vmatpush1.bf16.msra.mxu0 0
      %4841 = vmatprep.subr.bf16.mxu0 0
      %4842 = vmatpush1.bf16.msra.mxu0 0
      %4843 = vmatprep.subr.bf16.mxu0 0
      %4844 = vmatpush1.bf16.msra.mxu0 0
      %4845 = vmatprep.mubr.bf16.mxu0 0
      %4846 = vmatmul.mubr.bf16.gmra.mrb[0].mxu0 %v4802
      %v4847 = vpop.f32.mrb[0].mxu0
      %v4848 = vadd.f32 %v4799, %v4847
      %v4849 = vpop.f32.mrb[0].mxu0
      %v4850 = vpop.f32.mrb[0].mxu0
      %v4851 = vadd.f32 %v4799, %v4850
      %v4852 = vpop.f32.mrb[0].mxu0
      %4853 = vmatprep.mubr.bf16.mxu0 0
      %4854 = vmatmul.mubr.bf16.gmra.mrb[0].mxu0 %v4805
      %v4855 = vpop.f32.mrb[0].mxu0
      %v4856 = vadd.f32 %v4799, %v4855
      %v4857 = vpop.f32.mrb[0].mxu0
      %v4858 = vpop.f32.mrb[0].mxu0
      %v4859 = vadd.f32 %v4799, %v4858
      %v4860 = vpop.f32.mrb[0].mxu0
      %4861 = vmatprep.mubr.bf16.mxu0 0
      %4862 = vmatmul.mubr.bf16.gmra.mrb[0].mxu0 %v4808
      %v4863 = vpop.f32.mrb[0].mxu0
      %v4864 = vadd.f32 %v4799, %v4863
      %v4865 = vpop.f32.mrb[0].mxu0
      %v4866 = vpop.f32.mrb[0].mxu0
      %v4867 = vadd.f32 %v4799, %v4866
      %v4868 = vpop.f32.mrb[0].mxu0
      %4869 = vmatprep.mubr.bf16.mxu0 0
      %4870 = vmatmul.mubr.bf16.gmra.mrb[0].mxu0 %v4811
      %v4871 = vpop.f32.mrb[0].mxu0
      %v4872 = vadd.f32 %v4799, %v4871
      %v4873 = vpop.f32.mrb[0].mxu0
      %v4874 = vpop.f32.mrb[0].mxu0
      %v4875 = vadd.f32 %v4799, %v4874
      %v4876 = vpop.f32.mrb[0].mxu0
      %4877 = vdwg.mxu0
      %v4878 = vmul.f32 %v4848, 0.5
      %v4879 = vmul.f32 %v4851, 0.5
      %v4880 = vmul.f32 %v4856, 0.5
      %v4881 = vmul.f32 %v4859, 0.5
      %v4882 = vmul.f32 %v4864, 0.5
      %v4883 = vmul.f32 %v4867, 0.5
      %v4884 = vmul.f32 %v4872, 0.5
      %v4885 = vmul.f32 %v4875, 0.5
      %v4886 = vmul.f32 %v4848, 0.044715
      %v4887 = vmul.f32 %v4851, 0.044715
      %v4888 = vmul.f32 %v4856, 0.044715
      %v4889 = vmul.f32 %v4859, 0.044715
      %v4890 = vmul.f32 %v4864, 0.044715
      %v4891 = vmul.f32 %v4867, 0.044715
      %v4892 = vmul.f32 %v4872, 0.044715
      %v4893 = vmul.f32 %v4875, 0.044715
      %v4894 = vmul.f32 %v4886, %v4848
      %v4895 = vmul.f32 %v4887, %v4851
      %v4896 = vmul.f32 %v4888, %v4856
      %v4897 = vmul.f32 %v4889, %v4859
      %v4898 = vmul.f32 %v4890, %v4864
      %v4899 = vmul.f32 %v4891, %v4867
      %v4900 = vmul.f32 %v4892, %v4872
      %v4901 = vmul.f32 %v4893, %v4875
      %v4902 = vmul.f32 %v4894, %v4848
      %v4903 = vmul.f32 %v4895, %v4851
      %v4904 = vmul.f32 %v4896, %v4856
      %v4905 = vmul.f32 %v4897, %v4859
      %v4906 = vmul.f32 %v4898, %v4864
      %v4907 = vmul.f32 %v4899, %v4867
      %v4908 = vmul.f32 %v4900, %v4872
      %v4909 = vmul.f32 %v4901, %v4875
      %v4910 = vadd.f32 %v4848, %v4902
      %v4911 = vadd.f32 %v4851, %v4903
      %v4912 = vadd.f32 %v4856, %v4904
      %v4913 = vadd.f32 %v4859, %v4905
      %v4914 = vadd.f32 %v4864, %v4906
      %v4915 = vadd.f32 %v4867, %v4907
      %v4916 = vadd.f32 %v4872, %v4908
      %v4917 = vadd.f32 %v4875, %v4909
      %v4918 = vmul.f32 %v4910, 0.7978846
      %v4919 = vmul.f32 %v4911, 0.7978846
      %v4920 = vmul.f32 %v4912, 0.7978846
      %v4921 = vmul.f32 %v4913, 0.7978846
      %v4922 = vmul.f32 %v4914, 0.7978846
      %v4923 = vmul.f32 %v4915, 0.7978846
      %v4924 = vmul.f32 %v4916, 0.7978846
      %v4925 = vmul.f32 %v4917, 0.7978846
      %v4926 = vtanh.pop %v4918
      %v4927 = vtanh.pop %v4919
      %v4928 = vtanh.pop %v4920
      %v4929 = vtanh.pop %v4921
      %v4930 = vtanh.pop %v4922
      %v4931 = vtanh.pop %v4923
      %v4932 = vtanh.pop %v4924
      %v4933 = vtanh.pop %v4925
      %v4934 = vadd.f32 %v4926, 1.0
      %v4935 = vadd.f32 %v4927, 1.0
      %v4936 = vadd.f32 %v4928, 1.0
      %v4937 = vadd.f32 %v4929, 1.0
      %v4938 = vadd.f32 %v4930, 1.0
      %v4939 = vadd.f32 %v4931, 1.0
      %v4940 = vadd.f32 %v4932, 1.0
      %v4941 = vadd.f32 %v4933, 1.0
      %v4942 = vmul.f32 %v4878, %v4934
      %v4943 = vmul.f32 %v4879, %v4935
      %v4944 = vmul.f32 %v4880, %v4936
      %v4945 = vmul.f32 %v4881, %v4937
      %v4946 = vmul.f32 %v4882, %v4938
      %v4947 = vmul.f32 %v4883, %v4939
      %v4948 = vmul.f32 %v4884, %v4940
      %v4949 = vmul.f32 %v4885, %v4941
      %v4950 = vpack.c.bf16 %v4943, %v4942
      %v4951 = vpack.c.bf16 %v4945, %v4944
      %v4952 = vpack.c.bf16 %v4947, %v4946
      %v4953 = vpack.c.bf16 %v4949, %v4948
      %v4954 = vpack.c.bf16 %v622, %v621
      %v4955 = vpack.c.bf16 %v624, %v623
      %v4956 = vpack.c.bf16 %v626, %v625
      %v4957 = vpack.c.bf16 %v628, %v627
      %v4959 = vlaneseq
      %v4960 = vshrl.u32 %v4959, 7
      %v4961 = vsub.s32 0, %v4960
      %v4962 = vrot.slane %v629, %v4961
      %vm4964 = vcmask 523264
      %v4966 = vsel %vm4964, %v4950, 0
      %v4969 = vsel %vm4964, %v4951, 0
      %v4972 = vsel %vm4964, %v4952, 0
      %v4975 = vsel %vm4964, %v4953, 0
      %4977 = vmatprep.subr.bf16.mxu0 0
      %4978 = vmatpush1.bf16.msra.mxu0 %v4954
      %4979 = vmatprep.subr.bf16.mxu0 0
      %4980 = vmatpush1.bf16.msra.mxu0 %v4955
      %4981 = vmatprep.subr.bf16.mxu0 0
      %4982 = vmatpush1.bf16.msra.mxu0 %v4956
      %4983 = vmatprep.subr.bf16.mxu0 0
      %4984 = vmatpush1.bf16.msra.mxu0 %v4957
      %4985 = vmatprep.subr.bf16.mxu0 0
      %4986 = vmatpush1.bf16.msra.mxu0 0
      %4987 = vmatprep.subr.bf16.mxu0 0
      %4988 = vmatpush1.bf16.msra.mxu0 0
      %4989 = vmatprep.subr.bf16.mxu0 0
      %4990 = vmatpush1.bf16.msra.mxu0 0
      %4991 = vmatprep.subr.bf16.mxu0 0
      %4992 = vmatpush1.bf16.msra.mxu0 0
      %4993 = vmatprep.subr.bf16.mxu0 0
      %4994 = vmatpush1.bf16.msra.mxu0 0
      %4995 = vmatprep.subr.bf16.mxu0 0
      %4996 = vmatpush1.bf16.msra.mxu0 0
      %4997 = vmatprep.subr.bf16.mxu0 0
      %4998 = vmatpush1.bf16.msra.mxu0 0
      %4999 = vmatprep.subr.bf16.mxu0 0
      %5000 = vmatpush1.bf16.msra.mxu0 0
      %5001 = vmatprep.subr.bf16.mxu0 0
      %5002 = vmatpush1.bf16.msra.mxu0 0
      %5003 = vmatprep.subr.bf16.mxu0 0
      %5004 = vmatpush1.bf16.msra.mxu0 0
      %5005 = vmatprep.subr.bf16.mxu0 0
      %5006 = vmatpush1.bf16.msra.mxu0 0
      %5007 = vmatprep.subr.bf16.mxu0 0
      %5008 = vmatpush1.bf16.msra.mxu0 0
      %5009 = vmatprep.mubr.bf16.mxu0 0
      %5010 = vmatmul.mubr.bf16.gmra.mrb[0].mxu0 %v4966
      %v5011 = vpop.f32.mrb[0].mxu0
      %v5012 = vadd.f32 %v4962, %v5011
      %v5013 = vpop.f32.mrb[0].mxu0
      %v5014 = vpop.f32.mrb[0].mxu0
      %v5015 = vadd.f32 %v4962, %v5014
      %v5016 = vpop.f32.mrb[0].mxu0
      %5017 = vmatprep.mubr.bf16.mxu0 0
      %5018 = vmatmul.mubr.bf16.gmra.mrb[0].mxu0 %v4969
      %v5019 = vpop.f32.mrb[0].mxu0
      %v5020 = vadd.f32 %v4962, %v5019
      %v5021 = vpop.f32.mrb[0].mxu0
      %v5022 = vpop.f32.mrb[0].mxu0
      %v5023 = vadd.f32 %v4962, %v5022
      %v5024 = vpop.f32.mrb[0].mxu0
      %5025 = vmatprep.mubr.bf16.mxu0 0
      %5026 = vmatmul.mubr.bf16.gmra.mrb[0].mxu0 %v4972
      %v5027 = vpop.f32.mrb[0].mxu0
      %v5028 = vadd.f32 %v4962, %v5027
      %v5029 = vpop.f32.mrb[0].mxu0
      %v5030 = vpop.f32.mrb[0].mxu0
      %v5031 = vadd.f32 %v4962, %v5030
      %v5032 = vpop.f32.mrb[0].mxu0
      %5033 = vmatprep.mubr.bf16.mxu0 0
      %5034 = vmatmul.mubr.bf16.gmra.mrb[0].mxu0 %v4975
      %v5035 = vpop.f32.mrb[0].mxu0
      %v5036 = vadd.f32 %v4962, %v5035
      %v5037 = vpop.f32.mrb[0].mxu0
      %v5038 = vpop.f32.mrb[0].mxu0
      %v5039 = vadd.f32 %v4962, %v5038
      %v5040 = vpop.f32.mrb[0].mxu0
      %5041 = vdwg.mxu0
      %v5042 = vadd.f32 %v4782, %v5012
      %v5043 = vadd.f32 %v4783, %v5015
      %v5044 = vadd.f32 %v4784, %v5020
      %v5045 = vadd.f32 %v4785, %v5023
      %v5046 = vadd.f32 %v4786, %v5028
      %v5047 = vadd.f32 %v4787, %v5031
      %v5048 = vadd.f32 %v4788, %v5036
      %v5049 = vadd.f32 %v4789, %v5039
      %v5050 = vsel %vm643, %v5042, 0.0
      %5051 = vadd.xlane.f32.xlu0 %v5050
      %v5052 = vpop.xlane.xlu0 %5051
      %v5053 = vsel %vm643, %v5043, 0.0
      %5054 = vadd.xlane.f32.xlu0 %v5053
      %v5055 = vpop.xlane.xlu0 %5054
      %v5056 = vsel %vm643, %v5044, 0.0
      %5057 = vadd.xlane.f32.xlu0 %v5056
      %v5058 = vpop.xlane.xlu0 %5057
      %v5059 = vsel %vm643, %v5045, 0.0
      %5060 = vadd.xlane.f32.xlu0 %v5059
      %v5061 = vpop.xlane.xlu0 %5060
      %v5062 = vsel %vm643, %v5046, 0.0
      %5063 = vadd.xlane.f32.xlu0 %v5062
      %v5064 = vpop.xlane.xlu0 %5063
      %v5065 = vsel %vm643, %v5047, 0.0
      %5066 = vadd.xlane.f32.xlu0 %v5065
      %v5067 = vpop.xlane.xlu0 %5066
      %v5068 = vsel %vm643, %v5048, 0.0
      %5069 = vadd.xlane.f32.xlu0 %v5068
      %v5070 = vpop.xlane.xlu0 %5069
      %v5071 = vsel %vm643, %v5049, 0.0
      %5072 = vadd.xlane.f32.xlu0 %v5071
      %v5073 = vpop.xlane.xlu0 %5072
      %v5074 = vmul.f32 %v5052, %v4681
      %v5075 = vmul.f32 %v5055, %v4681
      %v5076 = vmul.f32 %v5058, %v4681
      %v5077 = vmul.f32 %v5061, %v4681
      %v5078 = vmul.f32 %v5064, %v4681
      %v5079 = vmul.f32 %v5067, %v4681
      %v5080 = vmul.f32 %v5070, %v4681
      %v5081 = vmul.f32 %v5073, %v4681
      %v5082 = vsub.f32 %v5042, %v5074
      %v5083 = vsub.f32 %v5043, %v5075
      %v5084 = vsub.f32 %v5044, %v5076
      %v5085 = vsub.f32 %v5045, %v5077
      %v5086 = vsub.f32 %v5046, %v5078
      %v5087 = vsub.f32 %v5047, %v5079
      %v5088 = vsub.f32 %v5048, %v5080
      %v5089 = vsub.f32 %v5049, %v5081
      %v5090 = vmul.f32 %v5082, %v5082
      %v5091 = vmul.f32 %v5083, %v5083
      %v5092 = vmul.f32 %v5084, %v5084
      %v5093 = vmul.f32 %v5085, %v5085
      %v5094 = vmul.f32 %v5086, %v5086
      %v5095 = vmul.f32 %v5087, %v5087
      %v5096 = vmul.f32 %v5088, %v5088
      %v5097 = vmul.f32 %v5089, %v5089
      %v5098 = vsel %vm643, %v5090, 0.0
      %5099 = vadd.xlane.f32.xlu0 %v5098
      %v5100 = vpop.xlane.xlu0 %5099
      %v5101 = vsel %vm643, %v5091, 0.0
      %5102 = vadd.xlane.f32.xlu0 %v5101
      %v5103 = vpop.xlane.xlu0 %5102
      %v5104 = vsel %vm643, %v5092, 0.0
      %5105 = vadd.xlane.f32.xlu0 %v5104
      %v5106 = vpop.xlane.xlu0 %5105
      %v5107 = vsel %vm643, %v5093, 0.0
      %5108 = vadd.xlane.f32.xlu0 %v5107
      %v5109 = vpop.xlane.xlu0 %5108
      %v5110 = vsel %vm643, %v5094, 0.0
      %5111 = vadd.xlane.f32.xlu0 %v5110
      %v5112 = vpop.xlane.xlu0 %5111
      %v5113 = vsel %vm643, %v5095, 0.0
      %5114 = vadd.xlane.f32.xlu0 %v5113
      %v5115 = vpop.xlane.xlu0 %5114
      %v5116 = vsel %vm643, %v5096, 0.0
      %5117 = vadd.xlane.f32.xlu0 %v5116
      %v5118 = vpop.xlane.xlu0 %5117
      %v5119 = vsel %vm643, %v5097, 0.0
      %5120 = vadd.xlane.f32.xlu0 %v5119
      %v5121 = vpop.xlane.xlu0 %5120
      %v5122 = vmul.f32 %v5100, %v4681
      %v5123 = vmul.f32 %v5103, %v4681
      %v5124 = vmul.f32 %v5106, %v4681
      %v5125 = vmul.f32 %v5109, %v4681
      %v5126 = vmul.f32 %v5112, %v4681
      %v5127 = vmul.f32 %v5115, %v4681
      %v5128 = vmul.f32 %v5118, %v4681
      %v5129 = vmul.f32 %v5121, %v4681
      %v5130 = vadd.f32 %v5122, 1e-05
      %v5131 = vadd.f32 %v5123, 1e-05
      %v5132 = vadd.f32 %v5124, 1e-05
      %v5133 = vadd.f32 %v5125, 1e-05
      %v5134 = vadd.f32 %v5126, 1e-05
      %v5135 = vadd.f32 %v5127, 1e-05
      %v5136 = vadd.f32 %v5128, 1e-05
      %v5137 = vadd.f32 %v5129, 1e-05
      %v5138 = vrsqrt.pop %v5130
      %v5139 = vrsqrt.pop %v5131
      %v5140 = vrsqrt.pop %v5132
      %v5141 = vrsqrt.pop %v5133
      %v5142 = vrsqrt.pop %v5134
      %v5143 = vrsqrt.pop %v5135
      %v5144 = vrsqrt.pop %v5136
      %v5145 = vrsqrt.pop %v5137
      %v5146 = vmul.f32 %v5082, %v5138
      %v5147 = vmul.f32 %v5083, %v5139
      %v5148 = vmul.f32 %v5084, %v5140
      %v5149 = vmul.f32 %v5085, %v5141
      %v5150 = vmul.f32 %v5086, %v5142
      %v5151 = vmul.f32 %v5087, %v5143
      %v5152 = vmul.f32 %v5088, %v5144
      %v5153 = vmul.f32 %v5089, %v5145
      %v5155 = vlaneseq
      %v5156 = vshrl.u32 %v5155, 7
      %v5157 = vsub.s32 0, %v5156
      %v5158 = vrot.slane %v630, %v5157
      %v5160 = vmul.f32 %v5146, %v5158
      %v5161 = vmul.f32 %v5147, %v5158
      %v5162 = vmul.f32 %v5148, %v5158
      %v5163 = vmul.f32 %v5149, %v5158
      %v5164 = vmul.f32 %v5150, %v5158
      %v5165 = vmul.f32 %v5151, %v5158
      %v5166 = vmul.f32 %v5152, %v5158
      %v5167 = vmul.f32 %v5153, %v5158
      %v5169 = vlaneseq
      %v5170 = vshrl.u32 %v5169, 7
      %v5171 = vsub.s32 0, %v5170
      %v5172 = vrot.slane %v631, %v5171
      %v5174 = vadd.f32 %v5160, %v5172
      %v5175 = vadd.f32 %v5161, %v5172
      %v5176 = vadd.f32 %v5162, %v5172
      %v5177 = vadd.f32 %v5163, %v5172
      %v5178 = vadd.f32 %v5164, %v5172
      %v5179 = vadd.f32 %v5165, %v5172
      %v5180 = vadd.f32 %v5166, %v5172
      %v5181 = vadd.f32 %v5167, %v5172
      %5182 = vst.msk [vmem:[%s535] sm:$0xff] %vm643, %v5174
      %5183 = vst.msk [vmem:[%s535 + $0x8] sm:$0xff] %vm643, %v5175
      %5184 = vst.msk [vmem:[%s535 + $0x10] sm:$0xff] %vm643, %v5176
      %5185 = vst.msk [vmem:[%s535 + $0x18] sm:$0xff] %vm643, %v5177
      %5186 = vst.msk [vmem:[%s535 + $0x20] sm:$0xff] %vm643, %v5178
      %5187 = vst.msk [vmem:[%s535 + $0x28] sm:$0xff] %vm643, %v5179
      %5188 = vst.msk [vmem:[%s535 + $0x30] sm:$0xff] %vm643, %v5180
      %5189 = vst.msk [vmem:[%s535 + $0x38] sm:$0xff] %vm643, %v5181
      %p5190 = scmp.lt.s32.totalorder %s27, 1
      %s5191 = scalar_select %p5190, %s27, 1
      %s5192 = smul.addr %s5191, 8
      %s5193 = smul.addr %s5192, 8
      %s5194 = scalar_lea.vmem %s16, %s5193
      // Predicated region
      $region85: #{forward.2} parent=83 // pred_check
        %p5195 = pneg %p391
      $region86: #{forward.2} parent=83 // pred_check_branch
        %5197 = sbr.rel (%p5195) target = $region88
      $region87: #{forward.2} parent=83 // pred_region
        _
      $region88: #{forward.2} parent=83 // pred_fallthru
        _
    $region84: #{forward.2} parent=5 // pred_fallthru
      _
    %p5198 = scmp.le.s32.totalorder 2, %s22
    // Predicated region
    $region89: #{forward.2} parent=5 // pred_check
      %p5199 = pneg %p5198
    $region90: #{forward.2} parent=5 // pred_check_branch
      %5201 = sbr.rel (%p5199) target = $region92
    $region91: #{forward.2} parent=5 // pred_region
      %s5202 = ssub.s32 %s22, 2
      // Predicated region
      $region93: #{forward.2} parent=91 // pred_check
        %p5203 = pneg %p397
      $region94: #{forward.2} parent=91 // pred_check_branch
        %5205 = sbr.rel (%p5203) target = $region96
      $region95: #{forward.2} parent=91 // pred_region
        %p5206 = scmp.lt.s32.totalorder %s28, 1
        %s5207 = scalar_select %p5206, %s28, 1
        %s5208 = smul.addr %s5207, 8
        %s5209 = smul.addr %s5208, 8
        %s5210 = scalar_lea.vmem %s16, %s5209
      $region96: #{forward.2} parent=91 // pred_fallthru
        _
    $region92: #{forward.2} parent=5 // pred_fallthru
      _
  $region6: #{forward.2} parent=0 // loop_footer
    %s26 = sadd.s32 1, %s22
  $region7: #{forward.2} parent=0 // loop_footer_branch
    %21 = sbr.rel target = $region3
  $region8: #{forward.2} parent=0 // loop_exit
    _

</llo_original>
